<compile_context>
chip_gen: v5e
topology: v5e:2x2
jax: 0.10.0
libtpu: 0.0.40
codegen_flags: <defaults>
</compile_context>

<pallas_src>
import functools
import math

import jax
import jax.numpy as jnp
from jax.experimental import pallas as pl
from jax.experimental.pallas import tpu as pltpu


def _layernorm(x, gamma, beta, eps=1e-5):
    mean = jnp.mean(x, axis=-1, keepdims=True)
    xc = x - mean
    var = jnp.mean(xc * xc, axis=-1, keepdims=True)
    return xc * jax.lax.rsqrt(var + eps) * gamma + beta


def _erf(x):
    # Abramowitz & Stegun 7.1.26 (|error| <= 1.5e-7): exact-GELU semantics without relying
    # on an erf primitive lowering; the single exp lands on the EUP.
    a1, a2, a3, a4, a5 = 0.254829592, -0.284496736, 1.421413741, -1.453152027, 1.061405429
    p = 0.3275911
    sgn = jnp.where(x < 0.0, -1.0, 1.0)
    ax = jnp.abs(x)
    t = 1.0 / (1.0 + p * ax)
    poly = ((((a5 * t + a4) * t + a3) * t + a2) * t + a1) * t
    return sgn * (1.0 - poly * jnp.exp(-ax * ax))


def _gelu_exact(x):
    # exact (erf) GELU == nn.GELU default
    return 0.5 * x * (1.0 + _erf(x * 0.7071067811865476))


_ROLL_SIGN = None


def _roll_sign():
    """Probe pltpu.roll's rotation convention once with a tiny kernel.

    Returns -1 if pltpu.roll matches jnp.roll (out[i] = in[i - shift]), +1 for the opposite
    convention, 0 if pltpu.roll is unavailable (a concat-based rotation is used instead).
    """
    global _ROLL_SIGN
    if _ROLL_SIGN is not None:
        return _ROLL_SIGN
    sign = 0
    try:
        def probe_kernel(x_ref, o_ref):
            o_ref[...] = pltpu.roll(x_ref[...], shift=1, axis=0)

        probe = jnp.broadcast_to(jnp.arange(8, dtype=jnp.float32)[:, None], (8, 128))
        out = jax.device_get(
            pl.pallas_call(probe_kernel,
                           out_shape=jax.ShapeDtypeStruct((8, 128), jnp.float32))(probe))
        if out[1, 0] == 0.0 and out[0, 0] == 7.0:
            sign = -1        # out[i] = in[i - 1]  (jnp.roll convention)
        elif out[0, 0] == 1.0 and out[7, 0] == 0.0:
            sign = 1         # out[i] = in[i + 1]
    except Exception:
        sign = 0
    _ROLL_SIGN = sign
    return sign


def _shift_rows(x, s, roll_sign):
    """y[r, :] = x[r + s, :] with wrap-around; the caller masks wrapped rows to zero."""
    m = x.shape[0]
    s = s % m
    if s == 0:
        return x
    if roll_sign == 0:   # fallback: rotate via two sublane slices + concat (always correct)
        return jnp.concatenate([x[s:, :], x[:s, :]], axis=0)
    return pltpu.roll(x, shift=(roll_sign * s) % m, axis=0)   # XLU slot, no VMEM copies


def _block_kernel(x_ref, g1_ref, b1_ref, wqkv_ref, wp_ref, bp_ref,
                  g2_ref, b2_ref, w1_ref, bias1_ref, wdw_ref, bdw_ref,
                  w2_ref, bias2_ref, o_ref, *, num_heads, H, W, bblk, roll_sign):
    N = H * W
    C = x_ref.shape[-1]
    hd = C // num_heads
    M = bblk * N
    bf16 = jnp.bfloat16

    x = x_ref[...].reshape(M, C).astype(jnp.float32)

    # ---------------- attention branch ----------------
    xn = _layernorm(x, g1_ref[0], b1_ref[0])
    # one wide MXU pass for q, k, v of all heads; attention scale is pre-folded into
    # the q columns of wqkv (bf16 operands, f32 accumulation).
    qkv = jnp.dot(xn.astype(bf16), wqkv_ref[...], preferred_element_type=jnp.float32)

    # TODO(synk): head-batched einsum pair would need a (0,2,1,3) activation transpose whose
    # Mosaic lowering is unreliable at hd=8; per-head loop kept (same net data movement).
    # TODO(synk): for production N, KV-tile this with an online softmax (v7x: 64 MiB VMEM).
    heads = []
    for h in range(num_heads):
        q_h = qkv[:, h * hd:(h + 1) * hd].reshape(bblk, N, hd).astype(bf16)
        k_h = qkv[:, C + h * hd:C + (h + 1) * hd].reshape(bblk, N, hd).astype(bf16)
        v_h = qkv[:, 2 * C + h * hd:2 * C + (h + 1) * hd].reshape(bblk, N, hd).astype(bf16)
        s = jnp.einsum('bnd,bmd->bnm', q_h, k_h,
                       preferred_element_type=jnp.float32)            # (bblk, N, N)
        s = s - jnp.max(s, axis=-1, keepdims=True)
        p = jnp.exp(s)
        inv_l = 1.0 / jnp.sum(p, axis=-1, keepdims=True)              # exact reciprocal
        o_h = jnp.einsum('bnm,bmd->bnd', p.astype(bf16), v_h,
                         preferred_element_type=jnp.float32) * inv_l  # (bblk, N, hd)
        heads.append(o_h)
    o_cat = jnp.concatenate(heads, axis=-1).reshape(M, C)
    attn = jnp.dot(o_cat.astype(bf16), wp_ref[...],
                   preferred_element_type=jnp.float32) + bp_ref[0]
    x1 = x + attn                                                     # residual 1 (in VMEM)

    # ---------------- MLP branch ----------------
    xn2 = _layernorm(x1, g2_ref[0], b2_ref[0])
    h1 = jnp.dot(xn2.astype(bf16), w1_ref[...],
                 preferred_element_type=jnp.float32) + bias1_ref[0]   # (M, hidden)

    # 3x3 depthwise conv (stride 1, pad 1) as 9 rolled token shifts + validity masks.
    # Rolling the flat (M, hidden) activation is safe: every row whose source falls outside
    # its own image (including cross-batch / full-buffer wrap) is exactly the set zeroed
    # by the row-bound mask combined with the column-boundary masks.
    flat = jax.lax.broadcasted_iota(jnp.int32, (M, 1), 0)
    tok = flat % N                                   # token index within an image
    col = flat % W                                   # column index within a row
    ones = jnp.ones((M, 1), jnp.float32)
    mh = {-1: (col >= 1).astype(jnp.float32), 0: ones,
          1: (col < W - 1).astype(jnp.float32)}
    mv = {dh: ((tok + dh * W >= 0) & (tok + dh * W < N)).astype(jnp.float32)
          for dh in (-1, 0, 1)}

    wdw = wdw_ref[...]                               # (3, 3, hidden)
    acc = jnp.zeros_like(h1)
    for dh in (-1, 0, 1):
        for dw in (-1, 0, 1):
            shifted = _shift_rows(h1, dh * W + dw, roll_sign)
            acc = acc + (shifted * (mv[dh] * mh[dw])) * wdw[dh + 1, dw + 1, :]
    conv = acc + bdw_ref[0]

    act = _gelu_exact(conv)
    mlp = jnp.dot(act.astype(bf16), w2_ref[...],
                  preferred_element_type=jnp.float32) + bias2_ref[0]

    # TODO(synk): for stages with C >= 128 store a lane-dense (bblk, N*C) slab instead;
    # at C=32 the in-kernel relayout would offset the masked-store savings.
    o_ref[...] = (x1 + mlp).reshape(bblk, N, C).astype(o_ref.dtype)


def block_forward(x, params, *, H, W, num_heads, bblk=None):
    B, N, C = x.shape
    assert N == H * W
    hidden = params["w1t"].shape[1]
    bf16 = jnp.bfloat16

    # Fold the learnable attention scale into the q-columns of the fused QKV weight
    # (a parameter, not data-dependent -> belongs in the weight).
    wqkv = params["wqkv"]
    wqkv = jnp.concatenate([wqkv[:, :C] * params["scale"][0], wqkv[:, C:]], axis=1)

    # bf16 operands for every MXU matmul (f32 accumulation via preferred_element_type);
    # biases / LayerNorm params / dwconv taps stay f32 so all VPU/EUP math is f32 (v5e-safe).
    wqkv = wqkv.astype(bf16)
    wp, w1t, w2t = (params[k].astype(bf16) for k in ("wp", "w1t", "w2t"))

    if bblk is None:
        # target >= ~256 MXU rows per grid step (v6e/v7x MXU is 256 wide; 128 fine on v5e) ...
        bblk = min(B, max(1, pl.cdiv(256, N)))
        while B % bblk:
            bblk -= 1
        # ... but keep >= 2 parallel grid steps when possible so v7x's two TCs both get work.
        if B // bblk == 1 and B > 1:
            bblk = max(1, bblk // 2)
            while B % bblk:
                bblk -= 1
    grid = (B // bblk,)

    def const(*shape):
        # constant-index weight blocks; pipeline_mode=pl.Buffered(1) would single-buffer
        # these (worthwhile on v7x at production C/hidden; negligible at C=32, so omitted).
        n = len(shape)
        return pl.BlockSpec(shape, lambda b: (0,) * n)

    kernel = functools.partial(_block_kernel, num_heads=num_heads, H=H, W=W,
                               bblk=bblk, roll_sign=_roll_sign())
    fn = pl.pallas_call(
        kernel,
        out_shape=jax.ShapeDtypeStruct((B, N, C), x.dtype),
        grid=grid,
        in_specs=[
            pl.BlockSpec((bblk, N, C), lambda b: (b, 0, 0)),     # x
            const(1, C), const(1, C),                            # norm1 gamma/beta
            const(C, 3 * C),                                     # fused W_qkv (q|k|v, bf16)
            const(C, C), const(1, C),                            # proj W^T (bf16), bias
            const(1, C), const(1, C),                            # norm2 gamma/beta
            const(C, hidden), const(1, hidden),                  # fc1 W^T (bf16), bias
            const(3, 3, hidden), const(1, hidden),               # dwconv weight, bias
            const(hidden, C), const(1, C),                       # fc2 W^T (bf16), bias
        ],
        out_specs=pl.BlockSpec((bblk, N, C), lambda b: (b, 0, 0)),
        compiler_params=pltpu.CompilerParams(dimension_semantics=("parallel",)),
    )
    return fn(x, params["g1"], params["b1"], wqkv, wp, params["bp"],
              params["g2"], params["b2"], w1t, params["bias1"],
              params["wdw"], params["bdw"], w2t, params["bias2"])


def init_params(key, *, dim, num_heads, mlp_ratio=4.0, qk_scale=None):
    """Deterministic synthetic init mirroring the module's parameter shapes."""
    hd = dim // num_heads
    hidden = int(dim * mlp_ratio)
    ks = jax.random.split(key, 6)
    std = 0.02
    # PyTorch-shaped (out_features, in_features) weights.
    wq = jax.random.normal(ks[0], (dim, dim), jnp.float32) * std            # q.weight
    wkv = jax.random.normal(ks[1], (2 * dim, dim), jnp.float32) * std       # kv.weight
    wpr = jax.random.normal(ks[2], (dim, dim), jnp.float32) * std           # proj.weight
    w1 = jax.random.normal(ks[3], (hidden, dim), jnp.float32) * std         # fc1.weight
    w2 = jax.random.normal(ks[4], (dim, hidden), jnp.float32) * std         # fc2.weight
    wdw = jax.random.normal(ks[5], (hidden, 1, 3, 3), jnp.float32) * math.sqrt(2.0 / 9.0)

    wkvt = wkv.T                                     # (dim, 2*dim): [:, :dim]=k, [:, dim:]=v
    wqkv = jnp.concatenate([wq.T, wkvt[:, :dim], wkvt[:, dim:]], axis=1)     # (dim, 3*dim)

    return dict(
        # per the module spec: scale = ((qk_scale or head_dim) * 0.5) ** (-0.5)
        scale=jnp.array([((qk_scale or hd) * 0.5) ** (-0.5)], jnp.float32),
        g1=jnp.ones((1, dim), jnp.float32), b1=jnp.zeros((1, dim), jnp.float32),
        g2=jnp.ones((1, dim), jnp.float32), b2=jnp.zeros((1, dim), jnp.float32),
        wqkv=wqkv,
        wp=wpr.T,                                    # (C, C) so that x @ wp == proj(x)
        bp=jnp.zeros((1, dim), jnp.float32),
        w1t=w1.T, bias1=jnp.zeros((1, hidden), jnp.float32),
        wdw=jnp.transpose(wdw[:, 0], (1, 2, 0)),     # (3, 3, hidden): wdw[i,j,c]=W[c,0,i,j]
        bdw=jnp.zeros((1, hidden), jnp.float32),
        w2t=w2.T, bias2=jnp.zeros((1, dim), jnp.float32),
    )


if __name__ == "__main__":
    # dim=32, heads=4 (head_dim=8), H=W=8 -> N=64, hidden=128, B=4 (bblk=2 -> 2 grid steps)
    B, C, num_heads, H, W = 4, 32, 4, 8, 8
    N = H * W
    key = jax.random.PRNGKey(0)
    kx, kp = jax.random.split(key)
    x = jax.random.normal(kx, (B, N, C), jnp.float32)
    params = init_params(kp, dim=C, num_heads=num_heads, mlp_ratio=4.0)

    y = block_forward(x, params, H=H, W=W, num_heads=num_heads)
    jax.block_until_ready(y)
    assert y.shape == (B, N, C) and y.dtype == jnp.float32
    assert bool(jnp.all(jnp.isfinite(y)))
    print("KERNEL_OK")
</pallas_src>

<mosaic_0001>
module attributes {stable_mosaic.version = 11 : i64} {
  func.func @probe_kernel(%arg0: memref<8x128xf32, #tpu.memory_space<vmem>>, %arg1: memref<8x128xf32, #tpu.memory_space<vmem>>) attributes {dimension_semantics = [], scalar_prefetch = 0 : i64, scratch_operands = 0 : i64, tpu.core_type = #tpu.core_type<tc>} {
    %c0 = arith.constant 0 : index
    %c0_0 = arith.constant 0 : index
    %0 = vector.load %arg0[%c0, %c0_0] : memref<8x128xf32, #tpu.memory_space<vmem>>, vector<8x128xf32>
    %c1_i32 = arith.constant 1 : i32
    %1 = tpu.dynamic_rotate %0 by %c1_i32 dim 0 : vector<8x128xf32>, i32 -> vector<8x128xf32>
    %c0_1 = arith.constant 0 : index
    %c0_2 = arith.constant 0 : index
    %2 = vector.load %arg1[%c0_1, %c0_2] : memref<8x128xf32, #tpu.memory_space<vmem>>, vector<8x128xf32>
    tpu.vector_store %arg1[%c0_1, %c0_2], %1 {strides = array<i32>} : memref<8x128xf32, #tpu.memory_space<vmem>>, vector<8x128xf32>,
    return
  }
}

module attributes {stable_mosaic.version = 11 : i64} {
  func.func @_block_kernel(%arg0: i32, %arg1: memref<2x64x32xf32, #tpu.memory_space<vmem>>, %arg2: memref<1x32xf32, #tpu.memory_space<vmem>>, %arg3: memref<1x32xf32, #tpu.memory_space<vmem>>, %arg4: memref<32x96xbf16, #tpu.memory_space<vmem>>, %arg5: memref<32x32xbf16, #tpu.memory_space<vmem>>, %arg6: memref<1x32xf32, #tpu.memory_space<vmem>>, %arg7: memref<1x32xf32, #tpu.memory_space<vmem>>, %arg8: memref<1x32xf32, #tpu.memory_space<vmem>>, %arg9: memref<32x128xbf16, #tpu.memory_space<vmem>>, %arg10: memref<1x128xf32, #tpu.memory_space<vmem>>, %arg11: memref<3x3x128xf32, #tpu.memory_space<vmem>>, %arg12: memref<1x128xf32, #tpu.memory_space<vmem>>, %arg13: memref<128x32xbf16, #tpu.memory_space<vmem>>, %arg14: memref<1x32xf32, #tpu.memory_space<vmem>>, %arg15: memref<2x64x32xf32, #tpu.memory_space<vmem>>) attributes {dimension_semantics = [#tpu.dimension_semantics<parallel>], iteration_bounds = array<i64: 2>, scalar_prefetch = 0 : i64, scratch_operands = 0 : i64, tpu.core_type = #tpu.core_type<tc>, window_params = [{transform_indices = @transform_0, window_bounds = array<i64: 2, 64, 32>}, {pipeline_mode = #tpu.pipeline_mode<synchronous>, transform_indices = @transform_1, window_bounds = array<i64: 1, 32>}, {pipeline_mode = #tpu.pipeline_mode<synchronous>, transform_indices = @transform_2, window_bounds = array<i64: 1, 32>}, {pipeline_mode = #tpu.pipeline_mode<synchronous>, transform_indices = @transform_3, window_bounds = array<i64: 32, 96>}, {pipeline_mode = #tpu.pipeline_mode<synchronous>, transform_indices = @transform_4, window_bounds = array<i64: 32, 32>}, {pipeline_mode = #tpu.pipeline_mode<synchronous>, transform_indices = @transform_5, window_bounds = array<i64: 1, 32>}, {pipeline_mode = #tpu.pipeline_mode<synchronous>, transform_indices = @transform_6, window_bounds = array<i64: 1, 32>}, {pipeline_mode = #tpu.pipeline_mode<synchronous>, transform_indices = @transform_7, window_bounds = array<i64: 1, 32>}, {pipeline_mode = #tpu.pipeline_mode<synchronous>, transform_indices = @transform_8, window_bounds = array<i64: 32, 128>}, {pipeline_mode = #tpu.pipeline_mode<synchronous>, transform_indices = @transform_9, window_bounds = array<i64: 1, 128>}, {pipeline_mode = #tpu.pipeline_mode<synchronous>, transform_indices = @transform_10, window_bounds = array<i64: 3, 3, 128>}, {pipeline_mode = #tpu.pipeline_mode<synchronous>, transform_indices = @transform_11, window_bounds = array<i64: 1, 128>}, {pipeline_mode = #tpu.pipeline_mode<synchronous>, transform_indices = @transform_12, window_bounds = array<i64: 128, 32>}, {pipeline_mode = #tpu.pipeline_mode<synchronous>, transform_indices = @transform_13, window_bounds = array<i64: 1, 32>}, {transform_indices = @transform_14, window_bounds = array<i64: 2, 64, 32>}]} {
    %c0 = arith.constant 0 : index
    %c0_0 = arith.constant 0 : index
    %c0_1 = arith.constant 0 : index
    %0 = vector.load %arg1[%c0, %c0_0, %c0_1] : memref<2x64x32xf32, #tpu.memory_space<vmem>>, vector<2x64x32xf32>
    %1 = vector.shape_cast %0 : vector<2x64x32xf32> to vector<128x32xf32>
    %c0_2 = arith.constant 0 : index
    %c0_3 = arith.constant 0 : index
    %2 = vector.load %arg2[%c0_2, %c0_3] : memref<1x32xf32, #tpu.memory_space<vmem>>, vector<1x32xf32>
    %3 = vector.shape_cast %2 : vector<1x32xf32> to vector<32xf32>
    %c0_4 = arith.constant 0 : index
    %c0_5 = arith.constant 0 : index
    %4 = vector.load %arg3[%c0_4, %c0_5] : memref<1x32xf32, #tpu.memory_space<vmem>>, vector<1x32xf32>
    %5 = vector.shape_cast %4 : vector<1x32xf32> to vector<32xf32>
    %cst = arith.constant dense<0.000000e+00> : vector<128xf32>
    %6 = vector.multi_reduction <add>, %1, %cst [1] : vector<128x32xf32> to vector<128xf32>
    %7 = vector.shape_cast %6 : vector<128xf32> to vector<128x1xf32>
    %cst_6 = arith.constant 3.200000e+01 : f32
    %8 = vector.broadcast %cst_6 : f32 to vector<128x1xf32>
    %9 = arith.divf %7, %8 : vector<128x1xf32>
    %10 = vector.broadcast %9 : vector<128x1xf32> to vector<128x32xf32>
    %11 = arith.subf %1, %10 : vector<128x32xf32>
    %12 = arith.mulf %11, %11 : vector<128x32xf32>
    %cst_7 = arith.constant dense<0.000000e+00> : vector<128xf32>
    %13 = vector.multi_reduction <add>, %12, %cst_7 [1] : vector<128x32xf32> to vector<128xf32>
    %14 = vector.shape_cast %13 : vector<128xf32> to vector<128x1xf32>
    %cst_8 = arith.constant 3.200000e+01 : f32
    %15 = vector.broadcast %cst_8 : f32 to vector<128x1xf32>
    %16 = arith.divf %14, %15 : vector<128x1xf32>
    %cst_9 = arith.constant 9.99999974E-6 : f32
    %17 = vector.broadcast %cst_9 : f32 to vector<128x1xf32>
    %18 = arith.addf %16, %17 : vector<128x1xf32>
    %19 = math.rsqrt %18 : vector<128x1xf32>
    %20 = vector.broadcast %19 : vector<128x1xf32> to vector<128x32xf32>
    %21 = arith.mulf %11, %20 : vector<128x32xf32>
    %22 = vector.shape_cast %3 : vector<32xf32> to vector<1x32xf32>
    %23 = vector.broadcast %22 : vector<1x32xf32> to vector<128x32xf32>
    %24 = arith.mulf %21, %23 : vector<128x32xf32>
    %25 = vector.shape_cast %5 : vector<32xf32> to vector<1x32xf32>
    %26 = vector.broadcast %25 : vector<1x32xf32> to vector<128x32xf32>
    %27 = arith.addf %24, %26 : vector<128x32xf32>
    %28 = arith.truncf %27 : vector<128x32xf32> to vector<128x32xbf16>
    %c0_10 = arith.constant 0 : index
    %c0_11 = arith.constant 0 : index
    %29 = vector.load %arg4[%c0_10, %c0_11] : memref<32x96xbf16, #tpu.memory_space<vmem>>, vector<32x96xbf16>
    %cst_12 = arith.constant dense<0.000000e+00> : vector<128x96xf32>
    %30 = tpu.matmul %28, %29, %cst_12 {dimension_numbers = #tpu.dot_dimension_numbers<[1], [0], [0], [1], [0, 0, 1, 1], [], []>} : vector<128x32xbf16>, vector<32x96xbf16>, vector<128x96xf32> -> vector<128x96xf32>
    %31 = vector.extract_strided_slice %30 {offsets = [0, 0], sizes = [128, 8], strides = [1, 1]} : vector<128x96xf32> to vector<128x8xf32>
    %32 = vector.shape_cast %31 : vector<128x8xf32> to vector<2x64x8xf32>
    %33 = arith.truncf %32 : vector<2x64x8xf32> to vector<2x64x8xbf16>
    %34 = vector.extract_strided_slice %30 {offsets = [0, 32], sizes = [128, 8], strides = [1, 1]} : vector<128x96xf32> to vector<128x8xf32>
    %35 = vector.shape_cast %34 : vector<128x8xf32> to vector<2x64x8xf32>
    %36 = arith.truncf %35 : vector<2x64x8xf32> to vector<2x64x8xbf16>
    %37 = vector.extract_strided_slice %30 {offsets = [0, 64], sizes = [128, 8], strides = [1, 1]} : vector<128x96xf32> to vector<128x8xf32>
    %38 = vector.shape_cast %37 : vector<128x8xf32> to vector<2x64x8xf32>
    %39 = arith.truncf %38 : vector<2x64x8xf32> to vector<2x64x8xbf16>
    "tpu.trace_start"() <{level = 10 : i32, message = "bnd,bmd->bnm"}> : () -> ()
    %cst_13 = arith.constant dense<0.000000e+00> : vector<2x64x64xf32>
    %40 = tpu.matmul %33, %36, %cst_13 {dimension_numbers = #tpu.dot_dimension_numbers<[2], [2], [1], [1], [0, 0, 0, 1, 1, 1], [0], [0]>} : vector<2x64x8xbf16>, vector<2x64x8xbf16>, vector<2x64x64xf32> -> vector<2x64x64xf32>
    "tpu.trace_stop"() : () -> ()
    %cst_14 = arith.constant dense<0xFF800000> : vector<2x64xf32>
    %41 = vector.multi_reduction <maximumf>, %40, %cst_14 [2] : vector<2x64x64xf32> to vector<2x64xf32>
    %42 = vector.shape_cast %41 : vector<2x64xf32> to vector<2x64x1xf32>
    %43 = vector.broadcast %42 : vector<2x64x1xf32> to vector<2x64x64xf32>
    %44 = arith.subf %40, %43 : vector<2x64x64xf32>
    %45 = math.exp %44 : vector<2x64x64xf32>
    %cst_15 = arith.constant dense<0.000000e+00> : vector<2x64xf32>
    %46 = vector.multi_reduction <add>, %45, %cst_15 [2] : vector<2x64x64xf32> to vector<2x64xf32>
    %47 = vector.shape_cast %46 : vector<2x64xf32> to vector<2x64x1xf32>
    %cst_16 = arith.constant 1.000000e+00 : f32
    %48 = vector.broadcast %cst_16 : f32 to vector<2x64x1xf32>
    %49 = arith.divf %48, %47 : vector<2x64x1xf32>
    %50 = arith.truncf %45 : vector<2x64x64xf32> to vector<2x64x64xbf16>
    "tpu.trace_start"() <{level = 10 : i32, message = "bnm,bmd->bnd"}> : () -> ()
    %cst_17 = arith.constant dense<0.000000e+00> : vector<2x64x8xf32>
    %51 = tpu.matmul %50, %39, %cst_17 {dimension_numbers = #tpu.dot_dimension_numbers<[2], [1], [1], [2], [0, 0, 0, 1, 1, 2], [0], [0]>} : vector<2x64x64xbf16>, vector<2x64x8xbf16>, vector<2x64x8xf32> -> vector<2x64x8xf32>
    "tpu.trace_stop"() : () -> ()
    %52 = vector.broadcast %49 : vector<2x64x1xf32> to vector<2x64x8xf32>
    %53 = arith.mulf %51, %52 : vector<2x64x8xf32>
    %54 = vector.extract_strided_slice %30 {offsets = [0, 8], sizes = [128, 8], strides = [1, 1]} : vector<128x96xf32> to vector<128x8xf32>
    %55 = vector.shape_cast %54 : vector<128x8xf32> to vector<2x64x8xf32>
    %56 = arith.truncf %55 : vector<2x64x8xf32> to vector<2x64x8xbf16>
    %57 = vector.extract_strided_slice %30 {offsets = [0, 40], sizes = [128, 8], strides = [1, 1]} : vector<128x96xf32> to vector<128x8xf32>
    %58 = vector.shape_cast %57 : vector<128x8xf32> to vector<2x64x8xf32>
    %59 = arith.truncf %58 : vector<2x64x8xf32> to vector<2x64x8xbf16>
    %60 = vector.extract_strided_slice %30 {offsets = [0, 72], sizes = [128, 8], strides = [1, 1]} : vector<128x96xf32> to vector<128x8xf32>
    %61 = vector.shape_cast %60 : vector<128x8xf32> to vector<2x64x8xf32>
    %62 = arith.truncf %61 : vector<2x64x8xf32> to vector<2x64x8xbf16>
    "tpu.trace_start"() <{level = 10 : i32, message = "bnd,bmd->bnm"}> : () -> ()
    %cst_18 = arith.constant dense<0.000000e+00> : vector<2x64x64xf32>
    %63 = tpu.matmul %56, %59, %cst_18 {dimension_numbers = #tpu.dot_dimension_numbers<[2], [2], [1], [1], [0, 0, 0, 1, 1, 1], [0], [0]>} : vector<2x64x8xbf16>, vector<2x64x8xbf16>, vector<2x64x64xf32> -> vector<2x64x64xf32>
    "tpu.trace_stop"() : () -> ()
    %cst_19 = arith.constant dense<0xFF800000> : vector<2x64xf32>
    %64 = vector.multi_reduction <maximumf>, %63, %cst_19 [2] : vector<2x64x64xf32> to vector<2x64xf32>
    %65 = vector.shape_cast %64 : vector<2x64xf32> to vector<2x64x1xf32>
    %66 = vector.broadcast %65 : vector<2x64x1xf32> to vector<2x64x64xf32>
    %67 = arith.subf %63, %66 : vector<2x64x64xf32>
    %68 = math.exp %67 : vector<2x64x64xf32>
    %cst_20 = arith.constant dense<0.000000e+00> : vector<2x64xf32>
    %69 = vector.multi_reduction <add>, %68, %cst_20 [2] : vector<2x64x64xf32> to vector<2x64xf32>
    %70 = vector.shape_cast %69 : vector<2x64xf32> to vector<2x64x1xf32>
    %cst_21 = arith.constant 1.000000e+00 : f32
    %71 = vector.broadcast %cst_21 : f32 to vector<2x64x1xf32>
    %72 = arith.divf %71, %70 : vector<2x64x1xf32>
    %73 = arith.truncf %68 : vector<2x64x64xf32> to vector<2x64x64xbf16>
    "tpu.trace_start"() <{level = 10 : i32, message = "bnm,bmd->bnd"}> : () -> ()
    %cst_22 = arith.constant dense<0.000000e+00> : vector<2x64x8xf32>
    %74 = tpu.matmul %73, %62, %cst_22 {dimension_numbers = #tpu.dot_dimension_numbers<[2], [1], [1], [2], [0, 0, 0, 1, 1, 2], [0], [0]>} : vector<2x64x64xbf16>, vector<2x64x8xbf16>, vector<2x64x8xf32> -> vector<2x64x8xf32>
    "tpu.trace_stop"() : () -> ()
    %75 = vector.broadcast %72 : vector<2x64x1xf32> to vector<2x64x8xf32>
    %76 = arith.mulf %74, %75 : vector<2x64x8xf32>
    %77 = vector.extract_strided_slice %30 {offsets = [0, 16], sizes = [128, 8], strides = [1, 1]} : vector<128x96xf32> to vector<128x8xf32>
    %78 = vector.shape_cast %77 : vector<128x8xf32> to vector<2x64x8xf32>
    %79 = arith.truncf %78 : vector<2x64x8xf32> to vector<2x64x8xbf16>
    %80 = vector.extract_strided_slice %30 {offsets = [0, 48], sizes = [128, 8], strides = [1, 1]} : vector<128x96xf32> to vector<128x8xf32>
    %81 = vector.shape_cast %80 : vector<128x8xf32> to vector<2x64x8xf32>
    %82 = arith.truncf %81 : vector<2x64x8xf32> to vector<2x64x8xbf16>
    %83 = vector.extract_strided_slice %30 {offsets = [0, 80], sizes = [128, 8], strides = [1, 1]} : vector<128x96xf32> to vector<128x8xf32>
    %84 = vector.shape_cast %83 : vector<128x8xf32> to vector<2x64x8xf32>
    %85 = arith.truncf %84 : vector<2x64x8xf32> to vector<2x64x8xbf16>
    "tpu.trace_start"() <{level = 10 : i32, message = "bnd,bmd->bnm"}> : () -> ()
    %cst_23 = arith.constant dense<0.000000e+00> : vector<2x64x64xf32>
    %86 = tpu.matmul %79, %82, %cst_23 {dimension_numbers = #tpu.dot_dimension_numbers<[2], [2], [1], [1], [0, 0, 0, 1, 1, 1], [0], [0]>} : vector<2x64x8xbf16>, vector<2x64x8xbf16>, vector<2x64x64xf32> -> vector<2x64x64xf32>
    "tpu.trace_stop"() : () -> ()
    %cst_24 = arith.constant dense<0xFF800000> : vector<2x64xf32>
    %87 = vector.multi_reduction <maximumf>, %86, %cst_24 [2] : vector<2x64x64xf32> to vector<2x64xf32>
    %88 = vector.shape_cast %87 : vector<2x64xf32> to vector<2x64x1xf32>
    %89 = vector.broadcast %88 : vector<2x64x1xf32> to vector<2x64x64xf32>
    %90 = arith.subf %86, %89 : vector<2x64x64xf32>
    %91 = math.exp %90 : vector<2x64x64xf32>
    %cst_25 = arith.constant dense<0.000000e+00> : vector<2x64xf32>
    %92 = vector.multi_reduction <add>, %91, %cst_25 [2] : vector<2x64x64xf32> to vector<2x64xf32>
    %93 = vector.shape_cast %92 : vector<2x64xf32> to vector<2x64x1xf32>
    %cst_26 = arith.constant 1.000000e+00 : f32
    %94 = vector.broadcast %cst_26 : f32 to vector<2x64x1xf32>
    %95 = arith.divf %94, %93 : vector<2x64x1xf32>
    %96 = arith.truncf %91 : vector<2x64x64xf32> to vector<2x64x64xbf16>
    "tpu.trace_start"() <{level = 10 : i32, message = "bnm,bmd->bnd"}> : () -> ()
    %cst_27 = arith.constant dense<0.000000e+00> : vector<2x64x8xf32>
    %97 = tpu.matmul %96, %85, %cst_27 {dimension_numbers = #tpu.dot_dimension_numbers<[2], [1], [1], [2], [0, 0, 0, 1, 1, 2], [0], [0]>} : vector<2x64x64xbf16>, vector<2x64x8xbf16>, vector<2x64x8xf32> -> vector<2x64x8xf32>
    "tpu.trace_stop"() : () -> ()
    %98 = vector.broadcast %95 : vector<2x64x1xf32> to vector<2x64x8xf32>
    %99 = arith.mulf %97, %98 : vector<2x64x8xf32>
    %100 = vector.extract_strided_slice %30 {offsets = [0, 24], sizes = [128, 8], strides = [1, 1]} : vector<128x96xf32> to vector<128x8xf32>
    %101 = vector.shape_cast %100 : vector<128x8xf32> to vector<2x64x8xf32>
    %102 = arith.truncf %101 : vector<2x64x8xf32> to vector<2x64x8xbf16>
    %103 = vector.extract_strided_slice %30 {offsets = [0, 56], sizes = [128, 8], strides = [1, 1]} : vector<128x96xf32> to vector<128x8xf32>
    %104 = vector.shape_cast %103 : vector<128x8xf32> to vector<2x64x8xf32>
    %105 = arith.truncf %104 : vector<2x64x8xf32> to vector<2x64x8xbf16>
    %106 = vector.extract_strided_slice %30 {offsets = [0, 88], sizes = [128, 8], strides = [1, 1]} : vector<128x96xf32> to vector<128x8xf32>
    %107 = vector.shape_cast %106 : vector<128x8xf32> to vector<2x64x8xf32>
    %108 = arith.truncf %107 : vector<2x64x8xf32> to vector<2x64x8xbf16>
    "tpu.trace_start"() <{level = 10 : i32, message = "bnd,bmd->bnm"}> : () -> ()
    %cst_28 = arith.constant dense<0.000000e+00> : vector<2x64x64xf32>
    %109 = tpu.matmul %102, %105, %cst_28 {dimension_numbers = #tpu.dot_dimension_numbers<[2], [2], [1], [1], [0, 0, 0, 1, 1, 1], [0], [0]>} : vector<2x64x8xbf16>, vector<2x64x8xbf16>, vector<2x64x64xf32> -> vector<2x64x64xf32>
    "tpu.trace_stop"() : () -> ()
    %cst_29 = arith.constant dense<0xFF800000> : vector<2x64xf32>
    %110 = vector.multi_reduction <maximumf>, %109, %cst_29 [2] : vector<2x64x64xf32> to vector<2x64xf32>
    %111 = vector.shape_cast %110 : vector<2x64xf32> to vector<2x64x1xf32>
    %112 = vector.broadcast %111 : vector<2x64x1xf32> to vector<2x64x64xf32>
    %113 = arith.subf %109, %112 : vector<2x64x64xf32>
    %114 = math.exp %113 : vector<2x64x64xf32>
    %cst_30 = arith.constant dense<0.000000e+00> : vector<2x64xf32>
    %115 = vector.multi_reduction <add>, %114, %cst_30 [2] : vector<2x64x64xf32> to vector<2x64xf32>
    %116 = vector.shape_cast %115 : vector<2x64xf32> to vector<2x64x1xf32>
    %cst_31 = arith.constant 1.000000e+00 : f32
    %117 = vector.broadcast %cst_31 : f32 to vector<2x64x1xf32>
    %118 = arith.divf %117, %116 : vector<2x64x1xf32>
    %119 = arith.truncf %114 : vector<2x64x64xf32> to vector<2x64x64xbf16>
    "tpu.trace_start"() <{level = 10 : i32, message = "bnm,bmd->bnd"}> : () -> ()
    %cst_32 = arith.constant dense<0.000000e+00> : vector<2x64x8xf32>
    %120 = tpu.matmul %119, %108, %cst_32 {dimension_numbers = #tpu.dot_dimension_numbers<[2], [1], [1], [2], [0, 0, 0, 1, 1, 2], [0], [0]>} : vector<2x64x64xbf16>, vector<2x64x8xbf16>, vector<2x64x8xf32> -> vector<2x64x8xf32>
    "tpu.trace_stop"() : () -> ()
    %121 = vector.broadcast %118 : vector<2x64x1xf32> to vector<2x64x8xf32>
    %122 = arith.mulf %120, %121 : vector<2x64x8xf32>
    %123 = tpu.concatenate %53, %76, %99, %122 in 2 : vector<2x64x8xf32>, vector<2x64x8xf32>, vector<2x64x8xf32>, vector<2x64x8xf32> -> vector<2x64x32xf32>
    %124 = vector.shape_cast %123 : vector<2x64x32xf32> to vector<128x32xf32>
    %125 = arith.truncf %124 : vector<128x32xf32> to vector<128x32xbf16>
    %c0_33 = arith.constant 0 : index
    %c0_34 = arith.constant 0 : index
    %126 = vector.load %arg5[%c0_33, %c0_34] : memref<32x32xbf16, #tpu.memory_space<vmem>>, vector<32x32xbf16>
    %cst_35 = arith.constant dense<0.000000e+00> : vector<128x32xf32>
    %127 = tpu.matmul %125, %126, %cst_35 {dimension_numbers = #tpu.dot_dimension_numbers<[1], [0], [0], [1], [0, 0, 1, 1], [], []>} : vector<128x32xbf16>, vector<32x32xbf16>, vector<128x32xf32> -> vector<128x32xf32>
    %c0_36 = arith.constant 0 : index
    %c0_37 = arith.constant 0 : index
    %128 = vector.load %arg6[%c0_36, %c0_37] : memref<1x32xf32, #tpu.memory_space<vmem>>, vector<1x32xf32>
    %129 = vector.shape_cast %128 : vector<1x32xf32> to vector<32xf32>
    %130 = vector.shape_cast %129 : vector<32xf32> to vector<1x32xf32>
    %131 = vector.broadcast %130 : vector<1x32xf32> to vector<128x32xf32>
    %132 = arith.addf %127, %131 : vector<128x32xf32>
    %133 = arith.addf %1, %132 : vector<128x32xf32>
    %c0_38 = arith.constant 0 : index
    %c0_39 = arith.constant 0 : index
    %134 = vector.load %arg7[%c0_38, %c0_39] : memref<1x32xf32, #tpu.memory_space<vmem>>, vector<1x32xf32>
    %135 = vector.shape_cast %134 : vector<1x32xf32> to vector<32xf32>
    %c0_40 = arith.constant 0 : index
    %c0_41 = arith.constant 0 : index
    %136 = vector.load %arg8[%c0_40, %c0_41] : memref<1x32xf32, #tpu.memory_space<vmem>>, vector<1x32xf32>
    %137 = vector.shape_cast %136 : vector<1x32xf32> to vector<32xf32>
    %cst_42 = arith.constant dense<0.000000e+00> : vector<128xf32>
    %138 = vector.multi_reduction <add>, %133, %cst_42 [1] : vector<128x32xf32> to vector<128xf32>
    %139 = vector.shape_cast %138 : vector<128xf32> to vector<128x1xf32>
    %cst_43 = arith.constant 3.200000e+01 : f32
    %140 = vector.broadcast %cst_43 : f32 to vector<128x1xf32>
    %141 = arith.divf %139, %140 : vector<128x1xf32>
    %142 = vector.broadcast %141 : vector<128x1xf32> to vector<128x32xf32>
    %143 = arith.subf %133, %142 : vector<128x32xf32>
    %144 = arith.mulf %143, %143 : vector<128x32xf32>
    %cst_44 = arith.constant dense<0.000000e+00> : vector<128xf32>
    %145 = vector.multi_reduction <add>, %144, %cst_44 [1] : vector<128x32xf32> to vector<128xf32>
    %146 = vector.shape_cast %145 : vector<128xf32> to vector<128x1xf32>
    %cst_45 = arith.constant 3.200000e+01 : f32
    %147 = vector.broadcast %cst_45 : f32 to vector<128x1xf32>
    %148 = arith.divf %146, %147 : vector<128x1xf32>
    %cst_46 = arith.constant 9.99999974E-6 : f32
    %149 = vector.broadcast %cst_46 : f32 to vector<128x1xf32>
    %150 = arith.addf %148, %149 : vector<128x1xf32>
    %151 = math.rsqrt %150 : vector<128x1xf32>
    %152 = vector.broadcast %151 : vector<128x1xf32> to vector<128x32xf32>
    %153 = arith.mulf %143, %152 : vector<128x32xf32>
    %154 = vector.shape_cast %135 : vector<32xf32> to vector<1x32xf32>
    %155 = vector.broadcast %154 : vector<1x32xf32> to vector<128x32xf32>
    %156 = arith.mulf %153, %155 : vector<128x32xf32>
    %157 = vector.shape_cast %137 : vector<32xf32> to vector<1x32xf32>
    %158 = vector.broadcast %157 : vector<1x32xf32> to vector<128x32xf32>
    %159 = arith.addf %156, %158 : vector<128x32xf32>
    %160 = arith.truncf %159 : vector<128x32xf32> to vector<128x32xbf16>
    %c0_47 = arith.constant 0 : index
    %c0_48 = arith.constant 0 : index
    %161 = vector.load %arg9[%c0_47, %c0_48] : memref<32x128xbf16, #tpu.memory_space<vmem>>, vector<32x128xbf16>
    %cst_49 = arith.constant dense<0.000000e+00> : vector<128x128xf32>
    %162 = tpu.matmul %160, %161, %cst_49 {dimension_numbers = #tpu.dot_dimension_numbers<[1], [0], [0], [1], [0, 0, 1, 1], [], []>} : vector<128x32xbf16>, vector<32x128xbf16>, vector<128x128xf32> -> vector<128x128xf32>
    %c0_50 = arith.constant 0 : index
    %c0_51 = arith.constant 0 : index
    %163 = vector.load %arg10[%c0_50, %c0_51] : memref<1x128xf32, #tpu.memory_space<vmem>>, vector<1x128xf32>
    %164 = vector.shape_cast %163 : vector<1x128xf32> to vector<128xf32>
    %165 = vector.shape_cast %164 : vector<128xf32> to vector<1x128xf32>
    %166 = vector.broadcast %165 : vector<1x128xf32> to vector<128x128xf32>
    %167 = arith.addf %162, %166 : vector<128x128xf32>
    %168 = tpu.iota {dimensions = array<i32: 0>} : vector<128x1xi32>
    %c64_i32 = arith.constant 64 : i32
    %c0_i32 = arith.constant 0 : i32
    %169 = arith.cmpi eq, %c64_i32, %c0_i32 : i32
    %c1_i32 = arith.constant 1 : i32
    %170 = arith.select %169, %c1_i32, %c64_i32 : i32
    %171 = vector.broadcast %170 : i32 to vector<128x1xi32>
    %172 = arith.remsi %168, %171 : vector<128x1xi32>
    %c0_i32_52 = arith.constant 0 : i32
    %173 = vector.broadcast %c0_i32_52 : i32 to vector<128x1xi32>
    %174 = arith.cmpi ne, %172, %173 : vector<128x1xi32>
    %c0_i32_53 = arith.constant 0 : i32
    %175 = vector.broadcast %c0_i32_53 : i32 to vector<128x1xi32>
    %176 = arith.cmpi slt, %172, %175 : vector<128x1xi32>
    %c0_i32_54 = arith.constant 0 : i32
    %177 = arith.cmpi slt, %170, %c0_i32_54 : i32
    %178 = vector.broadcast %177 : i1 to vector<128x1xi1>
    %179 = vector.broadcast %178 : vector<128x1xi1> to vector<128x1xi1>
    %180 = arith.xori %176, %179 : vector<128x1xi1>
    %181 = arith.andi %180, %174 : vector<128x1xi1>
    %182 = vector.broadcast %170 : i32 to vector<128x1xi32>
    %183 = arith.addi %172, %182 : vector<128x1xi32>
    %184 = arith.select %181, %183, %172 : vector<128x1xi1>, vector<128x1xi32>
    %c8_i32 = arith.constant 8 : i32
    %c0_i32_55 = arith.constant 0 : i32
    %185 = arith.cmpi eq, %c8_i32, %c0_i32_55 : i32
    %c1_i32_56 = arith.constant 1 : i32
    %186 = arith.select %185, %c1_i32_56, %c8_i32 : i32
    %187 = vector.broadcast %186 : i32 to vector<128x1xi32>
    %188 = arith.remsi %168, %187 : vector<128x1xi32>
    %c0_i32_57 = arith.constant 0 : i32
    %189 = vector.broadcast %c0_i32_57 : i32 to vector<128x1xi32>
    %190 = arith.cmpi ne, %188, %189 : vector<128x1xi32>
    %c0_i32_58 = arith.constant 0 : i32
    %191 = vector.broadcast %c0_i32_58 : i32 to vector<128x1xi32>
    %192 = arith.cmpi slt, %188, %191 : vector<128x1xi32>
    %c0_i32_59 = arith.constant 0 : i32
    %193 = arith.cmpi slt, %186, %c0_i32_59 : i32
    %194 = vector.broadcast %193 : i1 to vector<128x1xi1>
    %195 = vector.broadcast %194 : vector<128x1xi1> to vector<128x1xi1>
    %196 = arith.xori %192, %195 : vector<128x1xi1>
    %197 = arith.andi %196, %190 : vector<128x1xi1>
    %198 = vector.broadcast %186 : i32 to vector<128x1xi32>
    %199 = arith.addi %188, %198 : vector<128x1xi32>
    %200 = arith.select %197, %199, %188 : vector<128x1xi1>, vector<128x1xi32>
    %cst_60 = arith.constant 1.000000e+00 : f32
    %201 = vector.broadcast %cst_60 : f32 to vector<128x1xf32>
    %c1_i32_61 = arith.constant 1 : i32
    %202 = vector.broadcast %c1_i32_61 : i32 to vector<128x1xi32>
    %203 = arith.cmpi sge, %200, %202 : vector<128x1xi32>
    %204 = arith.extui %203 : vector<128x1xi1> to vector<128x1xi32>
    %205 = arith.sitofp %204 : vector<128x1xi32> to vector<128x1xf32>
    %c7_i32 = arith.constant 7 : i32
    %206 = vector.broadcast %c7_i32 : i32 to vector<128x1xi32>
    %207 = arith.cmpi slt, %200, %206 : vector<128x1xi32>
    %208 = arith.extui %207 : vector<128x1xi1> to vector<128x1xi32>
    %209 = arith.sitofp %208 : vector<128x1xi32> to vector<128x1xf32>
    %c-8_i32 = arith.constant -8 : i32
    %210 = vector.broadcast %c-8_i32 : i32 to vector<128x1xi32>
    %211 = arith.addi %184, %210 : vector<128x1xi32>
    %c0_i32_62 = arith.constant 0 : i32
    %212 = vector.broadcast %c0_i32_62 : i32 to vector<128x1xi32>
    %213 = arith.cmpi sge, %211, %212 : vector<128x1xi32>
    %c-8_i32_63 = arith.constant -8 : i32
    %214 = vector.broadcast %c-8_i32_63 : i32 to vector<128x1xi32>
    %215 = arith.addi %184, %214 : vector<128x1xi32>
    %c64_i32_64 = arith.constant 64 : i32
    %216 = vector.broadcast %c64_i32_64 : i32 to vector<128x1xi32>
    %217 = arith.cmpi slt, %215, %216 : vector<128x1xi32>
    %218 = arith.andi %213, %217 : vector<128x1xi1>
    %219 = arith.extui %218 : vector<128x1xi1> to vector<128x1xi32>
    %220 = arith.sitofp %219 : vector<128x1xi32> to vector<128x1xf32>
    %c0_i32_65 = arith.constant 0 : i32
    %221 = vector.broadcast %c0_i32_65 : i32 to vector<128x1xi32>
    %222 = arith.addi %184, %221 : vector<128x1xi32>
    %c0_i32_66 = arith.constant 0 : i32
    %223 = vector.broadcast %c0_i32_66 : i32 to vector<128x1xi32>
    %224 = arith.cmpi sge, %222, %223 : vector<128x1xi32>
    %c0_i32_67 = arith.constant 0 : i32
    %225 = vector.broadcast %c0_i32_67 : i32 to vector<128x1xi32>
    %226 = arith.addi %184, %225 : vector<128x1xi32>
    %c64_i32_68 = arith.constant 64 : i32
    %227 = vector.broadcast %c64_i32_68 : i32 to vector<128x1xi32>
    %228 = arith.cmpi slt, %226, %227 : vector<128x1xi32>
    %229 = arith.andi %224, %228 : vector<128x1xi1>
    %230 = arith.extui %229 : vector<128x1xi1> to vector<128x1xi32>
    %231 = arith.sitofp %230 : vector<128x1xi32> to vector<128x1xf32>
    %c8_i32_69 = arith.constant 8 : i32
    %232 = vector.broadcast %c8_i32_69 : i32 to vector<128x1xi32>
    %233 = arith.addi %184, %232 : vector<128x1xi32>
    %c0_i32_70 = arith.constant 0 : i32
    %234 = vector.broadcast %c0_i32_70 : i32 to vector<128x1xi32>
    %235 = arith.cmpi sge, %233, %234 : vector<128x1xi32>
    %c8_i32_71 = arith.constant 8 : i32
    %236 = vector.broadcast %c8_i32_71 : i32 to vector<128x1xi32>
    %237 = arith.addi %184, %236 : vector<128x1xi32>
    %c64_i32_72 = arith.constant 64 : i32
    %238 = vector.broadcast %c64_i32_72 : i32 to vector<128x1xi32>
    %239 = arith.cmpi slt, %237, %238 : vector<128x1xi32>
    %240 = arith.andi %235, %239 : vector<128x1xi1>
    %241 = arith.extui %240 : vector<128x1xi1> to vector<128x1xi32>
    %242 = arith.sitofp %241 : vector<128x1xi32> to vector<128x1xf32>
    %c0_73 = arith.constant 0 : index
    %c0_74 = arith.constant 0 : index
    %c0_75 = arith.constant 0 : index
    %243 = vector.load %arg11[%c0_73, %c0_74, %c0_75] : memref<3x3x128xf32, #tpu.memory_space<vmem>>, vector<3x3x128xf32>
    %cst_76 = arith.constant 0.000000e+00 : f32
    %244 = vector.broadcast %cst_76 : f32 to vector<128x128xf32>
    %245 = vector.extract_strided_slice %167 {offsets = [119, 0], sizes = [9, 128], strides = [1, 1]} : vector<128x128xf32> to vector<9x128xf32>
    %246 = vector.extract_strided_slice %167 {offsets = [0, 0], sizes = [119, 128], strides = [1, 1]} : vector<128x128xf32> to vector<119x128xf32>
    %247 = tpu.concatenate %245, %246 in 0 : vector<9x128xf32>, vector<119x128xf32> -> vector<128x128xf32>
    %248 = arith.mulf %220, %205 : vector<128x1xf32>
    %249 = vector.broadcast %248 : vector<128x1xf32> to vector<128x128xf32>
    %250 = arith.mulf %247, %249 : vector<128x128xf32>
    %251 = vector.extract_strided_slice %243 {offsets = [0, 0, 0], sizes = [1, 1, 128], strides = [1, 1, 1]} : vector<3x3x128xf32> to vector<1x1x128xf32>
    %252 = vector.shape_cast %251 : vector<1x1x128xf32> to vector<128xf32>
    %253 = vector.shape_cast %252 : vector<128xf32> to vector<1x128xf32>
    %254 = vector.broadcast %253 : vector<1x128xf32> to vector<128x128xf32>
    %255 = arith.mulf %250, %254 : vector<128x128xf32>
    %256 = arith.addf %244, %255 : vector<128x128xf32>
    %257 = vector.extract_strided_slice %167 {offsets = [120, 0], sizes = [8, 128], strides = [1, 1]} : vector<128x128xf32> to vector<8x128xf32>
    %258 = vector.extract_strided_slice %167 {offsets = [0, 0], sizes = [120, 128], strides = [1, 1]} : vector<128x128xf32> to vector<120x128xf32>
    %259 = tpu.concatenate %257, %258 in 0 : vector<8x128xf32>, vector<120x128xf32> -> vector<128x128xf32>
    %260 = arith.mulf %220, %201 : vector<128x1xf32>
    %261 = vector.broadcast %260 : vector<128x1xf32> to vector<128x128xf32>
    %262 = arith.mulf %259, %261 : vector<128x128xf32>
    %263 = vector.extract_strided_slice %243 {offsets = [0, 1, 0], sizes = [1, 1, 128], strides = [1, 1, 1]} : vector<3x3x128xf32> to vector<1x1x128xf32>
    %264 = vector.shape_cast %263 : vector<1x1x128xf32> to vector<128xf32>
    %265 = vector.shape_cast %264 : vector<128xf32> to vector<1x128xf32>
    %266 = vector.broadcast %265 : vector<1x128xf32> to vector<128x128xf32>
    %267 = arith.mulf %262, %266 : vector<128x128xf32>
    %268 = arith.addf %256, %267 : vector<128x128xf32>
    %269 = vector.extract_strided_slice %167 {offsets = [121, 0], sizes = [7, 128], strides = [1, 1]} : vector<128x128xf32> to vector<7x128xf32>
    %270 = vector.extract_strided_slice %167 {offsets = [0, 0], sizes = [121, 128], strides = [1, 1]} : vector<128x128xf32> to vector<121x128xf32>
    %271 = tpu.concatenate %269, %270 in 0 : vector<7x128xf32>, vector<121x128xf32> -> vector<128x128xf32>
    %272 = arith.mulf %220, %209 : vector<128x1xf32>
    %273 = vector.broadcast %272 : vector<128x1xf32> to vector<128x128xf32>
    %274 = arith.mulf %271, %273 : vector<128x128xf32>
    %275 = vector.extract_strided_slice %243 {offsets = [0, 2, 0], sizes = [1, 1, 128], strides = [1, 1, 1]} : vector<3x3x128xf32> to vector<1x1x128xf32>
    %276 = vector.shape_cast %275 : vector<1x1x128xf32> to vector<128xf32>
    %277 = vector.shape_cast %276 : vector<128xf32> to vector<1x128xf32>
    %278 = vector.broadcast %277 : vector<1x128xf32> to vector<128x128xf32>
    %279 = arith.mulf %274, %278 : vector<128x128xf32>
    %280 = arith.addf %268, %279 : vector<128x128xf32>
    %281 = vector.extract_strided_slice %167 {offsets = [127, 0], sizes = [1, 128], strides = [1, 1]} : vector<128x128xf32> to vector<1x128xf32>
    %282 = vector.extract_strided_slice %167 {offsets = [0, 0], sizes = [127, 128], strides = [1, 1]} : vector<128x128xf32> to vector<127x128xf32>
    %283 = tpu.concatenate %281, %282 in 0 : vector<1x128xf32>, vector<127x128xf32> -> vector<128x128xf32>
    %284 = arith.mulf %231, %205 : vector<128x1xf32>
    %285 = vector.broadcast %284 : vector<128x1xf32> to vector<128x128xf32>
    %286 = arith.mulf %283, %285 : vector<128x128xf32>
    %287 = vector.extract_strided_slice %243 {offsets = [1, 0, 0], sizes = [1, 1, 128], strides = [1, 1, 1]} : vector<3x3x128xf32> to vector<1x1x128xf32>
    %288 = vector.shape_cast %287 : vector<1x1x128xf32> to vector<128xf32>
    %289 = vector.shape_cast %288 : vector<128xf32> to vector<1x128xf32>
    %290 = vector.broadcast %289 : vector<1x128xf32> to vector<128x128xf32>
    %291 = arith.mulf %286, %290 : vector<128x128xf32>
    %292 = arith.addf %280, %291 : vector<128x128xf32>
    %293 = arith.mulf %231, %201 : vector<128x1xf32>
    %294 = vector.broadcast %293 : vector<128x1xf32> to vector<128x128xf32>
    %295 = arith.mulf %167, %294 : vector<128x128xf32>
    %296 = vector.extract_strided_slice %243 {offsets = [1, 1, 0], sizes = [1, 1, 128], strides = [1, 1, 1]} : vector<3x3x128xf32> to vector<1x1x128xf32>
    %297 = vector.shape_cast %296 : vector<1x1x128xf32> to vector<128xf32>
    %298 = vector.shape_cast %297 : vector<128xf32> to vector<1x128xf32>
    %299 = vector.broadcast %298 : vector<1x128xf32> to vector<128x128xf32>
    %300 = arith.mulf %295, %299 : vector<128x128xf32>
    %301 = arith.addf %292, %300 : vector<128x128xf32>
    %302 = vector.extract_strided_slice %167 {offsets = [1, 0], sizes = [127, 128], strides = [1, 1]} : vector<128x128xf32> to vector<127x128xf32>
    %303 = vector.extract_strided_slice %167 {offsets = [0, 0], sizes = [1, 128], strides = [1, 1]} : vector<128x128xf32> to vector<1x128xf32>
    %304 = tpu.concatenate %302, %303 in 0 : vector<127x128xf32>, vector<1x128xf32> -> vector<128x128xf32>
    %305 = arith.mulf %231, %209 : vector<128x1xf32>
    %306 = vector.broadcast %305 : vector<128x1xf32> to vector<128x128xf32>
    %307 = arith.mulf %304, %306 : vector<128x128xf32>
    %308 = vector.extract_strided_slice %243 {offsets = [1, 2, 0], sizes = [1, 1, 128], strides = [1, 1, 1]} : vector<3x3x128xf32> to vector<1x1x128xf32>
    %309 = vector.shape_cast %308 : vector<1x1x128xf32> to vector<128xf32>
    %310 = vector.shape_cast %309 : vector<128xf32> to vector<1x128xf32>
    %311 = vector.broadcast %310 : vector<1x128xf32> to vector<128x128xf32>
    %312 = arith.mulf %307, %311 : vector<128x128xf32>
    %313 = arith.addf %301, %312 : vector<128x128xf32>
    %314 = vector.extract_strided_slice %167 {offsets = [7, 0], sizes = [121, 128], strides = [1, 1]} : vector<128x128xf32> to vector<121x128xf32>
    %315 = vector.extract_strided_slice %167 {offsets = [0, 0], sizes = [7, 128], strides = [1, 1]} : vector<128x128xf32> to vector<7x128xf32>
    %316 = tpu.concatenate %314, %315 in 0 : vector<121x128xf32>, vector<7x128xf32> -> vector<128x128xf32>
    %317 = arith.mulf %242, %205 : vector<128x1xf32>
    %318 = vector.broadcast %317 : vector<128x1xf32> to vector<128x128xf32>
    %319 = arith.mulf %316, %318 : vector<128x128xf32>
    %320 = vector.extract_strided_slice %243 {offsets = [2, 0, 0], sizes = [1, 1, 128], strides = [1, 1, 1]} : vector<3x3x128xf32> to vector<1x1x128xf32>
    %321 = vector.shape_cast %320 : vector<1x1x128xf32> to vector<128xf32>
    %322 = vector.shape_cast %321 : vector<128xf32> to vector<1x128xf32>
    %323 = vector.broadcast %322 : vector<1x128xf32> to vector<128x128xf32>
    %324 = arith.mulf %319, %323 : vector<128x128xf32>
    %325 = arith.addf %313, %324 : vector<128x128xf32>
    %326 = vector.extract_strided_slice %167 {offsets = [8, 0], sizes = [120, 128], strides = [1, 1]} : vector<128x128xf32> to vector<120x128xf32>
    %327 = vector.extract_strided_slice %167 {offsets = [0, 0], sizes = [8, 128], strides = [1, 1]} : vector<128x128xf32> to vector<8x128xf32>
    %328 = tpu.concatenate %326, %327 in 0 : vector<120x128xf32>, vector<8x128xf32> -> vector<128x128xf32>
    %329 = arith.mulf %242, %201 : vector<128x1xf32>
    %330 = vector.broadcast %329 : vector<128x1xf32> to vector<128x128xf32>
    %331 = arith.mulf %328, %330 : vector<128x128xf32>
    %332 = vector.extract_strided_slice %243 {offsets = [2, 1, 0], sizes = [1, 1, 128], strides = [1, 1, 1]} : vector<3x3x128xf32> to vector<1x1x128xf32>
    %333 = vector.shape_cast %332 : vector<1x1x128xf32> to vector<128xf32>
    %334 = vector.shape_cast %333 : vector<128xf32> to vector<1x128xf32>
    %335 = vector.broadcast %334 : vector<1x128xf32> to vector<128x128xf32>
    %336 = arith.mulf %331, %335 : vector<128x128xf32>
    %337 = arith.addf %325, %336 : vector<128x128xf32>
    %338 = vector.extract_strided_slice %167 {offsets = [9, 0], sizes = [119, 128], strides = [1, 1]} : vector<128x128xf32> to vector<119x128xf32>
    %339 = vector.extract_strided_slice %167 {offsets = [0, 0], sizes = [9, 128], strides = [1, 1]} : vector<128x128xf32> to vector<9x128xf32>
    %340 = tpu.concatenate %338, %339 in 0 : vector<119x128xf32>, vector<9x128xf32> -> vector<128x128xf32>
    %341 = arith.mulf %242, %209 : vector<128x1xf32>
    %342 = vector.broadcast %341 : vector<128x1xf32> to vector<128x128xf32>
    %343 = arith.mulf %340, %342 : vector<128x128xf32>
    %344 = vector.extract_strided_slice %243 {offsets = [2, 2, 0], sizes = [1, 1, 128], strides = [1, 1, 1]} : vector<3x3x128xf32> to vector<1x1x128xf32>
    %345 = vector.shape_cast %344 : vector<1x1x128xf32> to vector<128xf32>
    %346 = vector.shape_cast %345 : vector<128xf32> to vector<1x128xf32>
    %347 = vector.broadcast %346 : vector<1x128xf32> to vector<128x128xf32>
    %348 = arith.mulf %343, %347 : vector<128x128xf32>
    %349 = arith.addf %337, %348 : vector<128x128xf32>
    %c0_77 = arith.constant 0 : index
    %c0_78 = arith.constant 0 : index
    %350 = vector.load %arg12[%c0_77, %c0_78] : memref<1x128xf32, #tpu.memory_space<vmem>>, vector<1x128xf32>
    %351 = vector.shape_cast %350 : vector<1x128xf32> to vector<128xf32>
    %352 = vector.shape_cast %351 : vector<128xf32> to vector<1x128xf32>
    %353 = vector.broadcast %352 : vector<1x128xf32> to vector<128x128xf32>
    %354 = arith.addf %349, %353 : vector<128x128xf32>
    %cst_79 = arith.constant 5.000000e-01 : f32
    %355 = vector.broadcast %cst_79 : f32 to vector<128x128xf32>
    %356 = arith.mulf %355, %354 : vector<128x128xf32>
    %cst_80 = arith.constant 0.707106769 : f32
    %357 = vector.broadcast %cst_80 : f32 to vector<128x128xf32>
    %358 = arith.mulf %354, %357 : vector<128x128xf32>
    %cst_81 = arith.constant 0.000000e+00 : f32
    %359 = vector.broadcast %cst_81 : f32 to vector<128x128xf32>
    %360 = arith.cmpf olt, %358, %359 : vector<128x128xf32>
    %cst_82 = arith.constant -1.000000e+00 : f32
    %cst_83 = arith.constant 1.000000e+00 : f32
    %361 = vector.broadcast %cst_82 : f32 to vector<128x128xf32>
    %362 = vector.broadcast %cst_83 : f32 to vector<128x128xf32>
    %363 = arith.select %360, %361, %362 : vector<128x128xi1>, vector<128x128xf32>
    %364 = math.absf %358 : vector<128x128xf32>
    %cst_84 = arith.constant 0.327591091 : f32
    %365 = vector.broadcast %cst_84 : f32 to vector<128x128xf32>
    %366 = arith.mulf %365, %364 : vector<128x128xf32>
    %cst_85 = arith.constant 1.000000e+00 : f32
    %367 = vector.broadcast %cst_85 : f32 to vector<128x128xf32>
    %368 = arith.addf %367, %366 : vector<128x128xf32>
    %cst_86 = arith.constant 1.000000e+00 : f32
    %369 = vector.broadcast %cst_86 : f32 to vector<128x128xf32>
    %370 = arith.divf %369, %368 : vector<128x128xf32>
    %cst_87 = arith.constant 1.06140542 : f32
    %371 = vector.broadcast %cst_87 : f32 to vector<128x128xf32>
    %372 = arith.mulf %371, %370 : vector<128x128xf32>
    %cst_88 = arith.constant -1.45315206 : f32
    %373 = vector.broadcast %cst_88 : f32 to vector<128x128xf32>
    %374 = arith.addf %372, %373 : vector<128x128xf32>
    %375 = arith.mulf %374, %370 : vector<128x128xf32>
    %cst_89 = arith.constant 1.42141378 : f32
    %376 = vector.broadcast %cst_89 : f32 to vector<128x128xf32>
    %377 = arith.addf %375, %376 : vector<128x128xf32>
    %378 = arith.mulf %377, %370 : vector<128x128xf32>
    %cst_90 = arith.constant -0.284496725 : f32
    %379 = vector.broadcast %cst_90 : f32 to vector<128x128xf32>
    %380 = arith.addf %378, %379 : vector<128x128xf32>
    %381 = arith.mulf %380, %370 : vector<128x128xf32>
    %cst_91 = arith.constant 0.254829586 : f32
    %382 = vector.broadcast %cst_91 : f32 to vector<128x128xf32>
    %383 = arith.addf %381, %382 : vector<128x128xf32>
    %384 = arith.mulf %383, %370 : vector<128x128xf32>
    %cst_92 = arith.constant 0.000000e+00 : f32
    %385 = vector.broadcast %cst_92 : f32 to vector<128x128xf32>
    %386 = arith.subf %385, %364 : vector<128x128xf32>
    %387 = arith.mulf %386, %364 : vector<128x128xf32>
    %388 = math.exp %387 : vector<128x128xf32>
    %389 = arith.mulf %384, %388 : vector<128x128xf32>
    %cst_93 = arith.constant 1.000000e+00 : f32
    %390 = vector.broadcast %cst_93 : f32 to vector<128x128xf32>
    %391 = arith.subf %390, %389 : vector<128x128xf32>
    %392 = arith.mulf %363, %391 : vector<128x128xf32>
    %cst_94 = arith.constant 1.000000e+00 : f32
    %393 = vector.broadcast %cst_94 : f32 to vector<128x128xf32>
    %394 = arith.addf %393, %392 : vector<128x128xf32>
    %395 = arith.mulf %356, %394 : vector<128x128xf32>
    %396 = arith.truncf %395 : vector<128x128xf32> to vector<128x128xbf16>
    %c0_95 = arith.constant 0 : index
    %c0_96 = arith.constant 0 : index
    %397 = vector.load %arg13[%c0_95, %c0_96] : memref<128x32xbf16, #tpu.memory_space<vmem>>, vector<128x32xbf16>
    %cst_97 = arith.constant dense<0.000000e+00> : vector<128x32xf32>
    %398 = tpu.matmul %396, %397, %cst_97 {dimension_numbers = #tpu.dot_dimension_numbers<[1], [0], [0], [1], [0, 0, 1, 1], [], []>} : vector<128x128xbf16>, vector<128x32xbf16>, vector<128x32xf32> -> vector<128x32xf32>
    %c0_98 = arith.constant 0 : index
    %c0_99 = arith.constant 0 : index
    %399 = vector.load %arg14[%c0_98, %c0_99] : memref<1x32xf32, #tpu.memory_space<vmem>>, vector<1x32xf32>
    %400 = vector.shape_cast %399 : vector<1x32xf32> to vector<32xf32>
    %401 = vector.shape_cast %400 : vector<32xf32> to vector<1x32xf32>
    %402 = vector.broadcast %401 : vector<1x32xf32> to vector<128x32xf32>
    %403 = arith.addf %398, %402 : vector<128x32xf32>
    %404 = arith.addf %133, %403 : vector<128x32xf32>
    %405 = vector.shape_cast %404 : vector<128x32xf32> to vector<2x64x32xf32>
    %c0_100 = arith.constant 0 : index
    %c0_101 = arith.constant 0 : index
    %c0_102 = arith.constant 0 : index
    %406 = vector.load %arg15[%c0_100, %c0_101, %c0_102] : memref<2x64x32xf32, #tpu.memory_space<vmem>>, vector<2x64x32xf32>
    tpu.vector_store %arg15[%c0_100, %c0_101, %c0_102], %405 {strides = array<i32>} : memref<2x64x32xf32, #tpu.memory_space<vmem>>, vector<2x64x32xf32>,
    return
  }
  func.func @transform_0(%arg0: i32) -> (i32, i32, i32) {
    %c0_i32 = arith.constant 0 : i32
    %c0_i32_0 = arith.constant 0 : i32
    %c0_i32_1 = arith.constant 0 : i32
    return %arg0, %c0_i32, %c0_i32_0 : i32, i32, i32
  }
  func.func @transform_1(%arg0: i32) -> (i32, i32) {
    %c0_i32 = arith.constant 0 : i32
    %c0_i32_0 = arith.constant 0 : i32
    %c0_i32_1 = arith.constant 0 : i32
    return %c0_i32, %c0_i32_0 : i32, i32
  }
  func.func @transform_2(%arg0: i32) -> (i32, i32) {
    %c0_i32 = arith.constant 0 : i32
    %c0_i32_0 = arith.constant 0 : i32
    %c0_i32_1 = arith.constant 0 : i32
    return %c0_i32, %c0_i32_0 : i32, i32
  }
  func.func @transform_3(%arg0: i32) -> (i32, i32) {
    %c0_i32 = arith.constant 0 : i32
    %c0_i32_0 = arith.constant 0 : i32
    %c0_i32_1 = arith.constant 0 : i32
    return %c0_i32, %c0_i32_0 : i32, i32
  }
  func.func @transform_4(%arg0: i32) -> (i32, i32) {
    %c0_i32 = arith.constant 0 : i32
    %c0_i32_0 = arith.constant 0 : i32
    %c0_i32_1 = arith.constant 0 : i32
    return %c0_i32, %c0_i32_0 : i32, i32
  }
  func.func @transform_5(%arg0: i32) -> (i32, i32) {
    %c0_i32 = arith.constant 0 : i32
    %c0_i32_0 = arith.constant 0 : i32
    %c0_i32_1 = arith.constant 0 : i32
    return %c0_i32, %c0_i32_0 : i32, i32
  }
  func.func @transform_6(%arg0: i32) -> (i32, i32) {
    %c0_i32 = arith.constant 0 : i32
    %c0_i32_0 = arith.constant 0 : i32
    %c0_i32_1 = arith.constant 0 : i32
    return %c0_i32, %c0_i32_0 : i32, i32
  }
  func.func @transform_7(%arg0: i32) -> (i32, i32) {
    %c0_i32 = arith.constant 0 : i32
    %c0_i32_0 = arith.constant 0 : i32
    %c0_i32_1 = arith.constant 0 : i32
    return %c0_i32, %c0_i32_0 : i32, i32
  }
  func.func @transform_8(%arg0: i32) -> (i32, i32) {
    %c0_i32 = arith.constant 0 : i32
    %c0_i32_0 = arith.constant 0 : i32
    %c0_i32_1 = arith.constant 0 : i32
    return %c0_i32, %c0_i32_0 : i32, i32
  }
  func.func @transform_9(%arg0: i32) -> (i32, i32) {
    %c0_i32 = arith.constant 0 : i32
    %c0_i32_0 = arith.constant 0 : i32
    %c0_i32_1 = arith.constant 0 : i32
    return %c0_i32, %c0_i32_0 : i32, i32
  }
  func.func @transform_10(%arg0: i32) -> (i32, i32, i32) {
    %c0_i32 = arith.constant 0 : i32
    %c0_i32_0 = arith.constant 0 : i32
    %c0_i32_1 = arith.constant 0 : i32
    %c0_i32_2 = arith.constant 0 : i32
    return %c0_i32, %c0_i32_0, %c0_i32_1 : i32, i32, i32
  }
  func.func @transform_11(%arg0: i32) -> (i32, i32) {
    %c0_i32 = arith.constant 0 : i32
    %c0_i32_0 = arith.constant 0 : i32
    %c0_i32_1 = arith.constant 0 : i32
    return %c0_i32, %c0_i32_0 : i32, i32
  }
  func.func @transform_12(%arg0: i32) -> (i32, i32) {
    %c0_i32 = arith.constant 0 : i32
    %c0_i32_0 = arith.constant 0 : i32
    %c0_i32_1 = arith.constant 0 : i32
    return %c0_i32, %c0_i32_0 : i32, i32
  }
  func.func @transform_13(%arg0: i32) -> (i32, i32) {
    %c0_i32 = arith.constant 0 : i32
    %c0_i32_0 = arith.constant 0 : i32
    %c0_i32_1 = arith.constant 0 : i32
    return %c0_i32, %c0_i32_0 : i32, i32
  }
  func.func @transform_14(%arg0: i32) -> (i32, i32, i32) {
    %c0_i32 = arith.constant 0 : i32
    %c0_i32_0 = arith.constant 0 : i32
    %c0_i32_1 = arith.constant 0 : i32
    return %arg0, %c0_i32, %c0_i32_0 : i32, i32, i32
  }
}

</mosaic_0001>

<llo_original>
// kernel: tpu_custom_call.1
$region0: #{tpu_custom_call.1}
  #allocation0 [shape = 'u32[]', space=smem, size = 0x4, offset = 0x4, fixed_abs, tag = 'smem constant byte address 0x4 - core index']
  #allocation1 [shape = 'u32[72,128]{1,0:T(1,128)}', space=vmem, size = 0x9000, scoped, tag = 'internal scratch']
  %s0 = inlined_call_operand.hbm [shape: f32[8,128], index: 0, kind: input, shape index: {}]
  %s1 = inlined_call_operand.hbm [shape: f32[8,128], index: 1, kind: output, shape index: {}]
  %s2 = sld [smem:[#allocation0]]
  $region18: #{tpu_custom_call.1} parent=0
    _
  %s4 = ssub.s32 1, %s2
  %s5 = scalar_select 0, %s4, %s2
  $region1: #{tpu_custom_call.1} parent=0
    #allocation2 [shape = 'u8[4096]{0}', space=vmem, size = 0x1000, scoped, tag = 'input window, operand 0, single buffered']
    #allocation3 [shape = 's32[1]{0}', space=sflag, size = 0x4, scoped, tag = 'scoped memory for tpu_custom_call.1']
    #allocation4 [shape = 's32[1]{0}', space=sflag, size = 0x4, scoped, tag = 'scoped memory for tpu_custom_call.1']
    #allocation5 [shape = 'u8[4096]{0}', space=vmem, size = 0x1000, scoped, tag = 'output window, operand 0, single buffered']
    %6 = vsyncpa [#allocation3], 0
    %7 = vsyncpa [#allocation4], 0
    // Predicated region
    $region2: #{tpu_custom_call.1} parent=1 // pred_check
      _
    $region3: #{tpu_custom_call.1} parent=1 // pred_check_branch
      %9 = sbr.rel (0) target = $region5
    $region4: #{tpu_custom_call.1} parent=1 // pred_region
      %11 = vsyncadd [#allocation3], 0
      %s13 = sshll.u32 %s0, 4
      %s14 = int_to_ptr.hbm [resolvable:$true] %s13
      %s15 = sshll.u32 [#allocation2], 4
      %s16 = int_to_ptr.vmem [resolvable:$true] %s15
      %18 = dma.hbm_to_vmem [thread:$0]  %s14, 128, %s16, [#allocation3]
    $region5: #{tpu_custom_call.1} parent=1 // pred_fallthru
      _
    // Predicated region
    $region6: #{tpu_custom_call.1} parent=1 // pred_check
      _
    $region7: #{tpu_custom_call.1} parent=1 // pred_check_branch
      %20 = sbr.rel (0) target = $region9
    $region8: #{tpu_custom_call.1} parent=1 // pred_region
      %22 = dma.done [#allocation3], 128
    $region9: #{tpu_custom_call.1} parent=1 // pred_fallthru
      _
    %v23 = vld [vmem:[#allocation2] sm:$0xff]
    %v24 = vrot.slane %v23, 7
    %25 = vst [vmem:[#allocation5] sm:$0xff] %v24
    // Predicated region
    $region10: #{tpu_custom_call.1} parent=1 // pred_check
      _
    $region11: #{tpu_custom_call.1} parent=1 // pred_check_branch
      %27 = sbr.rel (0) target = $region13
    $region12: #{tpu_custom_call.1} parent=1 // pred_region
      %29 = vsyncadd [#allocation4], 0
      %s31 = sshll.u32 [#allocation5], 4
      %s32 = int_to_ptr.vmem [resolvable:$true] %s31
      %s33 = sshll.u32 %s1, 4
      %s34 = int_to_ptr.hbm [resolvable:$true] %s33
      %36 = dma.vmem_to_hbm [thread:$0]  %s32, 128, %s34, [#allocation4]
    $region13: #{tpu_custom_call.1} parent=1 // pred_fallthru
      _
    // Predicated region
    $region14: #{tpu_custom_call.1} parent=1 // pred_check
      _
    $region15: #{tpu_custom_call.1} parent=1 // pred_check_branch
      %38 = sbr.rel (0) target = $region17
    $region16: #{tpu_custom_call.1} parent=1 // pred_region
      %40 = dma.done [#allocation4], 128
    $region17: #{tpu_custom_call.1} parent=1 // pred_fallthru
      _
    %41 = vsyncpa [#allocation3], 1
    %42 = vsyncpa [#allocation4], 1

// kernel: tpu_custom_call.1
$region0: #{tpu_custom_call.1}
  #allocation0 [shape = 'u32[]', space=smem, size = 0x4, offset = 0x4, fixed_abs, tag = 'smem constant byte address 0x4 - core index']
  #allocation1 [shape = 'u32[72,128]{1,0:T(1,128)}', space=vmem, size = 0x9000, scoped, tag = 'internal scratch']
  %s0 = inlined_call_operand.vmem [shape: f32[4,64,32], index: 0, kind: input, shape index: {}]
  %s1 = inlined_call_operand.vmem [shape: f32[1,32], index: 1, kind: input, shape index: {}]
  %s2 = inlined_call_operand.vmem [shape: f32[1,32], index: 2, kind: input, shape index: {}]
  %s3 = inlined_call_operand.vmem [shape: bf16[32,96], index: 3, kind: input, shape index: {}]
  %s4 = inlined_call_operand.vmem [shape: bf16[32,32], index: 4, kind: input, shape index: {}]
  %s5 = inlined_call_operand.vmem [shape: f32[1,32], index: 5, kind: input, shape index: {}]
  %s6 = inlined_call_operand.vmem [shape: f32[1,32], index: 6, kind: input, shape index: {}]
  %s7 = inlined_call_operand.vmem [shape: f32[1,32], index: 7, kind: input, shape index: {}]
  %s8 = inlined_call_operand.vmem [shape: bf16[32,128], index: 8, kind: input, shape index: {}]
  %s9 = inlined_call_operand.vmem [shape: f32[1,128], index: 9, kind: input, shape index: {}]
  %s10 = inlined_call_operand.vmem [shape: f32[3,3,128], index: 10, kind: input, shape index: {}]
  %s11 = inlined_call_operand.vmem [shape: f32[1,128], index: 11, kind: input, shape index: {}]
  %s12 = inlined_call_operand.vmem [shape: bf16[128,32], index: 12, kind: input, shape index: {}]
  %s13 = inlined_call_operand.vmem [shape: f32[1,32], index: 13, kind: input, shape index: {}]
  %s14 = inlined_call_operand.vmem [shape: f32[4,64,32], index: 14, kind: output, shape index: {}]
  %s15 = sld [smem:[#allocation0]]
  $region89: #{tpu_custom_call.1} parent=0
    _
  %s17 = ssub.s32 1, %s15
  %s18 = scalar_select 0, %s17, %s15
  loop: start=0, step=1, limit=4
  $region2: #{tpu_custom_call.1} parent=0 // loop_pre_header
    _
  $region3: #{tpu_custom_call.1} parent=0 // loop_header
    %s20 = sphi 0, %s24
    %p21 = scmp.ge.s32.totalorder %s20, 4
    %s30 = sphi 0, %s32
    %s33 = sphi 0, %s30
    %s34 = sphi 0, %s33
    %s50 = sphi 0, %s34
    %s54 = sphi 0, %s54
    %s56 = sphi 0, %s54
    %s57 = sphi 0, %s56
    %s71 = sphi 0, %s57
    %s75 = sphi 0, %s75
    %s77 = sphi 0, %s75
    %s78 = sphi 0, %s77
    %s92 = sphi 0, %s78
    %s96 = sphi 0, %s96
    %s98 = sphi 0, %s96
    %s99 = sphi 0, %s98
    %s113 = sphi 0, %s99
    %s117 = sphi 0, %s117
    %s119 = sphi 0, %s117
    %s120 = sphi 0, %s119
    %s134 = sphi 0, %s120
    %s138 = sphi 0, %s138
    %s140 = sphi 0, %s138
    %s141 = sphi 0, %s140
    %s155 = sphi 0, %s141
    %s159 = sphi 0, %s159
    %s161 = sphi 0, %s159
    %s162 = sphi 0, %s161
    %s176 = sphi 0, %s162
    %s180 = sphi 0, %s180
    %s182 = sphi 0, %s180
    %s183 = sphi 0, %s182
    %s197 = sphi 0, %s183
    %s201 = sphi 0, %s201
    %s203 = sphi 0, %s201
    %s204 = sphi 0, %s203
    %s218 = sphi 0, %s204
    %s222 = sphi 0, %s222
    %s224 = sphi 0, %s222
    %s225 = sphi 0, %s224
    %s239 = sphi 0, %s225
    %s243 = sphi 0, %s243
    %s245 = sphi 0, %s243
    %s246 = sphi 0, %s245
    %s260 = sphi 0, %s246
    %s264 = sphi 0, %s264
    %s266 = sphi 0, %s264
    %s267 = sphi 0, %s266
    %s281 = sphi 0, %s267
    %s285 = sphi 0, %s285
    %s287 = sphi 0, %s285
    %s288 = sphi 0, %s287
    %s302 = sphi 0, %s288
    %s306 = sphi 0, %s306
    %s308 = sphi 0, %s306
    %s309 = sphi 0, %s308
    %s323 = sphi 0, %s309
    %s329 = sphi 0, %s331
    %s332 = sphi 0, %s329
    %s333 = sphi 0, %s332
    %s349 = sphi 0, %s333
  $region4: #{tpu_custom_call.1} parent=0 // loop_header_branch
    %23 = sbr.rel (%p21) target = $region8
  $region5: #{tpu_custom_call.1} parent=0 // loop_body
    %s25 = ssub.s32 %s20, 1
    %s26 = ssub.s32 %s20, 2
    %s27 = sadd.s32 %s20, 1
    %s28 = ssub.s32 %s20, %s27
    %p29 = scmp.eq.s32.totalorder %s28, 0
    %s31 = sadd.s32 %s30, 1
    %s32 = scalar_select %p29, %s30, %s31
    %p35 = pneg %p29
    %p36 = scmp.eq.s32.totalorder %s20, 1
    %p37 = por %p35, %p36
    %p38 = scmp.ne.s32.totalorder %s30, %s33
    %p39 = scmp.eq.s32.totalorder %s20, 0
    %p40 = por %p38, %p39
    %p41 = scmp.ne.s32.totalorder %s30, %s33
    %p42 = scmp.eq.s32.totalorder %s25, 1
    %p43 = por %p41, %p42
    %p44 = scmp.ne.s32.totalorder %s33, %s34
    %p45 = scmp.eq.s32.totalorder %s25, 0
    %p46 = por %p44, %p45
    %p47 = scmp.ne.s32.totalorder %s33, %s34
    %p48 = scmp.eq.s32.totalorder %s26, 1
    %p49 = por %p47, %p48
    %p51 = scmp.ne.s32.totalorder %s34, %s50
    %p52 = scmp.eq.s32.totalorder %s26, 0
    %p53 = por %p51, %p52
    %s55 = sadd.s32 %s54, 1
    %p58 = scmp.eq.s32.totalorder %s20, 1
    %p59 = scmp.ne.s32.totalorder %s54, %s56
    %p60 = scmp.eq.s32.totalorder %s20, 0
    %p61 = por %p59, %p60
    %p62 = scmp.ne.s32.totalorder %s54, %s56
    %p63 = scmp.eq.s32.totalorder %s25, 1
    %p64 = por %p62, %p63
    %p65 = scmp.ne.s32.totalorder %s56, %s57
    %p66 = scmp.eq.s32.totalorder %s25, 0
    %p67 = por %p65, %p66
    %p68 = scmp.ne.s32.totalorder %s56, %s57
    %p69 = scmp.eq.s32.totalorder %s26, 1
    %p70 = por %p68, %p69
    %p72 = scmp.ne.s32.totalorder %s57, %s71
    %p73 = scmp.eq.s32.totalorder %s26, 0
    %p74 = por %p72, %p73
    %s76 = sadd.s32 %s75, 1
    %p79 = scmp.eq.s32.totalorder %s20, 1
    %p80 = scmp.ne.s32.totalorder %s75, %s77
    %p81 = scmp.eq.s32.totalorder %s20, 0
    %p82 = por %p80, %p81
    %p83 = scmp.ne.s32.totalorder %s75, %s77
    %p84 = scmp.eq.s32.totalorder %s25, 1
    %p85 = por %p83, %p84
    %p86 = scmp.ne.s32.totalorder %s77, %s78
    %p87 = scmp.eq.s32.totalorder %s25, 0
    %p88 = por %p86, %p87
    %p89 = scmp.ne.s32.totalorder %s77, %s78
    %p90 = scmp.eq.s32.totalorder %s26, 1
    %p91 = por %p89, %p90
    %p93 = scmp.ne.s32.totalorder %s78, %s92
    %p94 = scmp.eq.s32.totalorder %s26, 0
    %p95 = por %p93, %p94
    %s97 = sadd.s32 %s96, 1
    %p100 = scmp.eq.s32.totalorder %s20, 1
    %p101 = scmp.ne.s32.totalorder %s96, %s98
    %p102 = scmp.eq.s32.totalorder %s20, 0
    %p103 = por %p101, %p102
    %p104 = scmp.ne.s32.totalorder %s96, %s98
    %p105 = scmp.eq.s32.totalorder %s25, 1
    %p106 = por %p104, %p105
    %p107 = scmp.ne.s32.totalorder %s98, %s99
    %p108 = scmp.eq.s32.totalorder %s25, 0
    %p109 = por %p107, %p108
    %p110 = scmp.ne.s32.totalorder %s98, %s99
    %p111 = scmp.eq.s32.totalorder %s26, 1
    %p112 = por %p110, %p111
    %p114 = scmp.ne.s32.totalorder %s99, %s113
    %p115 = scmp.eq.s32.totalorder %s26, 0
    %p116 = por %p114, %p115
    %s118 = sadd.s32 %s117, 1
    %p121 = scmp.eq.s32.totalorder %s20, 1
    %p122 = scmp.ne.s32.totalorder %s117, %s119
    %p123 = scmp.eq.s32.totalorder %s20, 0
    %p124 = por %p122, %p123
    %p125 = scmp.ne.s32.totalorder %s117, %s119
    %p126 = scmp.eq.s32.totalorder %s25, 1
    %p127 = por %p125, %p126
    %p128 = scmp.ne.s32.totalorder %s119, %s120
    %p129 = scmp.eq.s32.totalorder %s25, 0
    %p130 = por %p128, %p129
    %p131 = scmp.ne.s32.totalorder %s119, %s120
    %p132 = scmp.eq.s32.totalorder %s26, 1
    %p133 = por %p131, %p132
    %p135 = scmp.ne.s32.totalorder %s120, %s134
    %p136 = scmp.eq.s32.totalorder %s26, 0
    %p137 = por %p135, %p136
    %s139 = sadd.s32 %s138, 1
    %p142 = scmp.eq.s32.totalorder %s20, 1
    %p143 = scmp.ne.s32.totalorder %s138, %s140
    %p144 = scmp.eq.s32.totalorder %s20, 0
    %p145 = por %p143, %p144
    %p146 = scmp.ne.s32.totalorder %s138, %s140
    %p147 = scmp.eq.s32.totalorder %s25, 1
    %p148 = por %p146, %p147
    %p149 = scmp.ne.s32.totalorder %s140, %s141
    %p150 = scmp.eq.s32.totalorder %s25, 0
    %p151 = por %p149, %p150
    %p152 = scmp.ne.s32.totalorder %s140, %s141
    %p153 = scmp.eq.s32.totalorder %s26, 1
    %p154 = por %p152, %p153
    %p156 = scmp.ne.s32.totalorder %s141, %s155
    %p157 = scmp.eq.s32.totalorder %s26, 0
    %p158 = por %p156, %p157
    %s160 = sadd.s32 %s159, 1
    %p163 = scmp.eq.s32.totalorder %s20, 1
    %p164 = scmp.ne.s32.totalorder %s159, %s161
    %p165 = scmp.eq.s32.totalorder %s20, 0
    %p166 = por %p164, %p165
    %p167 = scmp.ne.s32.totalorder %s159, %s161
    %p168 = scmp.eq.s32.totalorder %s25, 1
    %p169 = por %p167, %p168
    %p170 = scmp.ne.s32.totalorder %s161, %s162
    %p171 = scmp.eq.s32.totalorder %s25, 0
    %p172 = por %p170, %p171
    %p173 = scmp.ne.s32.totalorder %s161, %s162
    %p174 = scmp.eq.s32.totalorder %s26, 1
    %p175 = por %p173, %p174
    %p177 = scmp.ne.s32.totalorder %s162, %s176
    %p178 = scmp.eq.s32.totalorder %s26, 0
    %p179 = por %p177, %p178
    %s181 = sadd.s32 %s180, 1
    %p184 = scmp.eq.s32.totalorder %s20, 1
    %p185 = scmp.ne.s32.totalorder %s180, %s182
    %p186 = scmp.eq.s32.totalorder %s20, 0
    %p187 = por %p185, %p186
    %p188 = scmp.ne.s32.totalorder %s180, %s182
    %p189 = scmp.eq.s32.totalorder %s25, 1
    %p190 = por %p188, %p189
    %p191 = scmp.ne.s32.totalorder %s182, %s183
    %p192 = scmp.eq.s32.totalorder %s25, 0
    %p193 = por %p191, %p192
    %p194 = scmp.ne.s32.totalorder %s182, %s183
    %p195 = scmp.eq.s32.totalorder %s26, 1
    %p196 = por %p194, %p195
    %p198 = scmp.ne.s32.totalorder %s183, %s197
    %p199 = scmp.eq.s32.totalorder %s26, 0
    %p200 = por %p198, %p199
    %s202 = sadd.s32 %s201, 1
    %p205 = scmp.eq.s32.totalorder %s20, 1
    %p206 = scmp.ne.s32.totalorder %s201, %s203
    %p207 = scmp.eq.s32.totalorder %s20, 0
    %p208 = por %p206, %p207
    %p209 = scmp.ne.s32.totalorder %s201, %s203
    %p210 = scmp.eq.s32.totalorder %s25, 1
    %p211 = por %p209, %p210
    %p212 = scmp.ne.s32.totalorder %s203, %s204
    %p213 = scmp.eq.s32.totalorder %s25, 0
    %p214 = por %p212, %p213
    %p215 = scmp.ne.s32.totalorder %s203, %s204
    %p216 = scmp.eq.s32.totalorder %s26, 1
    %p217 = por %p215, %p216
    %p219 = scmp.ne.s32.totalorder %s204, %s218
    %p220 = scmp.eq.s32.totalorder %s26, 0
    %p221 = por %p219, %p220
    %s223 = sadd.s32 %s222, 1
    %p226 = scmp.eq.s32.totalorder %s20, 1
    %p227 = scmp.ne.s32.totalorder %s222, %s224
    %p228 = scmp.eq.s32.totalorder %s20, 0
    %p229 = por %p227, %p228
    %p230 = scmp.ne.s32.totalorder %s222, %s224
    %p231 = scmp.eq.s32.totalorder %s25, 1
    %p232 = por %p230, %p231
    %p233 = scmp.ne.s32.totalorder %s224, %s225
    %p234 = scmp.eq.s32.totalorder %s25, 0
    %p235 = por %p233, %p234
    %p236 = scmp.ne.s32.totalorder %s224, %s225
    %p237 = scmp.eq.s32.totalorder %s26, 1
    %p238 = por %p236, %p237
    %p240 = scmp.ne.s32.totalorder %s225, %s239
    %p241 = scmp.eq.s32.totalorder %s26, 0
    %p242 = por %p240, %p241
    %s244 = sadd.s32 %s243, 1
    %p247 = scmp.eq.s32.totalorder %s20, 1
    %p248 = scmp.ne.s32.totalorder %s243, %s245
    %p249 = scmp.eq.s32.totalorder %s20, 0
    %p250 = por %p248, %p249
    %p251 = scmp.ne.s32.totalorder %s243, %s245
    %p252 = scmp.eq.s32.totalorder %s25, 1
    %p253 = por %p251, %p252
    %p254 = scmp.ne.s32.totalorder %s245, %s246
    %p255 = scmp.eq.s32.totalorder %s25, 0
    %p256 = por %p254, %p255
    %p257 = scmp.ne.s32.totalorder %s245, %s246
    %p258 = scmp.eq.s32.totalorder %s26, 1
    %p259 = por %p257, %p258
    %p261 = scmp.ne.s32.totalorder %s246, %s260
    %p262 = scmp.eq.s32.totalorder %s26, 0
    %p263 = por %p261, %p262
    %s265 = sadd.s32 %s264, 1
    %p268 = scmp.eq.s32.totalorder %s20, 1
    %p269 = scmp.ne.s32.totalorder %s264, %s266
    %p270 = scmp.eq.s32.totalorder %s20, 0
    %p271 = por %p269, %p270
    %p272 = scmp.ne.s32.totalorder %s264, %s266
    %p273 = scmp.eq.s32.totalorder %s25, 1
    %p274 = por %p272, %p273
    %p275 = scmp.ne.s32.totalorder %s266, %s267
    %p276 = scmp.eq.s32.totalorder %s25, 0
    %p277 = por %p275, %p276
    %p278 = scmp.ne.s32.totalorder %s266, %s267
    %p279 = scmp.eq.s32.totalorder %s26, 1
    %p280 = por %p278, %p279
    %p282 = scmp.ne.s32.totalorder %s267, %s281
    %p283 = scmp.eq.s32.totalorder %s26, 0
    %p284 = por %p282, %p283
    %s286 = sadd.s32 %s285, 1
    %p289 = scmp.eq.s32.totalorder %s20, 1
    %p290 = scmp.ne.s32.totalorder %s285, %s287
    %p291 = scmp.eq.s32.totalorder %s20, 0
    %p292 = por %p290, %p291
    %p293 = scmp.ne.s32.totalorder %s285, %s287
    %p294 = scmp.eq.s32.totalorder %s25, 1
    %p295 = por %p293, %p294
    %p296 = scmp.ne.s32.totalorder %s287, %s288
    %p297 = scmp.eq.s32.totalorder %s25, 0
    %p298 = por %p296, %p297
    %p299 = scmp.ne.s32.totalorder %s287, %s288
    %p300 = scmp.eq.s32.totalorder %s26, 1
    %p301 = por %p299, %p300
    %p303 = scmp.ne.s32.totalorder %s288, %s302
    %p304 = scmp.eq.s32.totalorder %s26, 0
    %p305 = por %p303, %p304
    %s307 = sadd.s32 %s306, 1
    %p310 = scmp.eq.s32.totalorder %s20, 1
    %p311 = scmp.ne.s32.totalorder %s306, %s308
    %p312 = scmp.eq.s32.totalorder %s20, 0
    %p313 = por %p311, %p312
    %p314 = scmp.ne.s32.totalorder %s306, %s308
    %p315 = scmp.eq.s32.totalorder %s25, 1
    %p316 = por %p314, %p315
    %p317 = scmp.ne.s32.totalorder %s308, %s309
    %p318 = scmp.eq.s32.totalorder %s25, 0
    %p319 = por %p317, %p318
    %p320 = scmp.ne.s32.totalorder %s308, %s309
    %p321 = scmp.eq.s32.totalorder %s26, 1
    %p322 = por %p320, %p321
    %p324 = scmp.ne.s32.totalorder %s309, %s323
    %p325 = scmp.eq.s32.totalorder %s26, 0
    %p326 = por %p324, %p325
    %s327 = ssub.s32 %s20, %s27
    %p328 = scmp.eq.s32.totalorder %s327, 0
    %s330 = sadd.s32 %s329, 1
    %s331 = scalar_select %p328, %s329, %s330
    %p334 = pneg %p328
    %p335 = scmp.eq.s32.totalorder %s20, 1
    %p336 = por %p334, %p335
    %p337 = scmp.ne.s32.totalorder %s329, %s332
    %p338 = scmp.eq.s32.totalorder %s20, 0
    %p339 = por %p337, %p338
    %p340 = scmp.ne.s32.totalorder %s329, %s332
    %p341 = scmp.eq.s32.totalorder %s25, 1
    %p342 = por %p340, %p341
    %p343 = scmp.ne.s32.totalorder %s332, %s333
    %p344 = scmp.eq.s32.totalorder %s25, 0
    %p345 = por %p343, %p344
    %p346 = scmp.ne.s32.totalorder %s332, %s333
    %p347 = scmp.eq.s32.totalorder %s26, 1
    %p348 = por %p346, %p347
    %p350 = scmp.ne.s32.totalorder %s333, %s349
    %p351 = scmp.eq.s32.totalorder %s26, 0
    %p352 = por %p350, %p351
    %p353 = scmp.le.s32.totalorder 1, %s20
    %p354 = scmp.lt.s32.totalorder %s20, 3
    %p355 = pnand %p353, %p354
    %p356 = pneg %p355
    // Predicated region
    $region9: #{tpu_custom_call.1} parent=5 // pred_check
      _
    $region10: #{tpu_custom_call.1} parent=5 // pred_check_branch
      %358 = sbr.rel (%p355) target = $region12
    $region11: #{tpu_custom_call.1} parent=5 // pred_region
      %s359 = ssub.s32 %s20, 1
      // Predicated region
      $region13: #{tpu_custom_call.1} parent=11 // pred_check
        %p360 = pneg %p67
      $region14: #{tpu_custom_call.1} parent=11 // pred_check_branch
        %362 = sbr.rel (%p360) target = $region16
      $region15: #{tpu_custom_call.1} parent=11 // pred_region
        _
      $region16: #{tpu_custom_call.1} parent=11 // pred_fallthru
        _
      // Predicated region
      $region17: #{tpu_custom_call.1} parent=11 // pred_check
        %p363 = pneg %p88
      $region18: #{tpu_custom_call.1} parent=11 // pred_check_branch
        %365 = sbr.rel (%p363) target = $region20
      $region19: #{tpu_custom_call.1} parent=11 // pred_region
        _
      $region20: #{tpu_custom_call.1} parent=11 // pred_fallthru
        _
      // Predicated region
      $region21: #{tpu_custom_call.1} parent=11 // pred_check
        %p366 = pneg %p109
      $region22: #{tpu_custom_call.1} parent=11 // pred_check_branch
        %368 = sbr.rel (%p366) target = $region24
      $region23: #{tpu_custom_call.1} parent=11 // pred_region
        _
      $region24: #{tpu_custom_call.1} parent=11 // pred_fallthru
        _
      // Predicated region
      $region25: #{tpu_custom_call.1} parent=11 // pred_check
        %p369 = pneg %p130
      $region26: #{tpu_custom_call.1} parent=11 // pred_check_branch
        %371 = sbr.rel (%p369) target = $region28
      $region27: #{tpu_custom_call.1} parent=11 // pred_region
        _
      $region28: #{tpu_custom_call.1} parent=11 // pred_fallthru
        _
      // Predicated region
      $region29: #{tpu_custom_call.1} parent=11 // pred_check
        %p372 = pneg %p151
      $region30: #{tpu_custom_call.1} parent=11 // pred_check_branch
        %374 = sbr.rel (%p372) target = $region32
      $region31: #{tpu_custom_call.1} parent=11 // pred_region
        _
      $region32: #{tpu_custom_call.1} parent=11 // pred_fallthru
        _
      // Predicated region
      $region33: #{tpu_custom_call.1} parent=11 // pred_check
        %p375 = pneg %p172
      $region34: #{tpu_custom_call.1} parent=11 // pred_check_branch
        %377 = sbr.rel (%p375) target = $region36
      $region35: #{tpu_custom_call.1} parent=11 // pred_region
        _
      $region36: #{tpu_custom_call.1} parent=11 // pred_fallthru
        _
      // Predicated region
      $region37: #{tpu_custom_call.1} parent=11 // pred_check
        %p378 = pneg %p193
      $region38: #{tpu_custom_call.1} parent=11 // pred_check_branch
        %380 = sbr.rel (%p378) target = $region40
      $region39: #{tpu_custom_call.1} parent=11 // pred_region
        _
      $region40: #{tpu_custom_call.1} parent=11 // pred_fallthru
        _
      // Predicated region
      $region41: #{tpu_custom_call.1} parent=11 // pred_check
        %p381 = pneg %p214
      $region42: #{tpu_custom_call.1} parent=11 // pred_check_branch
        %383 = sbr.rel (%p381) target = $region44
      $region43: #{tpu_custom_call.1} parent=11 // pred_region
        _
      $region44: #{tpu_custom_call.1} parent=11 // pred_fallthru
        _
      // Predicated region
      $region45: #{tpu_custom_call.1} parent=11 // pred_check
        %p384 = pneg %p235
      $region46: #{tpu_custom_call.1} parent=11 // pred_check_branch
        %386 = sbr.rel (%p384) target = $region48
      $region47: #{tpu_custom_call.1} parent=11 // pred_region
        _
      $region48: #{tpu_custom_call.1} parent=11 // pred_fallthru
        _
      // Predicated region
      $region49: #{tpu_custom_call.1} parent=11 // pred_check
        %p387 = pneg %p256
      $region50: #{tpu_custom_call.1} parent=11 // pred_check_branch
        %389 = sbr.rel (%p387) target = $region52
      $region51: #{tpu_custom_call.1} parent=11 // pred_region
        _
      $region52: #{tpu_custom_call.1} parent=11 // pred_fallthru
        _
      // Predicated region
      $region53: #{tpu_custom_call.1} parent=11 // pred_check
        %p390 = pneg %p277
      $region54: #{tpu_custom_call.1} parent=11 // pred_check_branch
        %392 = sbr.rel (%p390) target = $region56
      $region55: #{tpu_custom_call.1} parent=11 // pred_region
        _
      $region56: #{tpu_custom_call.1} parent=11 // pred_fallthru
        _
      // Predicated region
      $region57: #{tpu_custom_call.1} parent=11 // pred_check
        %p393 = pneg %p298
      $region58: #{tpu_custom_call.1} parent=11 // pred_check_branch
        %395 = sbr.rel (%p393) target = $region60
      $region59: #{tpu_custom_call.1} parent=11 // pred_region
        _
      $region60: #{tpu_custom_call.1} parent=11 // pred_fallthru
        _
      // Predicated region
      $region61: #{tpu_custom_call.1} parent=11 // pred_check
        %p396 = pneg %p319
      $region62: #{tpu_custom_call.1} parent=11 // pred_check_branch
        %398 = sbr.rel (%p396) target = $region64
      $region63: #{tpu_custom_call.1} parent=11 // pred_region
        _
      $region64: #{tpu_custom_call.1} parent=11 // pred_fallthru
        _
    $region12: #{tpu_custom_call.1} parent=5 // pred_fallthru
      _
    %p399 = scmp.lt.s32.totalorder %s20, 2
    // Predicated region
    $region65: #{tpu_custom_call.1} parent=5 // pred_check
      %p400 = pneg %p399
    $region66: #{tpu_custom_call.1} parent=5 // pred_check_branch
      %402 = sbr.rel (%p400) target = $region68
    $region67: #{tpu_custom_call.1} parent=5 // pred_region
      // Predicated region
      $region69: #{tpu_custom_call.1} parent=67 // pred_check
        %p403 = pneg %p40
      $region70: #{tpu_custom_call.1} parent=67 // pred_check_branch
        %405 = sbr.rel (%p403) target = $region72
      $region71: #{tpu_custom_call.1} parent=67 // pred_region
        %s406 = smul.u32 2, %s20
        %p407 = scmp.lt.s32.totalorder %s406, 3
        %s408 = scalar_select %p407, %s406, 3
        %s409 = smul.addr %s408, 8
        %s410 = smul.addr %s409, 8
        %s411 = scalar_lea.vmem %s0, %s410
        %s412 = smul.u32 2, %s20
      $region72: #{tpu_custom_call.1} parent=67 // pred_fallthru
        _
    $region68: #{tpu_custom_call.1} parent=5 // pred_fallthru
      _
    %p413 = scmp.le.s32.totalorder 1, %s20
    %p414 = scmp.lt.s32.totalorder %s20, 3
    %p415 = pnand %p413, %p414
    %p416 = pneg %p415
    // Predicated region
    $region73: #{tpu_custom_call.1} parent=5 // pred_check
      _
    $region74: #{tpu_custom_call.1} parent=5 // pred_check_branch
      %418 = sbr.rel (%p415) target = $region76
    $region75: #{tpu_custom_call.1} parent=5 // pred_region
      %s419 = ssub.s32 %s20, 1
      %s420 = smul.u32 2, %s25
      %p421 = scmp.lt.s32.totalorder %s420, 3
      %s422 = scalar_select %p421, %s420, 3
      %s423 = smul.addr %s422, 8
      %s424 = smul.addr %s423, 8
      %s425 = scalar_lea.vmem %s0, %s424
      %p426 = pneg %p46
      %p427 = pneg %p43
      %p428 = pneg %p67
      %p429 = pneg %p64
      %p430 = pneg %p88
      %p431 = pneg %p85
      %p432 = pneg %p109
      %p433 = pneg %p106
      %p434 = pneg %p130
      %p435 = pneg %p127
      %p436 = pneg %p151
      %p437 = pneg %p148
      %p438 = pneg %p172
      %p439 = pneg %p169
      %p440 = pneg %p193
      %p441 = pneg %p190
      %p442 = pneg %p214
      %p443 = pneg %p211
      %p444 = pneg %p235
      %p445 = pneg %p232
      %p446 = pneg %p256
      %p447 = pneg %p253
      %p448 = pneg %p277
      %p449 = pneg %p274
      %p450 = pneg %p298
      %p451 = pneg %p295
      %p452 = pneg %p319
      %p453 = pneg %p316
      %p454 = pneg %p345
      %p455 = pneg %p342
      %s456 = smul.u32 2, %s25
      %p457 = scmp.lt.s32.totalorder %s456, 3
      %s458 = scalar_select %p457, %s456, 3
      %s459 = smul.addr %s458, 8
      %s460 = smul.addr %s459, 8
      %s461 = scalar_lea.vmem %s14, %s460
      %s462 = smul.u32 2, %s25
      %p463 = scmp.lt.s32.totalorder %s462, 3
      %s464 = scalar_select %p463, %s462, 3
      %s465 = smul.addr %s464, 8
      %s466 = smul.addr %s465, 8
      %s467 = scalar_lea.vmem %s0, %s466
      %s468 = smul.u32 2, %s25
      %s469 = smul.u32 2, %s25
      %p470 = scmp.lt.s32.totalorder %s469, 3
      %s471 = scalar_select %p470, %s469, 3
      %s472 = smul.addr %s471, 8
      %s473 = smul.addr %s472, 8
      %s474 = scalar_lea.vmem %s14, %s473
      %s475 = smul.u32 2, %s25
      %v477 = vld [vmem:[%s467] sm:$0xff]
      %v478 = vld [vmem:[%s467 + $0x8] sm:$0xff]
      %v479 = vld [vmem:[%s467 + $0x10] sm:$0xff]
      %v480 = vld [vmem:[%s467 + $0x18] sm:$0xff]
      %v481 = vld [vmem:[%s467 + $0x20] sm:$0xff]
      %v482 = vld [vmem:[%s467 + $0x28] sm:$0xff]
      %v483 = vld [vmem:[%s467 + $0x30] sm:$0xff]
      %v484 = vld [vmem:[%s467 + $0x38] sm:$0xff]
      %v485 = vld [vmem:[%s467 + $0x40] sm:$0xff]
      %v486 = vld [vmem:[%s467 + $0x48] sm:$0xff]
      %v487 = vld [vmem:[%s467 + $0x50] sm:$0xff]
      %v488 = vld [vmem:[%s467 + $0x58] sm:$0xff]
      %v489 = vld [vmem:[%s467 + $0x60] sm:$0xff]
      %v490 = vld [vmem:[%s467 + $0x68] sm:$0xff]
      %v491 = vld [vmem:[%s467 + $0x70] sm:$0xff]
      %v492 = vld [vmem:[%s467 + $0x78] sm:$0xff]
      %v493 = vld [vmem:[%s1] sm:$0x1]
      %v494 = vld [vmem:[%s2] sm:$0x1]
      %vm495 = vcmask 261120
      %v496 = vsel %vm495, %v477, 0.0
      %497 = vadd.xlane.f32.xlu0 %v496
      %v498 = vpop.xlane.xlu0 %497
      %v499 = vsel %vm495, %v478, 0.0
      %500 = vadd.xlane.f32.xlu0 %v499
      %v501 = vpop.xlane.xlu0 %500
      %v502 = vsel %vm495, %v479, 0.0
      %503 = vadd.xlane.f32.xlu0 %v502
      %v504 = vpop.xlane.xlu0 %503
      %v505 = vsel %vm495, %v480, 0.0
      %506 = vadd.xlane.f32.xlu0 %v505
      %v507 = vpop.xlane.xlu0 %506
      %v508 = vsel %vm495, %v481, 0.0
      %509 = vadd.xlane.f32.xlu0 %v508
      %v510 = vpop.xlane.xlu0 %509
      %v511 = vsel %vm495, %v482, 0.0
      %512 = vadd.xlane.f32.xlu0 %v511
      %v513 = vpop.xlane.xlu0 %512
      %v514 = vsel %vm495, %v483, 0.0
      %515 = vadd.xlane.f32.xlu0 %v514
      %v516 = vpop.xlane.xlu0 %515
      %v517 = vsel %vm495, %v484, 0.0
      %518 = vadd.xlane.f32.xlu0 %v517
      %v519 = vpop.xlane.xlu0 %518
      %v520 = vsel %vm495, %v485, 0.0
      %521 = vadd.xlane.f32.xlu0 %v520
      %v522 = vpop.xlane.xlu0 %521
      %v523 = vsel %vm495, %v486, 0.0
      %524 = vadd.xlane.f32.xlu0 %v523
      %v525 = vpop.xlane.xlu0 %524
      %v526 = vsel %vm495, %v487, 0.0
      %527 = vadd.xlane.f32.xlu0 %v526
      %v528 = vpop.xlane.xlu0 %527
      %v529 = vsel %vm495, %v488, 0.0
      %530 = vadd.xlane.f32.xlu0 %v529
      %v531 = vpop.xlane.xlu0 %530
      %v532 = vsel %vm495, %v489, 0.0
      %533 = vadd.xlane.f32.xlu0 %v532
      %v534 = vpop.xlane.xlu0 %533
      %v535 = vsel %vm495, %v490, 0.0
      %536 = vadd.xlane.f32.xlu0 %v535
      %v537 = vpop.xlane.xlu0 %536
      %v538 = vsel %vm495, %v491, 0.0
      %539 = vadd.xlane.f32.xlu0 %v538
      %v540 = vpop.xlane.xlu0 %539
      %v541 = vsel %vm495, %v492, 0.0
      %542 = vadd.xlane.f32.xlu0 %v541
      %v543 = vpop.xlane.xlu0 %542
      %v544 = vrcp.pop 32.0
      %v545 = vmul.f32 32.0, %v544
      %v546 = vsub.f32 1.0, %v545
      %v547 = vmul.f32 %v544, %v546
      %v548 = vadd.f32 %v544, %v547
      %vm549 = vweird.f32 %v544
      %v550 = vsel %vm549, %v544, %v548
      %v551 = vmul.f32 %v498, %v550
      %v552 = vmul.f32 %v501, %v550
      %v553 = vmul.f32 %v504, %v550
      %v554 = vmul.f32 %v507, %v550
      %v555 = vmul.f32 %v510, %v550
      %v556 = vmul.f32 %v513, %v550
      %v557 = vmul.f32 %v516, %v550
      %v558 = vmul.f32 %v519, %v550
      %v559 = vmul.f32 %v522, %v550
      %v560 = vmul.f32 %v525, %v550
      %v561 = vmul.f32 %v528, %v550
      %v562 = vmul.f32 %v531, %v550
      %v563 = vmul.f32 %v534, %v550
      %v564 = vmul.f32 %v537, %v550
      %v565 = vmul.f32 %v540, %v550
      %v566 = vmul.f32 %v543, %v550
      %v567 = vsub.f32 %v477, %v551
      %v568 = vsub.f32 %v478, %v552
      %v569 = vsub.f32 %v479, %v553
      %v570 = vsub.f32 %v480, %v554
      %v571 = vsub.f32 %v481, %v555
      %v572 = vsub.f32 %v482, %v556
      %v573 = vsub.f32 %v483, %v557
      %v574 = vsub.f32 %v484, %v558
      %v575 = vsub.f32 %v485, %v559
      %v576 = vsub.f32 %v486, %v560
      %v577 = vsub.f32 %v487, %v561
      %v578 = vsub.f32 %v488, %v562
      %v579 = vsub.f32 %v489, %v563
      %v580 = vsub.f32 %v490, %v564
      %v581 = vsub.f32 %v491, %v565
      %v582 = vsub.f32 %v492, %v566
      %v583 = vmul.f32 %v567, %v567
      %v584 = vmul.f32 %v568, %v568
      %v585 = vmul.f32 %v569, %v569
      %v586 = vmul.f32 %v570, %v570
      %v587 = vmul.f32 %v571, %v571
      %v588 = vmul.f32 %v572, %v572
      %v589 = vmul.f32 %v573, %v573
      %v590 = vmul.f32 %v574, %v574
      %v591 = vmul.f32 %v575, %v575
      %v592 = vmul.f32 %v576, %v576
      %v593 = vmul.f32 %v577, %v577
      %v594 = vmul.f32 %v578, %v578
      %v595 = vmul.f32 %v579, %v579
      %v596 = vmul.f32 %v580, %v580
      %v597 = vmul.f32 %v581, %v581
      %v598 = vmul.f32 %v582, %v582
      %v599 = vsel %vm495, %v583, 0.0
      %600 = vadd.xlane.f32.xlu0 %v599
      %v601 = vpop.xlane.xlu0 %600
      %v602 = vsel %vm495, %v584, 0.0
      %603 = vadd.xlane.f32.xlu0 %v602
      %v604 = vpop.xlane.xlu0 %603
      %v605 = vsel %vm495, %v585, 0.0
      %606 = vadd.xlane.f32.xlu0 %v605
      %v607 = vpop.xlane.xlu0 %606
      %v608 = vsel %vm495, %v586, 0.0
      %609 = vadd.xlane.f32.xlu0 %v608
      %v610 = vpop.xlane.xlu0 %609
      %v611 = vsel %vm495, %v587, 0.0
      %612 = vadd.xlane.f32.xlu0 %v611
      %v613 = vpop.xlane.xlu0 %612
      %v614 = vsel %vm495, %v588, 0.0
      %615 = vadd.xlane.f32.xlu0 %v614
      %v616 = vpop.xlane.xlu0 %615
      %v617 = vsel %vm495, %v589, 0.0
      %618 = vadd.xlane.f32.xlu0 %v617
      %v619 = vpop.xlane.xlu0 %618
      %v620 = vsel %vm495, %v590, 0.0
      %621 = vadd.xlane.f32.xlu0 %v620
      %v622 = vpop.xlane.xlu0 %621
      %v623 = vsel %vm495, %v591, 0.0
      %624 = vadd.xlane.f32.xlu0 %v623
      %v625 = vpop.xlane.xlu0 %624
      %v626 = vsel %vm495, %v592, 0.0
      %627 = vadd.xlane.f32.xlu0 %v626
      %v628 = vpop.xlane.xlu0 %627
      %v629 = vsel %vm495, %v593, 0.0
      %630 = vadd.xlane.f32.xlu0 %v629
      %v631 = vpop.xlane.xlu0 %630
      %v632 = vsel %vm495, %v594, 0.0
      %633 = vadd.xlane.f32.xlu0 %v632
      %v634 = vpop.xlane.xlu0 %633
      %v635 = vsel %vm495, %v595, 0.0
      %636 = vadd.xlane.f32.xlu0 %v635
      %v637 = vpop.xlane.xlu0 %636
      %v638 = vsel %vm495, %v596, 0.0
      %639 = vadd.xlane.f32.xlu0 %v638
      %v640 = vpop.xlane.xlu0 %639
      %v641 = vsel %vm495, %v597, 0.0
      %642 = vadd.xlane.f32.xlu0 %v641
      %v643 = vpop.xlane.xlu0 %642
      %v644 = vsel %vm495, %v598, 0.0
      %645 = vadd.xlane.f32.xlu0 %v644
      %v646 = vpop.xlane.xlu0 %645
      %v647 = vmul.f32 %v601, %v550
      %v648 = vmul.f32 %v604, %v550
      %v649 = vmul.f32 %v607, %v550
      %v650 = vmul.f32 %v610, %v550
      %v651 = vmul.f32 %v613, %v550
      %v652 = vmul.f32 %v616, %v550
      %v653 = vmul.f32 %v619, %v550
      %v654 = vmul.f32 %v622, %v550
      %v655 = vmul.f32 %v625, %v550
      %v656 = vmul.f32 %v628, %v550
      %v657 = vmul.f32 %v631, %v550
      %v658 = vmul.f32 %v634, %v550
      %v659 = vmul.f32 %v637, %v550
      %v660 = vmul.f32 %v640, %v550
      %v661 = vmul.f32 %v643, %v550
      %v662 = vmul.f32 %v646, %v550
      %v663 = vadd.f32 %v647, 1e-05
      %v664 = vadd.f32 %v648, 1e-05
      %v665 = vadd.f32 %v649, 1e-05
      %v666 = vadd.f32 %v650, 1e-05
      %v667 = vadd.f32 %v651, 1e-05
      %v668 = vadd.f32 %v652, 1e-05
      %v669 = vadd.f32 %v653, 1e-05
      %v670 = vadd.f32 %v654, 1e-05
      %v671 = vadd.f32 %v655, 1e-05
      %v672 = vadd.f32 %v656, 1e-05
      %v673 = vadd.f32 %v657, 1e-05
      %v674 = vadd.f32 %v658, 1e-05
      %v675 = vadd.f32 %v659, 1e-05
      %v676 = vadd.f32 %v660, 1e-05
      %v677 = vadd.f32 %v661, 1e-05
      %v678 = vadd.f32 %v662, 1e-05
      %v679 = vrsqrt.pop %v663
      %v680 = vmul.f32 %v679, %v663
      %v681 = vmul.f32 %v680, %v679
      %v682 = vmul.f32 0.5, %v681
      %v683 = vsub.f32 1.5, %v682
      %v684 = vmul.f32 %v679, %v683
      %vm685 = vweird.f32 %v663
      %vm686 = vweird.f32 %v679
      %vm687 = vmor %vm685, %vm686
      %v688 = vsel %vm687, %v679, %v684
      %v689 = vrsqrt.pop %v664
      %v690 = vmul.f32 %v689, %v664
      %v691 = vmul.f32 %v690, %v689
      %v692 = vmul.f32 0.5, %v691
      %v693 = vsub.f32 1.5, %v692
      %v694 = vmul.f32 %v689, %v693
      %vm695 = vweird.f32 %v664
      %vm696 = vweird.f32 %v689
      %vm697 = vmor %vm695, %vm696
      %v698 = vsel %vm697, %v689, %v694
      %v699 = vrsqrt.pop %v665
      %v700 = vmul.f32 %v699, %v665
      %v701 = vmul.f32 %v700, %v699
      %v702 = vmul.f32 0.5, %v701
      %v703 = vsub.f32 1.5, %v702
      %v704 = vmul.f32 %v699, %v703
      %vm705 = vweird.f32 %v665
      %vm706 = vweird.f32 %v699
      %vm707 = vmor %vm705, %vm706
      %v708 = vsel %vm707, %v699, %v704
      %v709 = vrsqrt.pop %v666
      %v710 = vmul.f32 %v709, %v666
      %v711 = vmul.f32 %v710, %v709
      %v712 = vmul.f32 0.5, %v711
      %v713 = vsub.f32 1.5, %v712
      %v714 = vmul.f32 %v709, %v713
      %vm715 = vweird.f32 %v666
      %vm716 = vweird.f32 %v709
      %vm717 = vmor %vm715, %vm716
      %v718 = vsel %vm717, %v709, %v714
      %v719 = vrsqrt.pop %v667
      %v720 = vmul.f32 %v719, %v667
      %v721 = vmul.f32 %v720, %v719
      %v722 = vmul.f32 0.5, %v721
      %v723 = vsub.f32 1.5, %v722
      %v724 = vmul.f32 %v719, %v723
      %vm725 = vweird.f32 %v667
      %vm726 = vweird.f32 %v719
      %vm727 = vmor %vm725, %vm726
      %v728 = vsel %vm727, %v719, %v724
      %v729 = vrsqrt.pop %v668
      %v730 = vmul.f32 %v729, %v668
      %v731 = vmul.f32 %v730, %v729
      %v732 = vmul.f32 0.5, %v731
      %v733 = vsub.f32 1.5, %v732
      %v734 = vmul.f32 %v729, %v733
      %vm735 = vweird.f32 %v668
      %vm736 = vweird.f32 %v729
      %vm737 = vmor %vm735, %vm736
      %v738 = vsel %vm737, %v729, %v734
      %v739 = vrsqrt.pop %v669
      %v740 = vmul.f32 %v739, %v669
      %v741 = vmul.f32 %v740, %v739
      %v742 = vmul.f32 0.5, %v741
      %v743 = vsub.f32 1.5, %v742
      %v744 = vmul.f32 %v739, %v743
      %vm745 = vweird.f32 %v669
      %vm746 = vweird.f32 %v739
      %vm747 = vmor %vm745, %vm746
      %v748 = vsel %vm747, %v739, %v744
      %v749 = vrsqrt.pop %v670
      %v750 = vmul.f32 %v749, %v670
      %v751 = vmul.f32 %v750, %v749
      %v752 = vmul.f32 0.5, %v751
      %v753 = vsub.f32 1.5, %v752
      %v754 = vmul.f32 %v749, %v753
      %vm755 = vweird.f32 %v670
      %vm756 = vweird.f32 %v749
      %vm757 = vmor %vm755, %vm756
      %v758 = vsel %vm757, %v749, %v754
      %v759 = vrsqrt.pop %v671
      %v760 = vmul.f32 %v759, %v671
      %v761 = vmul.f32 %v760, %v759
      %v762 = vmul.f32 0.5, %v761
      %v763 = vsub.f32 1.5, %v762
      %v764 = vmul.f32 %v759, %v763
      %vm765 = vweird.f32 %v671
      %vm766 = vweird.f32 %v759
      %vm767 = vmor %vm765, %vm766
      %v768 = vsel %vm767, %v759, %v764
      %v769 = vrsqrt.pop %v672
      %v770 = vmul.f32 %v769, %v672
      %v771 = vmul.f32 %v770, %v769
      %v772 = vmul.f32 0.5, %v771
      %v773 = vsub.f32 1.5, %v772
      %v774 = vmul.f32 %v769, %v773
      %vm775 = vweird.f32 %v672
      %vm776 = vweird.f32 %v769
      %vm777 = vmor %vm775, %vm776
      %v778 = vsel %vm777, %v769, %v774
      %v779 = vrsqrt.pop %v673
      %v780 = vmul.f32 %v779, %v673
      %v781 = vmul.f32 %v780, %v779
      %v782 = vmul.f32 0.5, %v781
      %v783 = vsub.f32 1.5, %v782
      %v784 = vmul.f32 %v779, %v783
      %vm785 = vweird.f32 %v673
      %vm786 = vweird.f32 %v779
      %vm787 = vmor %vm785, %vm786
      %v788 = vsel %vm787, %v779, %v784
      %v789 = vrsqrt.pop %v674
      %v790 = vmul.f32 %v789, %v674
      %v791 = vmul.f32 %v790, %v789
      %v792 = vmul.f32 0.5, %v791
      %v793 = vsub.f32 1.5, %v792
      %v794 = vmul.f32 %v789, %v793
      %vm795 = vweird.f32 %v674
      %vm796 = vweird.f32 %v789
      %vm797 = vmor %vm795, %vm796
      %v798 = vsel %vm797, %v789, %v794
      %v799 = vrsqrt.pop %v675
      %v800 = vmul.f32 %v799, %v675
      %v801 = vmul.f32 %v800, %v799
      %v802 = vmul.f32 0.5, %v801
      %v803 = vsub.f32 1.5, %v802
      %v804 = vmul.f32 %v799, %v803
      %vm805 = vweird.f32 %v675
      %vm806 = vweird.f32 %v799
      %vm807 = vmor %vm805, %vm806
      %v808 = vsel %vm807, %v799, %v804
      %v809 = vrsqrt.pop %v676
      %v810 = vmul.f32 %v809, %v676
      %v811 = vmul.f32 %v810, %v809
      %v812 = vmul.f32 0.5, %v811
      %v813 = vsub.f32 1.5, %v812
      %v814 = vmul.f32 %v809, %v813
      %vm815 = vweird.f32 %v676
      %vm816 = vweird.f32 %v809
      %vm817 = vmor %vm815, %vm816
      %v818 = vsel %vm817, %v809, %v814
      %v819 = vrsqrt.pop %v677
      %v820 = vmul.f32 %v819, %v677
      %v821 = vmul.f32 %v820, %v819
      %v822 = vmul.f32 0.5, %v821
      %v823 = vsub.f32 1.5, %v822
      %v824 = vmul.f32 %v819, %v823
      %vm825 = vweird.f32 %v677
      %vm826 = vweird.f32 %v819
      %vm827 = vmor %vm825, %vm826
      %v828 = vsel %vm827, %v819, %v824
      %v829 = vrsqrt.pop %v678
      %v830 = vmul.f32 %v829, %v678
      %v831 = vmul.f32 %v830, %v829
      %v832 = vmul.f32 0.5, %v831
      %v833 = vsub.f32 1.5, %v832
      %v834 = vmul.f32 %v829, %v833
      %vm835 = vweird.f32 %v678
      %vm836 = vweird.f32 %v829
      %vm837 = vmor %vm835, %vm836
      %v838 = vsel %vm837, %v829, %v834
      %v839 = vmul.f32 %v567, %v688
      %v840 = vmul.f32 %v568, %v698
      %v841 = vmul.f32 %v569, %v708
      %v842 = vmul.f32 %v570, %v718
      %v843 = vmul.f32 %v571, %v728
      %v844 = vmul.f32 %v572, %v738
      %v845 = vmul.f32 %v573, %v748
      %v846 = vmul.f32 %v574, %v758
      %v847 = vmul.f32 %v575, %v768
      %v848 = vmul.f32 %v576, %v778
      %v849 = vmul.f32 %v577, %v788
      %v850 = vmul.f32 %v578, %v798
      %v851 = vmul.f32 %v579, %v808
      %v852 = vmul.f32 %v580, %v818
      %v853 = vmul.f32 %v581, %v828
      %v854 = vmul.f32 %v582, %v838
      %v856 = vperm.slane %v493, 0
      %v858 = vmul.f32 %v839, %v856
      %v859 = vmul.f32 %v840, %v856
      %v860 = vmul.f32 %v841, %v856
      %v861 = vmul.f32 %v842, %v856
      %v862 = vmul.f32 %v843, %v856
      %v863 = vmul.f32 %v844, %v856
      %v864 = vmul.f32 %v845, %v856
      %v865 = vmul.f32 %v846, %v856
      %v866 = vmul.f32 %v847, %v856
      %v867 = vmul.f32 %v848, %v856
      %v868 = vmul.f32 %v849, %v856
      %v869 = vmul.f32 %v850, %v856
      %v870 = vmul.f32 %v851, %v856
      %v871 = vmul.f32 %v852, %v856
      %v872 = vmul.f32 %v853, %v856
      %v873 = vmul.f32 %v854, %v856
      %v875 = vperm.slane %v494, 0
      %v877 = vadd.f32 %v858, %v875
      %v878 = vadd.f32 %v859, %v875
      %v879 = vadd.f32 %v860, %v875
      %v880 = vadd.f32 %v861, %v875
      %v881 = vadd.f32 %v862, %v875
      %v882 = vadd.f32 %v863, %v875
      %v883 = vadd.f32 %v864, %v875
      %v884 = vadd.f32 %v865, %v875
      %v885 = vadd.f32 %v866, %v875
      %v886 = vadd.f32 %v867, %v875
      %v887 = vadd.f32 %v868, %v875
      %v888 = vadd.f32 %v869, %v875
      %v889 = vadd.f32 %v870, %v875
      %v890 = vadd.f32 %v871, %v875
      %v891 = vadd.f32 %v872, %v875
      %v892 = vadd.f32 %v873, %v875
      %v893 = vpack.c.bf16 %v878, %v877
      %v894 = vpack.c.bf16 %v880, %v879
      %v895 = vpack.c.bf16 %v882, %v881
      %v896 = vpack.c.bf16 %v884, %v883
      %v897 = vpack.c.bf16 %v886, %v885
      %v898 = vpack.c.bf16 %v888, %v887
      %v899 = vpack.c.bf16 %v890, %v889
      %v900 = vpack.c.bf16 %v892, %v891
      %v901 = vld [vmem:[%s3] sm:$0xf]
      %v902 = vld [vmem:[%s3 + $0x4] sm:$0xf]
      %v903 = vld [vmem:[%s3 + $0x8] sm:$0xf]
      %v904 = vld [vmem:[%s3 + $0xc] sm:$0xf]
      %v909 = vunpack.c.l.b16 %v901
      %v910 = vunpack.c.l.b16 %v902
      %v911 = vunpack.c.l.b16 %v903
      %v912 = vunpack.c.l.b16 %v904
      %v913 = vpack.c.b16 %v910, %v909
      %v914 = vpack.c.b16 %v912, %v911
      %v918 = vsel %vm495, %v893, 0
      %v921 = vsel %vm495, %v894, 0
      %v924 = vsel %vm495, %v895, 0
      %v927 = vsel %vm495, %v896, 0
      %v930 = vsel %vm495, %v897, 0
      %v933 = vsel %vm495, %v898, 0
      %v936 = vsel %vm495, %v899, 0
      %v939 = vsel %vm495, %v900, 0
      %941 = vmatpush.bf16.msra.mxu0 0
      %942 = vmatpush.bf16.msra.mxu0 0
      %943 = vmatpush.bf16.msra.mxu0 0
      %944 = vmatpush.bf16.msra.mxu0 0
      %945 = vmatpush.bf16.msra.mxu0 0
      %946 = vmatpush.bf16.msra.mxu0 0
      %947 = vmatpush.bf16.msra.mxu0 %v914
      %948 = vmatpush.bf16.msra.mxu0 %v913
      %949 = vmatmul.bf16.gmra.mxu0 %v918
      %v950 = vpop.f32.mrf.mxu0
      %v951 = vadd.f32 0.0, %v950
      %v952 = vpop.f32.mrf.mxu0
      %v953 = vadd.f32 0.0, %v952
      %954 = vmatmul.bf16.gmra.mxu0 %v921
      %v955 = vpop.f32.mrf.mxu0
      %v956 = vadd.f32 0.0, %v955
      %v957 = vpop.f32.mrf.mxu0
      %v958 = vadd.f32 0.0, %v957
      %959 = vmatmul.bf16.gmra.mxu0 %v924
      %v960 = vpop.f32.mrf.mxu0
      %v961 = vadd.f32 0.0, %v960
      %v962 = vpop.f32.mrf.mxu0
      %v963 = vadd.f32 0.0, %v962
      %964 = vmatmul.bf16.gmra.mxu0 %v927
      %v965 = vpop.f32.mrf.mxu0
      %v966 = vadd.f32 0.0, %v965
      %v967 = vpop.f32.mrf.mxu0
      %v968 = vadd.f32 0.0, %v967
      %969 = vmatmul.bf16.gmra.mxu0 %v930
      %v970 = vpop.f32.mrf.mxu0
      %v971 = vadd.f32 0.0, %v970
      %v972 = vpop.f32.mrf.mxu0
      %v973 = vadd.f32 0.0, %v972
      %974 = vmatmul.bf16.gmra.mxu0 %v933
      %v975 = vpop.f32.mrf.mxu0
      %v976 = vadd.f32 0.0, %v975
      %v977 = vpop.f32.mrf.mxu0
      %v978 = vadd.f32 0.0, %v977
      %979 = vmatmul.bf16.gmra.mxu0 %v936
      %v980 = vpop.f32.mrf.mxu0
      %v981 = vadd.f32 0.0, %v980
      %v982 = vpop.f32.mrf.mxu0
      %v983 = vadd.f32 0.0, %v982
      %984 = vmatmul.bf16.gmra.mxu0 %v939
      %v985 = vpop.f32.mrf.mxu0
      %v986 = vadd.f32 0.0, %v985
      %v987 = vpop.f32.mrf.mxu0
      %v988 = vadd.f32 0.0, %v987
      %989 = vdwg.mxu0
      %v990 = vpack.c.bf16 %v951, %v951
      %v991 = vpack.c.bf16 %v953, %v953
      %v992 = vpack.c.bf16 %v956, %v956
      %v993 = vpack.c.bf16 %v958, %v958
      %v994 = vpack.c.bf16 %v961, %v961
      %v995 = vpack.c.bf16 %v963, %v963
      %v996 = vpack.c.bf16 %v966, %v966
      %v997 = vpack.c.bf16 %v968, %v968
      %v998 = vpack.c.bf16 %v971, %v971
      %v999 = vpack.c.bf16 %v973, %v973
      %v1000 = vpack.c.bf16 %v976, %v976
      %v1001 = vpack.c.bf16 %v978, %v978
      %v1002 = vpack.c.bf16 %v981, %v981
      %v1003 = vpack.c.bf16 %v983, %v983
      %v1004 = vpack.c.bf16 %v986, %v986
      %v1005 = vpack.c.bf16 %v988, %v988
      %v1014 = vunpack.c.l.b16 %v990
      %v1015 = vunpack.c.l.b16 %v991
      %v1016 = vunpack.c.l.b16 %v992
      %v1017 = vunpack.c.l.b16 %v993
      %v1018 = vunpack.c.l.b16 %v994
      %v1019 = vunpack.c.l.b16 %v995
      %v1020 = vunpack.c.l.b16 %v996
      %v1021 = vunpack.c.l.b16 %v997
      %v1022 = vpack.c.b16 %v1015, %v1014
      %v1023 = vpack.c.b16 %v1017, %v1016
      %v1024 = vpack.c.b16 %v1019, %v1018
      %v1025 = vpack.c.b16 %v1021, %v1020
      %1026 = vrot.lane.b32.xlu0 %v1022, 96
      %v1027 = vpop.permute.xlu0 %1026
      %1028 = vrot.lane.b32.xlu0 %v1023, 96
      %v1029 = vpop.permute.xlu0 %1028
      %1030 = vrot.lane.b32.xlu0 %v1024, 96
      %v1031 = vpop.permute.xlu0 %1030
      %1032 = vrot.lane.b32.xlu0 %v1025, 96
      %v1033 = vpop.permute.xlu0 %1032
      %vm1034 = vcmask 64512
      %v1036 = vsel %vm1034, %v1022, 0
      %v1039 = vsel %vm1034, %v1023, 0
      %v1042 = vsel %vm1034, %v1024, 0
      %v1045 = vsel %vm1034, %v1025, 0
      %v1048 = vsel %vm1034, %v1027, 0
      %v1051 = vsel %vm1034, %v1029, 0
      %v1054 = vsel %vm1034, %v1031, 0
      %v1057 = vsel %vm1034, %v1033, 0
      %1059 = vmatpush.bf16.xpose.msra.mxu0 0
      %1060 = vmatpush.bf16.xpose.msra.mxu0 0
      %1061 = vmatpush.bf16.xpose.msra.mxu0 0
      %1062 = vmatpush.bf16.xpose.msra.mxu0 0
      %1063 = vmatpush.bf16.xpose.msra.mxu0 %v1057
      %1064 = vmatpush.bf16.xpose.msra.mxu0 %v1054
      %1065 = vmatpush.bf16.xpose.msra.mxu0 %v1051
      %1066 = vmatpush.bf16.xpose.msra.mxu0 %v1048
      %1067 = vmatmul.bf16.gmra.mxu0 %v1036
      %v1068 = vpop.f32.mrf.mxu0
      %v1069 = vadd.f32 0.0, %v1068
      %v1070 = vpop.f32.mrf.mxu0
      %v1071 = vadd.f32 0.0, %v1070
      %1072 = vmatmul.bf16.gmra.mxu0 %v1039
      %v1073 = vpop.f32.mrf.mxu0
      %v1074 = vadd.f32 0.0, %v1073
      %v1075 = vpop.f32.mrf.mxu0
      %v1076 = vadd.f32 0.0, %v1075
      %1077 = vmatmul.bf16.gmra.mxu0 %v1042
      %v1078 = vpop.f32.mrf.mxu0
      %v1079 = vadd.f32 0.0, %v1078
      %v1080 = vpop.f32.mrf.mxu0
      %v1081 = vadd.f32 0.0, %v1080
      %1082 = vmatmul.bf16.gmra.mxu0 %v1045
      %v1083 = vpop.f32.mrf.mxu0
      %v1084 = vadd.f32 0.0, %v1083
      %v1085 = vpop.f32.mrf.mxu0
      %v1086 = vadd.f32 0.0, %v1085
      %1087 = vdwg.mxu0
      %v1096 = vunpack.c.l.b16 %v998
      %v1097 = vunpack.c.l.b16 %v999
      %v1098 = vunpack.c.l.b16 %v1000
      %v1099 = vunpack.c.l.b16 %v1001
      %v1100 = vunpack.c.l.b16 %v1002
      %v1101 = vunpack.c.l.b16 %v1003
      %v1102 = vunpack.c.l.b16 %v1004
      %v1103 = vunpack.c.l.b16 %v1005
      %v1104 = vpack.c.b16 %v1097, %v1096
      %v1105 = vpack.c.b16 %v1099, %v1098
      %v1106 = vpack.c.b16 %v1101, %v1100
      %v1107 = vpack.c.b16 %v1103, %v1102
      %1108 = vrot.lane.b32.xlu0 %v1104, 96
      %v1109 = vpop.permute.xlu0 %1108
      %1110 = vrot.lane.b32.xlu0 %v1105, 96
      %v1111 = vpop.permute.xlu0 %1110
      %1112 = vrot.lane.b32.xlu0 %v1106, 96
      %v1113 = vpop.permute.xlu0 %1112
      %1114 = vrot.lane.b32.xlu0 %v1107, 96
      %v1115 = vpop.permute.xlu0 %1114
      %v1117 = vsel %vm1034, %v1104, 0
      %v1120 = vsel %vm1034, %v1105, 0
      %v1123 = vsel %vm1034, %v1106, 0
      %v1126 = vsel %vm1034, %v1107, 0
      %v1129 = vsel %vm1034, %v1109, 0
      %v1132 = vsel %vm1034, %v1111, 0
      %v1135 = vsel %vm1034, %v1113, 0
      %v1138 = vsel %vm1034, %v1115, 0
      %1140 = vmatpush.bf16.xpose.msra.mxu0 0
      %1141 = vmatpush.bf16.xpose.msra.mxu0 0
      %1142 = vmatpush.bf16.xpose.msra.mxu0 0
      %1143 = vmatpush.bf16.xpose.msra.mxu0 0
      %1144 = vmatpush.bf16.xpose.msra.mxu0 %v1138
      %1145 = vmatpush.bf16.xpose.msra.mxu0 %v1135
      %1146 = vmatpush.bf16.xpose.msra.mxu0 %v1132
      %1147 = vmatpush.bf16.xpose.msra.mxu0 %v1129
      %1148 = vmatmul.bf16.gmra.mxu0 %v1117
      %v1149 = vpop.f32.mrf.mxu0
      %v1150 = vadd.f32 0.0, %v1149
      %v1151 = vpop.f32.mrf.mxu0
      %v1152 = vadd.f32 0.0, %v1151
      %1153 = vmatmul.bf16.gmra.mxu0 %v1120
      %v1154 = vpop.f32.mrf.mxu0
      %v1155 = vadd.f32 0.0, %v1154
      %v1156 = vpop.f32.mrf.mxu0
      %v1157 = vadd.f32 0.0, %v1156
      %1158 = vmatmul.bf16.gmra.mxu0 %v1123
      %v1159 = vpop.f32.mrf.mxu0
      %v1160 = vadd.f32 0.0, %v1159
      %v1161 = vpop.f32.mrf.mxu0
      %v1162 = vadd.f32 0.0, %v1161
      %1163 = vmatmul.bf16.gmra.mxu0 %v1126
      %v1164 = vpop.f32.mrf.mxu0
      %v1165 = vadd.f32 0.0, %v1164
      %v1166 = vpop.f32.mrf.mxu0
      %v1167 = vadd.f32 0.0, %v1166
      %1168 = vdwg.mxu0
      %vm1169 = vcmask 523264
      %v1170 = vsel %vm1169, %v1069, -inf
      %1171 = vmax.xlane.f32.xlu0 %v1170
      %v1172 = vpop.xlane.xlu0 %1171
      %v1173 = vsel %vm1169, %v1071, -inf
      %1174 = vmax.xlane.f32.xlu0 %v1173
      %v1175 = vpop.xlane.xlu0 %1174
      %v1176 = vsel %vm1169, %v1074, -inf
      %1177 = vmax.xlane.f32.xlu0 %v1176
      %v1178 = vpop.xlane.xlu0 %1177
      %v1179 = vsel %vm1169, %v1076, -inf
      %1180 = vmax.xlane.f32.xlu0 %v1179
      %v1181 = vpop.xlane.xlu0 %1180
      %v1182 = vsel %vm1169, %v1079, -inf
      %1183 = vmax.xlane.f32.xlu0 %v1182
      %v1184 = vpop.xlane.xlu0 %1183
      %v1185 = vsel %vm1169, %v1081, -inf
      %1186 = vmax.xlane.f32.xlu0 %v1185
      %v1187 = vpop.xlane.xlu0 %1186
      %v1188 = vsel %vm1169, %v1084, -inf
      %1189 = vmax.xlane.f32.xlu0 %v1188
      %v1190 = vpop.xlane.xlu0 %1189
      %v1191 = vsel %vm1169, %v1086, -inf
      %1192 = vmax.xlane.f32.xlu0 %v1191
      %v1193 = vpop.xlane.xlu0 %1192
      %v1194 = vsel %vm1169, %v1150, -inf
      %1195 = vmax.xlane.f32.xlu0 %v1194
      %v1196 = vpop.xlane.xlu0 %1195
      %v1197 = vsel %vm1169, %v1152, -inf
      %1198 = vmax.xlane.f32.xlu0 %v1197
      %v1199 = vpop.xlane.xlu0 %1198
      %v1200 = vsel %vm1169, %v1155, -inf
      %1201 = vmax.xlane.f32.xlu0 %v1200
      %v1202 = vpop.xlane.xlu0 %1201
      %v1203 = vsel %vm1169, %v1157, -inf
      %1204 = vmax.xlane.f32.xlu0 %v1203
      %v1205 = vpop.xlane.xlu0 %1204
      %v1206 = vsel %vm1169, %v1160, -inf
      %1207 = vmax.xlane.f32.xlu0 %v1206
      %v1208 = vpop.xlane.xlu0 %1207
      %v1209 = vsel %vm1169, %v1162, -inf
      %1210 = vmax.xlane.f32.xlu0 %v1209
      %v1211 = vpop.xlane.xlu0 %1210
      %v1212 = vsel %vm1169, %v1165, -inf
      %1213 = vmax.xlane.f32.xlu0 %v1212
      %v1214 = vpop.xlane.xlu0 %1213
      %v1215 = vsel %vm1169, %v1167, -inf
      %1216 = vmax.xlane.f32.xlu0 %v1215
      %v1217 = vpop.xlane.xlu0 %1216
      %v1218 = vsub.f32 %v1069, %v1172
      %v1219 = vsub.f32 %v1071, %v1175
      %v1220 = vsub.f32 %v1074, %v1178
      %v1221 = vsub.f32 %v1076, %v1181
      %v1222 = vsub.f32 %v1079, %v1184
      %v1223 = vsub.f32 %v1081, %v1187
      %v1224 = vsub.f32 %v1084, %v1190
      %v1225 = vsub.f32 %v1086, %v1193
      %v1226 = vsub.f32 %v1150, %v1196
      %v1227 = vsub.f32 %v1152, %v1199
      %v1228 = vsub.f32 %v1155, %v1202
      %v1229 = vsub.f32 %v1157, %v1205
      %v1230 = vsub.f32 %v1160, %v1208
      %v1231 = vsub.f32 %v1162, %v1211
      %v1232 = vsub.f32 %v1165, %v1214
      %v1233 = vsub.f32 %v1167, %v1217
      %v1234 = vmul.f32 %v1218, 1.442695
      %v1235 = vpow.pop %v1234
      %v1236 = vmul.f32 %v1219, 1.442695
      %v1237 = vpow.pop %v1236
      %v1238 = vmul.f32 %v1220, 1.442695
      %v1239 = vpow.pop %v1238
      %v1240 = vmul.f32 %v1221, 1.442695
      %v1241 = vpow.pop %v1240
      %v1242 = vmul.f32 %v1222, 1.442695
      %v1243 = vpow.pop %v1242
      %v1244 = vmul.f32 %v1223, 1.442695
      %v1245 = vpow.pop %v1244
      %v1246 = vmul.f32 %v1224, 1.442695
      %v1247 = vpow.pop %v1246
      %v1248 = vmul.f32 %v1225, 1.442695
      %v1249 = vpow.pop %v1248
      %v1250 = vmul.f32 %v1226, 1.442695
      %v1251 = vpow.pop %v1250
      %v1252 = vmul.f32 %v1227, 1.442695
      %v1253 = vpow.pop %v1252
      %v1254 = vmul.f32 %v1228, 1.442695
      %v1255 = vpow.pop %v1254
      %v1256 = vmul.f32 %v1229, 1.442695
      %v1257 = vpow.pop %v1256
      %v1258 = vmul.f32 %v1230, 1.442695
      %v1259 = vpow.pop %v1258
      %v1260 = vmul.f32 %v1231, 1.442695
      %v1261 = vpow.pop %v1260
      %v1262 = vmul.f32 %v1232, 1.442695
      %v1263 = vpow.pop %v1262
      %v1264 = vmul.f32 %v1233, 1.442695
      %v1265 = vpow.pop %v1264
      %v1266 = vsel %vm1169, %v1235, 0.0
      %1267 = vadd.xlane.f32.xlu0 %v1266
      %v1268 = vpop.xlane.xlu0 %1267
      %v1269 = vsel %vm1169, %v1237, 0.0
      %1270 = vadd.xlane.f32.xlu0 %v1269
      %v1271 = vpop.xlane.xlu0 %1270
      %v1272 = vsel %vm1169, %v1239, 0.0
      %1273 = vadd.xlane.f32.xlu0 %v1272
      %v1274 = vpop.xlane.xlu0 %1273
      %v1275 = vsel %vm1169, %v1241, 0.0
      %1276 = vadd.xlane.f32.xlu0 %v1275
      %v1277 = vpop.xlane.xlu0 %1276
      %v1278 = vsel %vm1169, %v1243, 0.0
      %1279 = vadd.xlane.f32.xlu0 %v1278
      %v1280 = vpop.xlane.xlu0 %1279
      %v1281 = vsel %vm1169, %v1245, 0.0
      %1282 = vadd.xlane.f32.xlu0 %v1281
      %v1283 = vpop.xlane.xlu0 %1282
      %v1284 = vsel %vm1169, %v1247, 0.0
      %1285 = vadd.xlane.f32.xlu0 %v1284
      %v1286 = vpop.xlane.xlu0 %1285
      %v1287 = vsel %vm1169, %v1249, 0.0
      %1288 = vadd.xlane.f32.xlu0 %v1287
      %v1289 = vpop.xlane.xlu0 %1288
      %v1290 = vsel %vm1169, %v1251, 0.0
      %1291 = vadd.xlane.f32.xlu0 %v1290
      %v1292 = vpop.xlane.xlu0 %1291
      %v1293 = vsel %vm1169, %v1253, 0.0
      %1294 = vadd.xlane.f32.xlu0 %v1293
      %v1295 = vpop.xlane.xlu0 %1294
      %v1296 = vsel %vm1169, %v1255, 0.0
      %1297 = vadd.xlane.f32.xlu0 %v1296
      %v1298 = vpop.xlane.xlu0 %1297
      %v1299 = vsel %vm1169, %v1257, 0.0
      %1300 = vadd.xlane.f32.xlu0 %v1299
      %v1301 = vpop.xlane.xlu0 %1300
      %v1302 = vsel %vm1169, %v1259, 0.0
      %1303 = vadd.xlane.f32.xlu0 %v1302
      %v1304 = vpop.xlane.xlu0 %1303
      %v1305 = vsel %vm1169, %v1261, 0.0
      %1306 = vadd.xlane.f32.xlu0 %v1305
      %v1307 = vpop.xlane.xlu0 %1306
      %v1308 = vsel %vm1169, %v1263, 0.0
      %1309 = vadd.xlane.f32.xlu0 %v1308
      %v1310 = vpop.xlane.xlu0 %1309
      %v1311 = vsel %vm1169, %v1265, 0.0
      %1312 = vadd.xlane.f32.xlu0 %v1311
      %v1313 = vpop.xlane.xlu0 %1312
      %v1314 = vrcp.pop %v1268
      %v1315 = vmul.f32 %v1268, %v1314
      %v1316 = vsub.f32 1.0, %v1315
      %v1317 = vmul.f32 %v1314, %v1316
      %v1318 = vadd.f32 %v1314, %v1317
      %vm1319 = vweird.f32 %v1268
      %vm1320 = vweird.f32 %v1314
      %vm1321 = vmor %vm1319, %vm1320
      %v1322 = vsel %vm1321, %v1314, %v1318
      %v1323 = vand.u32 2147483647, %v1268
      %vm1324 = vcmp.eq.f32.partialorder %v1323, 8.507059e+37
      %v1325 = vand.u32 %v1268, 2147483648
      %v1326 = vor.u32 1.1754944e-38, %v1325
      %v1327 = vsel %vm1324, %v1326, %v1322
      %v1328 = vmul.f32 1.0, %v1327
      %v1329 = vrcp.pop %v1271
      %v1330 = vmul.f32 %v1271, %v1329
      %v1331 = vsub.f32 1.0, %v1330
      %v1332 = vmul.f32 %v1329, %v1331
      %v1333 = vadd.f32 %v1329, %v1332
      %vm1334 = vweird.f32 %v1271
      %vm1335 = vweird.f32 %v1329
      %vm1336 = vmor %vm1334, %vm1335
      %v1337 = vsel %vm1336, %v1329, %v1333
      %v1338 = vand.u32 2147483647, %v1271
      %vm1339 = vcmp.eq.f32.partialorder %v1338, 8.507059e+37
      %v1340 = vand.u32 %v1271, 2147483648
      %v1341 = vor.u32 1.1754944e-38, %v1340
      %v1342 = vsel %vm1339, %v1341, %v1337
      %v1343 = vmul.f32 1.0, %v1342
      %v1344 = vrcp.pop %v1274
      %v1345 = vmul.f32 %v1274, %v1344
      %v1346 = vsub.f32 1.0, %v1345
      %v1347 = vmul.f32 %v1344, %v1346
      %v1348 = vadd.f32 %v1344, %v1347
      %vm1349 = vweird.f32 %v1274
      %vm1350 = vweird.f32 %v1344
      %vm1351 = vmor %vm1349, %vm1350
      %v1352 = vsel %vm1351, %v1344, %v1348
      %v1353 = vand.u32 2147483647, %v1274
      %vm1354 = vcmp.eq.f32.partialorder %v1353, 8.507059e+37
      %v1355 = vand.u32 %v1274, 2147483648
      %v1356 = vor.u32 1.1754944e-38, %v1355
      %v1357 = vsel %vm1354, %v1356, %v1352
      %v1358 = vmul.f32 1.0, %v1357
      %v1359 = vrcp.pop %v1277
      %v1360 = vmul.f32 %v1277, %v1359
      %v1361 = vsub.f32 1.0, %v1360
      %v1362 = vmul.f32 %v1359, %v1361
      %v1363 = vadd.f32 %v1359, %v1362
      %vm1364 = vweird.f32 %v1277
      %vm1365 = vweird.f32 %v1359
      %vm1366 = vmor %vm1364, %vm1365
      %v1367 = vsel %vm1366, %v1359, %v1363
      %v1368 = vand.u32 2147483647, %v1277
      %vm1369 = vcmp.eq.f32.partialorder %v1368, 8.507059e+37
      %v1370 = vand.u32 %v1277, 2147483648
      %v1371 = vor.u32 1.1754944e-38, %v1370
      %v1372 = vsel %vm1369, %v1371, %v1367
      %v1373 = vmul.f32 1.0, %v1372
      %v1374 = vrcp.pop %v1280
      %v1375 = vmul.f32 %v1280, %v1374
      %v1376 = vsub.f32 1.0, %v1375
      %v1377 = vmul.f32 %v1374, %v1376
      %v1378 = vadd.f32 %v1374, %v1377
      %vm1379 = vweird.f32 %v1280
      %vm1380 = vweird.f32 %v1374
      %vm1381 = vmor %vm1379, %vm1380
      %v1382 = vsel %vm1381, %v1374, %v1378
      %v1383 = vand.u32 2147483647, %v1280
      %vm1384 = vcmp.eq.f32.partialorder %v1383, 8.507059e+37
      %v1385 = vand.u32 %v1280, 2147483648
      %v1386 = vor.u32 1.1754944e-38, %v1385
      %v1387 = vsel %vm1384, %v1386, %v1382
      %v1388 = vmul.f32 1.0, %v1387
      %v1389 = vrcp.pop %v1283
      %v1390 = vmul.f32 %v1283, %v1389
      %v1391 = vsub.f32 1.0, %v1390
      %v1392 = vmul.f32 %v1389, %v1391
      %v1393 = vadd.f32 %v1389, %v1392
      %vm1394 = vweird.f32 %v1283
      %vm1395 = vweird.f32 %v1389
      %vm1396 = vmor %vm1394, %vm1395
      %v1397 = vsel %vm1396, %v1389, %v1393
      %v1398 = vand.u32 2147483647, %v1283
      %vm1399 = vcmp.eq.f32.partialorder %v1398, 8.507059e+37
      %v1400 = vand.u32 %v1283, 2147483648
      %v1401 = vor.u32 1.1754944e-38, %v1400
      %v1402 = vsel %vm1399, %v1401, %v1397
      %v1403 = vmul.f32 1.0, %v1402
      %v1404 = vrcp.pop %v1286
      %v1405 = vmul.f32 %v1286, %v1404
      %v1406 = vsub.f32 1.0, %v1405
      %v1407 = vmul.f32 %v1404, %v1406
      %v1408 = vadd.f32 %v1404, %v1407
      %vm1409 = vweird.f32 %v1286
      %vm1410 = vweird.f32 %v1404
      %vm1411 = vmor %vm1409, %vm1410
      %v1412 = vsel %vm1411, %v1404, %v1408
      %v1413 = vand.u32 2147483647, %v1286
      %vm1414 = vcmp.eq.f32.partialorder %v1413, 8.507059e+37
      %v1415 = vand.u32 %v1286, 2147483648
      %v1416 = vor.u32 1.1754944e-38, %v1415
      %v1417 = vsel %vm1414, %v1416, %v1412
      %v1418 = vmul.f32 1.0, %v1417
      %v1419 = vrcp.pop %v1289
      %v1420 = vmul.f32 %v1289, %v1419
      %v1421 = vsub.f32 1.0, %v1420
      %v1422 = vmul.f32 %v1419, %v1421
      %v1423 = vadd.f32 %v1419, %v1422
      %vm1424 = vweird.f32 %v1289
      %vm1425 = vweird.f32 %v1419
      %vm1426 = vmor %vm1424, %vm1425
      %v1427 = vsel %vm1426, %v1419, %v1423
      %v1428 = vand.u32 2147483647, %v1289
      %vm1429 = vcmp.eq.f32.partialorder %v1428, 8.507059e+37
      %v1430 = vand.u32 %v1289, 2147483648
      %v1431 = vor.u32 1.1754944e-38, %v1430
      %v1432 = vsel %vm1429, %v1431, %v1427
      %v1433 = vmul.f32 1.0, %v1432
      %v1434 = vrcp.pop %v1292
      %v1435 = vmul.f32 %v1292, %v1434
      %v1436 = vsub.f32 1.0, %v1435
      %v1437 = vmul.f32 %v1434, %v1436
      %v1438 = vadd.f32 %v1434, %v1437
      %vm1439 = vweird.f32 %v1292
      %vm1440 = vweird.f32 %v1434
      %vm1441 = vmor %vm1439, %vm1440
      %v1442 = vsel %vm1441, %v1434, %v1438
      %v1443 = vand.u32 2147483647, %v1292
      %vm1444 = vcmp.eq.f32.partialorder %v1443, 8.507059e+37
      %v1445 = vand.u32 %v1292, 2147483648
      %v1446 = vor.u32 1.1754944e-38, %v1445
      %v1447 = vsel %vm1444, %v1446, %v1442
      %v1448 = vmul.f32 1.0, %v1447
      %v1449 = vrcp.pop %v1295
      %v1450 = vmul.f32 %v1295, %v1449
      %v1451 = vsub.f32 1.0, %v1450
      %v1452 = vmul.f32 %v1449, %v1451
      %v1453 = vadd.f32 %v1449, %v1452
      %vm1454 = vweird.f32 %v1295
      %vm1455 = vweird.f32 %v1449
      %vm1456 = vmor %vm1454, %vm1455
      %v1457 = vsel %vm1456, %v1449, %v1453
      %v1458 = vand.u32 2147483647, %v1295
      %vm1459 = vcmp.eq.f32.partialorder %v1458, 8.507059e+37
      %v1460 = vand.u32 %v1295, 2147483648
      %v1461 = vor.u32 1.1754944e-38, %v1460
      %v1462 = vsel %vm1459, %v1461, %v1457
      %v1463 = vmul.f32 1.0, %v1462
      %v1464 = vrcp.pop %v1298
      %v1465 = vmul.f32 %v1298, %v1464
      %v1466 = vsub.f32 1.0, %v1465
      %v1467 = vmul.f32 %v1464, %v1466
      %v1468 = vadd.f32 %v1464, %v1467
      %vm1469 = vweird.f32 %v1298
      %vm1470 = vweird.f32 %v1464
      %vm1471 = vmor %vm1469, %vm1470
      %v1472 = vsel %vm1471, %v1464, %v1468
      %v1473 = vand.u32 2147483647, %v1298
      %vm1474 = vcmp.eq.f32.partialorder %v1473, 8.507059e+37
      %v1475 = vand.u32 %v1298, 2147483648
      %v1476 = vor.u32 1.1754944e-38, %v1475
      %v1477 = vsel %vm1474, %v1476, %v1472
      %v1478 = vmul.f32 1.0, %v1477
      %v1479 = vrcp.pop %v1301
      %v1480 = vmul.f32 %v1301, %v1479
      %v1481 = vsub.f32 1.0, %v1480
      %v1482 = vmul.f32 %v1479, %v1481
      %v1483 = vadd.f32 %v1479, %v1482
      %vm1484 = vweird.f32 %v1301
      %vm1485 = vweird.f32 %v1479
      %vm1486 = vmor %vm1484, %vm1485
      %v1487 = vsel %vm1486, %v1479, %v1483
      %v1488 = vand.u32 2147483647, %v1301
      %vm1489 = vcmp.eq.f32.partialorder %v1488, 8.507059e+37
      %v1490 = vand.u32 %v1301, 2147483648
      %v1491 = vor.u32 1.1754944e-38, %v1490
      %v1492 = vsel %vm1489, %v1491, %v1487
      %v1493 = vmul.f32 1.0, %v1492
      %v1494 = vrcp.pop %v1304
      %v1495 = vmul.f32 %v1304, %v1494
      %v1496 = vsub.f32 1.0, %v1495
      %v1497 = vmul.f32 %v1494, %v1496
      %v1498 = vadd.f32 %v1494, %v1497
      %vm1499 = vweird.f32 %v1304
      %vm1500 = vweird.f32 %v1494
      %vm1501 = vmor %vm1499, %vm1500
      %v1502 = vsel %vm1501, %v1494, %v1498
      %v1503 = vand.u32 2147483647, %v1304
      %vm1504 = vcmp.eq.f32.partialorder %v1503, 8.507059e+37
      %v1505 = vand.u32 %v1304, 2147483648
      %v1506 = vor.u32 1.1754944e-38, %v1505
      %v1507 = vsel %vm1504, %v1506, %v1502
      %v1508 = vmul.f32 1.0, %v1507
      %v1509 = vrcp.pop %v1307
      %v1510 = vmul.f32 %v1307, %v1509
      %v1511 = vsub.f32 1.0, %v1510
      %v1512 = vmul.f32 %v1509, %v1511
      %v1513 = vadd.f32 %v1509, %v1512
      %vm1514 = vweird.f32 %v1307
      %vm1515 = vweird.f32 %v1509
      %vm1516 = vmor %vm1514, %vm1515
      %v1517 = vsel %vm1516, %v1509, %v1513
      %v1518 = vand.u32 2147483647, %v1307
      %vm1519 = vcmp.eq.f32.partialorder %v1518, 8.507059e+37
      %v1520 = vand.u32 %v1307, 2147483648
      %v1521 = vor.u32 1.1754944e-38, %v1520
      %v1522 = vsel %vm1519, %v1521, %v1517
      %v1523 = vmul.f32 1.0, %v1522
      %v1524 = vrcp.pop %v1310
      %v1525 = vmul.f32 %v1310, %v1524
      %v1526 = vsub.f32 1.0, %v1525
      %v1527 = vmul.f32 %v1524, %v1526
      %v1528 = vadd.f32 %v1524, %v1527
      %vm1529 = vweird.f32 %v1310
      %vm1530 = vweird.f32 %v1524
      %vm1531 = vmor %vm1529, %vm1530
      %v1532 = vsel %vm1531, %v1524, %v1528
      %v1533 = vand.u32 2147483647, %v1310
      %vm1534 = vcmp.eq.f32.partialorder %v1533, 8.507059e+37
      %v1535 = vand.u32 %v1310, 2147483648
      %v1536 = vor.u32 1.1754944e-38, %v1535
      %v1537 = vsel %vm1534, %v1536, %v1532
      %v1538 = vmul.f32 1.0, %v1537
      %v1539 = vrcp.pop %v1313
      %v1540 = vmul.f32 %v1313, %v1539
      %v1541 = vsub.f32 1.0, %v1540
      %v1542 = vmul.f32 %v1539, %v1541
      %v1543 = vadd.f32 %v1539, %v1542
      %vm1544 = vweird.f32 %v1313
      %vm1545 = vweird.f32 %v1539
      %vm1546 = vmor %vm1544, %vm1545
      %v1547 = vsel %vm1546, %v1539, %v1543
      %v1548 = vand.u32 2147483647, %v1313
      %vm1549 = vcmp.eq.f32.partialorder %v1548, 8.507059e+37
      %v1550 = vand.u32 %v1313, 2147483648
      %v1551 = vor.u32 1.1754944e-38, %v1550
      %v1552 = vsel %vm1549, %v1551, %v1547
      %v1553 = vmul.f32 1.0, %v1552
      %v1554 = vpack.c.bf16 %v1235, %v1235
      %v1555 = vpack.c.bf16 %v1237, %v1237
      %v1556 = vpack.c.bf16 %v1239, %v1239
      %v1557 = vpack.c.bf16 %v1241, %v1241
      %v1558 = vpack.c.bf16 %v1243, %v1243
      %v1559 = vpack.c.bf16 %v1245, %v1245
      %v1560 = vpack.c.bf16 %v1247, %v1247
      %v1561 = vpack.c.bf16 %v1249, %v1249
      %v1562 = vpack.c.bf16 %v1251, %v1251
      %v1563 = vpack.c.bf16 %v1253, %v1253
      %v1564 = vpack.c.bf16 %v1255, %v1255
      %v1565 = vpack.c.bf16 %v1257, %v1257
      %v1566 = vpack.c.bf16 %v1259, %v1259
      %v1567 = vpack.c.bf16 %v1261, %v1261
      %v1568 = vpack.c.bf16 %v1263, %v1263
      %v1569 = vpack.c.bf16 %v1265, %v1265
      %v1578 = vunpack.c.l.b16 %v1554
      %v1579 = vunpack.c.l.b16 %v1555
      %v1580 = vunpack.c.l.b16 %v1556
      %v1581 = vunpack.c.l.b16 %v1557
      %v1582 = vunpack.c.l.b16 %v1558
      %v1583 = vunpack.c.l.b16 %v1559
      %v1584 = vunpack.c.l.b16 %v1560
      %v1585 = vunpack.c.l.b16 %v1561
      %v1586 = vpack.c.b16 %v1579, %v1578
      %v1587 = vpack.c.b16 %v1581, %v1580
      %v1588 = vpack.c.b16 %v1583, %v1582
      %v1589 = vpack.c.b16 %v1585, %v1584
      %1590 = vrot.lane.b32.xlu0 %v1022, 64
      %v1591 = vpop.permute.xlu0 %1590
      %1592 = vrot.lane.b32.xlu0 %v1023, 64
      %v1593 = vpop.permute.xlu0 %1592
      %1594 = vrot.lane.b32.xlu0 %v1024, 64
      %v1595 = vpop.permute.xlu0 %1594
      %1596 = vrot.lane.b32.xlu0 %v1025, 64
      %v1597 = vpop.permute.xlu0 %1596
      %v1603 = vsel %vm1169, %v1586, 0
      %v1606 = vsel %vm1169, %v1587, 0
      %v1609 = vsel %vm1169, %v1588, 0
      %v1612 = vsel %vm1169, %v1589, 0
      %1614 = vmatpush.bf16.msra.mxu0 0
      %1615 = vmatpush.bf16.msra.mxu0 0
      %1616 = vmatpush.bf16.msra.mxu0 0
      %1617 = vmatpush.bf16.msra.mxu0 0
      %1618 = vmatpush.bf16.msra.mxu0 %v1597
      %1619 = vmatpush.bf16.msra.mxu0 %v1595
      %1620 = vmatpush.bf16.msra.mxu0 %v1593
      %1621 = vmatpush.bf16.msra.mxu0 %v1591
      %1622 = vmatmul.bf16.gmra.mxu0 %v1603
      %v1623 = vpop.f32.mrf.mxu0
      %v1624 = vadd.f32 0.0, %v1623
      %v1625 = vpop.f32.mrf.mxu0
      %v1626 = vadd.f32 0.0, %v1625
      %1627 = vmatmul.bf16.gmra.mxu0 %v1606
      %v1628 = vpop.f32.mrf.mxu0
      %v1629 = vadd.f32 0.0, %v1628
      %v1630 = vpop.f32.mrf.mxu0
      %v1631 = vadd.f32 0.0, %v1630
      %1632 = vmatmul.bf16.gmra.mxu0 %v1609
      %v1633 = vpop.f32.mrf.mxu0
      %v1634 = vadd.f32 0.0, %v1633
      %v1635 = vpop.f32.mrf.mxu0
      %v1636 = vadd.f32 0.0, %v1635
      %1637 = vmatmul.bf16.gmra.mxu0 %v1612
      %v1638 = vpop.f32.mrf.mxu0
      %v1639 = vadd.f32 0.0, %v1638
      %v1640 = vpop.f32.mrf.mxu0
      %v1641 = vadd.f32 0.0, %v1640
      %1642 = vdwg.mxu0
      %v1651 = vunpack.c.l.b16 %v1562
      %v1652 = vunpack.c.l.b16 %v1563
      %v1653 = vunpack.c.l.b16 %v1564
      %v1654 = vunpack.c.l.b16 %v1565
      %v1655 = vunpack.c.l.b16 %v1566
      %v1656 = vunpack.c.l.b16 %v1567
      %v1657 = vunpack.c.l.b16 %v1568
      %v1658 = vunpack.c.l.b16 %v1569
      %v1659 = vpack.c.b16 %v1652, %v1651
      %v1660 = vpack.c.b16 %v1654, %v1653
      %v1661 = vpack.c.b16 %v1656, %v1655
      %v1662 = vpack.c.b16 %v1658, %v1657
      %1663 = vrot.lane.b32.xlu0 %v1104, 64
      %v1664 = vpop.permute.xlu0 %1663
      %1665 = vrot.lane.b32.xlu0 %v1105, 64
      %v1666 = vpop.permute.xlu0 %1665
      %1667 = vrot.lane.b32.xlu0 %v1106, 64
      %v1668 = vpop.permute.xlu0 %1667
      %1669 = vrot.lane.b32.xlu0 %v1107, 64
      %v1670 = vpop.permute.xlu0 %1669
      %v1676 = vsel %vm1169, %v1659, 0
      %v1679 = vsel %vm1169, %v1660, 0
      %v1682 = vsel %vm1169, %v1661, 0
      %v1685 = vsel %vm1169, %v1662, 0
      %1687 = vmatpush.bf16.msra.mxu0 0
      %1688 = vmatpush.bf16.msra.mxu0 0
      %1689 = vmatpush.bf16.msra.mxu0 0
      %1690 = vmatpush.bf16.msra.mxu0 0
      %1691 = vmatpush.bf16.msra.mxu0 %v1670
      %1692 = vmatpush.bf16.msra.mxu0 %v1668
      %1693 = vmatpush.bf16.msra.mxu0 %v1666
      %1694 = vmatpush.bf16.msra.mxu0 %v1664
      %1695 = vmatmul.bf16.gmra.mxu0 %v1676
      %v1696 = vpop.f32.mrf.mxu0
      %v1697 = vadd.f32 0.0, %v1696
      %v1698 = vpop.f32.mrf.mxu0
      %v1699 = vadd.f32 0.0, %v1698
      %1700 = vmatmul.bf16.gmra.mxu0 %v1679
      %v1701 = vpop.f32.mrf.mxu0
      %v1702 = vadd.f32 0.0, %v1701
      %v1703 = vpop.f32.mrf.mxu0
      %v1704 = vadd.f32 0.0, %v1703
      %1705 = vmatmul.bf16.gmra.mxu0 %v1682
      %v1706 = vpop.f32.mrf.mxu0
      %v1707 = vadd.f32 0.0, %v1706
      %v1708 = vpop.f32.mrf.mxu0
      %v1709 = vadd.f32 0.0, %v1708
      %1710 = vmatmul.bf16.gmra.mxu0 %v1685
      %v1711 = vpop.f32.mrf.mxu0
      %v1712 = vadd.f32 0.0, %v1711
      %v1713 = vpop.f32.mrf.mxu0
      %v1714 = vadd.f32 0.0, %v1713
      %1715 = vdwg.mxu0
      %v1716 = vmul.f32 %v1624, %v1328
      %v1717 = vmul.f32 %v1626, %v1343
      %v1718 = vmul.f32 %v1629, %v1358
      %v1719 = vmul.f32 %v1631, %v1373
      %v1720 = vmul.f32 %v1634, %v1388
      %v1721 = vmul.f32 %v1636, %v1403
      %v1722 = vmul.f32 %v1639, %v1418
      %v1723 = vmul.f32 %v1641, %v1433
      %v1724 = vmul.f32 %v1697, %v1448
      %v1725 = vmul.f32 %v1699, %v1463
      %v1726 = vmul.f32 %v1702, %v1478
      %v1727 = vmul.f32 %v1704, %v1493
      %v1728 = vmul.f32 %v1707, %v1508
      %v1729 = vmul.f32 %v1709, %v1523
      %v1730 = vmul.f32 %v1712, %v1538
      %v1731 = vmul.f32 %v1714, %v1553
      %1732 = vrot.lane.b32.xlu0 %v1022, 120
      %v1733 = vpop.permute.xlu0 %1732
      %1734 = vrot.lane.b32.xlu0 %v1023, 120
      %v1735 = vpop.permute.xlu0 %1734
      %1736 = vrot.lane.b32.xlu0 %v1024, 120
      %v1737 = vpop.permute.xlu0 %1736
      %1738 = vrot.lane.b32.xlu0 %v1025, 120
      %v1739 = vpop.permute.xlu0 %1738
      %1740 = vrot.lane.b32.xlu0 %v1022, 88
      %v1741 = vpop.permute.xlu0 %1740
      %1742 = vrot.lane.b32.xlu0 %v1023, 88
      %v1743 = vpop.permute.xlu0 %1742
      %1744 = vrot.lane.b32.xlu0 %v1024, 88
      %v1745 = vpop.permute.xlu0 %1744
      %1746 = vrot.lane.b32.xlu0 %v1025, 88
      %v1747 = vpop.permute.xlu0 %1746
      %v1749 = vsel %vm1034, %v1733, 0
      %v1752 = vsel %vm1034, %v1735, 0
      %v1755 = vsel %vm1034, %v1737, 0
      %v1758 = vsel %vm1034, %v1739, 0
      %v1761 = vsel %vm1034, %v1741, 0
      %v1764 = vsel %vm1034, %v1743, 0
      %v1767 = vsel %vm1034, %v1745, 0
      %v1770 = vsel %vm1034, %v1747, 0
      %1772 = vmatpush.bf16.xpose.msra.mxu0 0
      %1773 = vmatpush.bf16.xpose.msra.mxu0 0
      %1774 = vmatpush.bf16.xpose.msra.mxu0 0
      %1775 = vmatpush.bf16.xpose.msra.mxu0 0
      %1776 = vmatpush.bf16.xpose.msra.mxu0 %v1770
      %1777 = vmatpush.bf16.xpose.msra.mxu0 %v1767
      %1778 = vmatpush.bf16.xpose.msra.mxu0 %v1764
      %1779 = vmatpush.bf16.xpose.msra.mxu0 %v1761
      %1780 = vmatmul.bf16.gmra.mxu0 %v1749
      %v1781 = vpop.f32.mrf.mxu0
      %v1782 = vadd.f32 0.0, %v1781
      %v1783 = vpop.f32.mrf.mxu0
      %v1784 = vadd.f32 0.0, %v1783
      %1785 = vmatmul.bf16.gmra.mxu0 %v1752
      %v1786 = vpop.f32.mrf.mxu0
      %v1787 = vadd.f32 0.0, %v1786
      %v1788 = vpop.f32.mrf.mxu0
      %v1789 = vadd.f32 0.0, %v1788
      %1790 = vmatmul.bf16.gmra.mxu0 %v1755
      %v1791 = vpop.f32.mrf.mxu0
      %v1792 = vadd.f32 0.0, %v1791
      %v1793 = vpop.f32.mrf.mxu0
      %v1794 = vadd.f32 0.0, %v1793
      %1795 = vmatmul.bf16.gmra.mxu0 %v1758
      %v1796 = vpop.f32.mrf.mxu0
      %v1797 = vadd.f32 0.0, %v1796
      %v1798 = vpop.f32.mrf.mxu0
      %v1799 = vadd.f32 0.0, %v1798
      %1800 = vdwg.mxu0
      %1801 = vrot.lane.b32.xlu0 %v1104, 120
      %v1802 = vpop.permute.xlu0 %1801
      %1803 = vrot.lane.b32.xlu0 %v1105, 120
      %v1804 = vpop.permute.xlu0 %1803
      %1805 = vrot.lane.b32.xlu0 %v1106, 120
      %v1806 = vpop.permute.xlu0 %1805
      %1807 = vrot.lane.b32.xlu0 %v1107, 120
      %v1808 = vpop.permute.xlu0 %1807
      %1809 = vrot.lane.b32.xlu0 %v1104, 88
      %v1810 = vpop.permute.xlu0 %1809
      %1811 = vrot.lane.b32.xlu0 %v1105, 88
      %v1812 = vpop.permute.xlu0 %1811
      %1813 = vrot.lane.b32.xlu0 %v1106, 88
      %v1814 = vpop.permute.xlu0 %1813
      %1815 = vrot.lane.b32.xlu0 %v1107, 88
      %v1816 = vpop.permute.xlu0 %1815
      %v1818 = vsel %vm1034, %v1802, 0
      %v1821 = vsel %vm1034, %v1804, 0
      %v1824 = vsel %vm1034, %v1806, 0
      %v1827 = vsel %vm1034, %v1808, 0
      %v1830 = vsel %vm1034, %v1810, 0
      %v1833 = vsel %vm1034, %v1812, 0
      %v1836 = vsel %vm1034, %v1814, 0
      %v1839 = vsel %vm1034, %v1816, 0
      %1841 = vmatpush.bf16.xpose.msra.mxu0 0
      %1842 = vmatpush.bf16.xpose.msra.mxu0 0
      %1843 = vmatpush.bf16.xpose.msra.mxu0 0
      %1844 = vmatpush.bf16.xpose.msra.mxu0 0
      %1845 = vmatpush.bf16.xpose.msra.mxu0 %v1839
      %1846 = vmatpush.bf16.xpose.msra.mxu0 %v1836
      %1847 = vmatpush.bf16.xpose.msra.mxu0 %v1833
      %1848 = vmatpush.bf16.xpose.msra.mxu0 %v1830
      %1849 = vmatmul.bf16.gmra.mxu0 %v1818
      %v1850 = vpop.f32.mrf.mxu0
      %v1851 = vadd.f32 0.0, %v1850
      %v1852 = vpop.f32.mrf.mxu0
      %v1853 = vadd.f32 0.0, %v1852
      %1854 = vmatmul.bf16.gmra.mxu0 %v1821
      %v1855 = vpop.f32.mrf.mxu0
      %v1856 = vadd.f32 0.0, %v1855
      %v1857 = vpop.f32.mrf.mxu0
      %v1858 = vadd.f32 0.0, %v1857
      %1859 = vmatmul.bf16.gmra.mxu0 %v1824
      %v1860 = vpop.f32.mrf.mxu0
      %v1861 = vadd.f32 0.0, %v1860
      %v1862 = vpop.f32.mrf.mxu0
      %v1863 = vadd.f32 0.0, %v1862
      %1864 = vmatmul.bf16.gmra.mxu0 %v1827
      %v1865 = vpop.f32.mrf.mxu0
      %v1866 = vadd.f32 0.0, %v1865
      %v1867 = vpop.f32.mrf.mxu0
      %v1868 = vadd.f32 0.0, %v1867
      %1869 = vdwg.mxu0
      %v1870 = vsel %vm1169, %v1782, -inf
      %1871 = vmax.xlane.f32.xlu0 %v1870
      %v1872 = vpop.xlane.xlu0 %1871
      %v1873 = vsel %vm1169, %v1784, -inf
      %1874 = vmax.xlane.f32.xlu0 %v1873
      %v1875 = vpop.xlane.xlu0 %1874
      %v1876 = vsel %vm1169, %v1787, -inf
      %1877 = vmax.xlane.f32.xlu0 %v1876
      %v1878 = vpop.xlane.xlu0 %1877
      %v1879 = vsel %vm1169, %v1789, -inf
      %1880 = vmax.xlane.f32.xlu0 %v1879
      %v1881 = vpop.xlane.xlu0 %1880
      %v1882 = vsel %vm1169, %v1792, -inf
      %1883 = vmax.xlane.f32.xlu0 %v1882
      %v1884 = vpop.xlane.xlu0 %1883
      %v1885 = vsel %vm1169, %v1794, -inf
      %1886 = vmax.xlane.f32.xlu0 %v1885
      %v1887 = vpop.xlane.xlu0 %1886
      %v1888 = vsel %vm1169, %v1797, -inf
      %1889 = vmax.xlane.f32.xlu0 %v1888
      %v1890 = vpop.xlane.xlu0 %1889
      %v1891 = vsel %vm1169, %v1799, -inf
      %1892 = vmax.xlane.f32.xlu0 %v1891
      %v1893 = vpop.xlane.xlu0 %1892
      %v1894 = vsel %vm1169, %v1851, -inf
      %1895 = vmax.xlane.f32.xlu0 %v1894
      %v1896 = vpop.xlane.xlu0 %1895
      %v1897 = vsel %vm1169, %v1853, -inf
      %1898 = vmax.xlane.f32.xlu0 %v1897
      %v1899 = vpop.xlane.xlu0 %1898
      %v1900 = vsel %vm1169, %v1856, -inf
      %1901 = vmax.xlane.f32.xlu0 %v1900
      %v1902 = vpop.xlane.xlu0 %1901
      %v1903 = vsel %vm1169, %v1858, -inf
      %1904 = vmax.xlane.f32.xlu0 %v1903
      %v1905 = vpop.xlane.xlu0 %1904
      %v1906 = vsel %vm1169, %v1861, -inf
      %1907 = vmax.xlane.f32.xlu0 %v1906
      %v1908 = vpop.xlane.xlu0 %1907
      %v1909 = vsel %vm1169, %v1863, -inf
      %1910 = vmax.xlane.f32.xlu0 %v1909
      %v1911 = vpop.xlane.xlu0 %1910
      %v1912 = vsel %vm1169, %v1866, -inf
      %1913 = vmax.xlane.f32.xlu0 %v1912
      %v1914 = vpop.xlane.xlu0 %1913
      %v1915 = vsel %vm1169, %v1868, -inf
      %1916 = vmax.xlane.f32.xlu0 %v1915
      %v1917 = vpop.xlane.xlu0 %1916
      %v1918 = vsub.f32 %v1782, %v1872
      %v1919 = vsub.f32 %v1784, %v1875
      %v1920 = vsub.f32 %v1787, %v1878
      %v1921 = vsub.f32 %v1789, %v1881
      %v1922 = vsub.f32 %v1792, %v1884
      %v1923 = vsub.f32 %v1794, %v1887
      %v1924 = vsub.f32 %v1797, %v1890
      %v1925 = vsub.f32 %v1799, %v1893
      %v1926 = vsub.f32 %v1851, %v1896
      %v1927 = vsub.f32 %v1853, %v1899
      %v1928 = vsub.f32 %v1856, %v1902
      %v1929 = vsub.f32 %v1858, %v1905
      %v1930 = vsub.f32 %v1861, %v1908
      %v1931 = vsub.f32 %v1863, %v1911
      %v1932 = vsub.f32 %v1866, %v1914
      %v1933 = vsub.f32 %v1868, %v1917
      %v1934 = vmul.f32 %v1918, 1.442695
      %v1935 = vpow.pop %v1934
      %v1936 = vmul.f32 %v1919, 1.442695
      %v1937 = vpow.pop %v1936
      %v1938 = vmul.f32 %v1920, 1.442695
      %v1939 = vpow.pop %v1938
      %v1940 = vmul.f32 %v1921, 1.442695
      %v1941 = vpow.pop %v1940
      %v1942 = vmul.f32 %v1922, 1.442695
      %v1943 = vpow.pop %v1942
      %v1944 = vmul.f32 %v1923, 1.442695
      %v1945 = vpow.pop %v1944
      %v1946 = vmul.f32 %v1924, 1.442695
      %v1947 = vpow.pop %v1946
      %v1948 = vmul.f32 %v1925, 1.442695
      %v1949 = vpow.pop %v1948
      %v1950 = vmul.f32 %v1926, 1.442695
      %v1951 = vpow.pop %v1950
      %v1952 = vmul.f32 %v1927, 1.442695
      %v1953 = vpow.pop %v1952
      %v1954 = vmul.f32 %v1928, 1.442695
      %v1955 = vpow.pop %v1954
      %v1956 = vmul.f32 %v1929, 1.442695
      %v1957 = vpow.pop %v1956
      %v1958 = vmul.f32 %v1930, 1.442695
      %v1959 = vpow.pop %v1958
      %v1960 = vmul.f32 %v1931, 1.442695
      %v1961 = vpow.pop %v1960
      %v1962 = vmul.f32 %v1932, 1.442695
      %v1963 = vpow.pop %v1962
      %v1964 = vmul.f32 %v1933, 1.442695
      %v1965 = vpow.pop %v1964
      %v1966 = vsel %vm1169, %v1935, 0.0
      %1967 = vadd.xlane.f32.xlu0 %v1966
      %v1968 = vpop.xlane.xlu0 %1967
      %v1969 = vsel %vm1169, %v1937, 0.0
      %1970 = vadd.xlane.f32.xlu0 %v1969
      %v1971 = vpop.xlane.xlu0 %1970
      %v1972 = vsel %vm1169, %v1939, 0.0
      %1973 = vadd.xlane.f32.xlu0 %v1972
      %v1974 = vpop.xlane.xlu0 %1973
      %v1975 = vsel %vm1169, %v1941, 0.0
      %1976 = vadd.xlane.f32.xlu0 %v1975
      %v1977 = vpop.xlane.xlu0 %1976
      %v1978 = vsel %vm1169, %v1943, 0.0
      %1979 = vadd.xlane.f32.xlu0 %v1978
      %v1980 = vpop.xlane.xlu0 %1979
      %v1981 = vsel %vm1169, %v1945, 0.0
      %1982 = vadd.xlane.f32.xlu0 %v1981
      %v1983 = vpop.xlane.xlu0 %1982
      %v1984 = vsel %vm1169, %v1947, 0.0
      %1985 = vadd.xlane.f32.xlu0 %v1984
      %v1986 = vpop.xlane.xlu0 %1985
      %v1987 = vsel %vm1169, %v1949, 0.0
      %1988 = vadd.xlane.f32.xlu0 %v1987
      %v1989 = vpop.xlane.xlu0 %1988
      %v1990 = vsel %vm1169, %v1951, 0.0
      %1991 = vadd.xlane.f32.xlu0 %v1990
      %v1992 = vpop.xlane.xlu0 %1991
      %v1993 = vsel %vm1169, %v1953, 0.0
      %1994 = vadd.xlane.f32.xlu0 %v1993
      %v1995 = vpop.xlane.xlu0 %1994
      %v1996 = vsel %vm1169, %v1955, 0.0
      %1997 = vadd.xlane.f32.xlu0 %v1996
      %v1998 = vpop.xlane.xlu0 %1997
      %v1999 = vsel %vm1169, %v1957, 0.0
      %2000 = vadd.xlane.f32.xlu0 %v1999
      %v2001 = vpop.xlane.xlu0 %2000
      %v2002 = vsel %vm1169, %v1959, 0.0
      %2003 = vadd.xlane.f32.xlu0 %v2002
      %v2004 = vpop.xlane.xlu0 %2003
      %v2005 = vsel %vm1169, %v1961, 0.0
      %2006 = vadd.xlane.f32.xlu0 %v2005
      %v2007 = vpop.xlane.xlu0 %2006
      %v2008 = vsel %vm1169, %v1963, 0.0
      %2009 = vadd.xlane.f32.xlu0 %v2008
      %v2010 = vpop.xlane.xlu0 %2009
      %v2011 = vsel %vm1169, %v1965, 0.0
      %2012 = vadd.xlane.f32.xlu0 %v2011
      %v2013 = vpop.xlane.xlu0 %2012
      %v2014 = vrcp.pop %v1968
      %v2015 = vmul.f32 %v1968, %v2014
      %v2016 = vsub.f32 1.0, %v2015
      %v2017 = vmul.f32 %v2014, %v2016
      %v2018 = vadd.f32 %v2014, %v2017
      %vm2019 = vweird.f32 %v1968
      %vm2020 = vweird.f32 %v2014
      %vm2021 = vmor %vm2019, %vm2020
      %v2022 = vsel %vm2021, %v2014, %v2018
      %v2023 = vand.u32 2147483647, %v1968
      %vm2024 = vcmp.eq.f32.partialorder %v2023, 8.507059e+37
      %v2025 = vand.u32 %v1968, 2147483648
      %v2026 = vor.u32 1.1754944e-38, %v2025
      %v2027 = vsel %vm2024, %v2026, %v2022
      %v2028 = vmul.f32 1.0, %v2027
      %v2029 = vrcp.pop %v1971
      %v2030 = vmul.f32 %v1971, %v2029
      %v2031 = vsub.f32 1.0, %v2030
      %v2032 = vmul.f32 %v2029, %v2031
      %v2033 = vadd.f32 %v2029, %v2032
      %vm2034 = vweird.f32 %v1971
      %vm2035 = vweird.f32 %v2029
      %vm2036 = vmor %vm2034, %vm2035
      %v2037 = vsel %vm2036, %v2029, %v2033
      %v2038 = vand.u32 2147483647, %v1971
      %vm2039 = vcmp.eq.f32.partialorder %v2038, 8.507059e+37
      %v2040 = vand.u32 %v1971, 2147483648
      %v2041 = vor.u32 1.1754944e-38, %v2040
      %v2042 = vsel %vm2039, %v2041, %v2037
      %v2043 = vmul.f32 1.0, %v2042
      %v2044 = vrcp.pop %v1974
      %v2045 = vmul.f32 %v1974, %v2044
      %v2046 = vsub.f32 1.0, %v2045
      %v2047 = vmul.f32 %v2044, %v2046
      %v2048 = vadd.f32 %v2044, %v2047
      %vm2049 = vweird.f32 %v1974
      %vm2050 = vweird.f32 %v2044
      %vm2051 = vmor %vm2049, %vm2050
      %v2052 = vsel %vm2051, %v2044, %v2048
      %v2053 = vand.u32 2147483647, %v1974
      %vm2054 = vcmp.eq.f32.partialorder %v2053, 8.507059e+37
      %v2055 = vand.u32 %v1974, 2147483648
      %v2056 = vor.u32 1.1754944e-38, %v2055
      %v2057 = vsel %vm2054, %v2056, %v2052
      %v2058 = vmul.f32 1.0, %v2057
      %v2059 = vrcp.pop %v1977
      %v2060 = vmul.f32 %v1977, %v2059
      %v2061 = vsub.f32 1.0, %v2060
      %v2062 = vmul.f32 %v2059, %v2061
      %v2063 = vadd.f32 %v2059, %v2062
      %vm2064 = vweird.f32 %v1977
      %vm2065 = vweird.f32 %v2059
      %vm2066 = vmor %vm2064, %vm2065
      %v2067 = vsel %vm2066, %v2059, %v2063
      %v2068 = vand.u32 2147483647, %v1977
      %vm2069 = vcmp.eq.f32.partialorder %v2068, 8.507059e+37
      %v2070 = vand.u32 %v1977, 2147483648
      %v2071 = vor.u32 1.1754944e-38, %v2070
      %v2072 = vsel %vm2069, %v2071, %v2067
      %v2073 = vmul.f32 1.0, %v2072
      %v2074 = vrcp.pop %v1980
      %v2075 = vmul.f32 %v1980, %v2074
      %v2076 = vsub.f32 1.0, %v2075
      %v2077 = vmul.f32 %v2074, %v2076
      %v2078 = vadd.f32 %v2074, %v2077
      %vm2079 = vweird.f32 %v1980
      %vm2080 = vweird.f32 %v2074
      %vm2081 = vmor %vm2079, %vm2080
      %v2082 = vsel %vm2081, %v2074, %v2078
      %v2083 = vand.u32 2147483647, %v1980
      %vm2084 = vcmp.eq.f32.partialorder %v2083, 8.507059e+37
      %v2085 = vand.u32 %v1980, 2147483648
      %v2086 = vor.u32 1.1754944e-38, %v2085
      %v2087 = vsel %vm2084, %v2086, %v2082
      %v2088 = vmul.f32 1.0, %v2087
      %v2089 = vrcp.pop %v1983
      %v2090 = vmul.f32 %v1983, %v2089
      %v2091 = vsub.f32 1.0, %v2090
      %v2092 = vmul.f32 %v2089, %v2091
      %v2093 = vadd.f32 %v2089, %v2092
      %vm2094 = vweird.f32 %v1983
      %vm2095 = vweird.f32 %v2089
      %vm2096 = vmor %vm2094, %vm2095
      %v2097 = vsel %vm2096, %v2089, %v2093
      %v2098 = vand.u32 2147483647, %v1983
      %vm2099 = vcmp.eq.f32.partialorder %v2098, 8.507059e+37
      %v2100 = vand.u32 %v1983, 2147483648
      %v2101 = vor.u32 1.1754944e-38, %v2100
      %v2102 = vsel %vm2099, %v2101, %v2097
      %v2103 = vmul.f32 1.0, %v2102
      %v2104 = vrcp.pop %v1986
      %v2105 = vmul.f32 %v1986, %v2104
      %v2106 = vsub.f32 1.0, %v2105
      %v2107 = vmul.f32 %v2104, %v2106
      %v2108 = vadd.f32 %v2104, %v2107
      %vm2109 = vweird.f32 %v1986
      %vm2110 = vweird.f32 %v2104
      %vm2111 = vmor %vm2109, %vm2110
      %v2112 = vsel %vm2111, %v2104, %v2108
      %v2113 = vand.u32 2147483647, %v1986
      %vm2114 = vcmp.eq.f32.partialorder %v2113, 8.507059e+37
      %v2115 = vand.u32 %v1986, 2147483648
      %v2116 = vor.u32 1.1754944e-38, %v2115
      %v2117 = vsel %vm2114, %v2116, %v2112
      %v2118 = vmul.f32 1.0, %v2117
      %v2119 = vrcp.pop %v1989
      %v2120 = vmul.f32 %v1989, %v2119
      %v2121 = vsub.f32 1.0, %v2120
      %v2122 = vmul.f32 %v2119, %v2121
      %v2123 = vadd.f32 %v2119, %v2122
      %vm2124 = vweird.f32 %v1989
      %vm2125 = vweird.f32 %v2119
      %vm2126 = vmor %vm2124, %vm2125
      %v2127 = vsel %vm2126, %v2119, %v2123
      %v2128 = vand.u32 2147483647, %v1989
      %vm2129 = vcmp.eq.f32.partialorder %v2128, 8.507059e+37
      %v2130 = vand.u32 %v1989, 2147483648
      %v2131 = vor.u32 1.1754944e-38, %v2130
      %v2132 = vsel %vm2129, %v2131, %v2127
      %v2133 = vmul.f32 1.0, %v2132
      %v2134 = vrcp.pop %v1992
      %v2135 = vmul.f32 %v1992, %v2134
      %v2136 = vsub.f32 1.0, %v2135
      %v2137 = vmul.f32 %v2134, %v2136
      %v2138 = vadd.f32 %v2134, %v2137
      %vm2139 = vweird.f32 %v1992
      %vm2140 = vweird.f32 %v2134
      %vm2141 = vmor %vm2139, %vm2140
      %v2142 = vsel %vm2141, %v2134, %v2138
      %v2143 = vand.u32 2147483647, %v1992
      %vm2144 = vcmp.eq.f32.partialorder %v2143, 8.507059e+37
      %v2145 = vand.u32 %v1992, 2147483648
      %v2146 = vor.u32 1.1754944e-38, %v2145
      %v2147 = vsel %vm2144, %v2146, %v2142
      %v2148 = vmul.f32 1.0, %v2147
      %v2149 = vrcp.pop %v1995
      %v2150 = vmul.f32 %v1995, %v2149
      %v2151 = vsub.f32 1.0, %v2150
      %v2152 = vmul.f32 %v2149, %v2151
      %v2153 = vadd.f32 %v2149, %v2152
      %vm2154 = vweird.f32 %v1995
      %vm2155 = vweird.f32 %v2149
      %vm2156 = vmor %vm2154, %vm2155
      %v2157 = vsel %vm2156, %v2149, %v2153
      %v2158 = vand.u32 2147483647, %v1995
      %vm2159 = vcmp.eq.f32.partialorder %v2158, 8.507059e+37
      %v2160 = vand.u32 %v1995, 2147483648
      %v2161 = vor.u32 1.1754944e-38, %v2160
      %v2162 = vsel %vm2159, %v2161, %v2157
      %v2163 = vmul.f32 1.0, %v2162
      %v2164 = vrcp.pop %v1998
      %v2165 = vmul.f32 %v1998, %v2164
      %v2166 = vsub.f32 1.0, %v2165
      %v2167 = vmul.f32 %v2164, %v2166
      %v2168 = vadd.f32 %v2164, %v2167
      %vm2169 = vweird.f32 %v1998
      %vm2170 = vweird.f32 %v2164
      %vm2171 = vmor %vm2169, %vm2170
      %v2172 = vsel %vm2171, %v2164, %v2168
      %v2173 = vand.u32 2147483647, %v1998
      %vm2174 = vcmp.eq.f32.partialorder %v2173, 8.507059e+37
      %v2175 = vand.u32 %v1998, 2147483648
      %v2176 = vor.u32 1.1754944e-38, %v2175
      %v2177 = vsel %vm2174, %v2176, %v2172
      %v2178 = vmul.f32 1.0, %v2177
      %v2179 = vrcp.pop %v2001
      %v2180 = vmul.f32 %v2001, %v2179
      %v2181 = vsub.f32 1.0, %v2180
      %v2182 = vmul.f32 %v2179, %v2181
      %v2183 = vadd.f32 %v2179, %v2182
      %vm2184 = vweird.f32 %v2001
      %vm2185 = vweird.f32 %v2179
      %vm2186 = vmor %vm2184, %vm2185
      %v2187 = vsel %vm2186, %v2179, %v2183
      %v2188 = vand.u32 2147483647, %v2001
      %vm2189 = vcmp.eq.f32.partialorder %v2188, 8.507059e+37
      %v2190 = vand.u32 %v2001, 2147483648
      %v2191 = vor.u32 1.1754944e-38, %v2190
      %v2192 = vsel %vm2189, %v2191, %v2187
      %v2193 = vmul.f32 1.0, %v2192
      %v2194 = vrcp.pop %v2004
      %v2195 = vmul.f32 %v2004, %v2194
      %v2196 = vsub.f32 1.0, %v2195
      %v2197 = vmul.f32 %v2194, %v2196
      %v2198 = vadd.f32 %v2194, %v2197
      %vm2199 = vweird.f32 %v2004
      %vm2200 = vweird.f32 %v2194
      %vm2201 = vmor %vm2199, %vm2200
      %v2202 = vsel %vm2201, %v2194, %v2198
      %v2203 = vand.u32 2147483647, %v2004
      %vm2204 = vcmp.eq.f32.partialorder %v2203, 8.507059e+37
      %v2205 = vand.u32 %v2004, 2147483648
      %v2206 = vor.u32 1.1754944e-38, %v2205
      %v2207 = vsel %vm2204, %v2206, %v2202
      %v2208 = vmul.f32 1.0, %v2207
      %v2209 = vrcp.pop %v2007
      %v2210 = vmul.f32 %v2007, %v2209
      %v2211 = vsub.f32 1.0, %v2210
      %v2212 = vmul.f32 %v2209, %v2211
      %v2213 = vadd.f32 %v2209, %v2212
      %vm2214 = vweird.f32 %v2007
      %vm2215 = vweird.f32 %v2209
      %vm2216 = vmor %vm2214, %vm2215
      %v2217 = vsel %vm2216, %v2209, %v2213
      %v2218 = vand.u32 2147483647, %v2007
      %vm2219 = vcmp.eq.f32.partialorder %v2218, 8.507059e+37
      %v2220 = vand.u32 %v2007, 2147483648
      %v2221 = vor.u32 1.1754944e-38, %v2220
      %v2222 = vsel %vm2219, %v2221, %v2217
      %v2223 = vmul.f32 1.0, %v2222
      %v2224 = vrcp.pop %v2010
      %v2225 = vmul.f32 %v2010, %v2224
      %v2226 = vsub.f32 1.0, %v2225
      %v2227 = vmul.f32 %v2224, %v2226
      %v2228 = vadd.f32 %v2224, %v2227
      %vm2229 = vweird.f32 %v2010
      %vm2230 = vweird.f32 %v2224
      %vm2231 = vmor %vm2229, %vm2230
      %v2232 = vsel %vm2231, %v2224, %v2228
      %v2233 = vand.u32 2147483647, %v2010
      %vm2234 = vcmp.eq.f32.partialorder %v2233, 8.507059e+37
      %v2235 = vand.u32 %v2010, 2147483648
      %v2236 = vor.u32 1.1754944e-38, %v2235
      %v2237 = vsel %vm2234, %v2236, %v2232
      %v2238 = vmul.f32 1.0, %v2237
      %v2239 = vrcp.pop %v2013
      %v2240 = vmul.f32 %v2013, %v2239
      %v2241 = vsub.f32 1.0, %v2240
      %v2242 = vmul.f32 %v2239, %v2241
      %v2243 = vadd.f32 %v2239, %v2242
      %vm2244 = vweird.f32 %v2013
      %vm2245 = vweird.f32 %v2239
      %vm2246 = vmor %vm2244, %vm2245
      %v2247 = vsel %vm2246, %v2239, %v2243
      %v2248 = vand.u32 2147483647, %v2013
      %vm2249 = vcmp.eq.f32.partialorder %v2248, 8.507059e+37
      %v2250 = vand.u32 %v2013, 2147483648
      %v2251 = vor.u32 1.1754944e-38, %v2250
      %v2252 = vsel %vm2249, %v2251, %v2247
      %v2253 = vmul.f32 1.0, %v2252
      %v2254 = vpack.c.bf16 %v1935, %v1935
      %v2255 = vpack.c.bf16 %v1937, %v1937
      %v2256 = vpack.c.bf16 %v1939, %v1939
      %v2257 = vpack.c.bf16 %v1941, %v1941
      %v2258 = vpack.c.bf16 %v1943, %v1943
      %v2259 = vpack.c.bf16 %v1945, %v1945
      %v2260 = vpack.c.bf16 %v1947, %v1947
      %v2261 = vpack.c.bf16 %v1949, %v1949
      %v2262 = vpack.c.bf16 %v1951, %v1951
      %v2263 = vpack.c.bf16 %v1953, %v1953
      %v2264 = vpack.c.bf16 %v1955, %v1955
      %v2265 = vpack.c.bf16 %v1957, %v1957
      %v2266 = vpack.c.bf16 %v1959, %v1959
      %v2267 = vpack.c.bf16 %v1961, %v1961
      %v2268 = vpack.c.bf16 %v1963, %v1963
      %v2269 = vpack.c.bf16 %v1965, %v1965
      %v2278 = vunpack.c.l.b16 %v2254
      %v2279 = vunpack.c.l.b16 %v2255
      %v2280 = vunpack.c.l.b16 %v2256
      %v2281 = vunpack.c.l.b16 %v2257
      %v2282 = vunpack.c.l.b16 %v2258
      %v2283 = vunpack.c.l.b16 %v2259
      %v2284 = vunpack.c.l.b16 %v2260
      %v2285 = vunpack.c.l.b16 %v2261
      %v2286 = vpack.c.b16 %v2279, %v2278
      %v2287 = vpack.c.b16 %v2281, %v2280
      %v2288 = vpack.c.b16 %v2283, %v2282
      %v2289 = vpack.c.b16 %v2285, %v2284
      %2290 = vrot.lane.b32.xlu0 %v1022, 56
      %v2291 = vpop.permute.xlu0 %2290
      %2292 = vrot.lane.b32.xlu0 %v1023, 56
      %v2293 = vpop.permute.xlu0 %2292
      %2294 = vrot.lane.b32.xlu0 %v1024, 56
      %v2295 = vpop.permute.xlu0 %2294
      %2296 = vrot.lane.b32.xlu0 %v1025, 56
      %v2297 = vpop.permute.xlu0 %2296
      %v2303 = vsel %vm1169, %v2286, 0
      %v2306 = vsel %vm1169, %v2287, 0
      %v2309 = vsel %vm1169, %v2288, 0
      %v2312 = vsel %vm1169, %v2289, 0
      %2314 = vmatpush.bf16.msra.mxu0 0
      %2315 = vmatpush.bf16.msra.mxu0 0
      %2316 = vmatpush.bf16.msra.mxu0 0
      %2317 = vmatpush.bf16.msra.mxu0 0
      %2318 = vmatpush.bf16.msra.mxu0 %v2297
      %2319 = vmatpush.bf16.msra.mxu0 %v2295
      %2320 = vmatpush.bf16.msra.mxu0 %v2293
      %2321 = vmatpush.bf16.msra.mxu0 %v2291
      %2322 = vmatmul.bf16.gmra.mxu0 %v2303
      %v2323 = vpop.f32.mrf.mxu0
      %v2324 = vadd.f32 0.0, %v2323
      %v2325 = vpop.f32.mrf.mxu0
      %v2326 = vadd.f32 0.0, %v2325
      %2327 = vmatmul.bf16.gmra.mxu0 %v2306
      %v2328 = vpop.f32.mrf.mxu0
      %v2329 = vadd.f32 0.0, %v2328
      %v2330 = vpop.f32.mrf.mxu0
      %v2331 = vadd.f32 0.0, %v2330
      %2332 = vmatmul.bf16.gmra.mxu0 %v2309
      %v2333 = vpop.f32.mrf.mxu0
      %v2334 = vadd.f32 0.0, %v2333
      %v2335 = vpop.f32.mrf.mxu0
      %v2336 = vadd.f32 0.0, %v2335
      %2337 = vmatmul.bf16.gmra.mxu0 %v2312
      %v2338 = vpop.f32.mrf.mxu0
      %v2339 = vadd.f32 0.0, %v2338
      %v2340 = vpop.f32.mrf.mxu0
      %v2341 = vadd.f32 0.0, %v2340
      %2342 = vdwg.mxu0
      %v2351 = vunpack.c.l.b16 %v2262
      %v2352 = vunpack.c.l.b16 %v2263
      %v2353 = vunpack.c.l.b16 %v2264
      %v2354 = vunpack.c.l.b16 %v2265
      %v2355 = vunpack.c.l.b16 %v2266
      %v2356 = vunpack.c.l.b16 %v2267
      %v2357 = vunpack.c.l.b16 %v2268
      %v2358 = vunpack.c.l.b16 %v2269
      %v2359 = vpack.c.b16 %v2352, %v2351
      %v2360 = vpack.c.b16 %v2354, %v2353
      %v2361 = vpack.c.b16 %v2356, %v2355
      %v2362 = vpack.c.b16 %v2358, %v2357
      %2363 = vrot.lane.b32.xlu0 %v1104, 56
      %v2364 = vpop.permute.xlu0 %2363
      %2365 = vrot.lane.b32.xlu0 %v1105, 56
      %v2366 = vpop.permute.xlu0 %2365
      %2367 = vrot.lane.b32.xlu0 %v1106, 56
      %v2368 = vpop.permute.xlu0 %2367
      %2369 = vrot.lane.b32.xlu0 %v1107, 56
      %v2370 = vpop.permute.xlu0 %2369
      %v2376 = vsel %vm1169, %v2359, 0
      %v2379 = vsel %vm1169, %v2360, 0
      %v2382 = vsel %vm1169, %v2361, 0
      %v2385 = vsel %vm1169, %v2362, 0
      %2387 = vmatpush.bf16.msra.mxu0 0
      %2388 = vmatpush.bf16.msra.mxu0 0
      %2389 = vmatpush.bf16.msra.mxu0 0
      %2390 = vmatpush.bf16.msra.mxu0 0
      %2391 = vmatpush.bf16.msra.mxu0 %v2370
      %2392 = vmatpush.bf16.msra.mxu0 %v2368
      %2393 = vmatpush.bf16.msra.mxu0 %v2366
      %2394 = vmatpush.bf16.msra.mxu0 %v2364
      %2395 = vmatmul.bf16.gmra.mxu0 %v2376
      %v2396 = vpop.f32.mrf.mxu0
      %v2397 = vadd.f32 0.0, %v2396
      %v2398 = vpop.f32.mrf.mxu0
      %v2399 = vadd.f32 0.0, %v2398
      %2400 = vmatmul.bf16.gmra.mxu0 %v2379
      %v2401 = vpop.f32.mrf.mxu0
      %v2402 = vadd.f32 0.0, %v2401
      %v2403 = vpop.f32.mrf.mxu0
      %v2404 = vadd.f32 0.0, %v2403
      %2405 = vmatmul.bf16.gmra.mxu0 %v2382
      %v2406 = vpop.f32.mrf.mxu0
      %v2407 = vadd.f32 0.0, %v2406
      %v2408 = vpop.f32.mrf.mxu0
      %v2409 = vadd.f32 0.0, %v2408
      %2410 = vmatmul.bf16.gmra.mxu0 %v2385
      %v2411 = vpop.f32.mrf.mxu0
      %v2412 = vadd.f32 0.0, %v2411
      %v2413 = vpop.f32.mrf.mxu0
      %v2414 = vadd.f32 0.0, %v2413
      %2415 = vdwg.mxu0
      %v2416 = vmul.f32 %v2324, %v2028
      %v2417 = vmul.f32 %v2326, %v2043
      %v2418 = vmul.f32 %v2329, %v2058
      %v2419 = vmul.f32 %v2331, %v2073
      %v2420 = vmul.f32 %v2334, %v2088
      %v2421 = vmul.f32 %v2336, %v2103
      %v2422 = vmul.f32 %v2339, %v2118
      %v2423 = vmul.f32 %v2341, %v2133
      %v2424 = vmul.f32 %v2397, %v2148
      %v2425 = vmul.f32 %v2399, %v2163
      %v2426 = vmul.f32 %v2402, %v2178
      %v2427 = vmul.f32 %v2404, %v2193
      %v2428 = vmul.f32 %v2407, %v2208
      %v2429 = vmul.f32 %v2409, %v2223
      %v2430 = vmul.f32 %v2412, %v2238
      %v2431 = vmul.f32 %v2414, %v2253
      %2432 = vrot.lane.b32.xlu0 %v1022, 112
      %v2433 = vpop.permute.xlu0 %2432
      %2434 = vrot.lane.b32.xlu0 %v1023, 112
      %v2435 = vpop.permute.xlu0 %2434
      %2436 = vrot.lane.b32.xlu0 %v1024, 112
      %v2437 = vpop.permute.xlu0 %2436
      %2438 = vrot.lane.b32.xlu0 %v1025, 112
      %v2439 = vpop.permute.xlu0 %2438
      %2440 = vrot.lane.b32.xlu0 %v1022, 80
      %v2441 = vpop.permute.xlu0 %2440
      %2442 = vrot.lane.b32.xlu0 %v1023, 80
      %v2443 = vpop.permute.xlu0 %2442
      %2444 = vrot.lane.b32.xlu0 %v1024, 80
      %v2445 = vpop.permute.xlu0 %2444
      %2446 = vrot.lane.b32.xlu0 %v1025, 80
      %v2447 = vpop.permute.xlu0 %2446
      %v2449 = vsel %vm1034, %v2433, 0
      %v2452 = vsel %vm1034, %v2435, 0
      %v2455 = vsel %vm1034, %v2437, 0
      %v2458 = vsel %vm1034, %v2439, 0
      %v2461 = vsel %vm1034, %v2441, 0
      %v2464 = vsel %vm1034, %v2443, 0
      %v2467 = vsel %vm1034, %v2445, 0
      %v2470 = vsel %vm1034, %v2447, 0
      %2472 = vmatpush.bf16.xpose.msra.mxu0 0
      %2473 = vmatpush.bf16.xpose.msra.mxu0 0
      %2474 = vmatpush.bf16.xpose.msra.mxu0 0
      %2475 = vmatpush.bf16.xpose.msra.mxu0 0
      %2476 = vmatpush.bf16.xpose.msra.mxu0 %v2470
      %2477 = vmatpush.bf16.xpose.msra.mxu0 %v2467
      %2478 = vmatpush.bf16.xpose.msra.mxu0 %v2464
      %2479 = vmatpush.bf16.xpose.msra.mxu0 %v2461
      %2480 = vmatmul.bf16.gmra.mxu0 %v2449
      %v2481 = vpop.f32.mrf.mxu0
      %v2482 = vadd.f32 0.0, %v2481
      %v2483 = vpop.f32.mrf.mxu0
      %v2484 = vadd.f32 0.0, %v2483
      %2485 = vmatmul.bf16.gmra.mxu0 %v2452
      %v2486 = vpop.f32.mrf.mxu0
      %v2487 = vadd.f32 0.0, %v2486
      %v2488 = vpop.f32.mrf.mxu0
      %v2489 = vadd.f32 0.0, %v2488
      %2490 = vmatmul.bf16.gmra.mxu0 %v2455
      %v2491 = vpop.f32.mrf.mxu0
      %v2492 = vadd.f32 0.0, %v2491
      %v2493 = vpop.f32.mrf.mxu0
      %v2494 = vadd.f32 0.0, %v2493
      %2495 = vmatmul.bf16.gmra.mxu0 %v2458
      %v2496 = vpop.f32.mrf.mxu0
      %v2497 = vadd.f32 0.0, %v2496
      %v2498 = vpop.f32.mrf.mxu0
      %v2499 = vadd.f32 0.0, %v2498
      %2500 = vdwg.mxu0
      %2501 = vrot.lane.b32.xlu0 %v1104, 112
      %v2502 = vpop.permute.xlu0 %2501
      %2503 = vrot.lane.b32.xlu0 %v1105, 112
      %v2504 = vpop.permute.xlu0 %2503
      %2505 = vrot.lane.b32.xlu0 %v1106, 112
      %v2506 = vpop.permute.xlu0 %2505
      %2507 = vrot.lane.b32.xlu0 %v1107, 112
      %v2508 = vpop.permute.xlu0 %2507
      %2509 = vrot.lane.b32.xlu0 %v1104, 80
      %v2510 = vpop.permute.xlu0 %2509
      %2511 = vrot.lane.b32.xlu0 %v1105, 80
      %v2512 = vpop.permute.xlu0 %2511
      %2513 = vrot.lane.b32.xlu0 %v1106, 80
      %v2514 = vpop.permute.xlu0 %2513
      %2515 = vrot.lane.b32.xlu0 %v1107, 80
      %v2516 = vpop.permute.xlu0 %2515
      %v2518 = vsel %vm1034, %v2502, 0
      %v2521 = vsel %vm1034, %v2504, 0
      %v2524 = vsel %vm1034, %v2506, 0
      %v2527 = vsel %vm1034, %v2508, 0
      %v2530 = vsel %vm1034, %v2510, 0
      %v2533 = vsel %vm1034, %v2512, 0
      %v2536 = vsel %vm1034, %v2514, 0
      %v2539 = vsel %vm1034, %v2516, 0
      %2541 = vmatpush.bf16.xpose.msra.mxu0 0
      %2542 = vmatpush.bf16.xpose.msra.mxu0 0
      %2543 = vmatpush.bf16.xpose.msra.mxu0 0
      %2544 = vmatpush.bf16.xpose.msra.mxu0 0
      %2545 = vmatpush.bf16.xpose.msra.mxu0 %v2539
      %2546 = vmatpush.bf16.xpose.msra.mxu0 %v2536
      %2547 = vmatpush.bf16.xpose.msra.mxu0 %v2533
      %2548 = vmatpush.bf16.xpose.msra.mxu0 %v2530
      %2549 = vmatmul.bf16.gmra.mxu0 %v2518
      %v2550 = vpop.f32.mrf.mxu0
      %v2551 = vadd.f32 0.0, %v2550
      %v2552 = vpop.f32.mrf.mxu0
      %v2553 = vadd.f32 0.0, %v2552
      %2554 = vmatmul.bf16.gmra.mxu0 %v2521
      %v2555 = vpop.f32.mrf.mxu0
      %v2556 = vadd.f32 0.0, %v2555
      %v2557 = vpop.f32.mrf.mxu0
      %v2558 = vadd.f32 0.0, %v2557
      %2559 = vmatmul.bf16.gmra.mxu0 %v2524
      %v2560 = vpop.f32.mrf.mxu0
      %v2561 = vadd.f32 0.0, %v2560
      %v2562 = vpop.f32.mrf.mxu0
      %v2563 = vadd.f32 0.0, %v2562
      %2564 = vmatmul.bf16.gmra.mxu0 %v2527
      %v2565 = vpop.f32.mrf.mxu0
      %v2566 = vadd.f32 0.0, %v2565
      %v2567 = vpop.f32.mrf.mxu0
      %v2568 = vadd.f32 0.0, %v2567
      %2569 = vdwg.mxu0
      %v2570 = vsel %vm1169, %v2482, -inf
      %2571 = vmax.xlane.f32.xlu0 %v2570
      %v2572 = vpop.xlane.xlu0 %2571
      %v2573 = vsel %vm1169, %v2484, -inf
      %2574 = vmax.xlane.f32.xlu0 %v2573
      %v2575 = vpop.xlane.xlu0 %2574
      %v2576 = vsel %vm1169, %v2487, -inf
      %2577 = vmax.xlane.f32.xlu0 %v2576
      %v2578 = vpop.xlane.xlu0 %2577
      %v2579 = vsel %vm1169, %v2489, -inf
      %2580 = vmax.xlane.f32.xlu0 %v2579
      %v2581 = vpop.xlane.xlu0 %2580
      %v2582 = vsel %vm1169, %v2492, -inf
      %2583 = vmax.xlane.f32.xlu0 %v2582
      %v2584 = vpop.xlane.xlu0 %2583
      %v2585 = vsel %vm1169, %v2494, -inf
      %2586 = vmax.xlane.f32.xlu0 %v2585
      %v2587 = vpop.xlane.xlu0 %2586
      %v2588 = vsel %vm1169, %v2497, -inf
      %2589 = vmax.xlane.f32.xlu0 %v2588
      %v2590 = vpop.xlane.xlu0 %2589
      %v2591 = vsel %vm1169, %v2499, -inf
      %2592 = vmax.xlane.f32.xlu0 %v2591
      %v2593 = vpop.xlane.xlu0 %2592
      %v2594 = vsel %vm1169, %v2551, -inf
      %2595 = vmax.xlane.f32.xlu0 %v2594
      %v2596 = vpop.xlane.xlu0 %2595
      %v2597 = vsel %vm1169, %v2553, -inf
      %2598 = vmax.xlane.f32.xlu0 %v2597
      %v2599 = vpop.xlane.xlu0 %2598
      %v2600 = vsel %vm1169, %v2556, -inf
      %2601 = vmax.xlane.f32.xlu0 %v2600
      %v2602 = vpop.xlane.xlu0 %2601
      %v2603 = vsel %vm1169, %v2558, -inf
      %2604 = vmax.xlane.f32.xlu0 %v2603
      %v2605 = vpop.xlane.xlu0 %2604
      %v2606 = vsel %vm1169, %v2561, -inf
      %2607 = vmax.xlane.f32.xlu0 %v2606
      %v2608 = vpop.xlane.xlu0 %2607
      %v2609 = vsel %vm1169, %v2563, -inf
      %2610 = vmax.xlane.f32.xlu0 %v2609
      %v2611 = vpop.xlane.xlu0 %2610
      %v2612 = vsel %vm1169, %v2566, -inf
      %2613 = vmax.xlane.f32.xlu0 %v2612
      %v2614 = vpop.xlane.xlu0 %2613
      %v2615 = vsel %vm1169, %v2568, -inf
      %2616 = vmax.xlane.f32.xlu0 %v2615
      %v2617 = vpop.xlane.xlu0 %2616
      %v2618 = vsub.f32 %v2482, %v2572
      %v2619 = vsub.f32 %v2484, %v2575
      %v2620 = vsub.f32 %v2487, %v2578
      %v2621 = vsub.f32 %v2489, %v2581
      %v2622 = vsub.f32 %v2492, %v2584
      %v2623 = vsub.f32 %v2494, %v2587
      %v2624 = vsub.f32 %v2497, %v2590
      %v2625 = vsub.f32 %v2499, %v2593
      %v2626 = vsub.f32 %v2551, %v2596
      %v2627 = vsub.f32 %v2553, %v2599
      %v2628 = vsub.f32 %v2556, %v2602
      %v2629 = vsub.f32 %v2558, %v2605
      %v2630 = vsub.f32 %v2561, %v2608
      %v2631 = vsub.f32 %v2563, %v2611
      %v2632 = vsub.f32 %v2566, %v2614
      %v2633 = vsub.f32 %v2568, %v2617
      %v2634 = vmul.f32 %v2618, 1.442695
      %v2635 = vpow.pop %v2634
      %v2636 = vmul.f32 %v2619, 1.442695
      %v2637 = vpow.pop %v2636
      %v2638 = vmul.f32 %v2620, 1.442695
      %v2639 = vpow.pop %v2638
      %v2640 = vmul.f32 %v2621, 1.442695
      %v2641 = vpow.pop %v2640
      %v2642 = vmul.f32 %v2622, 1.442695
      %v2643 = vpow.pop %v2642
      %v2644 = vmul.f32 %v2623, 1.442695
      %v2645 = vpow.pop %v2644
      %v2646 = vmul.f32 %v2624, 1.442695
      %v2647 = vpow.pop %v2646
      %v2648 = vmul.f32 %v2625, 1.442695
      %v2649 = vpow.pop %v2648
      %v2650 = vmul.f32 %v2626, 1.442695
      %v2651 = vpow.pop %v2650
      %v2652 = vmul.f32 %v2627, 1.442695
      %v2653 = vpow.pop %v2652
      %v2654 = vmul.f32 %v2628, 1.442695
      %v2655 = vpow.pop %v2654
      %v2656 = vmul.f32 %v2629, 1.442695
      %v2657 = vpow.pop %v2656
      %v2658 = vmul.f32 %v2630, 1.442695
      %v2659 = vpow.pop %v2658
      %v2660 = vmul.f32 %v2631, 1.442695
      %v2661 = vpow.pop %v2660
      %v2662 = vmul.f32 %v2632, 1.442695
      %v2663 = vpow.pop %v2662
      %v2664 = vmul.f32 %v2633, 1.442695
      %v2665 = vpow.pop %v2664
      %v2666 = vsel %vm1169, %v2635, 0.0
      %2667 = vadd.xlane.f32.xlu0 %v2666
      %v2668 = vpop.xlane.xlu0 %2667
      %v2669 = vsel %vm1169, %v2637, 0.0
      %2670 = vadd.xlane.f32.xlu0 %v2669
      %v2671 = vpop.xlane.xlu0 %2670
      %v2672 = vsel %vm1169, %v2639, 0.0
      %2673 = vadd.xlane.f32.xlu0 %v2672
      %v2674 = vpop.xlane.xlu0 %2673
      %v2675 = vsel %vm1169, %v2641, 0.0
      %2676 = vadd.xlane.f32.xlu0 %v2675
      %v2677 = vpop.xlane.xlu0 %2676
      %v2678 = vsel %vm1169, %v2643, 0.0
      %2679 = vadd.xlane.f32.xlu0 %v2678
      %v2680 = vpop.xlane.xlu0 %2679
      %v2681 = vsel %vm1169, %v2645, 0.0
      %2682 = vadd.xlane.f32.xlu0 %v2681
      %v2683 = vpop.xlane.xlu0 %2682
      %v2684 = vsel %vm1169, %v2647, 0.0
      %2685 = vadd.xlane.f32.xlu0 %v2684
      %v2686 = vpop.xlane.xlu0 %2685
      %v2687 = vsel %vm1169, %v2649, 0.0
      %2688 = vadd.xlane.f32.xlu0 %v2687
      %v2689 = vpop.xlane.xlu0 %2688
      %v2690 = vsel %vm1169, %v2651, 0.0
      %2691 = vadd.xlane.f32.xlu0 %v2690
      %v2692 = vpop.xlane.xlu0 %2691
      %v2693 = vsel %vm1169, %v2653, 0.0
      %2694 = vadd.xlane.f32.xlu0 %v2693
      %v2695 = vpop.xlane.xlu0 %2694
      %v2696 = vsel %vm1169, %v2655, 0.0
      %2697 = vadd.xlane.f32.xlu0 %v2696
      %v2698 = vpop.xlane.xlu0 %2697
      %v2699 = vsel %vm1169, %v2657, 0.0
      %2700 = vadd.xlane.f32.xlu0 %v2699
      %v2701 = vpop.xlane.xlu0 %2700
      %v2702 = vsel %vm1169, %v2659, 0.0
      %2703 = vadd.xlane.f32.xlu0 %v2702
      %v2704 = vpop.xlane.xlu0 %2703
      %v2705 = vsel %vm1169, %v2661, 0.0
      %2706 = vadd.xlane.f32.xlu0 %v2705
      %v2707 = vpop.xlane.xlu0 %2706
      %v2708 = vsel %vm1169, %v2663, 0.0
      %2709 = vadd.xlane.f32.xlu0 %v2708
      %v2710 = vpop.xlane.xlu0 %2709
      %v2711 = vsel %vm1169, %v2665, 0.0
      %2712 = vadd.xlane.f32.xlu0 %v2711
      %v2713 = vpop.xlane.xlu0 %2712
      %v2714 = vrcp.pop %v2668
      %v2715 = vmul.f32 %v2668, %v2714
      %v2716 = vsub.f32 1.0, %v2715
      %v2717 = vmul.f32 %v2714, %v2716
      %v2718 = vadd.f32 %v2714, %v2717
      %vm2719 = vweird.f32 %v2668
      %vm2720 = vweird.f32 %v2714
      %vm2721 = vmor %vm2719, %vm2720
      %v2722 = vsel %vm2721, %v2714, %v2718
      %v2723 = vand.u32 2147483647, %v2668
      %vm2724 = vcmp.eq.f32.partialorder %v2723, 8.507059e+37
      %v2725 = vand.u32 %v2668, 2147483648
      %v2726 = vor.u32 1.1754944e-38, %v2725
      %v2727 = vsel %vm2724, %v2726, %v2722
      %v2728 = vmul.f32 1.0, %v2727
      %v2729 = vrcp.pop %v2671
      %v2730 = vmul.f32 %v2671, %v2729
      %v2731 = vsub.f32 1.0, %v2730
      %v2732 = vmul.f32 %v2729, %v2731
      %v2733 = vadd.f32 %v2729, %v2732
      %vm2734 = vweird.f32 %v2671
      %vm2735 = vweird.f32 %v2729
      %vm2736 = vmor %vm2734, %vm2735
      %v2737 = vsel %vm2736, %v2729, %v2733
      %v2738 = vand.u32 2147483647, %v2671
      %vm2739 = vcmp.eq.f32.partialorder %v2738, 8.507059e+37
      %v2740 = vand.u32 %v2671, 2147483648
      %v2741 = vor.u32 1.1754944e-38, %v2740
      %v2742 = vsel %vm2739, %v2741, %v2737
      %v2743 = vmul.f32 1.0, %v2742
      %v2744 = vrcp.pop %v2674
      %v2745 = vmul.f32 %v2674, %v2744
      %v2746 = vsub.f32 1.0, %v2745
      %v2747 = vmul.f32 %v2744, %v2746
      %v2748 = vadd.f32 %v2744, %v2747
      %vm2749 = vweird.f32 %v2674
      %vm2750 = vweird.f32 %v2744
      %vm2751 = vmor %vm2749, %vm2750
      %v2752 = vsel %vm2751, %v2744, %v2748
      %v2753 = vand.u32 2147483647, %v2674
      %vm2754 = vcmp.eq.f32.partialorder %v2753, 8.507059e+37
      %v2755 = vand.u32 %v2674, 2147483648
      %v2756 = vor.u32 1.1754944e-38, %v2755
      %v2757 = vsel %vm2754, %v2756, %v2752
      %v2758 = vmul.f32 1.0, %v2757
      %v2759 = vrcp.pop %v2677
      %v2760 = vmul.f32 %v2677, %v2759
      %v2761 = vsub.f32 1.0, %v2760
      %v2762 = vmul.f32 %v2759, %v2761
      %v2763 = vadd.f32 %v2759, %v2762
      %vm2764 = vweird.f32 %v2677
      %vm2765 = vweird.f32 %v2759
      %vm2766 = vmor %vm2764, %vm2765
      %v2767 = vsel %vm2766, %v2759, %v2763
      %v2768 = vand.u32 2147483647, %v2677
      %vm2769 = vcmp.eq.f32.partialorder %v2768, 8.507059e+37
      %v2770 = vand.u32 %v2677, 2147483648
      %v2771 = vor.u32 1.1754944e-38, %v2770
      %v2772 = vsel %vm2769, %v2771, %v2767
      %v2773 = vmul.f32 1.0, %v2772
      %v2774 = vrcp.pop %v2680
      %v2775 = vmul.f32 %v2680, %v2774
      %v2776 = vsub.f32 1.0, %v2775
      %v2777 = vmul.f32 %v2774, %v2776
      %v2778 = vadd.f32 %v2774, %v2777
      %vm2779 = vweird.f32 %v2680
      %vm2780 = vweird.f32 %v2774
      %vm2781 = vmor %vm2779, %vm2780
      %v2782 = vsel %vm2781, %v2774, %v2778
      %v2783 = vand.u32 2147483647, %v2680
      %vm2784 = vcmp.eq.f32.partialorder %v2783, 8.507059e+37
      %v2785 = vand.u32 %v2680, 2147483648
      %v2786 = vor.u32 1.1754944e-38, %v2785
      %v2787 = vsel %vm2784, %v2786, %v2782
      %v2788 = vmul.f32 1.0, %v2787
      %v2789 = vrcp.pop %v2683
      %v2790 = vmul.f32 %v2683, %v2789
      %v2791 = vsub.f32 1.0, %v2790
      %v2792 = vmul.f32 %v2789, %v2791
      %v2793 = vadd.f32 %v2789, %v2792
      %vm2794 = vweird.f32 %v2683
      %vm2795 = vweird.f32 %v2789
      %vm2796 = vmor %vm2794, %vm2795
      %v2797 = vsel %vm2796, %v2789, %v2793
      %v2798 = vand.u32 2147483647, %v2683
      %vm2799 = vcmp.eq.f32.partialorder %v2798, 8.507059e+37
      %v2800 = vand.u32 %v2683, 2147483648
      %v2801 = vor.u32 1.1754944e-38, %v2800
      %v2802 = vsel %vm2799, %v2801, %v2797
      %v2803 = vmul.f32 1.0, %v2802
      %v2804 = vrcp.pop %v2686
      %v2805 = vmul.f32 %v2686, %v2804
      %v2806 = vsub.f32 1.0, %v2805
      %v2807 = vmul.f32 %v2804, %v2806
      %v2808 = vadd.f32 %v2804, %v2807
      %vm2809 = vweird.f32 %v2686
      %vm2810 = vweird.f32 %v2804
      %vm2811 = vmor %vm2809, %vm2810
      %v2812 = vsel %vm2811, %v2804, %v2808
      %v2813 = vand.u32 2147483647, %v2686
      %vm2814 = vcmp.eq.f32.partialorder %v2813, 8.507059e+37
      %v2815 = vand.u32 %v2686, 2147483648
      %v2816 = vor.u32 1.1754944e-38, %v2815
      %v2817 = vsel %vm2814, %v2816, %v2812
      %v2818 = vmul.f32 1.0, %v2817
      %v2819 = vrcp.pop %v2689
      %v2820 = vmul.f32 %v2689, %v2819
      %v2821 = vsub.f32 1.0, %v2820
      %v2822 = vmul.f32 %v2819, %v2821
      %v2823 = vadd.f32 %v2819, %v2822
      %vm2824 = vweird.f32 %v2689
      %vm2825 = vweird.f32 %v2819
      %vm2826 = vmor %vm2824, %vm2825
      %v2827 = vsel %vm2826, %v2819, %v2823
      %v2828 = vand.u32 2147483647, %v2689
      %vm2829 = vcmp.eq.f32.partialorder %v2828, 8.507059e+37
      %v2830 = vand.u32 %v2689, 2147483648
      %v2831 = vor.u32 1.1754944e-38, %v2830
      %v2832 = vsel %vm2829, %v2831, %v2827
      %v2833 = vmul.f32 1.0, %v2832
      %v2834 = vrcp.pop %v2692
      %v2835 = vmul.f32 %v2692, %v2834
      %v2836 = vsub.f32 1.0, %v2835
      %v2837 = vmul.f32 %v2834, %v2836
      %v2838 = vadd.f32 %v2834, %v2837
      %vm2839 = vweird.f32 %v2692
      %vm2840 = vweird.f32 %v2834
      %vm2841 = vmor %vm2839, %vm2840
      %v2842 = vsel %vm2841, %v2834, %v2838
      %v2843 = vand.u32 2147483647, %v2692
      %vm2844 = vcmp.eq.f32.partialorder %v2843, 8.507059e+37
      %v2845 = vand.u32 %v2692, 2147483648
      %v2846 = vor.u32 1.1754944e-38, %v2845
      %v2847 = vsel %vm2844, %v2846, %v2842
      %v2848 = vmul.f32 1.0, %v2847
      %v2849 = vrcp.pop %v2695
      %v2850 = vmul.f32 %v2695, %v2849
      %v2851 = vsub.f32 1.0, %v2850
      %v2852 = vmul.f32 %v2849, %v2851
      %v2853 = vadd.f32 %v2849, %v2852
      %vm2854 = vweird.f32 %v2695
      %vm2855 = vweird.f32 %v2849
      %vm2856 = vmor %vm2854, %vm2855
      %v2857 = vsel %vm2856, %v2849, %v2853
      %v2858 = vand.u32 2147483647, %v2695
      %vm2859 = vcmp.eq.f32.partialorder %v2858, 8.507059e+37
      %v2860 = vand.u32 %v2695, 2147483648
      %v2861 = vor.u32 1.1754944e-38, %v2860
      %v2862 = vsel %vm2859, %v2861, %v2857
      %v2863 = vmul.f32 1.0, %v2862
      %v2864 = vrcp.pop %v2698
      %v2865 = vmul.f32 %v2698, %v2864
      %v2866 = vsub.f32 1.0, %v2865
      %v2867 = vmul.f32 %v2864, %v2866
      %v2868 = vadd.f32 %v2864, %v2867
      %vm2869 = vweird.f32 %v2698
      %vm2870 = vweird.f32 %v2864
      %vm2871 = vmor %vm2869, %vm2870
      %v2872 = vsel %vm2871, %v2864, %v2868
      %v2873 = vand.u32 2147483647, %v2698
      %vm2874 = vcmp.eq.f32.partialorder %v2873, 8.507059e+37
      %v2875 = vand.u32 %v2698, 2147483648
      %v2876 = vor.u32 1.1754944e-38, %v2875
      %v2877 = vsel %vm2874, %v2876, %v2872
      %v2878 = vmul.f32 1.0, %v2877
      %v2879 = vrcp.pop %v2701
      %v2880 = vmul.f32 %v2701, %v2879
      %v2881 = vsub.f32 1.0, %v2880
      %v2882 = vmul.f32 %v2879, %v2881
      %v2883 = vadd.f32 %v2879, %v2882
      %vm2884 = vweird.f32 %v2701
      %vm2885 = vweird.f32 %v2879
      %vm2886 = vmor %vm2884, %vm2885
      %v2887 = vsel %vm2886, %v2879, %v2883
      %v2888 = vand.u32 2147483647, %v2701
      %vm2889 = vcmp.eq.f32.partialorder %v2888, 8.507059e+37
      %v2890 = vand.u32 %v2701, 2147483648
      %v2891 = vor.u32 1.1754944e-38, %v2890
      %v2892 = vsel %vm2889, %v2891, %v2887
      %v2893 = vmul.f32 1.0, %v2892
      %v2894 = vrcp.pop %v2704
      %v2895 = vmul.f32 %v2704, %v2894
      %v2896 = vsub.f32 1.0, %v2895
      %v2897 = vmul.f32 %v2894, %v2896
      %v2898 = vadd.f32 %v2894, %v2897
      %vm2899 = vweird.f32 %v2704
      %vm2900 = vweird.f32 %v2894
      %vm2901 = vmor %vm2899, %vm2900
      %v2902 = vsel %vm2901, %v2894, %v2898
      %v2903 = vand.u32 2147483647, %v2704
      %vm2904 = vcmp.eq.f32.partialorder %v2903, 8.507059e+37
      %v2905 = vand.u32 %v2704, 2147483648
      %v2906 = vor.u32 1.1754944e-38, %v2905
      %v2907 = vsel %vm2904, %v2906, %v2902
      %v2908 = vmul.f32 1.0, %v2907
      %v2909 = vrcp.pop %v2707
      %v2910 = vmul.f32 %v2707, %v2909
      %v2911 = vsub.f32 1.0, %v2910
      %v2912 = vmul.f32 %v2909, %v2911
      %v2913 = vadd.f32 %v2909, %v2912
      %vm2914 = vweird.f32 %v2707
      %vm2915 = vweird.f32 %v2909
      %vm2916 = vmor %vm2914, %vm2915
      %v2917 = vsel %vm2916, %v2909, %v2913
      %v2918 = vand.u32 2147483647, %v2707
      %vm2919 = vcmp.eq.f32.partialorder %v2918, 8.507059e+37
      %v2920 = vand.u32 %v2707, 2147483648
      %v2921 = vor.u32 1.1754944e-38, %v2920
      %v2922 = vsel %vm2919, %v2921, %v2917
      %v2923 = vmul.f32 1.0, %v2922
      %v2924 = vrcp.pop %v2710
      %v2925 = vmul.f32 %v2710, %v2924
      %v2926 = vsub.f32 1.0, %v2925
      %v2927 = vmul.f32 %v2924, %v2926
      %v2928 = vadd.f32 %v2924, %v2927
      %vm2929 = vweird.f32 %v2710
      %vm2930 = vweird.f32 %v2924
      %vm2931 = vmor %vm2929, %vm2930
      %v2932 = vsel %vm2931, %v2924, %v2928
      %v2933 = vand.u32 2147483647, %v2710
      %vm2934 = vcmp.eq.f32.partialorder %v2933, 8.507059e+37
      %v2935 = vand.u32 %v2710, 2147483648
      %v2936 = vor.u32 1.1754944e-38, %v2935
      %v2937 = vsel %vm2934, %v2936, %v2932
      %v2938 = vmul.f32 1.0, %v2937
      %v2939 = vrcp.pop %v2713
      %v2940 = vmul.f32 %v2713, %v2939
      %v2941 = vsub.f32 1.0, %v2940
      %v2942 = vmul.f32 %v2939, %v2941
      %v2943 = vadd.f32 %v2939, %v2942
      %vm2944 = vweird.f32 %v2713
      %vm2945 = vweird.f32 %v2939
      %vm2946 = vmor %vm2944, %vm2945
      %v2947 = vsel %vm2946, %v2939, %v2943
      %v2948 = vand.u32 2147483647, %v2713
      %vm2949 = vcmp.eq.f32.partialorder %v2948, 8.507059e+37
      %v2950 = vand.u32 %v2713, 2147483648
      %v2951 = vor.u32 1.1754944e-38, %v2950
      %v2952 = vsel %vm2949, %v2951, %v2947
      %v2953 = vmul.f32 1.0, %v2952
      %v2954 = vpack.c.bf16 %v2635, %v2635
      %v2955 = vpack.c.bf16 %v2637, %v2637
      %v2956 = vpack.c.bf16 %v2639, %v2639
      %v2957 = vpack.c.bf16 %v2641, %v2641
      %v2958 = vpack.c.bf16 %v2643, %v2643
      %v2959 = vpack.c.bf16 %v2645, %v2645
      %v2960 = vpack.c.bf16 %v2647, %v2647
      %v2961 = vpack.c.bf16 %v2649, %v2649
      %v2962 = vpack.c.bf16 %v2651, %v2651
      %v2963 = vpack.c.bf16 %v2653, %v2653
      %v2964 = vpack.c.bf16 %v2655, %v2655
      %v2965 = vpack.c.bf16 %v2657, %v2657
      %v2966 = vpack.c.bf16 %v2659, %v2659
      %v2967 = vpack.c.bf16 %v2661, %v2661
      %v2968 = vpack.c.bf16 %v2663, %v2663
      %v2969 = vpack.c.bf16 %v2665, %v2665
      %v2978 = vunpack.c.l.b16 %v2954
      %v2979 = vunpack.c.l.b16 %v2955
      %v2980 = vunpack.c.l.b16 %v2956
      %v2981 = vunpack.c.l.b16 %v2957
      %v2982 = vunpack.c.l.b16 %v2958
      %v2983 = vunpack.c.l.b16 %v2959
      %v2984 = vunpack.c.l.b16 %v2960
      %v2985 = vunpack.c.l.b16 %v2961
      %v2986 = vpack.c.b16 %v2979, %v2978
      %v2987 = vpack.c.b16 %v2981, %v2980
      %v2988 = vpack.c.b16 %v2983, %v2982
      %v2989 = vpack.c.b16 %v2985, %v2984
      %2990 = vrot.lane.b32.xlu0 %v1022, 48
      %v2991 = vpop.permute.xlu0 %2990
      %2992 = vrot.lane.b32.xlu0 %v1023, 48
      %v2993 = vpop.permute.xlu0 %2992
      %2994 = vrot.lane.b32.xlu0 %v1024, 48
      %v2995 = vpop.permute.xlu0 %2994
      %2996 = vrot.lane.b32.xlu0 %v1025, 48
      %v2997 = vpop.permute.xlu0 %2996
      %v3003 = vsel %vm1169, %v2986, 0
      %v3006 = vsel %vm1169, %v2987, 0
      %v3009 = vsel %vm1169, %v2988, 0
      %v3012 = vsel %vm1169, %v2989, 0
      %3014 = vmatpush.bf16.msra.mxu0 0
      %3015 = vmatpush.bf16.msra.mxu0 0
      %3016 = vmatpush.bf16.msra.mxu0 0
      %3017 = vmatpush.bf16.msra.mxu0 0
      %3018 = vmatpush.bf16.msra.mxu0 %v2997
      %3019 = vmatpush.bf16.msra.mxu0 %v2995
      %3020 = vmatpush.bf16.msra.mxu0 %v2993
      %3021 = vmatpush.bf16.msra.mxu0 %v2991
      %3022 = vmatmul.bf16.gmra.mxu0 %v3003
      %v3023 = vpop.f32.mrf.mxu0
      %v3024 = vadd.f32 0.0, %v3023
      %v3025 = vpop.f32.mrf.mxu0
      %v3026 = vadd.f32 0.0, %v3025
      %3027 = vmatmul.bf16.gmra.mxu0 %v3006
      %v3028 = vpop.f32.mrf.mxu0
      %v3029 = vadd.f32 0.0, %v3028
      %v3030 = vpop.f32.mrf.mxu0
      %v3031 = vadd.f32 0.0, %v3030
      %3032 = vmatmul.bf16.gmra.mxu0 %v3009
      %v3033 = vpop.f32.mrf.mxu0
      %v3034 = vadd.f32 0.0, %v3033
      %v3035 = vpop.f32.mrf.mxu0
      %v3036 = vadd.f32 0.0, %v3035
      %3037 = vmatmul.bf16.gmra.mxu0 %v3012
      %v3038 = vpop.f32.mrf.mxu0
      %v3039 = vadd.f32 0.0, %v3038
      %v3040 = vpop.f32.mrf.mxu0
      %v3041 = vadd.f32 0.0, %v3040
      %3042 = vdwg.mxu0
      %v3051 = vunpack.c.l.b16 %v2962
      %v3052 = vunpack.c.l.b16 %v2963
      %v3053 = vunpack.c.l.b16 %v2964
      %v3054 = vunpack.c.l.b16 %v2965
      %v3055 = vunpack.c.l.b16 %v2966
      %v3056 = vunpack.c.l.b16 %v2967
      %v3057 = vunpack.c.l.b16 %v2968
      %v3058 = vunpack.c.l.b16 %v2969
      %v3059 = vpack.c.b16 %v3052, %v3051
      %v3060 = vpack.c.b16 %v3054, %v3053
      %v3061 = vpack.c.b16 %v3056, %v3055
      %v3062 = vpack.c.b16 %v3058, %v3057
      %3063 = vrot.lane.b32.xlu0 %v1104, 48
      %v3064 = vpop.permute.xlu0 %3063
      %3065 = vrot.lane.b32.xlu0 %v1105, 48
      %v3066 = vpop.permute.xlu0 %3065
      %3067 = vrot.lane.b32.xlu0 %v1106, 48
      %v3068 = vpop.permute.xlu0 %3067
      %3069 = vrot.lane.b32.xlu0 %v1107, 48
      %v3070 = vpop.permute.xlu0 %3069
      %v3076 = vsel %vm1169, %v3059, 0
      %v3079 = vsel %vm1169, %v3060, 0
      %v3082 = vsel %vm1169, %v3061, 0
      %v3085 = vsel %vm1169, %v3062, 0
      %3087 = vmatpush.bf16.msra.mxu0 0
      %3088 = vmatpush.bf16.msra.mxu0 0
      %3089 = vmatpush.bf16.msra.mxu0 0
      %3090 = vmatpush.bf16.msra.mxu0 0
      %3091 = vmatpush.bf16.msra.mxu0 %v3070
      %3092 = vmatpush.bf16.msra.mxu0 %v3068
      %3093 = vmatpush.bf16.msra.mxu0 %v3066
      %3094 = vmatpush.bf16.msra.mxu0 %v3064
      %3095 = vmatmul.bf16.gmra.mxu0 %v3076
      %v3096 = vpop.f32.mrf.mxu0
      %v3097 = vadd.f32 0.0, %v3096
      %v3098 = vpop.f32.mrf.mxu0
      %v3099 = vadd.f32 0.0, %v3098
      %3100 = vmatmul.bf16.gmra.mxu0 %v3079
      %v3101 = vpop.f32.mrf.mxu0
      %v3102 = vadd.f32 0.0, %v3101
      %v3103 = vpop.f32.mrf.mxu0
      %v3104 = vadd.f32 0.0, %v3103
      %3105 = vmatmul.bf16.gmra.mxu0 %v3082
      %v3106 = vpop.f32.mrf.mxu0
      %v3107 = vadd.f32 0.0, %v3106
      %v3108 = vpop.f32.mrf.mxu0
      %v3109 = vadd.f32 0.0, %v3108
      %3110 = vmatmul.bf16.gmra.mxu0 %v3085
      %v3111 = vpop.f32.mrf.mxu0
      %v3112 = vadd.f32 0.0, %v3111
      %v3113 = vpop.f32.mrf.mxu0
      %v3114 = vadd.f32 0.0, %v3113
      %3115 = vdwg.mxu0
      %v3116 = vmul.f32 %v3024, %v2728
      %v3117 = vmul.f32 %v3026, %v2743
      %v3118 = vmul.f32 %v3029, %v2758
      %v3119 = vmul.f32 %v3031, %v2773
      %v3120 = vmul.f32 %v3034, %v2788
      %v3121 = vmul.f32 %v3036, %v2803
      %v3122 = vmul.f32 %v3039, %v2818
      %v3123 = vmul.f32 %v3041, %v2833
      %v3124 = vmul.f32 %v3097, %v2848
      %v3125 = vmul.f32 %v3099, %v2863
      %v3126 = vmul.f32 %v3102, %v2878
      %v3127 = vmul.f32 %v3104, %v2893
      %v3128 = vmul.f32 %v3107, %v2908
      %v3129 = vmul.f32 %v3109, %v2923
      %v3130 = vmul.f32 %v3112, %v2938
      %v3131 = vmul.f32 %v3114, %v2953
      %3132 = vrot.lane.b32.xlu0 %v1022, 104
      %v3133 = vpop.permute.xlu0 %3132
      %3134 = vrot.lane.b32.xlu0 %v1023, 104
      %v3135 = vpop.permute.xlu0 %3134
      %3136 = vrot.lane.b32.xlu0 %v1024, 104
      %v3137 = vpop.permute.xlu0 %3136
      %3138 = vrot.lane.b32.xlu0 %v1025, 104
      %v3139 = vpop.permute.xlu0 %3138
      %3140 = vrot.lane.b32.xlu0 %v1022, 72
      %v3141 = vpop.permute.xlu0 %3140
      %3142 = vrot.lane.b32.xlu0 %v1023, 72
      %v3143 = vpop.permute.xlu0 %3142
      %3144 = vrot.lane.b32.xlu0 %v1024, 72
      %v3145 = vpop.permute.xlu0 %3144
      %3146 = vrot.lane.b32.xlu0 %v1025, 72
      %v3147 = vpop.permute.xlu0 %3146
      %v3149 = vsel %vm1034, %v3133, 0
      %v3152 = vsel %vm1034, %v3135, 0
      %v3155 = vsel %vm1034, %v3137, 0
      %v3158 = vsel %vm1034, %v3139, 0
      %v3161 = vsel %vm1034, %v3141, 0
      %v3164 = vsel %vm1034, %v3143, 0
      %v3167 = vsel %vm1034, %v3145, 0
      %v3170 = vsel %vm1034, %v3147, 0
      %3172 = vmatpush.bf16.xpose.msra.mxu0 0
      %3173 = vmatpush.bf16.xpose.msra.mxu0 0
      %3174 = vmatpush.bf16.xpose.msra.mxu0 0
      %3175 = vmatpush.bf16.xpose.msra.mxu0 0
      %3176 = vmatpush.bf16.xpose.msra.mxu0 %v3170
      %3177 = vmatpush.bf16.xpose.msra.mxu0 %v3167
      %3178 = vmatpush.bf16.xpose.msra.mxu0 %v3164
      %3179 = vmatpush.bf16.xpose.msra.mxu0 %v3161
      %3180 = vmatmul.bf16.gmra.mxu0 %v3149
      %v3181 = vpop.f32.mrf.mxu0
      %v3182 = vadd.f32 0.0, %v3181
      %v3183 = vpop.f32.mrf.mxu0
      %v3184 = vadd.f32 0.0, %v3183
      %3185 = vmatmul.bf16.gmra.mxu0 %v3152
      %v3186 = vpop.f32.mrf.mxu0
      %v3187 = vadd.f32 0.0, %v3186
      %v3188 = vpop.f32.mrf.mxu0
      %v3189 = vadd.f32 0.0, %v3188
      %3190 = vmatmul.bf16.gmra.mxu0 %v3155
      %v3191 = vpop.f32.mrf.mxu0
      %v3192 = vadd.f32 0.0, %v3191
      %v3193 = vpop.f32.mrf.mxu0
      %v3194 = vadd.f32 0.0, %v3193
      %3195 = vmatmul.bf16.gmra.mxu0 %v3158
      %v3196 = vpop.f32.mrf.mxu0
      %v3197 = vadd.f32 0.0, %v3196
      %v3198 = vpop.f32.mrf.mxu0
      %v3199 = vadd.f32 0.0, %v3198
      %3200 = vdwg.mxu0
      %3201 = vrot.lane.b32.xlu0 %v1104, 104
      %v3202 = vpop.permute.xlu0 %3201
      %3203 = vrot.lane.b32.xlu0 %v1105, 104
      %v3204 = vpop.permute.xlu0 %3203
      %3205 = vrot.lane.b32.xlu0 %v1106, 104
      %v3206 = vpop.permute.xlu0 %3205
      %3207 = vrot.lane.b32.xlu0 %v1107, 104
      %v3208 = vpop.permute.xlu0 %3207
      %3209 = vrot.lane.b32.xlu0 %v1104, 72
      %v3210 = vpop.permute.xlu0 %3209
      %3211 = vrot.lane.b32.xlu0 %v1105, 72
      %v3212 = vpop.permute.xlu0 %3211
      %3213 = vrot.lane.b32.xlu0 %v1106, 72
      %v3214 = vpop.permute.xlu0 %3213
      %3215 = vrot.lane.b32.xlu0 %v1107, 72
      %v3216 = vpop.permute.xlu0 %3215
      %v3218 = vsel %vm1034, %v3202, 0
      %v3221 = vsel %vm1034, %v3204, 0
      %v3224 = vsel %vm1034, %v3206, 0
      %v3227 = vsel %vm1034, %v3208, 0
      %v3230 = vsel %vm1034, %v3210, 0
      %v3233 = vsel %vm1034, %v3212, 0
      %v3236 = vsel %vm1034, %v3214, 0
      %v3239 = vsel %vm1034, %v3216, 0
      %3241 = vmatpush.bf16.xpose.msra.mxu0 0
      %3242 = vmatpush.bf16.xpose.msra.mxu0 0
      %3243 = vmatpush.bf16.xpose.msra.mxu0 0
      %3244 = vmatpush.bf16.xpose.msra.mxu0 0
      %3245 = vmatpush.bf16.xpose.msra.mxu0 %v3239
      %3246 = vmatpush.bf16.xpose.msra.mxu0 %v3236
      %3247 = vmatpush.bf16.xpose.msra.mxu0 %v3233
      %3248 = vmatpush.bf16.xpose.msra.mxu0 %v3230
      %3249 = vmatmul.bf16.gmra.mxu0 %v3218
      %v3250 = vpop.f32.mrf.mxu0
      %v3251 = vadd.f32 0.0, %v3250
      %v3252 = vpop.f32.mrf.mxu0
      %v3253 = vadd.f32 0.0, %v3252
      %3254 = vmatmul.bf16.gmra.mxu0 %v3221
      %v3255 = vpop.f32.mrf.mxu0
      %v3256 = vadd.f32 0.0, %v3255
      %v3257 = vpop.f32.mrf.mxu0
      %v3258 = vadd.f32 0.0, %v3257
      %3259 = vmatmul.bf16.gmra.mxu0 %v3224
      %v3260 = vpop.f32.mrf.mxu0
      %v3261 = vadd.f32 0.0, %v3260
      %v3262 = vpop.f32.mrf.mxu0
      %v3263 = vadd.f32 0.0, %v3262
      %3264 = vmatmul.bf16.gmra.mxu0 %v3227
      %v3265 = vpop.f32.mrf.mxu0
      %v3266 = vadd.f32 0.0, %v3265
      %v3267 = vpop.f32.mrf.mxu0
      %v3268 = vadd.f32 0.0, %v3267
      %3269 = vdwg.mxu0
      %v3270 = vsel %vm1169, %v3182, -inf
      %3271 = vmax.xlane.f32.xlu0 %v3270
      %v3272 = vpop.xlane.xlu0 %3271
      %v3273 = vsel %vm1169, %v3184, -inf
      %3274 = vmax.xlane.f32.xlu0 %v3273
      %v3275 = vpop.xlane.xlu0 %3274
      %v3276 = vsel %vm1169, %v3187, -inf
      %3277 = vmax.xlane.f32.xlu0 %v3276
      %v3278 = vpop.xlane.xlu0 %3277
      %v3279 = vsel %vm1169, %v3189, -inf
      %3280 = vmax.xlane.f32.xlu0 %v3279
      %v3281 = vpop.xlane.xlu0 %3280
      %v3282 = vsel %vm1169, %v3192, -inf
      %3283 = vmax.xlane.f32.xlu0 %v3282
      %v3284 = vpop.xlane.xlu0 %3283
      %v3285 = vsel %vm1169, %v3194, -inf
      %3286 = vmax.xlane.f32.xlu0 %v3285
      %v3287 = vpop.xlane.xlu0 %3286
      %v3288 = vsel %vm1169, %v3197, -inf
      %3289 = vmax.xlane.f32.xlu0 %v3288
      %v3290 = vpop.xlane.xlu0 %3289
      %v3291 = vsel %vm1169, %v3199, -inf
      %3292 = vmax.xlane.f32.xlu0 %v3291
      %v3293 = vpop.xlane.xlu0 %3292
      %v3294 = vsel %vm1169, %v3251, -inf
      %3295 = vmax.xlane.f32.xlu0 %v3294
      %v3296 = vpop.xlane.xlu0 %3295
      %v3297 = vsel %vm1169, %v3253, -inf
      %3298 = vmax.xlane.f32.xlu0 %v3297
      %v3299 = vpop.xlane.xlu0 %3298
      %v3300 = vsel %vm1169, %v3256, -inf
      %3301 = vmax.xlane.f32.xlu0 %v3300
      %v3302 = vpop.xlane.xlu0 %3301
      %v3303 = vsel %vm1169, %v3258, -inf
      %3304 = vmax.xlane.f32.xlu0 %v3303
      %v3305 = vpop.xlane.xlu0 %3304
      %v3306 = vsel %vm1169, %v3261, -inf
      %3307 = vmax.xlane.f32.xlu0 %v3306
      %v3308 = vpop.xlane.xlu0 %3307
      %v3309 = vsel %vm1169, %v3263, -inf
      %3310 = vmax.xlane.f32.xlu0 %v3309
      %v3311 = vpop.xlane.xlu0 %3310
      %v3312 = vsel %vm1169, %v3266, -inf
      %3313 = vmax.xlane.f32.xlu0 %v3312
      %v3314 = vpop.xlane.xlu0 %3313
      %v3315 = vsel %vm1169, %v3268, -inf
      %3316 = vmax.xlane.f32.xlu0 %v3315
      %v3317 = vpop.xlane.xlu0 %3316
      %v3318 = vsub.f32 %v3182, %v3272
      %v3319 = vsub.f32 %v3184, %v3275
      %v3320 = vsub.f32 %v3187, %v3278
      %v3321 = vsub.f32 %v3189, %v3281
      %v3322 = vsub.f32 %v3192, %v3284
      %v3323 = vsub.f32 %v3194, %v3287
      %v3324 = vsub.f32 %v3197, %v3290
      %v3325 = vsub.f32 %v3199, %v3293
      %v3326 = vsub.f32 %v3251, %v3296
      %v3327 = vsub.f32 %v3253, %v3299
      %v3328 = vsub.f32 %v3256, %v3302
      %v3329 = vsub.f32 %v3258, %v3305
      %v3330 = vsub.f32 %v3261, %v3308
      %v3331 = vsub.f32 %v3263, %v3311
      %v3332 = vsub.f32 %v3266, %v3314
      %v3333 = vsub.f32 %v3268, %v3317
      %v3334 = vmul.f32 %v3318, 1.442695
      %v3335 = vpow.pop %v3334
      %v3336 = vmul.f32 %v3319, 1.442695
      %v3337 = vpow.pop %v3336
      %v3338 = vmul.f32 %v3320, 1.442695
      %v3339 = vpow.pop %v3338
      %v3340 = vmul.f32 %v3321, 1.442695
      %v3341 = vpow.pop %v3340
      %v3342 = vmul.f32 %v3322, 1.442695
      %v3343 = vpow.pop %v3342
      %v3344 = vmul.f32 %v3323, 1.442695
      %v3345 = vpow.pop %v3344
      %v3346 = vmul.f32 %v3324, 1.442695
      %v3347 = vpow.pop %v3346
      %v3348 = vmul.f32 %v3325, 1.442695
      %v3349 = vpow.pop %v3348
      %v3350 = vmul.f32 %v3326, 1.442695
      %v3351 = vpow.pop %v3350
      %v3352 = vmul.f32 %v3327, 1.442695
      %v3353 = vpow.pop %v3352
      %v3354 = vmul.f32 %v3328, 1.442695
      %v3355 = vpow.pop %v3354
      %v3356 = vmul.f32 %v3329, 1.442695
      %v3357 = vpow.pop %v3356
      %v3358 = vmul.f32 %v3330, 1.442695
      %v3359 = vpow.pop %v3358
      %v3360 = vmul.f32 %v3331, 1.442695
      %v3361 = vpow.pop %v3360
      %v3362 = vmul.f32 %v3332, 1.442695
      %v3363 = vpow.pop %v3362
      %v3364 = vmul.f32 %v3333, 1.442695
      %v3365 = vpow.pop %v3364
      %v3366 = vsel %vm1169, %v3335, 0.0
      %3367 = vadd.xlane.f32.xlu0 %v3366
      %v3368 = vpop.xlane.xlu0 %3367
      %v3369 = vsel %vm1169, %v3337, 0.0
      %3370 = vadd.xlane.f32.xlu0 %v3369
      %v3371 = vpop.xlane.xlu0 %3370
      %v3372 = vsel %vm1169, %v3339, 0.0
      %3373 = vadd.xlane.f32.xlu0 %v3372
      %v3374 = vpop.xlane.xlu0 %3373
      %v3375 = vsel %vm1169, %v3341, 0.0
      %3376 = vadd.xlane.f32.xlu0 %v3375
      %v3377 = vpop.xlane.xlu0 %3376
      %v3378 = vsel %vm1169, %v3343, 0.0
      %3379 = vadd.xlane.f32.xlu0 %v3378
      %v3380 = vpop.xlane.xlu0 %3379
      %v3381 = vsel %vm1169, %v3345, 0.0
      %3382 = vadd.xlane.f32.xlu0 %v3381
      %v3383 = vpop.xlane.xlu0 %3382
      %v3384 = vsel %vm1169, %v3347, 0.0
      %3385 = vadd.xlane.f32.xlu0 %v3384
      %v3386 = vpop.xlane.xlu0 %3385
      %v3387 = vsel %vm1169, %v3349, 0.0
      %3388 = vadd.xlane.f32.xlu0 %v3387
      %v3389 = vpop.xlane.xlu0 %3388
      %v3390 = vsel %vm1169, %v3351, 0.0
      %3391 = vadd.xlane.f32.xlu0 %v3390
      %v3392 = vpop.xlane.xlu0 %3391
      %v3393 = vsel %vm1169, %v3353, 0.0
      %3394 = vadd.xlane.f32.xlu0 %v3393
      %v3395 = vpop.xlane.xlu0 %3394
      %v3396 = vsel %vm1169, %v3355, 0.0
      %3397 = vadd.xlane.f32.xlu0 %v3396
      %v3398 = vpop.xlane.xlu0 %3397
      %v3399 = vsel %vm1169, %v3357, 0.0
      %3400 = vadd.xlane.f32.xlu0 %v3399
      %v3401 = vpop.xlane.xlu0 %3400
      %v3402 = vsel %vm1169, %v3359, 0.0
      %3403 = vadd.xlane.f32.xlu0 %v3402
      %v3404 = vpop.xlane.xlu0 %3403
      %v3405 = vsel %vm1169, %v3361, 0.0
      %3406 = vadd.xlane.f32.xlu0 %v3405
      %v3407 = vpop.xlane.xlu0 %3406
      %v3408 = vsel %vm1169, %v3363, 0.0
      %3409 = vadd.xlane.f32.xlu0 %v3408
      %v3410 = vpop.xlane.xlu0 %3409
      %v3411 = vsel %vm1169, %v3365, 0.0
      %3412 = vadd.xlane.f32.xlu0 %v3411
      %v3413 = vpop.xlane.xlu0 %3412
      %v3414 = vrcp.pop %v3368
      %v3415 = vmul.f32 %v3368, %v3414
      %v3416 = vsub.f32 1.0, %v3415
      %v3417 = vmul.f32 %v3414, %v3416
      %v3418 = vadd.f32 %v3414, %v3417
      %vm3419 = vweird.f32 %v3368
      %vm3420 = vweird.f32 %v3414
      %vm3421 = vmor %vm3419, %vm3420
      %v3422 = vsel %vm3421, %v3414, %v3418
      %v3423 = vand.u32 2147483647, %v3368
      %vm3424 = vcmp.eq.f32.partialorder %v3423, 8.507059e+37
      %v3425 = vand.u32 %v3368, 2147483648
      %v3426 = vor.u32 1.1754944e-38, %v3425
      %v3427 = vsel %vm3424, %v3426, %v3422
      %v3428 = vmul.f32 1.0, %v3427
      %v3429 = vrcp.pop %v3371
      %v3430 = vmul.f32 %v3371, %v3429
      %v3431 = vsub.f32 1.0, %v3430
      %v3432 = vmul.f32 %v3429, %v3431
      %v3433 = vadd.f32 %v3429, %v3432
      %vm3434 = vweird.f32 %v3371
      %vm3435 = vweird.f32 %v3429
      %vm3436 = vmor %vm3434, %vm3435
      %v3437 = vsel %vm3436, %v3429, %v3433
      %v3438 = vand.u32 2147483647, %v3371
      %vm3439 = vcmp.eq.f32.partialorder %v3438, 8.507059e+37
      %v3440 = vand.u32 %v3371, 2147483648
      %v3441 = vor.u32 1.1754944e-38, %v3440
      %v3442 = vsel %vm3439, %v3441, %v3437
      %v3443 = vmul.f32 1.0, %v3442
      %v3444 = vrcp.pop %v3374
      %v3445 = vmul.f32 %v3374, %v3444
      %v3446 = vsub.f32 1.0, %v3445
      %v3447 = vmul.f32 %v3444, %v3446
      %v3448 = vadd.f32 %v3444, %v3447
      %vm3449 = vweird.f32 %v3374
      %vm3450 = vweird.f32 %v3444
      %vm3451 = vmor %vm3449, %vm3450
      %v3452 = vsel %vm3451, %v3444, %v3448
      %v3453 = vand.u32 2147483647, %v3374
      %vm3454 = vcmp.eq.f32.partialorder %v3453, 8.507059e+37
      %v3455 = vand.u32 %v3374, 2147483648
      %v3456 = vor.u32 1.1754944e-38, %v3455
      %v3457 = vsel %vm3454, %v3456, %v3452
      %v3458 = vmul.f32 1.0, %v3457
      %v3459 = vrcp.pop %v3377
      %v3460 = vmul.f32 %v3377, %v3459
      %v3461 = vsub.f32 1.0, %v3460
      %v3462 = vmul.f32 %v3459, %v3461
      %v3463 = vadd.f32 %v3459, %v3462
      %vm3464 = vweird.f32 %v3377
      %vm3465 = vweird.f32 %v3459
      %vm3466 = vmor %vm3464, %vm3465
      %v3467 = vsel %vm3466, %v3459, %v3463
      %v3468 = vand.u32 2147483647, %v3377
      %vm3469 = vcmp.eq.f32.partialorder %v3468, 8.507059e+37
      %v3470 = vand.u32 %v3377, 2147483648
      %v3471 = vor.u32 1.1754944e-38, %v3470
      %v3472 = vsel %vm3469, %v3471, %v3467
      %v3473 = vmul.f32 1.0, %v3472
      %v3474 = vrcp.pop %v3380
      %v3475 = vmul.f32 %v3380, %v3474
      %v3476 = vsub.f32 1.0, %v3475
      %v3477 = vmul.f32 %v3474, %v3476
      %v3478 = vadd.f32 %v3474, %v3477
      %vm3479 = vweird.f32 %v3380
      %vm3480 = vweird.f32 %v3474
      %vm3481 = vmor %vm3479, %vm3480
      %v3482 = vsel %vm3481, %v3474, %v3478
      %v3483 = vand.u32 2147483647, %v3380
      %vm3484 = vcmp.eq.f32.partialorder %v3483, 8.507059e+37
      %v3485 = vand.u32 %v3380, 2147483648
      %v3486 = vor.u32 1.1754944e-38, %v3485
      %v3487 = vsel %vm3484, %v3486, %v3482
      %v3488 = vmul.f32 1.0, %v3487
      %v3489 = vrcp.pop %v3383
      %v3490 = vmul.f32 %v3383, %v3489
      %v3491 = vsub.f32 1.0, %v3490
      %v3492 = vmul.f32 %v3489, %v3491
      %v3493 = vadd.f32 %v3489, %v3492
      %vm3494 = vweird.f32 %v3383
      %vm3495 = vweird.f32 %v3489
      %vm3496 = vmor %vm3494, %vm3495
      %v3497 = vsel %vm3496, %v3489, %v3493
      %v3498 = vand.u32 2147483647, %v3383
      %vm3499 = vcmp.eq.f32.partialorder %v3498, 8.507059e+37
      %v3500 = vand.u32 %v3383, 2147483648
      %v3501 = vor.u32 1.1754944e-38, %v3500
      %v3502 = vsel %vm3499, %v3501, %v3497
      %v3503 = vmul.f32 1.0, %v3502
      %v3504 = vrcp.pop %v3386
      %v3505 = vmul.f32 %v3386, %v3504
      %v3506 = vsub.f32 1.0, %v3505
      %v3507 = vmul.f32 %v3504, %v3506
      %v3508 = vadd.f32 %v3504, %v3507
      %vm3509 = vweird.f32 %v3386
      %vm3510 = vweird.f32 %v3504
      %vm3511 = vmor %vm3509, %vm3510
      %v3512 = vsel %vm3511, %v3504, %v3508
      %v3513 = vand.u32 2147483647, %v3386
      %vm3514 = vcmp.eq.f32.partialorder %v3513, 8.507059e+37
      %v3515 = vand.u32 %v3386, 2147483648
      %v3516 = vor.u32 1.1754944e-38, %v3515
      %v3517 = vsel %vm3514, %v3516, %v3512
      %v3518 = vmul.f32 1.0, %v3517
      %v3519 = vrcp.pop %v3389
      %v3520 = vmul.f32 %v3389, %v3519
      %v3521 = vsub.f32 1.0, %v3520
      %v3522 = vmul.f32 %v3519, %v3521
      %v3523 = vadd.f32 %v3519, %v3522
      %vm3524 = vweird.f32 %v3389
      %vm3525 = vweird.f32 %v3519
      %vm3526 = vmor %vm3524, %vm3525
      %v3527 = vsel %vm3526, %v3519, %v3523
      %v3528 = vand.u32 2147483647, %v3389
      %vm3529 = vcmp.eq.f32.partialorder %v3528, 8.507059e+37
      %v3530 = vand.u32 %v3389, 2147483648
      %v3531 = vor.u32 1.1754944e-38, %v3530
      %v3532 = vsel %vm3529, %v3531, %v3527
      %v3533 = vmul.f32 1.0, %v3532
      %v3534 = vrcp.pop %v3392
      %v3535 = vmul.f32 %v3392, %v3534
      %v3536 = vsub.f32 1.0, %v3535
      %v3537 = vmul.f32 %v3534, %v3536
      %v3538 = vadd.f32 %v3534, %v3537
      %vm3539 = vweird.f32 %v3392
      %vm3540 = vweird.f32 %v3534
      %vm3541 = vmor %vm3539, %vm3540
      %v3542 = vsel %vm3541, %v3534, %v3538
      %v3543 = vand.u32 2147483647, %v3392
      %vm3544 = vcmp.eq.f32.partialorder %v3543, 8.507059e+37
      %v3545 = vand.u32 %v3392, 2147483648
      %v3546 = vor.u32 1.1754944e-38, %v3545
      %v3547 = vsel %vm3544, %v3546, %v3542
      %v3548 = vmul.f32 1.0, %v3547
      %v3549 = vrcp.pop %v3395
      %v3550 = vmul.f32 %v3395, %v3549
      %v3551 = vsub.f32 1.0, %v3550
      %v3552 = vmul.f32 %v3549, %v3551
      %v3553 = vadd.f32 %v3549, %v3552
      %vm3554 = vweird.f32 %v3395
      %vm3555 = vweird.f32 %v3549
      %vm3556 = vmor %vm3554, %vm3555
      %v3557 = vsel %vm3556, %v3549, %v3553
      %v3558 = vand.u32 2147483647, %v3395
      %vm3559 = vcmp.eq.f32.partialorder %v3558, 8.507059e+37
      %v3560 = vand.u32 %v3395, 2147483648
      %v3561 = vor.u32 1.1754944e-38, %v3560
      %v3562 = vsel %vm3559, %v3561, %v3557
      %v3563 = vmul.f32 1.0, %v3562
      %v3564 = vrcp.pop %v3398
      %v3565 = vmul.f32 %v3398, %v3564
      %v3566 = vsub.f32 1.0, %v3565
      %v3567 = vmul.f32 %v3564, %v3566
      %v3568 = vadd.f32 %v3564, %v3567
      %vm3569 = vweird.f32 %v3398
      %vm3570 = vweird.f32 %v3564
      %vm3571 = vmor %vm3569, %vm3570
      %v3572 = vsel %vm3571, %v3564, %v3568
      %v3573 = vand.u32 2147483647, %v3398
      %vm3574 = vcmp.eq.f32.partialorder %v3573, 8.507059e+37
      %v3575 = vand.u32 %v3398, 2147483648
      %v3576 = vor.u32 1.1754944e-38, %v3575
      %v3577 = vsel %vm3574, %v3576, %v3572
      %v3578 = vmul.f32 1.0, %v3577
      %v3579 = vrcp.pop %v3401
      %v3580 = vmul.f32 %v3401, %v3579
      %v3581 = vsub.f32 1.0, %v3580
      %v3582 = vmul.f32 %v3579, %v3581
      %v3583 = vadd.f32 %v3579, %v3582
      %vm3584 = vweird.f32 %v3401
      %vm3585 = vweird.f32 %v3579
      %vm3586 = vmor %vm3584, %vm3585
      %v3587 = vsel %vm3586, %v3579, %v3583
      %v3588 = vand.u32 2147483647, %v3401
      %vm3589 = vcmp.eq.f32.partialorder %v3588, 8.507059e+37
      %v3590 = vand.u32 %v3401, 2147483648
      %v3591 = vor.u32 1.1754944e-38, %v3590
      %v3592 = vsel %vm3589, %v3591, %v3587
      %v3593 = vmul.f32 1.0, %v3592
      %v3594 = vrcp.pop %v3404
      %v3595 = vmul.f32 %v3404, %v3594
      %v3596 = vsub.f32 1.0, %v3595
      %v3597 = vmul.f32 %v3594, %v3596
      %v3598 = vadd.f32 %v3594, %v3597
      %vm3599 = vweird.f32 %v3404
      %vm3600 = vweird.f32 %v3594
      %vm3601 = vmor %vm3599, %vm3600
      %v3602 = vsel %vm3601, %v3594, %v3598
      %v3603 = vand.u32 2147483647, %v3404
      %vm3604 = vcmp.eq.f32.partialorder %v3603, 8.507059e+37
      %v3605 = vand.u32 %v3404, 2147483648
      %v3606 = vor.u32 1.1754944e-38, %v3605
      %v3607 = vsel %vm3604, %v3606, %v3602
      %v3608 = vmul.f32 1.0, %v3607
      %v3609 = vrcp.pop %v3407
      %v3610 = vmul.f32 %v3407, %v3609
      %v3611 = vsub.f32 1.0, %v3610
      %v3612 = vmul.f32 %v3609, %v3611
      %v3613 = vadd.f32 %v3609, %v3612
      %vm3614 = vweird.f32 %v3407
      %vm3615 = vweird.f32 %v3609
      %vm3616 = vmor %vm3614, %vm3615
      %v3617 = vsel %vm3616, %v3609, %v3613
      %v3618 = vand.u32 2147483647, %v3407
      %vm3619 = vcmp.eq.f32.partialorder %v3618, 8.507059e+37
      %v3620 = vand.u32 %v3407, 2147483648
      %v3621 = vor.u32 1.1754944e-38, %v3620
      %v3622 = vsel %vm3619, %v3621, %v3617
      %v3623 = vmul.f32 1.0, %v3622
      %v3624 = vrcp.pop %v3410
      %v3625 = vmul.f32 %v3410, %v3624
      %v3626 = vsub.f32 1.0, %v3625
      %v3627 = vmul.f32 %v3624, %v3626
      %v3628 = vadd.f32 %v3624, %v3627
      %vm3629 = vweird.f32 %v3410
      %vm3630 = vweird.f32 %v3624
      %vm3631 = vmor %vm3629, %vm3630
      %v3632 = vsel %vm3631, %v3624, %v3628
      %v3633 = vand.u32 2147483647, %v3410
      %vm3634 = vcmp.eq.f32.partialorder %v3633, 8.507059e+37
      %v3635 = vand.u32 %v3410, 2147483648
      %v3636 = vor.u32 1.1754944e-38, %v3635
      %v3637 = vsel %vm3634, %v3636, %v3632
      %v3638 = vmul.f32 1.0, %v3637
      %v3639 = vrcp.pop %v3413
      %v3640 = vmul.f32 %v3413, %v3639
      %v3641 = vsub.f32 1.0, %v3640
      %v3642 = vmul.f32 %v3639, %v3641
      %v3643 = vadd.f32 %v3639, %v3642
      %vm3644 = vweird.f32 %v3413
      %vm3645 = vweird.f32 %v3639
      %vm3646 = vmor %vm3644, %vm3645
      %v3647 = vsel %vm3646, %v3639, %v3643
      %v3648 = vand.u32 2147483647, %v3413
      %vm3649 = vcmp.eq.f32.partialorder %v3648, 8.507059e+37
      %v3650 = vand.u32 %v3413, 2147483648
      %v3651 = vor.u32 1.1754944e-38, %v3650
      %v3652 = vsel %vm3649, %v3651, %v3647
      %v3653 = vmul.f32 1.0, %v3652
      %v3654 = vpack.c.bf16 %v3335, %v3335
      %v3655 = vpack.c.bf16 %v3337, %v3337
      %v3656 = vpack.c.bf16 %v3339, %v3339
      %v3657 = vpack.c.bf16 %v3341, %v3341
      %v3658 = vpack.c.bf16 %v3343, %v3343
      %v3659 = vpack.c.bf16 %v3345, %v3345
      %v3660 = vpack.c.bf16 %v3347, %v3347
      %v3661 = vpack.c.bf16 %v3349, %v3349
      %v3662 = vpack.c.bf16 %v3351, %v3351
      %v3663 = vpack.c.bf16 %v3353, %v3353
      %v3664 = vpack.c.bf16 %v3355, %v3355
      %v3665 = vpack.c.bf16 %v3357, %v3357
      %v3666 = vpack.c.bf16 %v3359, %v3359
      %v3667 = vpack.c.bf16 %v3361, %v3361
      %v3668 = vpack.c.bf16 %v3363, %v3363
      %v3669 = vpack.c.bf16 %v3365, %v3365
      %v3678 = vunpack.c.l.b16 %v3654
      %v3679 = vunpack.c.l.b16 %v3655
      %v3680 = vunpack.c.l.b16 %v3656
      %v3681 = vunpack.c.l.b16 %v3657
      %v3682 = vunpack.c.l.b16 %v3658
      %v3683 = vunpack.c.l.b16 %v3659
      %v3684 = vunpack.c.l.b16 %v3660
      %v3685 = vunpack.c.l.b16 %v3661
      %v3686 = vpack.c.b16 %v3679, %v3678
      %v3687 = vpack.c.b16 %v3681, %v3680
      %v3688 = vpack.c.b16 %v3683, %v3682
      %v3689 = vpack.c.b16 %v3685, %v3684
      %3690 = vrot.lane.b32.xlu0 %v1022, 40
      %v3691 = vpop.permute.xlu0 %3690
      %3692 = vrot.lane.b32.xlu0 %v1023, 40
      %v3693 = vpop.permute.xlu0 %3692
      %3694 = vrot.lane.b32.xlu0 %v1024, 40
      %v3695 = vpop.permute.xlu0 %3694
      %3696 = vrot.lane.b32.xlu0 %v1025, 40
      %v3697 = vpop.permute.xlu0 %3696
      %v3703 = vsel %vm1169, %v3686, 0
      %v3706 = vsel %vm1169, %v3687, 0
      %v3709 = vsel %vm1169, %v3688, 0
      %v3712 = vsel %vm1169, %v3689, 0
      %3714 = vmatpush.bf16.msra.mxu0 0
      %3715 = vmatpush.bf16.msra.mxu0 0
      %3716 = vmatpush.bf16.msra.mxu0 0
      %3717 = vmatpush.bf16.msra.mxu0 0
      %3718 = vmatpush.bf16.msra.mxu0 %v3697
      %3719 = vmatpush.bf16.msra.mxu0 %v3695
      %3720 = vmatpush.bf16.msra.mxu0 %v3693
      %3721 = vmatpush.bf16.msra.mxu0 %v3691
      %3722 = vmatmul.bf16.gmra.mxu0 %v3703
      %v3723 = vpop.f32.mrf.mxu0
      %v3724 = vadd.f32 0.0, %v3723
      %v3725 = vpop.f32.mrf.mxu0
      %v3726 = vadd.f32 0.0, %v3725
      %3727 = vmatmul.bf16.gmra.mxu0 %v3706
      %v3728 = vpop.f32.mrf.mxu0
      %v3729 = vadd.f32 0.0, %v3728
      %v3730 = vpop.f32.mrf.mxu0
      %v3731 = vadd.f32 0.0, %v3730
      %3732 = vmatmul.bf16.gmra.mxu0 %v3709
      %v3733 = vpop.f32.mrf.mxu0
      %v3734 = vadd.f32 0.0, %v3733
      %v3735 = vpop.f32.mrf.mxu0
      %v3736 = vadd.f32 0.0, %v3735
      %3737 = vmatmul.bf16.gmra.mxu0 %v3712
      %v3738 = vpop.f32.mrf.mxu0
      %v3739 = vadd.f32 0.0, %v3738
      %v3740 = vpop.f32.mrf.mxu0
      %v3741 = vadd.f32 0.0, %v3740
      %3742 = vdwg.mxu0
      %v3751 = vunpack.c.l.b16 %v3662
      %v3752 = vunpack.c.l.b16 %v3663
      %v3753 = vunpack.c.l.b16 %v3664
      %v3754 = vunpack.c.l.b16 %v3665
      %v3755 = vunpack.c.l.b16 %v3666
      %v3756 = vunpack.c.l.b16 %v3667
      %v3757 = vunpack.c.l.b16 %v3668
      %v3758 = vunpack.c.l.b16 %v3669
      %v3759 = vpack.c.b16 %v3752, %v3751
      %v3760 = vpack.c.b16 %v3754, %v3753
      %v3761 = vpack.c.b16 %v3756, %v3755
      %v3762 = vpack.c.b16 %v3758, %v3757
      %3763 = vrot.lane.b32.xlu0 %v1104, 40
      %v3764 = vpop.permute.xlu0 %3763
      %3765 = vrot.lane.b32.xlu0 %v1105, 40
      %v3766 = vpop.permute.xlu0 %3765
      %3767 = vrot.lane.b32.xlu0 %v1106, 40
      %v3768 = vpop.permute.xlu0 %3767
      %3769 = vrot.lane.b32.xlu0 %v1107, 40
      %v3770 = vpop.permute.xlu0 %3769
      %v3776 = vsel %vm1169, %v3759, 0
      %v3779 = vsel %vm1169, %v3760, 0
      %v3782 = vsel %vm1169, %v3761, 0
      %v3785 = vsel %vm1169, %v3762, 0
      %3787 = vmatpush.bf16.msra.mxu0 0
      %3788 = vmatpush.bf16.msra.mxu0 0
      %3789 = vmatpush.bf16.msra.mxu0 0
      %3790 = vmatpush.bf16.msra.mxu0 0
      %3791 = vmatpush.bf16.msra.mxu0 %v3770
      %3792 = vmatpush.bf16.msra.mxu0 %v3768
      %3793 = vmatpush.bf16.msra.mxu0 %v3766
      %3794 = vmatpush.bf16.msra.mxu0 %v3764
      %3795 = vmatmul.bf16.gmra.mxu0 %v3776
      %v3796 = vpop.f32.mrf.mxu0
      %v3797 = vadd.f32 0.0, %v3796
      %v3798 = vpop.f32.mrf.mxu0
      %v3799 = vadd.f32 0.0, %v3798
      %3800 = vmatmul.bf16.gmra.mxu0 %v3779
      %v3801 = vpop.f32.mrf.mxu0
      %v3802 = vadd.f32 0.0, %v3801
      %v3803 = vpop.f32.mrf.mxu0
      %v3804 = vadd.f32 0.0, %v3803
      %3805 = vmatmul.bf16.gmra.mxu0 %v3782
      %v3806 = vpop.f32.mrf.mxu0
      %v3807 = vadd.f32 0.0, %v3806
      %v3808 = vpop.f32.mrf.mxu0
      %v3809 = vadd.f32 0.0, %v3808
      %3810 = vmatmul.bf16.gmra.mxu0 %v3785
      %v3811 = vpop.f32.mrf.mxu0
      %v3812 = vadd.f32 0.0, %v3811
      %v3813 = vpop.f32.mrf.mxu0
      %v3814 = vadd.f32 0.0, %v3813
      %3815 = vdwg.mxu0
      %v3816 = vmul.f32 %v3724, %v3428
      %v3817 = vmul.f32 %v3726, %v3443
      %v3818 = vmul.f32 %v3729, %v3458
      %v3819 = vmul.f32 %v3731, %v3473
      %v3820 = vmul.f32 %v3734, %v3488
      %v3821 = vmul.f32 %v3736, %v3503
      %v3822 = vmul.f32 %v3739, %v3518
      %v3823 = vmul.f32 %v3741, %v3533
      %v3824 = vmul.f32 %v3797, %v3548
      %v3825 = vmul.f32 %v3799, %v3563
      %v3826 = vmul.f32 %v3802, %v3578
      %v3827 = vmul.f32 %v3804, %v3593
      %v3828 = vmul.f32 %v3807, %v3608
      %v3829 = vmul.f32 %v3809, %v3623
      %v3830 = vmul.f32 %v3812, %v3638
      %v3831 = vmul.f32 %v3814, %v3653
      %3848 = vrot.lane.b32.xlu0 %v2416, 8
      %v3849 = vpop.permute.xlu0 %3848
      %3850 = vrot.lane.b32.xlu0 %v2417, 8
      %v3851 = vpop.permute.xlu0 %3850
      %3852 = vrot.lane.b32.xlu0 %v2418, 8
      %v3853 = vpop.permute.xlu0 %3852
      %3854 = vrot.lane.b32.xlu0 %v2419, 8
      %v3855 = vpop.permute.xlu0 %3854
      %3856 = vrot.lane.b32.xlu0 %v2420, 8
      %v3857 = vpop.permute.xlu0 %3856
      %3858 = vrot.lane.b32.xlu0 %v2421, 8
      %v3859 = vpop.permute.xlu0 %3858
      %3860 = vrot.lane.b32.xlu0 %v2422, 8
      %v3861 = vpop.permute.xlu0 %3860
      %3862 = vrot.lane.b32.xlu0 %v2423, 8
      %v3863 = vpop.permute.xlu0 %3862
      %3864 = vrot.lane.b32.xlu0 %v2424, 8
      %v3865 = vpop.permute.xlu0 %3864
      %3866 = vrot.lane.b32.xlu0 %v2425, 8
      %v3867 = vpop.permute.xlu0 %3866
      %3868 = vrot.lane.b32.xlu0 %v2426, 8
      %v3869 = vpop.permute.xlu0 %3868
      %3870 = vrot.lane.b32.xlu0 %v2427, 8
      %v3871 = vpop.permute.xlu0 %3870
      %3872 = vrot.lane.b32.xlu0 %v2428, 8
      %v3873 = vpop.permute.xlu0 %3872
      %3874 = vrot.lane.b32.xlu0 %v2429, 8
      %v3875 = vpop.permute.xlu0 %3874
      %3876 = vrot.lane.b32.xlu0 %v2430, 8
      %v3877 = vpop.permute.xlu0 %3876
      %3878 = vrot.lane.b32.xlu0 %v2431, 8
      %v3879 = vpop.permute.xlu0 %3878
      %3912 = vrot.lane.b32.xlu0 %v3116, 16
      %v3913 = vpop.permute.xlu0 %3912
      %3914 = vrot.lane.b32.xlu0 %v3117, 16
      %v3915 = vpop.permute.xlu0 %3914
      %3916 = vrot.lane.b32.xlu0 %v3118, 16
      %v3917 = vpop.permute.xlu0 %3916
      %3918 = vrot.lane.b32.xlu0 %v3119, 16
      %v3919 = vpop.permute.xlu0 %3918
      %3920 = vrot.lane.b32.xlu0 %v3120, 16
      %v3921 = vpop.permute.xlu0 %3920
      %3922 = vrot.lane.b32.xlu0 %v3121, 16
      %v3923 = vpop.permute.xlu0 %3922
      %3924 = vrot.lane.b32.xlu0 %v3122, 16
      %v3925 = vpop.permute.xlu0 %3924
      %3926 = vrot.lane.b32.xlu0 %v3123, 16
      %v3927 = vpop.permute.xlu0 %3926
      %3928 = vrot.lane.b32.xlu0 %v3124, 16
      %v3929 = vpop.permute.xlu0 %3928
      %3930 = vrot.lane.b32.xlu0 %v3125, 16
      %v3931 = vpop.permute.xlu0 %3930
      %3932 = vrot.lane.b32.xlu0 %v3126, 16
      %v3933 = vpop.permute.xlu0 %3932
      %3934 = vrot.lane.b32.xlu0 %v3127, 16
      %v3935 = vpop.permute.xlu0 %3934
      %3936 = vrot.lane.b32.xlu0 %v3128, 16
      %v3937 = vpop.permute.xlu0 %3936
      %3938 = vrot.lane.b32.xlu0 %v3129, 16
      %v3939 = vpop.permute.xlu0 %3938
      %3940 = vrot.lane.b32.xlu0 %v3130, 16
      %v3941 = vpop.permute.xlu0 %3940
      %3942 = vrot.lane.b32.xlu0 %v3131, 16
      %v3943 = vpop.permute.xlu0 %3942
      %3976 = vrot.lane.b32.xlu0 %v3816, 24
      %v3977 = vpop.permute.xlu0 %3976
      %3978 = vrot.lane.b32.xlu0 %v3817, 24
      %v3979 = vpop.permute.xlu0 %3978
      %3980 = vrot.lane.b32.xlu0 %v3818, 24
      %v3981 = vpop.permute.xlu0 %3980
      %3982 = vrot.lane.b32.xlu0 %v3819, 24
      %v3983 = vpop.permute.xlu0 %3982
      %3984 = vrot.lane.b32.xlu0 %v3820, 24
      %v3985 = vpop.permute.xlu0 %3984
      %3986 = vrot.lane.b32.xlu0 %v3821, 24
      %v3987 = vpop.permute.xlu0 %3986
      %3988 = vrot.lane.b32.xlu0 %v3822, 24
      %v3989 = vpop.permute.xlu0 %3988
      %3990 = vrot.lane.b32.xlu0 %v3823, 24
      %v3991 = vpop.permute.xlu0 %3990
      %3992 = vrot.lane.b32.xlu0 %v3824, 24
      %v3993 = vpop.permute.xlu0 %3992
      %3994 = vrot.lane.b32.xlu0 %v3825, 24
      %v3995 = vpop.permute.xlu0 %3994
      %3996 = vrot.lane.b32.xlu0 %v3826, 24
      %v3997 = vpop.permute.xlu0 %3996
      %3998 = vrot.lane.b32.xlu0 %v3827, 24
      %v3999 = vpop.permute.xlu0 %3998
      %4000 = vrot.lane.b32.xlu0 %v3828, 24
      %v4001 = vpop.permute.xlu0 %4000
      %4002 = vrot.lane.b32.xlu0 %v3829, 24
      %v4003 = vpop.permute.xlu0 %4002
      %4004 = vrot.lane.b32.xlu0 %v3830, 24
      %v4005 = vpop.permute.xlu0 %4004
      %4006 = vrot.lane.b32.xlu0 %v3831, 24
      %v4007 = vpop.permute.xlu0 %4006
      %v4024 = vsel %vm1034, %v1716, %v3849
      %v4025 = vsel %vm1034, %v1717, %v3851
      %v4026 = vsel %vm1034, %v1718, %v3853
      %v4027 = vsel %vm1034, %v1719, %v3855
      %v4028 = vsel %vm1034, %v1720, %v3857
      %v4029 = vsel %vm1034, %v1721, %v3859
      %v4030 = vsel %vm1034, %v1722, %v3861
      %v4031 = vsel %vm1034, %v1723, %v3863
      %v4032 = vsel %vm1034, %v1724, %v3865
      %v4033 = vsel %vm1034, %v1725, %v3867
      %v4034 = vsel %vm1034, %v1726, %v3869
      %v4035 = vsel %vm1034, %v1727, %v3871
      %v4036 = vsel %vm1034, %v1728, %v3873
      %v4037 = vsel %vm1034, %v1729, %v3875
      %v4038 = vsel %vm1034, %v1730, %v3877
      %v4039 = vsel %vm1034, %v1731, %v3879
      %vm4040 = vcmask 130048
      %v4041 = vsel %vm4040, %v4024, %v3913
      %v4042 = vsel %vm4040, %v4025, %v3915
      %v4043 = vsel %vm4040, %v4026, %v3917
      %v4044 = vsel %vm4040, %v4027, %v3919
      %v4045 = vsel %vm4040, %v4028, %v3921
      %v4046 = vsel %vm4040, %v4029, %v3923
      %v4047 = vsel %vm4040, %v4030, %v3925
      %v4048 = vsel %vm4040, %v4031, %v3927
      %v4049 = vsel %vm4040, %v4032, %v3929
      %v4050 = vsel %vm4040, %v4033, %v3931
      %v4051 = vsel %vm4040, %v4034, %v3933
      %v4052 = vsel %vm4040, %v4035, %v3935
      %v4053 = vsel %vm4040, %v4036, %v3937
      %v4054 = vsel %vm4040, %v4037, %v3939
      %v4055 = vsel %vm4040, %v4038, %v3941
      %v4056 = vsel %vm4040, %v4039, %v3943
      %vm4057 = vcmask 195584
      %v4058 = vsel %vm4057, %v4041, %v3977
      %v4059 = vsel %vm4057, %v4042, %v3979
      %v4060 = vsel %vm4057, %v4043, %v3981
      %v4061 = vsel %vm4057, %v4044, %v3983
      %v4062 = vsel %vm4057, %v4045, %v3985
      %v4063 = vsel %vm4057, %v4046, %v3987
      %v4064 = vsel %vm4057, %v4047, %v3989
      %v4065 = vsel %vm4057, %v4048, %v3991
      %v4066 = vsel %vm4057, %v4049, %v3993
      %v4067 = vsel %vm4057, %v4050, %v3995
      %v4068 = vsel %vm4057, %v4051, %v3997
      %v4069 = vsel %vm4057, %v4052, %v3999
      %v4070 = vsel %vm4057, %v4053, %v4001
      %v4071 = vsel %vm4057, %v4054, %v4003
      %v4072 = vsel %vm4057, %v4055, %v4005
      %v4073 = vsel %vm4057, %v4056, %v4007
      %v4074 = vpack.c.bf16 %v4059, %v4058
      %v4075 = vpack.c.bf16 %v4061, %v4060
      %v4076 = vpack.c.bf16 %v4063, %v4062
      %v4077 = vpack.c.bf16 %v4065, %v4064
      %v4078 = vpack.c.bf16 %v4067, %v4066
      %v4079 = vpack.c.bf16 %v4069, %v4068
      %v4080 = vpack.c.bf16 %v4071, %v4070
      %v4081 = vpack.c.bf16 %v4073, %v4072
      %v4082 = vld [vmem:[%s4] sm:$0xf]
      %v4083 = vld [vmem:[%s4 + $0x4] sm:$0xf]
      %v4084 = vld [vmem:[%s4 + $0x8] sm:$0xf]
      %v4085 = vld [vmem:[%s4 + $0xc] sm:$0xf]
      %v4086 = vld [vmem:[%s5] sm:$0x1]
      %v4088 = vperm.slane %v4086, 0
      %v4094 = vunpack.c.l.b16 %v4082
      %v4095 = vunpack.c.l.b16 %v4083
      %v4096 = vunpack.c.l.b16 %v4084
      %v4097 = vunpack.c.l.b16 %v4085
      %v4098 = vpack.c.b16 %v4095, %v4094
      %v4099 = vpack.c.b16 %v4097, %v4096
      %v4103 = vsel %vm495, %v4074, 0
      %v4106 = vsel %vm495, %v4075, 0
      %v4109 = vsel %vm495, %v4076, 0
      %v4112 = vsel %vm495, %v4077, 0
      %v4115 = vsel %vm495, %v4078, 0
      %v4118 = vsel %vm495, %v4079, 0
      %v4121 = vsel %vm495, %v4080, 0
      %v4124 = vsel %vm495, %v4081, 0
      %4126 = vmatpush.bf16.msra.mxu0 0
      %4127 = vmatpush.bf16.msra.mxu0 0
      %4128 = vmatpush.bf16.msra.mxu0 0
      %4129 = vmatpush.bf16.msra.mxu0 0
      %4130 = vmatpush.bf16.msra.mxu0 0
      %4131 = vmatpush.bf16.msra.mxu0 0
      %4132 = vmatpush.bf16.msra.mxu0 %v4099
      %4133 = vmatpush.bf16.msra.mxu0 %v4098
      %4134 = vmatmul.bf16.gmra.mxu0 %v4103
      %v4135 = vpop.f32.mrf.mxu0
      %v4136 = vadd.f32 %v4088, %v4135
      %v4137 = vpop.f32.mrf.mxu0
      %v4138 = vadd.f32 %v4088, %v4137
      %4139 = vmatmul.bf16.gmra.mxu0 %v4106
      %v4140 = vpop.f32.mrf.mxu0
      %v4141 = vadd.f32 %v4088, %v4140
      %v4142 = vpop.f32.mrf.mxu0
      %v4143 = vadd.f32 %v4088, %v4142
      %4144 = vmatmul.bf16.gmra.mxu0 %v4109
      %v4145 = vpop.f32.mrf.mxu0
      %v4146 = vadd.f32 %v4088, %v4145
      %v4147 = vpop.f32.mrf.mxu0
      %v4148 = vadd.f32 %v4088, %v4147
      %4149 = vmatmul.bf16.gmra.mxu0 %v4112
      %v4150 = vpop.f32.mrf.mxu0
      %v4151 = vadd.f32 %v4088, %v4150
      %v4152 = vpop.f32.mrf.mxu0
      %v4153 = vadd.f32 %v4088, %v4152
      %4154 = vmatmul.bf16.gmra.mxu0 %v4115
      %v4155 = vpop.f32.mrf.mxu0
      %v4156 = vadd.f32 %v4088, %v4155
      %v4157 = vpop.f32.mrf.mxu0
      %v4158 = vadd.f32 %v4088, %v4157
      %4159 = vmatmul.bf16.gmra.mxu0 %v4118
      %v4160 = vpop.f32.mrf.mxu0
      %v4161 = vadd.f32 %v4088, %v4160
      %v4162 = vpop.f32.mrf.mxu0
      %v4163 = vadd.f32 %v4088, %v4162
      %4164 = vmatmul.bf16.gmra.mxu0 %v4121
      %v4165 = vpop.f32.mrf.mxu0
      %v4166 = vadd.f32 %v4088, %v4165
      %v4167 = vpop.f32.mrf.mxu0
      %v4168 = vadd.f32 %v4088, %v4167
      %4169 = vmatmul.bf16.gmra.mxu0 %v4124
      %v4170 = vpop.f32.mrf.mxu0
      %v4171 = vadd.f32 %v4088, %v4170
      %v4172 = vpop.f32.mrf.mxu0
      %v4173 = vadd.f32 %v4088, %v4172
      %4174 = vdwg.mxu0
      %v4175 = vadd.f32 %v477, %v4136
      %v4176 = vadd.f32 %v478, %v4138
      %v4177 = vadd.f32 %v479, %v4141
      %v4178 = vadd.f32 %v480, %v4143
      %v4179 = vadd.f32 %v481, %v4146
      %v4180 = vadd.f32 %v482, %v4148
      %v4181 = vadd.f32 %v483, %v4151
      %v4182 = vadd.f32 %v484, %v4153
      %v4183 = vadd.f32 %v485, %v4156
      %v4184 = vadd.f32 %v486, %v4158
      %v4185 = vadd.f32 %v487, %v4161
      %v4186 = vadd.f32 %v488, %v4163
      %v4187 = vadd.f32 %v489, %v4166
      %v4188 = vadd.f32 %v490, %v4168
      %v4189 = vadd.f32 %v491, %v4171
      %v4190 = vadd.f32 %v492, %v4173
      %v4191 = vld [vmem:[%s6] sm:$0x1]
      %v4192 = vld [vmem:[%s7] sm:$0x1]
      %v4193 = vsel %vm495, %v4175, 0.0
      %4194 = vadd.xlane.f32.xlu0 %v4193
      %v4195 = vpop.xlane.xlu0 %4194
      %v4196 = vsel %vm495, %v4176, 0.0
      %4197 = vadd.xlane.f32.xlu0 %v4196
      %v4198 = vpop.xlane.xlu0 %4197
      %v4199 = vsel %vm495, %v4177, 0.0
      %4200 = vadd.xlane.f32.xlu0 %v4199
      %v4201 = vpop.xlane.xlu0 %4200
      %v4202 = vsel %vm495, %v4178, 0.0
      %4203 = vadd.xlane.f32.xlu0 %v4202
      %v4204 = vpop.xlane.xlu0 %4203
      %v4205 = vsel %vm495, %v4179, 0.0
      %4206 = vadd.xlane.f32.xlu0 %v4205
      %v4207 = vpop.xlane.xlu0 %4206
      %v4208 = vsel %vm495, %v4180, 0.0
      %4209 = vadd.xlane.f32.xlu0 %v4208
      %v4210 = vpop.xlane.xlu0 %4209
      %v4211 = vsel %vm495, %v4181, 0.0
      %4212 = vadd.xlane.f32.xlu0 %v4211
      %v4213 = vpop.xlane.xlu0 %4212
      %v4214 = vsel %vm495, %v4182, 0.0
      %4215 = vadd.xlane.f32.xlu0 %v4214
      %v4216 = vpop.xlane.xlu0 %4215
      %v4217 = vsel %vm495, %v4183, 0.0
      %4218 = vadd.xlane.f32.xlu0 %v4217
      %v4219 = vpop.xlane.xlu0 %4218
      %v4220 = vsel %vm495, %v4184, 0.0
      %4221 = vadd.xlane.f32.xlu0 %v4220
      %v4222 = vpop.xlane.xlu0 %4221
      %v4223 = vsel %vm495, %v4185, 0.0
      %4224 = vadd.xlane.f32.xlu0 %v4223
      %v4225 = vpop.xlane.xlu0 %4224
      %v4226 = vsel %vm495, %v4186, 0.0
      %4227 = vadd.xlane.f32.xlu0 %v4226
      %v4228 = vpop.xlane.xlu0 %4227
      %v4229 = vsel %vm495, %v4187, 0.0
      %4230 = vadd.xlane.f32.xlu0 %v4229
      %v4231 = vpop.xlane.xlu0 %4230
      %v4232 = vsel %vm495, %v4188, 0.0
      %4233 = vadd.xlane.f32.xlu0 %v4232
      %v4234 = vpop.xlane.xlu0 %4233
      %v4235 = vsel %vm495, %v4189, 0.0
      %4236 = vadd.xlane.f32.xlu0 %v4235
      %v4237 = vpop.xlane.xlu0 %4236
      %v4238 = vsel %vm495, %v4190, 0.0
      %4239 = vadd.xlane.f32.xlu0 %v4238
      %v4240 = vpop.xlane.xlu0 %4239
      %v4241 = vmul.f32 %v4195, %v550
      %v4242 = vmul.f32 %v4198, %v550
      %v4243 = vmul.f32 %v4201, %v550
      %v4244 = vmul.f32 %v4204, %v550
      %v4245 = vmul.f32 %v4207, %v550
      %v4246 = vmul.f32 %v4210, %v550
      %v4247 = vmul.f32 %v4213, %v550
      %v4248 = vmul.f32 %v4216, %v550
      %v4249 = vmul.f32 %v4219, %v550
      %v4250 = vmul.f32 %v4222, %v550
      %v4251 = vmul.f32 %v4225, %v550
      %v4252 = vmul.f32 %v4228, %v550
      %v4253 = vmul.f32 %v4231, %v550
      %v4254 = vmul.f32 %v4234, %v550
      %v4255 = vmul.f32 %v4237, %v550
      %v4256 = vmul.f32 %v4240, %v550
      %v4257 = vsub.f32 %v4175, %v4241
      %v4258 = vsub.f32 %v4176, %v4242
      %v4259 = vsub.f32 %v4177, %v4243
      %v4260 = vsub.f32 %v4178, %v4244
      %v4261 = vsub.f32 %v4179, %v4245
      %v4262 = vsub.f32 %v4180, %v4246
      %v4263 = vsub.f32 %v4181, %v4247
      %v4264 = vsub.f32 %v4182, %v4248
      %v4265 = vsub.f32 %v4183, %v4249
      %v4266 = vsub.f32 %v4184, %v4250
      %v4267 = vsub.f32 %v4185, %v4251
      %v4268 = vsub.f32 %v4186, %v4252
      %v4269 = vsub.f32 %v4187, %v4253
      %v4270 = vsub.f32 %v4188, %v4254
      %v4271 = vsub.f32 %v4189, %v4255
      %v4272 = vsub.f32 %v4190, %v4256
      %v4273 = vmul.f32 %v4257, %v4257
      %v4274 = vmul.f32 %v4258, %v4258
      %v4275 = vmul.f32 %v4259, %v4259
      %v4276 = vmul.f32 %v4260, %v4260
      %v4277 = vmul.f32 %v4261, %v4261
      %v4278 = vmul.f32 %v4262, %v4262
      %v4279 = vmul.f32 %v4263, %v4263
      %v4280 = vmul.f32 %v4264, %v4264
      %v4281 = vmul.f32 %v4265, %v4265
      %v4282 = vmul.f32 %v4266, %v4266
      %v4283 = vmul.f32 %v4267, %v4267
      %v4284 = vmul.f32 %v4268, %v4268
      %v4285 = vmul.f32 %v4269, %v4269
      %v4286 = vmul.f32 %v4270, %v4270
      %v4287 = vmul.f32 %v4271, %v4271
      %v4288 = vmul.f32 %v4272, %v4272
      %v4289 = vsel %vm495, %v4273, 0.0
      %4290 = vadd.xlane.f32.xlu0 %v4289
      %v4291 = vpop.xlane.xlu0 %4290
      %v4292 = vsel %vm495, %v4274, 0.0
      %4293 = vadd.xlane.f32.xlu0 %v4292
      %v4294 = vpop.xlane.xlu0 %4293
      %v4295 = vsel %vm495, %v4275, 0.0
      %4296 = vadd.xlane.f32.xlu0 %v4295
      %v4297 = vpop.xlane.xlu0 %4296
      %v4298 = vsel %vm495, %v4276, 0.0
      %4299 = vadd.xlane.f32.xlu0 %v4298
      %v4300 = vpop.xlane.xlu0 %4299
      %v4301 = vsel %vm495, %v4277, 0.0
      %4302 = vadd.xlane.f32.xlu0 %v4301
      %v4303 = vpop.xlane.xlu0 %4302
      %v4304 = vsel %vm495, %v4278, 0.0
      %4305 = vadd.xlane.f32.xlu0 %v4304
      %v4306 = vpop.xlane.xlu0 %4305
      %v4307 = vsel %vm495, %v4279, 0.0
      %4308 = vadd.xlane.f32.xlu0 %v4307
      %v4309 = vpop.xlane.xlu0 %4308
      %v4310 = vsel %vm495, %v4280, 0.0
      %4311 = vadd.xlane.f32.xlu0 %v4310
      %v4312 = vpop.xlane.xlu0 %4311
      %v4313 = vsel %vm495, %v4281, 0.0
      %4314 = vadd.xlane.f32.xlu0 %v4313
      %v4315 = vpop.xlane.xlu0 %4314
      %v4316 = vsel %vm495, %v4282, 0.0
      %4317 = vadd.xlane.f32.xlu0 %v4316
      %v4318 = vpop.xlane.xlu0 %4317
      %v4319 = vsel %vm495, %v4283, 0.0
      %4320 = vadd.xlane.f32.xlu0 %v4319
      %v4321 = vpop.xlane.xlu0 %4320
      %v4322 = vsel %vm495, %v4284, 0.0
      %4323 = vadd.xlane.f32.xlu0 %v4322
      %v4324 = vpop.xlane.xlu0 %4323
      %v4325 = vsel %vm495, %v4285, 0.0
      %4326 = vadd.xlane.f32.xlu0 %v4325
      %v4327 = vpop.xlane.xlu0 %4326
      %v4328 = vsel %vm495, %v4286, 0.0
      %4329 = vadd.xlane.f32.xlu0 %v4328
      %v4330 = vpop.xlane.xlu0 %4329
      %v4331 = vsel %vm495, %v4287, 0.0
      %4332 = vadd.xlane.f32.xlu0 %v4331
      %v4333 = vpop.xlane.xlu0 %4332
      %v4334 = vsel %vm495, %v4288, 0.0
      %4335 = vadd.xlane.f32.xlu0 %v4334
      %v4336 = vpop.xlane.xlu0 %4335
      %v4337 = vmul.f32 %v4291, %v550
      %v4338 = vmul.f32 %v4294, %v550
      %v4339 = vmul.f32 %v4297, %v550
      %v4340 = vmul.f32 %v4300, %v550
      %v4341 = vmul.f32 %v4303, %v550
      %v4342 = vmul.f32 %v4306, %v550
      %v4343 = vmul.f32 %v4309, %v550
      %v4344 = vmul.f32 %v4312, %v550
      %v4345 = vmul.f32 %v4315, %v550
      %v4346 = vmul.f32 %v4318, %v550
      %v4347 = vmul.f32 %v4321, %v550
      %v4348 = vmul.f32 %v4324, %v550
      %v4349 = vmul.f32 %v4327, %v550
      %v4350 = vmul.f32 %v4330, %v550
      %v4351 = vmul.f32 %v4333, %v550
      %v4352 = vmul.f32 %v4336, %v550
      %v4353 = vadd.f32 %v4337, 1e-05
      %v4354 = vadd.f32 %v4338, 1e-05
      %v4355 = vadd.f32 %v4339, 1e-05
      %v4356 = vadd.f32 %v4340, 1e-05
      %v4357 = vadd.f32 %v4341, 1e-05
      %v4358 = vadd.f32 %v4342, 1e-05
      %v4359 = vadd.f32 %v4343, 1e-05
      %v4360 = vadd.f32 %v4344, 1e-05
      %v4361 = vadd.f32 %v4345, 1e-05
      %v4362 = vadd.f32 %v4346, 1e-05
      %v4363 = vadd.f32 %v4347, 1e-05
      %v4364 = vadd.f32 %v4348, 1e-05
      %v4365 = vadd.f32 %v4349, 1e-05
      %v4366 = vadd.f32 %v4350, 1e-05
      %v4367 = vadd.f32 %v4351, 1e-05
      %v4368 = vadd.f32 %v4352, 1e-05
      %v4369 = vrsqrt.pop %v4353
      %v4370 = vmul.f32 %v4369, %v4353
      %v4371 = vmul.f32 %v4370, %v4369
      %v4372 = vmul.f32 0.5, %v4371
      %v4373 = vsub.f32 1.5, %v4372
      %v4374 = vmul.f32 %v4369, %v4373
      %vm4375 = vweird.f32 %v4353
      %vm4376 = vweird.f32 %v4369
      %vm4377 = vmor %vm4375, %vm4376
      %v4378 = vsel %vm4377, %v4369, %v4374
      %v4379 = vrsqrt.pop %v4354
      %v4380 = vmul.f32 %v4379, %v4354
      %v4381 = vmul.f32 %v4380, %v4379
      %v4382 = vmul.f32 0.5, %v4381
      %v4383 = vsub.f32 1.5, %v4382
      %v4384 = vmul.f32 %v4379, %v4383
      %vm4385 = vweird.f32 %v4354
      %vm4386 = vweird.f32 %v4379
      %vm4387 = vmor %vm4385, %vm4386
      %v4388 = vsel %vm4387, %v4379, %v4384
      %v4389 = vrsqrt.pop %v4355
      %v4390 = vmul.f32 %v4389, %v4355
      %v4391 = vmul.f32 %v4390, %v4389
      %v4392 = vmul.f32 0.5, %v4391
      %v4393 = vsub.f32 1.5, %v4392
      %v4394 = vmul.f32 %v4389, %v4393
      %vm4395 = vweird.f32 %v4355
      %vm4396 = vweird.f32 %v4389
      %vm4397 = vmor %vm4395, %vm4396
      %v4398 = vsel %vm4397, %v4389, %v4394
      %v4399 = vrsqrt.pop %v4356
      %v4400 = vmul.f32 %v4399, %v4356
      %v4401 = vmul.f32 %v4400, %v4399
      %v4402 = vmul.f32 0.5, %v4401
      %v4403 = vsub.f32 1.5, %v4402
      %v4404 = vmul.f32 %v4399, %v4403
      %vm4405 = vweird.f32 %v4356
      %vm4406 = vweird.f32 %v4399
      %vm4407 = vmor %vm4405, %vm4406
      %v4408 = vsel %vm4407, %v4399, %v4404
      %v4409 = vrsqrt.pop %v4357
      %v4410 = vmul.f32 %v4409, %v4357
      %v4411 = vmul.f32 %v4410, %v4409
      %v4412 = vmul.f32 0.5, %v4411
      %v4413 = vsub.f32 1.5, %v4412
      %v4414 = vmul.f32 %v4409, %v4413
      %vm4415 = vweird.f32 %v4357
      %vm4416 = vweird.f32 %v4409
      %vm4417 = vmor %vm4415, %vm4416
      %v4418 = vsel %vm4417, %v4409, %v4414
      %v4419 = vrsqrt.pop %v4358
      %v4420 = vmul.f32 %v4419, %v4358
      %v4421 = vmul.f32 %v4420, %v4419
      %v4422 = vmul.f32 0.5, %v4421
      %v4423 = vsub.f32 1.5, %v4422
      %v4424 = vmul.f32 %v4419, %v4423
      %vm4425 = vweird.f32 %v4358
      %vm4426 = vweird.f32 %v4419
      %vm4427 = vmor %vm4425, %vm4426
      %v4428 = vsel %vm4427, %v4419, %v4424
      %v4429 = vrsqrt.pop %v4359
      %v4430 = vmul.f32 %v4429, %v4359
      %v4431 = vmul.f32 %v4430, %v4429
      %v4432 = vmul.f32 0.5, %v4431
      %v4433 = vsub.f32 1.5, %v4432
      %v4434 = vmul.f32 %v4429, %v4433
      %vm4435 = vweird.f32 %v4359
      %vm4436 = vweird.f32 %v4429
      %vm4437 = vmor %vm4435, %vm4436
      %v4438 = vsel %vm4437, %v4429, %v4434
      %v4439 = vrsqrt.pop %v4360
      %v4440 = vmul.f32 %v4439, %v4360
      %v4441 = vmul.f32 %v4440, %v4439
      %v4442 = vmul.f32 0.5, %v4441
      %v4443 = vsub.f32 1.5, %v4442
      %v4444 = vmul.f32 %v4439, %v4443
      %vm4445 = vweird.f32 %v4360
      %vm4446 = vweird.f32 %v4439
      %vm4447 = vmor %vm4445, %vm4446
      %v4448 = vsel %vm4447, %v4439, %v4444
      %v4449 = vrsqrt.pop %v4361
      %v4450 = vmul.f32 %v4449, %v4361
      %v4451 = vmul.f32 %v4450, %v4449
      %v4452 = vmul.f32 0.5, %v4451
      %v4453 = vsub.f32 1.5, %v4452
      %v4454 = vmul.f32 %v4449, %v4453
      %vm4455 = vweird.f32 %v4361
      %vm4456 = vweird.f32 %v4449
      %vm4457 = vmor %vm4455, %vm4456
      %v4458 = vsel %vm4457, %v4449, %v4454
      %v4459 = vrsqrt.pop %v4362
      %v4460 = vmul.f32 %v4459, %v4362
      %v4461 = vmul.f32 %v4460, %v4459
      %v4462 = vmul.f32 0.5, %v4461
      %v4463 = vsub.f32 1.5, %v4462
      %v4464 = vmul.f32 %v4459, %v4463
      %vm4465 = vweird.f32 %v4362
      %vm4466 = vweird.f32 %v4459
      %vm4467 = vmor %vm4465, %vm4466
      %v4468 = vsel %vm4467, %v4459, %v4464
      %v4469 = vrsqrt.pop %v4363
      %v4470 = vmul.f32 %v4469, %v4363
      %v4471 = vmul.f32 %v4470, %v4469
      %v4472 = vmul.f32 0.5, %v4471
      %v4473 = vsub.f32 1.5, %v4472
      %v4474 = vmul.f32 %v4469, %v4473
      %vm4475 = vweird.f32 %v4363
      %vm4476 = vweird.f32 %v4469
      %vm4477 = vmor %vm4475, %vm4476
      %v4478 = vsel %vm4477, %v4469, %v4474
      %v4479 = vrsqrt.pop %v4364
      %v4480 = vmul.f32 %v4479, %v4364
      %v4481 = vmul.f32 %v4480, %v4479
      %v4482 = vmul.f32 0.5, %v4481
      %v4483 = vsub.f32 1.5, %v4482
      %v4484 = vmul.f32 %v4479, %v4483
      %vm4485 = vweird.f32 %v4364
      %vm4486 = vweird.f32 %v4479
      %vm4487 = vmor %vm4485, %vm4486
      %v4488 = vsel %vm4487, %v4479, %v4484
      %v4489 = vrsqrt.pop %v4365
      %v4490 = vmul.f32 %v4489, %v4365
      %v4491 = vmul.f32 %v4490, %v4489
      %v4492 = vmul.f32 0.5, %v4491
      %v4493 = vsub.f32 1.5, %v4492
      %v4494 = vmul.f32 %v4489, %v4493
      %vm4495 = vweird.f32 %v4365
      %vm4496 = vweird.f32 %v4489
      %vm4497 = vmor %vm4495, %vm4496
      %v4498 = vsel %vm4497, %v4489, %v4494
      %v4499 = vrsqrt.pop %v4366
      %v4500 = vmul.f32 %v4499, %v4366
      %v4501 = vmul.f32 %v4500, %v4499
      %v4502 = vmul.f32 0.5, %v4501
      %v4503 = vsub.f32 1.5, %v4502
      %v4504 = vmul.f32 %v4499, %v4503
      %vm4505 = vweird.f32 %v4366
      %vm4506 = vweird.f32 %v4499
      %vm4507 = vmor %vm4505, %vm4506
      %v4508 = vsel %vm4507, %v4499, %v4504
      %v4509 = vrsqrt.pop %v4367
      %v4510 = vmul.f32 %v4509, %v4367
      %v4511 = vmul.f32 %v4510, %v4509
      %v4512 = vmul.f32 0.5, %v4511
      %v4513 = vsub.f32 1.5, %v4512
      %v4514 = vmul.f32 %v4509, %v4513
      %vm4515 = vweird.f32 %v4367
      %vm4516 = vweird.f32 %v4509
      %vm4517 = vmor %vm4515, %vm4516
      %v4518 = vsel %vm4517, %v4509, %v4514
      %v4519 = vrsqrt.pop %v4368
      %v4520 = vmul.f32 %v4519, %v4368
      %v4521 = vmul.f32 %v4520, %v4519
      %v4522 = vmul.f32 0.5, %v4521
      %v4523 = vsub.f32 1.5, %v4522
      %v4524 = vmul.f32 %v4519, %v4523
      %vm4525 = vweird.f32 %v4368
      %vm4526 = vweird.f32 %v4519
      %vm4527 = vmor %vm4525, %vm4526
      %v4528 = vsel %vm4527, %v4519, %v4524
      %v4529 = vmul.f32 %v4257, %v4378
      %v4530 = vmul.f32 %v4258, %v4388
      %v4531 = vmul.f32 %v4259, %v4398
      %v4532 = vmul.f32 %v4260, %v4408
      %v4533 = vmul.f32 %v4261, %v4418
      %v4534 = vmul.f32 %v4262, %v4428
      %v4535 = vmul.f32 %v4263, %v4438
      %v4536 = vmul.f32 %v4264, %v4448
      %v4537 = vmul.f32 %v4265, %v4458
      %v4538 = vmul.f32 %v4266, %v4468
      %v4539 = vmul.f32 %v4267, %v4478
      %v4540 = vmul.f32 %v4268, %v4488
      %v4541 = vmul.f32 %v4269, %v4498
      %v4542 = vmul.f32 %v4270, %v4508
      %v4543 = vmul.f32 %v4271, %v4518
      %v4544 = vmul.f32 %v4272, %v4528
      %v4546 = vperm.slane %v4191, 0
      %v4548 = vmul.f32 %v4529, %v4546
      %v4549 = vmul.f32 %v4530, %v4546
      %v4550 = vmul.f32 %v4531, %v4546
      %v4551 = vmul.f32 %v4532, %v4546
      %v4552 = vmul.f32 %v4533, %v4546
      %v4553 = vmul.f32 %v4534, %v4546
      %v4554 = vmul.f32 %v4535, %v4546
      %v4555 = vmul.f32 %v4536, %v4546
      %v4556 = vmul.f32 %v4537, %v4546
      %v4557 = vmul.f32 %v4538, %v4546
      %v4558 = vmul.f32 %v4539, %v4546
      %v4559 = vmul.f32 %v4540, %v4546
      %v4560 = vmul.f32 %v4541, %v4546
      %v4561 = vmul.f32 %v4542, %v4546
      %v4562 = vmul.f32 %v4543, %v4546
      %v4563 = vmul.f32 %v4544, %v4546
      %v4565 = vperm.slane %v4192, 0
      %v4567 = vadd.f32 %v4548, %v4565
      %v4568 = vadd.f32 %v4549, %v4565
      %v4569 = vadd.f32 %v4550, %v4565
      %v4570 = vadd.f32 %v4551, %v4565
      %v4571 = vadd.f32 %v4552, %v4565
      %v4572 = vadd.f32 %v4553, %v4565
      %v4573 = vadd.f32 %v4554, %v4565
      %v4574 = vadd.f32 %v4555, %v4565
      %v4575 = vadd.f32 %v4556, %v4565
      %v4576 = vadd.f32 %v4557, %v4565
      %v4577 = vadd.f32 %v4558, %v4565
      %v4578 = vadd.f32 %v4559, %v4565
      %v4579 = vadd.f32 %v4560, %v4565
      %v4580 = vadd.f32 %v4561, %v4565
      %v4581 = vadd.f32 %v4562, %v4565
      %v4582 = vadd.f32 %v4563, %v4565
      %v4583 = vpack.c.bf16 %v4568, %v4567
      %v4584 = vpack.c.bf16 %v4570, %v4569
      %v4585 = vpack.c.bf16 %v4572, %v4571
      %v4586 = vpack.c.bf16 %v4574, %v4573
      %v4587 = vpack.c.bf16 %v4576, %v4575
      %v4588 = vpack.c.bf16 %v4578, %v4577
      %v4589 = vpack.c.bf16 %v4580, %v4579
      %v4590 = vpack.c.bf16 %v4582, %v4581
      %v4591 = vld [vmem:[%s8] sm:$0xf]
      %v4592 = vld [vmem:[%s8 + $0x4] sm:$0xf]
      %v4593 = vld [vmem:[%s8 + $0x8] sm:$0xf]
      %v4594 = vld [vmem:[%s8 + $0xc] sm:$0xf]
      %v4595 = vld [vmem:[%s9] sm:$0x1]
      %v4597 = vperm.slane %v4595, 0
      %v4603 = vunpack.c.l.b16 %v4591
      %v4604 = vunpack.c.l.b16 %v4592
      %v4605 = vunpack.c.l.b16 %v4593
      %v4606 = vunpack.c.l.b16 %v4594
      %v4607 = vpack.c.b16 %v4604, %v4603
      %v4608 = vpack.c.b16 %v4606, %v4605
      %v4612 = vsel %vm495, %v4583, 0
      %v4615 = vsel %vm495, %v4584, 0
      %v4618 = vsel %vm495, %v4585, 0
      %v4621 = vsel %vm495, %v4586, 0
      %v4624 = vsel %vm495, %v4587, 0
      %v4627 = vsel %vm495, %v4588, 0
      %v4630 = vsel %vm495, %v4589, 0
      %v4633 = vsel %vm495, %v4590, 0
      %4635 = vmatpush.bf16.msra.mxu0 0
      %4636 = vmatpush.bf16.msra.mxu0 0
      %4637 = vmatpush.bf16.msra.mxu0 0
      %4638 = vmatpush.bf16.msra.mxu0 0
      %4639 = vmatpush.bf16.msra.mxu0 0
      %4640 = vmatpush.bf16.msra.mxu0 0
      %4641 = vmatpush.bf16.msra.mxu0 %v4608
      %4642 = vmatpush.bf16.msra.mxu0 %v4607
      %4643 = vmatmul.bf16.gmra.mxu0 %v4612
      %v4644 = vpop.f32.mrf.mxu0
      %v4645 = vadd.f32 %v4597, %v4644
      %v4646 = vpop.f32.mrf.mxu0
      %v4647 = vadd.f32 %v4597, %v4646
      %4648 = vmatmul.bf16.gmra.mxu0 %v4615
      %v4649 = vpop.f32.mrf.mxu0
      %v4650 = vadd.f32 %v4597, %v4649
      %v4651 = vpop.f32.mrf.mxu0
      %v4652 = vadd.f32 %v4597, %v4651
      %4653 = vmatmul.bf16.gmra.mxu0 %v4618
      %v4654 = vpop.f32.mrf.mxu0
      %v4655 = vadd.f32 %v4597, %v4654
      %v4656 = vpop.f32.mrf.mxu0
      %v4657 = vadd.f32 %v4597, %v4656
      %4658 = vmatmul.bf16.gmra.mxu0 %v4621
      %v4659 = vpop.f32.mrf.mxu0
      %v4660 = vadd.f32 %v4597, %v4659
      %v4661 = vpop.f32.mrf.mxu0
      %v4662 = vadd.f32 %v4597, %v4661
      %4663 = vmatmul.bf16.gmra.mxu0 %v4624
      %v4664 = vpop.f32.mrf.mxu0
      %v4665 = vadd.f32 %v4597, %v4664
      %v4666 = vpop.f32.mrf.mxu0
      %v4667 = vadd.f32 %v4597, %v4666
      %4668 = vmatmul.bf16.gmra.mxu0 %v4627
      %v4669 = vpop.f32.mrf.mxu0
      %v4670 = vadd.f32 %v4597, %v4669
      %v4671 = vpop.f32.mrf.mxu0
      %v4672 = vadd.f32 %v4597, %v4671
      %4673 = vmatmul.bf16.gmra.mxu0 %v4630
      %v4674 = vpop.f32.mrf.mxu0
      %v4675 = vadd.f32 %v4597, %v4674
      %v4676 = vpop.f32.mrf.mxu0
      %v4677 = vadd.f32 %v4597, %v4676
      %4678 = vmatmul.bf16.gmra.mxu0 %v4633
      %v4679 = vpop.f32.mrf.mxu0
      %v4680 = vadd.f32 %v4597, %v4679
      %v4681 = vpop.f32.mrf.mxu0
      %v4682 = vadd.f32 %v4597, %v4681
      %4683 = vdwg.mxu0
      %v4684 = vlaneseq
      %v4685 = vshrl.u32 %v4684, 7
      %v4686 = vadd.s32 %v4685, 8
      %v4687 = vadd.s32 %v4685, 16
      %v4688 = vadd.s32 %v4685, 24
      %v4689 = vadd.s32 %v4685, 32
      %v4690 = vadd.s32 %v4685, 40
      %v4691 = vadd.s32 %v4685, 48
      %v4692 = vadd.s32 %v4685, 56
      %v4693 = vadd.s32 %v4685, 64
      %v4694 = vadd.s32 %v4685, 72
      %v4695 = vadd.s32 %v4685, 80
      %v4696 = vadd.s32 %v4685, 88
      %v4697 = vadd.s32 %v4685, 96
      %v4698 = vadd.s32 %v4685, 104
      %v4699 = vadd.s32 %v4685, 112
      %v4700 = vadd.s32 %v4685, 120
      %vm4701 = vcmp.lt.s32.totalorder %v4685, 0
      %v4702 = vsub.s32 0, %v4685
      %v4703 = vsel %vm4701, %v4702, %v4685
      %v4704 = vshrl.u32 %v4703, 6
      %v4705 = vand.u32 %v4703, 63
      %v4706 = vsub.s32 0, %v4705
      %v4707 = vsel %vm4701, %v4706, %v4705
      %vm4708 = vcmp.lt.s32.totalorder %v4686, 0
      %v4709 = vsub.s32 0, %v4686
      %v4710 = vsel %vm4708, %v4709, %v4686
      %v4711 = vshrl.u32 %v4710, 6
      %v4712 = vand.u32 %v4710, 63
      %v4713 = vsub.s32 0, %v4712
      %v4714 = vsel %vm4708, %v4713, %v4712
      %vm4715 = vcmp.lt.s32.totalorder %v4687, 0
      %v4716 = vsub.s32 0, %v4687
      %v4717 = vsel %vm4715, %v4716, %v4687
      %v4718 = vshrl.u32 %v4717, 6
      %v4719 = vand.u32 %v4717, 63
      %v4720 = vsub.s32 0, %v4719
      %v4721 = vsel %vm4715, %v4720, %v4719
      %vm4722 = vcmp.lt.s32.totalorder %v4688, 0
      %v4723 = vsub.s32 0, %v4688
      %v4724 = vsel %vm4722, %v4723, %v4688
      %v4725 = vshrl.u32 %v4724, 6
      %v4726 = vand.u32 %v4724, 63
      %v4727 = vsub.s32 0, %v4726
      %v4728 = vsel %vm4722, %v4727, %v4726
      %vm4729 = vcmp.lt.s32.totalorder %v4689, 0
      %v4730 = vsub.s32 0, %v4689
      %v4731 = vsel %vm4729, %v4730, %v4689
      %v4732 = vshrl.u32 %v4731, 6
      %v4733 = vand.u32 %v4731, 63
      %v4734 = vsub.s32 0, %v4733
      %v4735 = vsel %vm4729, %v4734, %v4733
      %vm4736 = vcmp.lt.s32.totalorder %v4690, 0
      %v4737 = vsub.s32 0, %v4690
      %v4738 = vsel %vm4736, %v4737, %v4690
      %v4739 = vshrl.u32 %v4738, 6
      %v4740 = vand.u32 %v4738, 63
      %v4741 = vsub.s32 0, %v4740
      %v4742 = vsel %vm4736, %v4741, %v4740
      %vm4743 = vcmp.lt.s32.totalorder %v4691, 0
      %v4744 = vsub.s32 0, %v4691
      %v4745 = vsel %vm4743, %v4744, %v4691
      %v4746 = vshrl.u32 %v4745, 6
      %v4747 = vand.u32 %v4745, 63
      %v4748 = vsub.s32 0, %v4747
      %v4749 = vsel %vm4743, %v4748, %v4747
      %vm4750 = vcmp.lt.s32.totalorder %v4692, 0
      %v4751 = vsub.s32 0, %v4692
      %v4752 = vsel %vm4750, %v4751, %v4692
      %v4753 = vshrl.u32 %v4752, 6
      %v4754 = vand.u32 %v4752, 63
      %v4755 = vsub.s32 0, %v4754
      %v4756 = vsel %vm4750, %v4755, %v4754
      %vm4757 = vcmp.lt.s32.totalorder %v4693, 0
      %v4758 = vsub.s32 0, %v4693
      %v4759 = vsel %vm4757, %v4758, %v4693
      %v4760 = vshrl.u32 %v4759, 6
      %v4761 = vand.u32 %v4759, 63
      %v4762 = vsub.s32 0, %v4761
      %v4763 = vsel %vm4757, %v4762, %v4761
      %vm4764 = vcmp.lt.s32.totalorder %v4694, 0
      %v4765 = vsub.s32 0, %v4694
      %v4766 = vsel %vm4764, %v4765, %v4694
      %v4767 = vshrl.u32 %v4766, 6
      %v4768 = vand.u32 %v4766, 63
      %v4769 = vsub.s32 0, %v4768
      %v4770 = vsel %vm4764, %v4769, %v4768
      %vm4771 = vcmp.lt.s32.totalorder %v4695, 0
      %v4772 = vsub.s32 0, %v4695
      %v4773 = vsel %vm4771, %v4772, %v4695
      %v4774 = vshrl.u32 %v4773, 6
      %v4775 = vand.u32 %v4773, 63
      %v4776 = vsub.s32 0, %v4775
      %v4777 = vsel %vm4771, %v4776, %v4775
      %vm4778 = vcmp.lt.s32.totalorder %v4696, 0
      %v4779 = vsub.s32 0, %v4696
      %v4780 = vsel %vm4778, %v4779, %v4696
      %v4781 = vshrl.u32 %v4780, 6
      %v4782 = vand.u32 %v4780, 63
      %v4783 = vsub.s32 0, %v4782
      %v4784 = vsel %vm4778, %v4783, %v4782
      %vm4785 = vcmp.lt.s32.totalorder %v4697, 0
      %v4786 = vsub.s32 0, %v4697
      %v4787 = vsel %vm4785, %v4786, %v4697
      %v4788 = vshrl.u32 %v4787, 6
      %v4789 = vand.u32 %v4787, 63
      %v4790 = vsub.s32 0, %v4789
      %v4791 = vsel %vm4785, %v4790, %v4789
      %vm4792 = vcmp.lt.s32.totalorder %v4698, 0
      %v4793 = vsub.s32 0, %v4698
      %v4794 = vsel %vm4792, %v4793, %v4698
      %v4795 = vshrl.u32 %v4794, 6
      %v4796 = vand.u32 %v4794, 63
      %v4797 = vsub.s32 0, %v4796
      %v4798 = vsel %vm4792, %v4797, %v4796
      %vm4799 = vcmp.lt.s32.totalorder %v4699, 0
      %v4800 = vsub.s32 0, %v4699
      %v4801 = vsel %vm4799, %v4800, %v4699
      %v4802 = vshrl.u32 %v4801, 6
      %v4803 = vand.u32 %v4801, 63
      %v4804 = vsub.s32 0, %v4803
      %v4805 = vsel %vm4799, %v4804, %v4803
      %vm4806 = vcmp.lt.s32.totalorder %v4700, 0
      %v4807 = vsub.s32 0, %v4700
      %v4808 = vsel %vm4806, %v4807, %v4700
      %v4809 = vshrl.u32 %v4808, 6
      %v4810 = vand.u32 %v4808, 63
      %v4811 = vsub.s32 0, %v4810
      %v4812 = vsel %vm4806, %v4811, %v4810
      %vm4813 = vcmp.ne.s32.totalorder %v4707, 0
      %vm4814 = vcmp.ne.s32.totalorder %v4714, 0
      %vm4815 = vcmp.ne.s32.totalorder %v4721, 0
      %vm4816 = vcmp.ne.s32.totalorder %v4728, 0
      %vm4817 = vcmp.ne.s32.totalorder %v4735, 0
      %vm4818 = vcmp.ne.s32.totalorder %v4742, 0
      %vm4819 = vcmp.ne.s32.totalorder %v4749, 0
      %vm4820 = vcmp.ne.s32.totalorder %v4756, 0
      %vm4821 = vcmp.ne.s32.totalorder %v4763, 0
      %vm4822 = vcmp.ne.s32.totalorder %v4770, 0
      %vm4823 = vcmp.ne.s32.totalorder %v4777, 0
      %vm4824 = vcmp.ne.s32.totalorder %v4784, 0
      %vm4825 = vcmp.ne.s32.totalorder %v4791, 0
      %vm4826 = vcmp.ne.s32.totalorder %v4798, 0
      %vm4827 = vcmp.ne.s32.totalorder %v4805, 0
      %vm4828 = vcmp.ne.s32.totalorder %v4812, 0
      %vm4829 = vcmp.lt.s32.totalorder %v4707, 0
      %vm4830 = vcmp.lt.s32.totalorder %v4714, 0
      %vm4831 = vcmp.lt.s32.totalorder %v4721, 0
      %vm4832 = vcmp.lt.s32.totalorder %v4728, 0
      %vm4833 = vcmp.lt.s32.totalorder %v4735, 0
      %vm4834 = vcmp.lt.s32.totalorder %v4742, 0
      %vm4835 = vcmp.lt.s32.totalorder %v4749, 0
      %vm4836 = vcmp.lt.s32.totalorder %v4756, 0
      %vm4837 = vcmp.lt.s32.totalorder %v4763, 0
      %vm4838 = vcmp.lt.s32.totalorder %v4770, 0
      %vm4839 = vcmp.lt.s32.totalorder %v4777, 0
      %vm4840 = vcmp.lt.s32.totalorder %v4784, 0
      %vm4841 = vcmp.lt.s32.totalorder %v4791, 0
      %vm4842 = vcmp.lt.s32.totalorder %v4798, 0
      %vm4843 = vcmp.lt.s32.totalorder %v4805, 0
      %vm4844 = vcmp.lt.s32.totalorder %v4812, 0
      %vm4845 = vmand %vm4829, %vm4813
      %vm4846 = vmand %vm4830, %vm4814
      %vm4847 = vmand %vm4831, %vm4815
      %vm4848 = vmand %vm4832, %vm4816
      %vm4849 = vmand %vm4833, %vm4817
      %vm4850 = vmand %vm4834, %vm4818
      %vm4851 = vmand %vm4835, %vm4819
      %vm4852 = vmand %vm4836, %vm4820
      %vm4853 = vmand %vm4837, %vm4821
      %vm4854 = vmand %vm4838, %vm4822
      %vm4855 = vmand %vm4839, %vm4823
      %vm4856 = vmand %vm4840, %vm4824
      %vm4857 = vmand %vm4841, %vm4825
      %vm4858 = vmand %vm4842, %vm4826
      %vm4859 = vmand %vm4843, %vm4827
      %vm4860 = vmand %vm4844, %vm4828
      %v4861 = vadd.s32 %v4707, 64
      %v4862 = vadd.s32 %v4714, 64
      %v4863 = vadd.s32 %v4721, 64
      %v4864 = vadd.s32 %v4728, 64
      %v4865 = vadd.s32 %v4735, 64
      %v4866 = vadd.s32 %v4742, 64
      %v4867 = vadd.s32 %v4749, 64
      %v4868 = vadd.s32 %v4756, 64
      %v4869 = vadd.s32 %v4763, 64
      %v4870 = vadd.s32 %v4770, 64
      %v4871 = vadd.s32 %v4777, 64
      %v4872 = vadd.s32 %v4784, 64
      %v4873 = vadd.s32 %v4791, 64
      %v4874 = vadd.s32 %v4798, 64
      %v4875 = vadd.s32 %v4805, 64
      %v4876 = vadd.s32 %v4812, 64
      %v4877 = vsel %vm4845, %v4861, %v4707
      %v4878 = vsel %vm4846, %v4862, %v4714
      %v4879 = vsel %vm4847, %v4863, %v4721
      %v4880 = vsel %vm4848, %v4864, %v4728
      %v4881 = vsel %vm4849, %v4865, %v4735
      %v4882 = vsel %vm4850, %v4866, %v4742
      %v4883 = vsel %vm4851, %v4867, %v4749
      %v4884 = vsel %vm4852, %v4868, %v4756
      %v4885 = vsel %vm4853, %v4869, %v4763
      %v4886 = vsel %vm4854, %v4870, %v4770
      %v4887 = vsel %vm4855, %v4871, %v4777
      %v4888 = vsel %vm4856, %v4872, %v4784
      %v4889 = vsel %vm4857, %v4873, %v4791
      %v4890 = vsel %vm4858, %v4874, %v4798
      %v4891 = vsel %vm4859, %v4875, %v4805
      %v4892 = vsel %vm4860, %v4876, %v4812
      %vm4893 = vcmp.lt.s32.totalorder %v4685, 0
      %v4894 = vsub.s32 0, %v4685
      %v4895 = vsel %vm4893, %v4894, %v4685
      %v4896 = vshrl.u32 %v4895, 3
      %v4897 = vand.u32 %v4895, 7
      %v4898 = vsub.s32 0, %v4897
      %v4899 = vsel %vm4893, %v4898, %v4897
      %vm4900 = vcmp.lt.s32.totalorder %v4686, 0
      %v4901 = vsub.s32 0, %v4686
      %v4902 = vsel %vm4900, %v4901, %v4686
      %v4903 = vshrl.u32 %v4902, 3
      %v4904 = vand.u32 %v4902, 7
      %v4905 = vsub.s32 0, %v4904
      %v4906 = vsel %vm4900, %v4905, %v4904
      %vm4907 = vcmp.lt.s32.totalorder %v4687, 0
      %v4908 = vsub.s32 0, %v4687
      %v4909 = vsel %vm4907, %v4908, %v4687
      %v4910 = vshrl.u32 %v4909, 3
      %v4911 = vand.u32 %v4909, 7
      %v4912 = vsub.s32 0, %v4911
      %v4913 = vsel %vm4907, %v4912, %v4911
      %vm4914 = vcmp.lt.s32.totalorder %v4688, 0
      %v4915 = vsub.s32 0, %v4688
      %v4916 = vsel %vm4914, %v4915, %v4688
      %v4917 = vshrl.u32 %v4916, 3
      %v4918 = vand.u32 %v4916, 7
      %v4919 = vsub.s32 0, %v4918
      %v4920 = vsel %vm4914, %v4919, %v4918
      %vm4921 = vcmp.lt.s32.totalorder %v4689, 0
      %v4922 = vsub.s32 0, %v4689
      %v4923 = vsel %vm4921, %v4922, %v4689
      %v4924 = vshrl.u32 %v4923, 3
      %v4925 = vand.u32 %v4923, 7
      %v4926 = vsub.s32 0, %v4925
      %v4927 = vsel %vm4921, %v4926, %v4925
      %vm4928 = vcmp.lt.s32.totalorder %v4690, 0
      %v4929 = vsub.s32 0, %v4690
      %v4930 = vsel %vm4928, %v4929, %v4690
      %v4931 = vshrl.u32 %v4930, 3
      %v4932 = vand.u32 %v4930, 7
      %v4933 = vsub.s32 0, %v4932
      %v4934 = vsel %vm4928, %v4933, %v4932
      %vm4935 = vcmp.lt.s32.totalorder %v4691, 0
      %v4936 = vsub.s32 0, %v4691
      %v4937 = vsel %vm4935, %v4936, %v4691
      %v4938 = vshrl.u32 %v4937, 3
      %v4939 = vand.u32 %v4937, 7
      %v4940 = vsub.s32 0, %v4939
      %v4941 = vsel %vm4935, %v4940, %v4939
      %vm4942 = vcmp.lt.s32.totalorder %v4692, 0
      %v4943 = vsub.s32 0, %v4692
      %v4944 = vsel %vm4942, %v4943, %v4692
      %v4945 = vshrl.u32 %v4944, 3
      %v4946 = vand.u32 %v4944, 7
      %v4947 = vsub.s32 0, %v4946
      %v4948 = vsel %vm4942, %v4947, %v4946
      %vm4949 = vcmp.lt.s32.totalorder %v4693, 0
      %v4950 = vsub.s32 0, %v4693
      %v4951 = vsel %vm4949, %v4950, %v4693
      %v4952 = vshrl.u32 %v4951, 3
      %v4953 = vand.u32 %v4951, 7
      %v4954 = vsub.s32 0, %v4953
      %v4955 = vsel %vm4949, %v4954, %v4953
      %vm4956 = vcmp.lt.s32.totalorder %v4694, 0
      %v4957 = vsub.s32 0, %v4694
      %v4958 = vsel %vm4956, %v4957, %v4694
      %v4959 = vshrl.u32 %v4958, 3
      %v4960 = vand.u32 %v4958, 7
      %v4961 = vsub.s32 0, %v4960
      %v4962 = vsel %vm4956, %v4961, %v4960
      %vm4963 = vcmp.lt.s32.totalorder %v4695, 0
      %v4964 = vsub.s32 0, %v4695
      %v4965 = vsel %vm4963, %v4964, %v4695
      %v4966 = vshrl.u32 %v4965, 3
      %v4967 = vand.u32 %v4965, 7
      %v4968 = vsub.s32 0, %v4967
      %v4969 = vsel %vm4963, %v4968, %v4967
      %vm4970 = vcmp.lt.s32.totalorder %v4696, 0
      %v4971 = vsub.s32 0, %v4696
      %v4972 = vsel %vm4970, %v4971, %v4696
      %v4973 = vshrl.u32 %v4972, 3
      %v4974 = vand.u32 %v4972, 7
      %v4975 = vsub.s32 0, %v4974
      %v4976 = vsel %vm4970, %v4975, %v4974
      %vm4977 = vcmp.lt.s32.totalorder %v4697, 0
      %v4978 = vsub.s32 0, %v4697
      %v4979 = vsel %vm4977, %v4978, %v4697
      %v4980 = vshrl.u32 %v4979, 3
      %v4981 = vand.u32 %v4979, 7
      %v4982 = vsub.s32 0, %v4981
      %v4983 = vsel %vm4977, %v4982, %v4981
      %vm4984 = vcmp.lt.s32.totalorder %v4698, 0
      %v4985 = vsub.s32 0, %v4698
      %v4986 = vsel %vm4984, %v4985, %v4698
      %v4987 = vshrl.u32 %v4986, 3
      %v4988 = vand.u32 %v4986, 7
      %v4989 = vsub.s32 0, %v4988
      %v4990 = vsel %vm4984, %v4989, %v4988
      %vm4991 = vcmp.lt.s32.totalorder %v4699, 0
      %v4992 = vsub.s32 0, %v4699
      %v4993 = vsel %vm4991, %v4992, %v4699
      %v4994 = vshrl.u32 %v4993, 3
      %v4995 = vand.u32 %v4993, 7
      %v4996 = vsub.s32 0, %v4995
      %v4997 = vsel %vm4991, %v4996, %v4995
      %vm4998 = vcmp.lt.s32.totalorder %v4700, 0
      %v4999 = vsub.s32 0, %v4700
      %v5000 = vsel %vm4998, %v4999, %v4700
      %v5001 = vshrl.u32 %v5000, 3
      %v5002 = vand.u32 %v5000, 7
      %v5003 = vsub.s32 0, %v5002
      %v5004 = vsel %vm4998, %v5003, %v5002
      %vm5005 = vcmp.ne.s32.totalorder %v4899, 0
      %vm5006 = vcmp.ne.s32.totalorder %v4906, 0
      %vm5007 = vcmp.ne.s32.totalorder %v4913, 0
      %vm5008 = vcmp.ne.s32.totalorder %v4920, 0
      %vm5009 = vcmp.ne.s32.totalorder %v4927, 0
      %vm5010 = vcmp.ne.s32.totalorder %v4934, 0
      %vm5011 = vcmp.ne.s32.totalorder %v4941, 0
      %vm5012 = vcmp.ne.s32.totalorder %v4948, 0
      %vm5013 = vcmp.ne.s32.totalorder %v4955, 0
      %vm5014 = vcmp.ne.s32.totalorder %v4962, 0
      %vm5015 = vcmp.ne.s32.totalorder %v4969, 0
      %vm5016 = vcmp.ne.s32.totalorder %v4976, 0
      %vm5017 = vcmp.ne.s32.totalorder %v4983, 0
      %vm5018 = vcmp.ne.s32.totalorder %v4990, 0
      %vm5019 = vcmp.ne.s32.totalorder %v4997, 0
      %vm5020 = vcmp.ne.s32.totalorder %v5004, 0
      %vm5021 = vcmp.lt.s32.totalorder %v4899, 0
      %vm5022 = vcmp.lt.s32.totalorder %v4906, 0
      %vm5023 = vcmp.lt.s32.totalorder %v4913, 0
      %vm5024 = vcmp.lt.s32.totalorder %v4920, 0
      %vm5025 = vcmp.lt.s32.totalorder %v4927, 0
      %vm5026 = vcmp.lt.s32.totalorder %v4934, 0
      %vm5027 = vcmp.lt.s32.totalorder %v4941, 0
      %vm5028 = vcmp.lt.s32.totalorder %v4948, 0
      %vm5029 = vcmp.lt.s32.totalorder %v4955, 0
      %vm5030 = vcmp.lt.s32.totalorder %v4962, 0
      %vm5031 = vcmp.lt.s32.totalorder %v4969, 0
      %vm5032 = vcmp.lt.s32.totalorder %v4976, 0
      %vm5033 = vcmp.lt.s32.totalorder %v4983, 0
      %vm5034 = vcmp.lt.s32.totalorder %v4990, 0
      %vm5035 = vcmp.lt.s32.totalorder %v4997, 0
      %vm5036 = vcmp.lt.s32.totalorder %v5004, 0
      %vm5037 = vmand %vm5021, %vm5005
      %vm5038 = vmand %vm5022, %vm5006
      %vm5039 = vmand %vm5023, %vm5007
      %vm5040 = vmand %vm5024, %vm5008
      %vm5041 = vmand %vm5025, %vm5009
      %vm5042 = vmand %vm5026, %vm5010
      %vm5043 = vmand %vm5027, %vm5011
      %vm5044 = vmand %vm5028, %vm5012
      %vm5045 = vmand %vm5029, %vm5013
      %vm5046 = vmand %vm5030, %vm5014
      %vm5047 = vmand %vm5031, %vm5015
      %vm5048 = vmand %vm5032, %vm5016
      %vm5049 = vmand %vm5033, %vm5017
      %vm5050 = vmand %vm5034, %vm5018
      %vm5051 = vmand %vm5035, %vm5019
      %vm5052 = vmand %vm5036, %vm5020
      %v5053 = vadd.s32 %v4899, 8
      %v5054 = vadd.s32 %v4906, 8
      %v5055 = vadd.s32 %v4913, 8
      %v5056 = vadd.s32 %v4920, 8
      %v5057 = vadd.s32 %v4927, 8
      %v5058 = vadd.s32 %v4934, 8
      %v5059 = vadd.s32 %v4941, 8
      %v5060 = vadd.s32 %v4948, 8
      %v5061 = vadd.s32 %v4955, 8
      %v5062 = vadd.s32 %v4962, 8
      %v5063 = vadd.s32 %v4969, 8
      %v5064 = vadd.s32 %v4976, 8
      %v5065 = vadd.s32 %v4983, 8
      %v5066 = vadd.s32 %v4990, 8
      %v5067 = vadd.s32 %v4997, 8
      %v5068 = vadd.s32 %v5004, 8
      %v5069 = vsel %vm5037, %v5053, %v4899
      %v5070 = vsel %vm5038, %v5054, %v4906
      %v5071 = vsel %vm5039, %v5055, %v4913
      %v5072 = vsel %vm5040, %v5056, %v4920
      %v5073 = vsel %vm5041, %v5057, %v4927
      %v5074 = vsel %vm5042, %v5058, %v4934
      %v5075 = vsel %vm5043, %v5059, %v4941
      %v5076 = vsel %vm5044, %v5060, %v4948
      %v5077 = vsel %vm5045, %v5061, %v4955
      %v5078 = vsel %vm5046, %v5062, %v4962
      %v5079 = vsel %vm5047, %v5063, %v4969
      %v5080 = vsel %vm5048, %v5064, %v4976
      %v5081 = vsel %vm5049, %v5065, %v4983
      %v5082 = vsel %vm5050, %v5066, %v4990
      %v5083 = vsel %vm5051, %v5067, %v4997
      %v5084 = vsel %vm5052, %v5068, %v5004
      %vm5085 = vcmp.ge.s32.totalorder %v5069, 1
      %vm5086 = vcmp.ge.s32.totalorder %v5070, 1
      %vm5087 = vcmp.ge.s32.totalorder %v5071, 1
      %vm5088 = vcmp.ge.s32.totalorder %v5072, 1
      %vm5089 = vcmp.ge.s32.totalorder %v5073, 1
      %vm5090 = vcmp.ge.s32.totalorder %v5074, 1
      %vm5091 = vcmp.ge.s32.totalorder %v5075, 1
      %vm5092 = vcmp.ge.s32.totalorder %v5076, 1
      %vm5093 = vcmp.ge.s32.totalorder %v5077, 1
      %vm5094 = vcmp.ge.s32.totalorder %v5078, 1
      %vm5095 = vcmp.ge.s32.totalorder %v5079, 1
      %vm5096 = vcmp.ge.s32.totalorder %v5080, 1
      %vm5097 = vcmp.ge.s32.totalorder %v5081, 1
      %vm5098 = vcmp.ge.s32.totalorder %v5082, 1
      %vm5099 = vcmp.ge.s32.totalorder %v5083, 1
      %vm5100 = vcmp.ge.s32.totalorder %v5084, 1
      %v5101 = vsel %vm5085, 1, 0
      %v5102 = vsel %vm5086, 1, 0
      %v5103 = vsel %vm5087, 1, 0
      %v5104 = vsel %vm5088, 1, 0
      %v5105 = vsel %vm5089, 1, 0
      %v5106 = vsel %vm5090, 1, 0
      %v5107 = vsel %vm5091, 1, 0
      %v5108 = vsel %vm5092, 1, 0
      %v5109 = vsel %vm5093, 1, 0
      %v5110 = vsel %vm5094, 1, 0
      %v5111 = vsel %vm5095, 1, 0
      %v5112 = vsel %vm5096, 1, 0
      %v5113 = vsel %vm5097, 1, 0
      %v5114 = vsel %vm5098, 1, 0
      %v5115 = vsel %vm5099, 1, 0
      %v5116 = vsel %vm5100, 1, 0
      %v5117 = vcvt.s32.f32 %v5101
      %v5118 = vcvt.s32.f32 %v5102
      %v5119 = vcvt.s32.f32 %v5103
      %v5120 = vcvt.s32.f32 %v5104
      %v5121 = vcvt.s32.f32 %v5105
      %v5122 = vcvt.s32.f32 %v5106
      %v5123 = vcvt.s32.f32 %v5107
      %v5124 = vcvt.s32.f32 %v5108
      %v5125 = vcvt.s32.f32 %v5109
      %v5126 = vcvt.s32.f32 %v5110
      %v5127 = vcvt.s32.f32 %v5111
      %v5128 = vcvt.s32.f32 %v5112
      %v5129 = vcvt.s32.f32 %v5113
      %v5130 = vcvt.s32.f32 %v5114
      %v5131 = vcvt.s32.f32 %v5115
      %v5132 = vcvt.s32.f32 %v5116
      %vm5133 = vcmp.lt.s32.totalorder %v5069, 7
      %vm5134 = vcmp.lt.s32.totalorder %v5070, 7
      %vm5135 = vcmp.lt.s32.totalorder %v5071, 7
      %vm5136 = vcmp.lt.s32.totalorder %v5072, 7
      %vm5137 = vcmp.lt.s32.totalorder %v5073, 7
      %vm5138 = vcmp.lt.s32.totalorder %v5074, 7
      %vm5139 = vcmp.lt.s32.totalorder %v5075, 7
      %vm5140 = vcmp.lt.s32.totalorder %v5076, 7
      %vm5141 = vcmp.lt.s32.totalorder %v5077, 7
      %vm5142 = vcmp.lt.s32.totalorder %v5078, 7
      %vm5143 = vcmp.lt.s32.totalorder %v5079, 7
      %vm5144 = vcmp.lt.s32.totalorder %v5080, 7
      %vm5145 = vcmp.lt.s32.totalorder %v5081, 7
      %vm5146 = vcmp.lt.s32.totalorder %v5082, 7
      %vm5147 = vcmp.lt.s32.totalorder %v5083, 7
      %vm5148 = vcmp.lt.s32.totalorder %v5084, 7
      %v5149 = vsel %vm5133, 1, 0
      %v5150 = vsel %vm5134, 1, 0
      %v5151 = vsel %vm5135, 1, 0
      %v5152 = vsel %vm5136, 1, 0
      %v5153 = vsel %vm5137, 1, 0
      %v5154 = vsel %vm5138, 1, 0
      %v5155 = vsel %vm5139, 1, 0
      %v5156 = vsel %vm5140, 1, 0
      %v5157 = vsel %vm5141, 1, 0
      %v5158 = vsel %vm5142, 1, 0
      %v5159 = vsel %vm5143, 1, 0
      %v5160 = vsel %vm5144, 1, 0
      %v5161 = vsel %vm5145, 1, 0
      %v5162 = vsel %vm5146, 1, 0
      %v5163 = vsel %vm5147, 1, 0
      %v5164 = vsel %vm5148, 1, 0
      %v5165 = vcvt.s32.f32 %v5149
      %v5166 = vcvt.s32.f32 %v5150
      %v5167 = vcvt.s32.f32 %v5151
      %v5168 = vcvt.s32.f32 %v5152
      %v5169 = vcvt.s32.f32 %v5153
      %v5170 = vcvt.s32.f32 %v5154
      %v5171 = vcvt.s32.f32 %v5155
      %v5172 = vcvt.s32.f32 %v5156
      %v5173 = vcvt.s32.f32 %v5157
      %v5174 = vcvt.s32.f32 %v5158
      %v5175 = vcvt.s32.f32 %v5159
      %v5176 = vcvt.s32.f32 %v5160
      %v5177 = vcvt.s32.f32 %v5161
      %v5178 = vcvt.s32.f32 %v5162
      %v5179 = vcvt.s32.f32 %v5163
      %v5180 = vcvt.s32.f32 %v5164
      %v5181 = vadd.s32 %v4877, 4294967288
      %v5182 = vadd.s32 %v4878, 4294967288
      %v5183 = vadd.s32 %v4879, 4294967288
      %v5184 = vadd.s32 %v4880, 4294967288
      %v5185 = vadd.s32 %v4881, 4294967288
      %v5186 = vadd.s32 %v4882, 4294967288
      %v5187 = vadd.s32 %v4883, 4294967288
      %v5188 = vadd.s32 %v4884, 4294967288
      %v5189 = vadd.s32 %v4885, 4294967288
      %v5190 = vadd.s32 %v4886, 4294967288
      %v5191 = vadd.s32 %v4887, 4294967288
      %v5192 = vadd.s32 %v4888, 4294967288
      %v5193 = vadd.s32 %v4889, 4294967288
      %v5194 = vadd.s32 %v4890, 4294967288
      %v5195 = vadd.s32 %v4891, 4294967288
      %v5196 = vadd.s32 %v4892, 4294967288
      %vm5197 = vcmp.ge.s32.totalorder %v5181, 0
      %vm5198 = vcmp.ge.s32.totalorder %v5182, 0
      %vm5199 = vcmp.ge.s32.totalorder %v5183, 0
      %vm5200 = vcmp.ge.s32.totalorder %v5184, 0
      %vm5201 = vcmp.ge.s32.totalorder %v5185, 0
      %vm5202 = vcmp.ge.s32.totalorder %v5186, 0
      %vm5203 = vcmp.ge.s32.totalorder %v5187, 0
      %vm5204 = vcmp.ge.s32.totalorder %v5188, 0
      %vm5205 = vcmp.ge.s32.totalorder %v5189, 0
      %vm5206 = vcmp.ge.s32.totalorder %v5190, 0
      %vm5207 = vcmp.ge.s32.totalorder %v5191, 0
      %vm5208 = vcmp.ge.s32.totalorder %v5192, 0
      %vm5209 = vcmp.ge.s32.totalorder %v5193, 0
      %vm5210 = vcmp.ge.s32.totalorder %v5194, 0
      %vm5211 = vcmp.ge.s32.totalorder %v5195, 0
      %vm5212 = vcmp.ge.s32.totalorder %v5196, 0
      %vm5213 = vcmp.lt.s32.totalorder %v5181, 64
      %vm5214 = vcmp.lt.s32.totalorder %v5182, 64
      %vm5215 = vcmp.lt.s32.totalorder %v5183, 64
      %vm5216 = vcmp.lt.s32.totalorder %v5184, 64
      %vm5217 = vcmp.lt.s32.totalorder %v5185, 64
      %vm5218 = vcmp.lt.s32.totalorder %v5186, 64
      %vm5219 = vcmp.lt.s32.totalorder %v5187, 64
      %vm5220 = vcmp.lt.s32.totalorder %v5188, 64
      %vm5221 = vcmp.lt.s32.totalorder %v5189, 64
      %vm5222 = vcmp.lt.s32.totalorder %v5190, 64
      %vm5223 = vcmp.lt.s32.totalorder %v5191, 64
      %vm5224 = vcmp.lt.s32.totalorder %v5192, 64
      %vm5225 = vcmp.lt.s32.totalorder %v5193, 64
      %vm5226 = vcmp.lt.s32.totalorder %v5194, 64
      %vm5227 = vcmp.lt.s32.totalorder %v5195, 64
      %vm5228 = vcmp.lt.s32.totalorder %v5196, 64
      %vm5229 = vmand %vm5197, %vm5213
      %vm5230 = vmand %vm5198, %vm5214
      %vm5231 = vmand %vm5199, %vm5215
      %vm5232 = vmand %vm5200, %vm5216
      %vm5233 = vmand %vm5201, %vm5217
      %vm5234 = vmand %vm5202, %vm5218
      %vm5235 = vmand %vm5203, %vm5219
      %vm5236 = vmand %vm5204, %vm5220
      %vm5237 = vmand %vm5205, %vm5221
      %vm5238 = vmand %vm5206, %vm5222
      %vm5239 = vmand %vm5207, %vm5223
      %vm5240 = vmand %vm5208, %vm5224
      %vm5241 = vmand %vm5209, %vm5225
      %vm5242 = vmand %vm5210, %vm5226
      %vm5243 = vmand %vm5211, %vm5227
      %vm5244 = vmand %vm5212, %vm5228
      %v5245 = vsel %vm5229, 1, 0
      %v5246 = vsel %vm5230, 1, 0
      %v5247 = vsel %vm5231, 1, 0
      %v5248 = vsel %vm5232, 1, 0
      %v5249 = vsel %vm5233, 1, 0
      %v5250 = vsel %vm5234, 1, 0
      %v5251 = vsel %vm5235, 1, 0
      %v5252 = vsel %vm5236, 1, 0
      %v5253 = vsel %vm5237, 1, 0
      %v5254 = vsel %vm5238, 1, 0
      %v5255 = vsel %vm5239, 1, 0
      %v5256 = vsel %vm5240, 1, 0
      %v5257 = vsel %vm5241, 1, 0
      %v5258 = vsel %vm5242, 1, 0
      %v5259 = vsel %vm5243, 1, 0
      %v5260 = vsel %vm5244, 1, 0
      %v5261 = vcvt.s32.f32 %v5245
      %v5262 = vcvt.s32.f32 %v5246
      %v5263 = vcvt.s32.f32 %v5247
      %v5264 = vcvt.s32.f32 %v5248
      %v5265 = vcvt.s32.f32 %v5249
      %v5266 = vcvt.s32.f32 %v5250
      %v5267 = vcvt.s32.f32 %v5251
      %v5268 = vcvt.s32.f32 %v5252
      %v5269 = vcvt.s32.f32 %v5253
      %v5270 = vcvt.s32.f32 %v5254
      %v5271 = vcvt.s32.f32 %v5255
      %v5272 = vcvt.s32.f32 %v5256
      %v5273 = vcvt.s32.f32 %v5257
      %v5274 = vcvt.s32.f32 %v5258
      %v5275 = vcvt.s32.f32 %v5259
      %v5276 = vcvt.s32.f32 %v5260
      %vm5277 = vcmp.ge.s32.totalorder %v4877, 0
      %vm5278 = vcmp.ge.s32.totalorder %v4878, 0
      %vm5279 = vcmp.ge.s32.totalorder %v4879, 0
      %vm5280 = vcmp.ge.s32.totalorder %v4880, 0
      %vm5281 = vcmp.ge.s32.totalorder %v4881, 0
      %vm5282 = vcmp.ge.s32.totalorder %v4882, 0
      %vm5283 = vcmp.ge.s32.totalorder %v4883, 0
      %vm5284 = vcmp.ge.s32.totalorder %v4884, 0
      %vm5285 = vcmp.ge.s32.totalorder %v4885, 0
      %vm5286 = vcmp.ge.s32.totalorder %v4886, 0
      %vm5287 = vcmp.ge.s32.totalorder %v4887, 0
      %vm5288 = vcmp.ge.s32.totalorder %v4888, 0
      %vm5289 = vcmp.ge.s32.totalorder %v4889, 0
      %vm5290 = vcmp.ge.s32.totalorder %v4890, 0
      %vm5291 = vcmp.ge.s32.totalorder %v4891, 0
      %vm5292 = vcmp.ge.s32.totalorder %v4892, 0
      %vm5293 = vcmp.lt.s32.totalorder %v4877, 64
      %vm5294 = vcmp.lt.s32.totalorder %v4878, 64
      %vm5295 = vcmp.lt.s32.totalorder %v4879, 64
      %vm5296 = vcmp.lt.s32.totalorder %v4880, 64
      %vm5297 = vcmp.lt.s32.totalorder %v4881, 64
      %vm5298 = vcmp.lt.s32.totalorder %v4882, 64
      %vm5299 = vcmp.lt.s32.totalorder %v4883, 64
      %vm5300 = vcmp.lt.s32.totalorder %v4884, 64
      %vm5301 = vcmp.lt.s32.totalorder %v4885, 64
      %vm5302 = vcmp.lt.s32.totalorder %v4886, 64
      %vm5303 = vcmp.lt.s32.totalorder %v4887, 64
      %vm5304 = vcmp.lt.s32.totalorder %v4888, 64
      %vm5305 = vcmp.lt.s32.totalorder %v4889, 64
      %vm5306 = vcmp.lt.s32.totalorder %v4890, 64
      %vm5307 = vcmp.lt.s32.totalorder %v4891, 64
      %vm5308 = vcmp.lt.s32.totalorder %v4892, 64
      %vm5309 = vmand %vm5277, %vm5293
      %vm5310 = vmand %vm5278, %vm5294
      %vm5311 = vmand %vm5279, %vm5295
      %vm5312 = vmand %vm5280, %vm5296
      %vm5313 = vmand %vm5281, %vm5297
      %vm5314 = vmand %vm5282, %vm5298
      %vm5315 = vmand %vm5283, %vm5299
      %vm5316 = vmand %vm5284, %vm5300
      %vm5317 = vmand %vm5285, %vm5301
      %vm5318 = vmand %vm5286, %vm5302
      %vm5319 = vmand %vm5287, %vm5303
      %vm5320 = vmand %vm5288, %vm5304
      %vm5321 = vmand %vm5289, %vm5305
      %vm5322 = vmand %vm5290, %vm5306
      %vm5323 = vmand %vm5291, %vm5307
      %vm5324 = vmand %vm5292, %vm5308
      %v5325 = vsel %vm5309, 1, 0
      %v5326 = vsel %vm5310, 1, 0
      %v5327 = vsel %vm5311, 1, 0
      %v5328 = vsel %vm5312, 1, 0
      %v5329 = vsel %vm5313, 1, 0
      %v5330 = vsel %vm5314, 1, 0
      %v5331 = vsel %vm5315, 1, 0
      %v5332 = vsel %vm5316, 1, 0
      %v5333 = vsel %vm5317, 1, 0
      %v5334 = vsel %vm5318, 1, 0
      %v5335 = vsel %vm5319, 1, 0
      %v5336 = vsel %vm5320, 1, 0
      %v5337 = vsel %vm5321, 1, 0
      %v5338 = vsel %vm5322, 1, 0
      %v5339 = vsel %vm5323, 1, 0
      %v5340 = vsel %vm5324, 1, 0
      %v5341 = vcvt.s32.f32 %v5325
      %v5342 = vcvt.s32.f32 %v5326
      %v5343 = vcvt.s32.f32 %v5327
      %v5344 = vcvt.s32.f32 %v5328
      %v5345 = vcvt.s32.f32 %v5329
      %v5346 = vcvt.s32.f32 %v5330
      %v5347 = vcvt.s32.f32 %v5331
      %v5348 = vcvt.s32.f32 %v5332
      %v5349 = vcvt.s32.f32 %v5333
      %v5350 = vcvt.s32.f32 %v5334
      %v5351 = vcvt.s32.f32 %v5335
      %v5352 = vcvt.s32.f32 %v5336
      %v5353 = vcvt.s32.f32 %v5337
      %v5354 = vcvt.s32.f32 %v5338
      %v5355 = vcvt.s32.f32 %v5339
      %v5356 = vcvt.s32.f32 %v5340
      %v5357 = vadd.s32 %v4877, 8
      %v5358 = vadd.s32 %v4878, 8
      %v5359 = vadd.s32 %v4879, 8
      %v5360 = vadd.s32 %v4880, 8
      %v5361 = vadd.s32 %v4881, 8
      %v5362 = vadd.s32 %v4882, 8
      %v5363 = vadd.s32 %v4883, 8
      %v5364 = vadd.s32 %v4884, 8
      %v5365 = vadd.s32 %v4885, 8
      %v5366 = vadd.s32 %v4886, 8
      %v5367 = vadd.s32 %v4887, 8
      %v5368 = vadd.s32 %v4888, 8
      %v5369 = vadd.s32 %v4889, 8
      %v5370 = vadd.s32 %v4890, 8
      %v5371 = vadd.s32 %v4891, 8
      %v5372 = vadd.s32 %v4892, 8
      %vm5373 = vcmp.ge.s32.totalorder %v5357, 0
      %vm5374 = vcmp.ge.s32.totalorder %v5358, 0
      %vm5375 = vcmp.ge.s32.totalorder %v5359, 0
      %vm5376 = vcmp.ge.s32.totalorder %v5360, 0
      %vm5377 = vcmp.ge.s32.totalorder %v5361, 0
      %vm5378 = vcmp.ge.s32.totalorder %v5362, 0
      %vm5379 = vcmp.ge.s32.totalorder %v5363, 0
      %vm5380 = vcmp.ge.s32.totalorder %v5364, 0
      %vm5381 = vcmp.ge.s32.totalorder %v5365, 0
      %vm5382 = vcmp.ge.s32.totalorder %v5366, 0
      %vm5383 = vcmp.ge.s32.totalorder %v5367, 0
      %vm5384 = vcmp.ge.s32.totalorder %v5368, 0
      %vm5385 = vcmp.ge.s32.totalorder %v5369, 0
      %vm5386 = vcmp.ge.s32.totalorder %v5370, 0
      %vm5387 = vcmp.ge.s32.totalorder %v5371, 0
      %vm5388 = vcmp.ge.s32.totalorder %v5372, 0
      %vm5389 = vcmp.lt.s32.totalorder %v5357, 64
      %vm5390 = vcmp.lt.s32.totalorder %v5358, 64
      %vm5391 = vcmp.lt.s32.totalorder %v5359, 64
      %vm5392 = vcmp.lt.s32.totalorder %v5360, 64
      %vm5393 = vcmp.lt.s32.totalorder %v5361, 64
      %vm5394 = vcmp.lt.s32.totalorder %v5362, 64
      %vm5395 = vcmp.lt.s32.totalorder %v5363, 64
      %vm5396 = vcmp.lt.s32.totalorder %v5364, 64
      %vm5397 = vcmp.lt.s32.totalorder %v5365, 64
      %vm5398 = vcmp.lt.s32.totalorder %v5366, 64
      %vm5399 = vcmp.lt.s32.totalorder %v5367, 64
      %vm5400 = vcmp.lt.s32.totalorder %v5368, 64
      %vm5401 = vcmp.lt.s32.totalorder %v5369, 64
      %vm5402 = vcmp.lt.s32.totalorder %v5370, 64
      %vm5403 = vcmp.lt.s32.totalorder %v5371, 64
      %vm5404 = vcmp.lt.s32.totalorder %v5372, 64
      %vm5405 = vmand %vm5373, %vm5389
      %vm5406 = vmand %vm5374, %vm5390
      %vm5407 = vmand %vm5375, %vm5391
      %vm5408 = vmand %vm5376, %vm5392
      %vm5409 = vmand %vm5377, %vm5393
      %vm5410 = vmand %vm5378, %vm5394
      %vm5411 = vmand %vm5379, %vm5395
      %vm5412 = vmand %vm5380, %vm5396
      %vm5413 = vmand %vm5381, %vm5397
      %vm5414 = vmand %vm5382, %vm5398
      %vm5415 = vmand %vm5383, %vm5399
      %vm5416 = vmand %vm5384, %vm5400
      %vm5417 = vmand %vm5385, %vm5401
      %vm5418 = vmand %vm5386, %vm5402
      %vm5419 = vmand %vm5387, %vm5403
      %vm5420 = vmand %vm5388, %vm5404
      %v5421 = vsel %vm5405, 1, 0
      %v5422 = vsel %vm5406, 1, 0
      %v5423 = vsel %vm5407, 1, 0
      %v5424 = vsel %vm5408, 1, 0
      %v5425 = vsel %vm5409, 1, 0
      %v5426 = vsel %vm5410, 1, 0
      %v5427 = vsel %vm5411, 1, 0
      %v5428 = vsel %vm5412, 1, 0
      %v5429 = vsel %vm5413, 1, 0
      %v5430 = vsel %vm5414, 1, 0
      %v5431 = vsel %vm5415, 1, 0
      %v5432 = vsel %vm5416, 1, 0
      %v5433 = vsel %vm5417, 1, 0
      %v5434 = vsel %vm5418, 1, 0
      %v5435 = vsel %vm5419, 1, 0
      %v5436 = vsel %vm5420, 1, 0
      %v5437 = vcvt.s32.f32 %v5421
      %v5438 = vcvt.s32.f32 %v5422
      %v5439 = vcvt.s32.f32 %v5423
      %v5440 = vcvt.s32.f32 %v5424
      %v5441 = vcvt.s32.f32 %v5425
      %v5442 = vcvt.s32.f32 %v5426
      %v5443 = vcvt.s32.f32 %v5427
      %v5444 = vcvt.s32.f32 %v5428
      %v5445 = vcvt.s32.f32 %v5429
      %v5446 = vcvt.s32.f32 %v5430
      %v5447 = vcvt.s32.f32 %v5431
      %v5448 = vcvt.s32.f32 %v5432
      %v5449 = vcvt.s32.f32 %v5433
      %v5450 = vcvt.s32.f32 %v5434
      %v5451 = vcvt.s32.f32 %v5435
      %v5452 = vcvt.s32.f32 %v5436
      %v5453 = vld [vmem:[%s10] sm:$0x7]
      %v5454 = vld [vmem:[%s10 + $0x4] sm:$0x7]
      %v5455 = vld [vmem:[%s10 + $0x8] sm:$0x7]
      %vm5458 = vcmask 1040384
      %v5459 = vrot.slane %v4680, 7
      %v5460 = vrot.slane %v4682, 7
      %v5461 = vsel %vm5458, %v5459, %v5460
      %v5478 = vrot.slane %v4645, 7
      %v5479 = vrot.slane %v4647, 7
      %v5480 = vsel %vm5458, %v5478, %v5479
      %v5481 = vrot.slane %v4650, 7
      %v5482 = vsel %vm5458, %v5479, %v5481
      %v5483 = vrot.slane %v4652, 7
      %v5484 = vsel %vm5458, %v5481, %v5483
      %v5485 = vrot.slane %v4655, 7
      %v5486 = vsel %vm5458, %v5483, %v5485
      %v5487 = vrot.slane %v4657, 7
      %v5488 = vsel %vm5458, %v5485, %v5487
      %v5489 = vrot.slane %v4660, 7
      %v5490 = vsel %vm5458, %v5487, %v5489
      %v5491 = vrot.slane %v4662, 7
      %v5492 = vsel %vm5458, %v5489, %v5491
      %v5493 = vrot.slane %v4665, 7
      %v5494 = vsel %vm5458, %v5491, %v5493
      %v5495 = vrot.slane %v4667, 7
      %v5496 = vsel %vm5458, %v5493, %v5495
      %v5497 = vrot.slane %v4670, 7
      %v5498 = vsel %vm5458, %v5495, %v5497
      %v5499 = vrot.slane %v4672, 7
      %v5500 = vsel %vm5458, %v5497, %v5499
      %v5501 = vrot.slane %v4675, 7
      %v5502 = vsel %vm5458, %v5499, %v5501
      %v5503 = vrot.slane %v4677, 7
      %v5504 = vsel %vm5458, %v5501, %v5503
      %v5505 = vsel %vm5458, %v5503, %v5459
      %v5521 = vsel %vm5458, %v5460, %v5478
      %v5522 = vmul.f32 %v5261, %v5117
      %v5523 = vmul.f32 %v5262, %v5118
      %v5524 = vmul.f32 %v5263, %v5119
      %v5525 = vmul.f32 %v5264, %v5120
      %v5526 = vmul.f32 %v5265, %v5121
      %v5527 = vmul.f32 %v5266, %v5122
      %v5528 = vmul.f32 %v5267, %v5123
      %v5529 = vmul.f32 %v5268, %v5124
      %v5530 = vmul.f32 %v5269, %v5125
      %v5531 = vmul.f32 %v5270, %v5126
      %v5532 = vmul.f32 %v5271, %v5127
      %v5533 = vmul.f32 %v5272, %v5128
      %v5534 = vmul.f32 %v5273, %v5129
      %v5535 = vmul.f32 %v5274, %v5130
      %v5536 = vmul.f32 %v5275, %v5131
      %v5537 = vmul.f32 %v5276, %v5132
      %v5538 = vmul.f32 %v5461, %v5522
      %v5539 = vmul.f32 %v5521, %v5523
      %v5540 = vmul.f32 %v5480, %v5524
      %v5541 = vmul.f32 %v5482, %v5525
      %v5542 = vmul.f32 %v5484, %v5526
      %v5543 = vmul.f32 %v5486, %v5527
      %v5544 = vmul.f32 %v5488, %v5528
      %v5545 = vmul.f32 %v5490, %v5529
      %v5546 = vmul.f32 %v5492, %v5530
      %v5547 = vmul.f32 %v5494, %v5531
      %v5548 = vmul.f32 %v5496, %v5532
      %v5549 = vmul.f32 %v5498, %v5533
      %v5550 = vmul.f32 %v5500, %v5534
      %v5551 = vmul.f32 %v5502, %v5535
      %v5552 = vmul.f32 %v5504, %v5536
      %v5553 = vmul.f32 %v5505, %v5537
      %v5554 = vperm.slane %v5453, 0
      %v5555 = vmul.f32 %v5538, %v5554
      %v5556 = vmul.f32 %v5539, %v5554
      %v5557 = vmul.f32 %v5540, %v5554
      %v5558 = vmul.f32 %v5541, %v5554
      %v5559 = vmul.f32 %v5542, %v5554
      %v5560 = vmul.f32 %v5543, %v5554
      %v5561 = vmul.f32 %v5544, %v5554
      %v5562 = vmul.f32 %v5545, %v5554
      %v5563 = vmul.f32 %v5546, %v5554
      %v5564 = vmul.f32 %v5547, %v5554
      %v5565 = vmul.f32 %v5548, %v5554
      %v5566 = vmul.f32 %v5549, %v5554
      %v5567 = vmul.f32 %v5550, %v5554
      %v5568 = vmul.f32 %v5551, %v5554
      %v5569 = vmul.f32 %v5552, %v5554
      %v5570 = vmul.f32 %v5553, %v5554
      %v5571 = vadd.f32 %v5555, 0.0
      %v5572 = vadd.f32 %v5556, 0.0
      %v5573 = vadd.f32 %v5557, 0.0
      %v5574 = vadd.f32 %v5558, 0.0
      %v5575 = vadd.f32 %v5559, 0.0
      %v5576 = vadd.f32 %v5560, 0.0
      %v5577 = vadd.f32 %v5561, 0.0
      %v5578 = vadd.f32 %v5562, 0.0
      %v5579 = vadd.f32 %v5563, 0.0
      %v5580 = vadd.f32 %v5564, 0.0
      %v5581 = vadd.f32 %v5565, 0.0
      %v5582 = vadd.f32 %v5566, 0.0
      %v5583 = vadd.f32 %v5567, 0.0
      %v5584 = vadd.f32 %v5568, 0.0
      %v5585 = vadd.f32 %v5569, 0.0
      %v5586 = vadd.f32 %v5570, 0.0
      %v5587 = vmul.f32 %v4682, %v5261
      %v5588 = vmul.f32 %v4645, %v5262
      %v5589 = vmul.f32 %v4647, %v5263
      %v5590 = vmul.f32 %v4650, %v5264
      %v5591 = vmul.f32 %v4652, %v5265
      %v5592 = vmul.f32 %v4655, %v5266
      %v5593 = vmul.f32 %v4657, %v5267
      %v5594 = vmul.f32 %v4660, %v5268
      %v5595 = vmul.f32 %v4662, %v5269
      %v5596 = vmul.f32 %v4665, %v5270
      %v5597 = vmul.f32 %v4667, %v5271
      %v5598 = vmul.f32 %v4670, %v5272
      %v5599 = vmul.f32 %v4672, %v5273
      %v5600 = vmul.f32 %v4675, %v5274
      %v5601 = vmul.f32 %v4677, %v5275
      %v5602 = vmul.f32 %v4680, %v5276
      %v5603 = vperm.slane %v5453, 1
      %v5604 = vmul.f32 %v5587, %v5603
      %v5605 = vmul.f32 %v5588, %v5603
      %v5606 = vmul.f32 %v5589, %v5603
      %v5607 = vmul.f32 %v5590, %v5603
      %v5608 = vmul.f32 %v5591, %v5603
      %v5609 = vmul.f32 %v5592, %v5603
      %v5610 = vmul.f32 %v5593, %v5603
      %v5611 = vmul.f32 %v5594, %v5603
      %v5612 = vmul.f32 %v5595, %v5603
      %v5613 = vmul.f32 %v5596, %v5603
      %v5614 = vmul.f32 %v5597, %v5603
      %v5615 = vmul.f32 %v5598, %v5603
      %v5616 = vmul.f32 %v5599, %v5603
      %v5617 = vmul.f32 %v5600, %v5603
      %v5618 = vmul.f32 %v5601, %v5603
      %v5619 = vmul.f32 %v5602, %v5603
      %v5620 = vadd.f32 %v5571, %v5604
      %v5621 = vadd.f32 %v5572, %v5605
      %v5622 = vadd.f32 %v5573, %v5606
      %v5623 = vadd.f32 %v5574, %v5607
      %v5624 = vadd.f32 %v5575, %v5608
      %v5625 = vadd.f32 %v5576, %v5609
      %v5626 = vadd.f32 %v5577, %v5610
      %v5627 = vadd.f32 %v5578, %v5611
      %v5628 = vadd.f32 %v5579, %v5612
      %v5629 = vadd.f32 %v5580, %v5613
      %v5630 = vadd.f32 %v5581, %v5614
      %v5631 = vadd.f32 %v5582, %v5615
      %v5632 = vadd.f32 %v5583, %v5616
      %v5633 = vadd.f32 %v5584, %v5617
      %v5634 = vadd.f32 %v5585, %v5618
      %v5635 = vadd.f32 %v5586, %v5619
      %v5636 = vrot.slane %v4682, 1
      %vm5638 = vcmask 1046528
      %v5639 = vrot.slane %v4645, 1
      %v5640 = vrot.slane %v4647, 1
      %v5641 = vsel %vm5638, %v5639, %v5640
      %v5642 = vrot.slane %v4650, 1
      %v5643 = vsel %vm5638, %v5640, %v5642
      %v5644 = vrot.slane %v4652, 1
      %v5645 = vsel %vm5638, %v5642, %v5644
      %v5646 = vrot.slane %v4655, 1
      %v5647 = vsel %vm5638, %v5644, %v5646
      %v5648 = vrot.slane %v4657, 1
      %v5649 = vsel %vm5638, %v5646, %v5648
      %v5650 = vrot.slane %v4660, 1
      %v5651 = vsel %vm5638, %v5648, %v5650
      %v5652 = vrot.slane %v4662, 1
      %v5653 = vsel %vm5638, %v5650, %v5652
      %v5654 = vrot.slane %v4665, 1
      %v5655 = vsel %vm5638, %v5652, %v5654
      %v5656 = vrot.slane %v4667, 1
      %v5657 = vsel %vm5638, %v5654, %v5656
      %v5658 = vrot.slane %v4670, 1
      %v5659 = vsel %vm5638, %v5656, %v5658
      %v5660 = vrot.slane %v4672, 1
      %v5661 = vsel %vm5638, %v5658, %v5660
      %v5662 = vrot.slane %v4675, 1
      %v5663 = vsel %vm5638, %v5660, %v5662
      %v5664 = vrot.slane %v4677, 1
      %v5665 = vsel %vm5638, %v5662, %v5664
      %v5666 = vrot.slane %v4680, 1
      %v5667 = vsel %vm5638, %v5664, %v5666
      %v5668 = vsel %vm5638, %v5666, %v5636
      %v5685 = vsel %vm5638, %v5636, %v5639
      %v5686 = vmul.f32 %v5261, %v5165
      %v5687 = vmul.f32 %v5262, %v5166
      %v5688 = vmul.f32 %v5263, %v5167
      %v5689 = vmul.f32 %v5264, %v5168
      %v5690 = vmul.f32 %v5265, %v5169
      %v5691 = vmul.f32 %v5266, %v5170
      %v5692 = vmul.f32 %v5267, %v5171
      %v5693 = vmul.f32 %v5268, %v5172
      %v5694 = vmul.f32 %v5269, %v5173
      %v5695 = vmul.f32 %v5270, %v5174
      %v5696 = vmul.f32 %v5271, %v5175
      %v5697 = vmul.f32 %v5272, %v5176
      %v5698 = vmul.f32 %v5273, %v5177
      %v5699 = vmul.f32 %v5274, %v5178
      %v5700 = vmul.f32 %v5275, %v5179
      %v5701 = vmul.f32 %v5276, %v5180
      %v5702 = vmul.f32 %v5685, %v5686
      %v5703 = vmul.f32 %v5641, %v5687
      %v5704 = vmul.f32 %v5643, %v5688
      %v5705 = vmul.f32 %v5645, %v5689
      %v5706 = vmul.f32 %v5647, %v5690
      %v5707 = vmul.f32 %v5649, %v5691
      %v5708 = vmul.f32 %v5651, %v5692
      %v5709 = vmul.f32 %v5653, %v5693
      %v5710 = vmul.f32 %v5655, %v5694
      %v5711 = vmul.f32 %v5657, %v5695
      %v5712 = vmul.f32 %v5659, %v5696
      %v5713 = vmul.f32 %v5661, %v5697
      %v5714 = vmul.f32 %v5663, %v5698
      %v5715 = vmul.f32 %v5665, %v5699
      %v5716 = vmul.f32 %v5667, %v5700
      %v5717 = vmul.f32 %v5668, %v5701
      %v5718 = vperm.slane %v5453, 2
      %v5719 = vmul.f32 %v5702, %v5718
      %v5720 = vmul.f32 %v5703, %v5718
      %v5721 = vmul.f32 %v5704, %v5718
      %v5722 = vmul.f32 %v5705, %v5718
      %v5723 = vmul.f32 %v5706, %v5718
      %v5724 = vmul.f32 %v5707, %v5718
      %v5725 = vmul.f32 %v5708, %v5718
      %v5726 = vmul.f32 %v5709, %v5718
      %v5727 = vmul.f32 %v5710, %v5718
      %v5728 = vmul.f32 %v5711, %v5718
      %v5729 = vmul.f32 %v5712, %v5718
      %v5730 = vmul.f32 %v5713, %v5718
      %v5731 = vmul.f32 %v5714, %v5718
      %v5732 = vmul.f32 %v5715, %v5718
      %v5733 = vmul.f32 %v5716, %v5718
      %v5734 = vmul.f32 %v5717, %v5718
      %v5735 = vadd.f32 %v5620, %v5719
      %v5736 = vadd.f32 %v5621, %v5720
      %v5737 = vadd.f32 %v5622, %v5721
      %v5738 = vadd.f32 %v5623, %v5722
      %v5739 = vadd.f32 %v5624, %v5723
      %v5740 = vadd.f32 %v5625, %v5724
      %v5741 = vadd.f32 %v5626, %v5725
      %v5742 = vadd.f32 %v5627, %v5726
      %v5743 = vadd.f32 %v5628, %v5727
      %v5744 = vadd.f32 %v5629, %v5728
      %v5745 = vadd.f32 %v5630, %v5729
      %v5746 = vadd.f32 %v5631, %v5730
      %v5747 = vadd.f32 %v5632, %v5731
      %v5748 = vadd.f32 %v5633, %v5732
      %v5749 = vadd.f32 %v5634, %v5733
      %v5750 = vadd.f32 %v5635, %v5734
      %v5751 = vmul.f32 %v5341, %v5117
      %v5752 = vmul.f32 %v5342, %v5118
      %v5753 = vmul.f32 %v5343, %v5119
      %v5754 = vmul.f32 %v5344, %v5120
      %v5755 = vmul.f32 %v5345, %v5121
      %v5756 = vmul.f32 %v5346, %v5122
      %v5757 = vmul.f32 %v5347, %v5123
      %v5758 = vmul.f32 %v5348, %v5124
      %v5759 = vmul.f32 %v5349, %v5125
      %v5760 = vmul.f32 %v5350, %v5126
      %v5761 = vmul.f32 %v5351, %v5127
      %v5762 = vmul.f32 %v5352, %v5128
      %v5763 = vmul.f32 %v5353, %v5129
      %v5764 = vmul.f32 %v5354, %v5130
      %v5765 = vmul.f32 %v5355, %v5131
      %v5766 = vmul.f32 %v5356, %v5132
      %v5767 = vmul.f32 %v5521, %v5751
      %v5768 = vmul.f32 %v5480, %v5752
      %v5769 = vmul.f32 %v5482, %v5753
      %v5770 = vmul.f32 %v5484, %v5754
      %v5771 = vmul.f32 %v5486, %v5755
      %v5772 = vmul.f32 %v5488, %v5756
      %v5773 = vmul.f32 %v5490, %v5757
      %v5774 = vmul.f32 %v5492, %v5758
      %v5775 = vmul.f32 %v5494, %v5759
      %v5776 = vmul.f32 %v5496, %v5760
      %v5777 = vmul.f32 %v5498, %v5761
      %v5778 = vmul.f32 %v5500, %v5762
      %v5779 = vmul.f32 %v5502, %v5763
      %v5780 = vmul.f32 %v5504, %v5764
      %v5781 = vmul.f32 %v5505, %v5765
      %v5782 = vmul.f32 %v5461, %v5766
      %v5783 = vperm.slane %v5454, 0
      %v5784 = vmul.f32 %v5767, %v5783
      %v5785 = vmul.f32 %v5768, %v5783
      %v5786 = vmul.f32 %v5769, %v5783
      %v5787 = vmul.f32 %v5770, %v5783
      %v5788 = vmul.f32 %v5771, %v5783
      %v5789 = vmul.f32 %v5772, %v5783
      %v5790 = vmul.f32 %v5773, %v5783
      %v5791 = vmul.f32 %v5774, %v5783
      %v5792 = vmul.f32 %v5775, %v5783
      %v5793 = vmul.f32 %v5776, %v5783
      %v5794 = vmul.f32 %v5777, %v5783
      %v5795 = vmul.f32 %v5778, %v5783
      %v5796 = vmul.f32 %v5779, %v5783
      %v5797 = vmul.f32 %v5780, %v5783
      %v5798 = vmul.f32 %v5781, %v5783
      %v5799 = vmul.f32 %v5782, %v5783
      %v5800 = vadd.f32 %v5735, %v5784
      %v5801 = vadd.f32 %v5736, %v5785
      %v5802 = vadd.f32 %v5737, %v5786
      %v5803 = vadd.f32 %v5738, %v5787
      %v5804 = vadd.f32 %v5739, %v5788
      %v5805 = vadd.f32 %v5740, %v5789
      %v5806 = vadd.f32 %v5741, %v5790
      %v5807 = vadd.f32 %v5742, %v5791
      %v5808 = vadd.f32 %v5743, %v5792
      %v5809 = vadd.f32 %v5744, %v5793
      %v5810 = vadd.f32 %v5745, %v5794
      %v5811 = vadd.f32 %v5746, %v5795
      %v5812 = vadd.f32 %v5747, %v5796
      %v5813 = vadd.f32 %v5748, %v5797
      %v5814 = vadd.f32 %v5749, %v5798
      %v5815 = vadd.f32 %v5750, %v5799
      %v5816 = vmul.f32 %v4645, %v5341
      %v5817 = vmul.f32 %v4647, %v5342
      %v5818 = vmul.f32 %v4650, %v5343
      %v5819 = vmul.f32 %v4652, %v5344
      %v5820 = vmul.f32 %v4655, %v5345
      %v5821 = vmul.f32 %v4657, %v5346
      %v5822 = vmul.f32 %v4660, %v5347
      %v5823 = vmul.f32 %v4662, %v5348
      %v5824 = vmul.f32 %v4665, %v5349
      %v5825 = vmul.f32 %v4667, %v5350
      %v5826 = vmul.f32 %v4670, %v5351
      %v5827 = vmul.f32 %v4672, %v5352
      %v5828 = vmul.f32 %v4675, %v5353
      %v5829 = vmul.f32 %v4677, %v5354
      %v5830 = vmul.f32 %v4680, %v5355
      %v5831 = vmul.f32 %v4682, %v5356
      %v5832 = vperm.slane %v5454, 1
      %v5833 = vmul.f32 %v5816, %v5832
      %v5834 = vmul.f32 %v5817, %v5832
      %v5835 = vmul.f32 %v5818, %v5832
      %v5836 = vmul.f32 %v5819, %v5832
      %v5837 = vmul.f32 %v5820, %v5832
      %v5838 = vmul.f32 %v5821, %v5832
      %v5839 = vmul.f32 %v5822, %v5832
      %v5840 = vmul.f32 %v5823, %v5832
      %v5841 = vmul.f32 %v5824, %v5832
      %v5842 = vmul.f32 %v5825, %v5832
      %v5843 = vmul.f32 %v5826, %v5832
      %v5844 = vmul.f32 %v5827, %v5832
      %v5845 = vmul.f32 %v5828, %v5832
      %v5846 = vmul.f32 %v5829, %v5832
      %v5847 = vmul.f32 %v5830, %v5832
      %v5848 = vmul.f32 %v5831, %v5832
      %v5849 = vadd.f32 %v5800, %v5833
      %v5850 = vadd.f32 %v5801, %v5834
      %v5851 = vadd.f32 %v5802, %v5835
      %v5852 = vadd.f32 %v5803, %v5836
      %v5853 = vadd.f32 %v5804, %v5837
      %v5854 = vadd.f32 %v5805, %v5838
      %v5855 = vadd.f32 %v5806, %v5839
      %v5856 = vadd.f32 %v5807, %v5840
      %v5857 = vadd.f32 %v5808, %v5841
      %v5858 = vadd.f32 %v5809, %v5842
      %v5859 = vadd.f32 %v5810, %v5843
      %v5860 = vadd.f32 %v5811, %v5844
      %v5861 = vadd.f32 %v5812, %v5845
      %v5862 = vadd.f32 %v5813, %v5846
      %v5863 = vadd.f32 %v5814, %v5847
      %v5864 = vadd.f32 %v5815, %v5848
      %v5865 = vmul.f32 %v5341, %v5165
      %v5866 = vmul.f32 %v5342, %v5166
      %v5867 = vmul.f32 %v5343, %v5167
      %v5868 = vmul.f32 %v5344, %v5168
      %v5869 = vmul.f32 %v5345, %v5169
      %v5870 = vmul.f32 %v5346, %v5170
      %v5871 = vmul.f32 %v5347, %v5171
      %v5872 = vmul.f32 %v5348, %v5172
      %v5873 = vmul.f32 %v5349, %v5173
      %v5874 = vmul.f32 %v5350, %v5174
      %v5875 = vmul.f32 %v5351, %v5175
      %v5876 = vmul.f32 %v5352, %v5176
      %v5877 = vmul.f32 %v5353, %v5177
      %v5878 = vmul.f32 %v5354, %v5178
      %v5879 = vmul.f32 %v5355, %v5179
      %v5880 = vmul.f32 %v5356, %v5180
      %v5881 = vmul.f32 %v5641, %v5865
      %v5882 = vmul.f32 %v5643, %v5866
      %v5883 = vmul.f32 %v5645, %v5867
      %v5884 = vmul.f32 %v5647, %v5868
      %v5885 = vmul.f32 %v5649, %v5869
      %v5886 = vmul.f32 %v5651, %v5870
      %v5887 = vmul.f32 %v5653, %v5871
      %v5888 = vmul.f32 %v5655, %v5872
      %v5889 = vmul.f32 %v5657, %v5873
      %v5890 = vmul.f32 %v5659, %v5874
      %v5891 = vmul.f32 %v5661, %v5875
      %v5892 = vmul.f32 %v5663, %v5876
      %v5893 = vmul.f32 %v5665, %v5877
      %v5894 = vmul.f32 %v5667, %v5878
      %v5895 = vmul.f32 %v5668, %v5879
      %v5896 = vmul.f32 %v5685, %v5880
      %v5897 = vperm.slane %v5454, 2
      %v5898 = vmul.f32 %v5881, %v5897
      %v5899 = vmul.f32 %v5882, %v5897
      %v5900 = vmul.f32 %v5883, %v5897
      %v5901 = vmul.f32 %v5884, %v5897
      %v5902 = vmul.f32 %v5885, %v5897
      %v5903 = vmul.f32 %v5886, %v5897
      %v5904 = vmul.f32 %v5887, %v5897
      %v5905 = vmul.f32 %v5888, %v5897
      %v5906 = vmul.f32 %v5889, %v5897
      %v5907 = vmul.f32 %v5890, %v5897
      %v5908 = vmul.f32 %v5891, %v5897
      %v5909 = vmul.f32 %v5892, %v5897
      %v5910 = vmul.f32 %v5893, %v5897
      %v5911 = vmul.f32 %v5894, %v5897
      %v5912 = vmul.f32 %v5895, %v5897
      %v5913 = vmul.f32 %v5896, %v5897
      %v5914 = vadd.f32 %v5849, %v5898
      %v5915 = vadd.f32 %v5850, %v5899
      %v5916 = vadd.f32 %v5851, %v5900
      %v5917 = vadd.f32 %v5852, %v5901
      %v5918 = vadd.f32 %v5853, %v5902
      %v5919 = vadd.f32 %v5854, %v5903
      %v5920 = vadd.f32 %v5855, %v5904
      %v5921 = vadd.f32 %v5856, %v5905
      %v5922 = vadd.f32 %v5857, %v5906
      %v5923 = vadd.f32 %v5858, %v5907
      %v5924 = vadd.f32 %v5859, %v5908
      %v5925 = vadd.f32 %v5860, %v5909
      %v5926 = vadd.f32 %v5861, %v5910
      %v5927 = vadd.f32 %v5862, %v5911
      %v5928 = vadd.f32 %v5863, %v5912
      %v5929 = vadd.f32 %v5864, %v5913
      %v5930 = vmul.f32 %v5437, %v5117
      %v5931 = vmul.f32 %v5438, %v5118
      %v5932 = vmul.f32 %v5439, %v5119
      %v5933 = vmul.f32 %v5440, %v5120
      %v5934 = vmul.f32 %v5441, %v5121
      %v5935 = vmul.f32 %v5442, %v5122
      %v5936 = vmul.f32 %v5443, %v5123
      %v5937 = vmul.f32 %v5444, %v5124
      %v5938 = vmul.f32 %v5445, %v5125
      %v5939 = vmul.f32 %v5446, %v5126
      %v5940 = vmul.f32 %v5447, %v5127
      %v5941 = vmul.f32 %v5448, %v5128
      %v5942 = vmul.f32 %v5449, %v5129
      %v5943 = vmul.f32 %v5450, %v5130
      %v5944 = vmul.f32 %v5451, %v5131
      %v5945 = vmul.f32 %v5452, %v5132
      %v5946 = vmul.f32 %v5480, %v5930
      %v5947 = vmul.f32 %v5482, %v5931
      %v5948 = vmul.f32 %v5484, %v5932
      %v5949 = vmul.f32 %v5486, %v5933
      %v5950 = vmul.f32 %v5488, %v5934
      %v5951 = vmul.f32 %v5490, %v5935
      %v5952 = vmul.f32 %v5492, %v5936
      %v5953 = vmul.f32 %v5494, %v5937
      %v5954 = vmul.f32 %v5496, %v5938
      %v5955 = vmul.f32 %v5498, %v5939
      %v5956 = vmul.f32 %v5500, %v5940
      %v5957 = vmul.f32 %v5502, %v5941
      %v5958 = vmul.f32 %v5504, %v5942
      %v5959 = vmul.f32 %v5505, %v5943
      %v5960 = vmul.f32 %v5461, %v5944
      %v5961 = vmul.f32 %v5521, %v5945
      %v5962 = vperm.slane %v5455, 0
      %v5963 = vmul.f32 %v5946, %v5962
      %v5964 = vmul.f32 %v5947, %v5962
      %v5965 = vmul.f32 %v5948, %v5962
      %v5966 = vmul.f32 %v5949, %v5962
      %v5967 = vmul.f32 %v5950, %v5962
      %v5968 = vmul.f32 %v5951, %v5962
      %v5969 = vmul.f32 %v5952, %v5962
      %v5970 = vmul.f32 %v5953, %v5962
      %v5971 = vmul.f32 %v5954, %v5962
      %v5972 = vmul.f32 %v5955, %v5962
      %v5973 = vmul.f32 %v5956, %v5962
      %v5974 = vmul.f32 %v5957, %v5962
      %v5975 = vmul.f32 %v5958, %v5962
      %v5976 = vmul.f32 %v5959, %v5962
      %v5977 = vmul.f32 %v5960, %v5962
      %v5978 = vmul.f32 %v5961, %v5962
      %v5979 = vadd.f32 %v5914, %v5963
      %v5980 = vadd.f32 %v5915, %v5964
      %v5981 = vadd.f32 %v5916, %v5965
      %v5982 = vadd.f32 %v5917, %v5966
      %v5983 = vadd.f32 %v5918, %v5967
      %v5984 = vadd.f32 %v5919, %v5968
      %v5985 = vadd.f32 %v5920, %v5969
      %v5986 = vadd.f32 %v5921, %v5970
      %v5987 = vadd.f32 %v5922, %v5971
      %v5988 = vadd.f32 %v5923, %v5972
      %v5989 = vadd.f32 %v5924, %v5973
      %v5990 = vadd.f32 %v5925, %v5974
      %v5991 = vadd.f32 %v5926, %v5975
      %v5992 = vadd.f32 %v5927, %v5976
      %v5993 = vadd.f32 %v5928, %v5977
      %v5994 = vadd.f32 %v5929, %v5978
      %v5995 = vmul.f32 %v4647, %v5437
      %v5996 = vmul.f32 %v4650, %v5438
      %v5997 = vmul.f32 %v4652, %v5439
      %v5998 = vmul.f32 %v4655, %v5440
      %v5999 = vmul.f32 %v4657, %v5441
      %v6000 = vmul.f32 %v4660, %v5442
      %v6001 = vmul.f32 %v4662, %v5443
      %v6002 = vmul.f32 %v4665, %v5444
      %v6003 = vmul.f32 %v4667, %v5445
      %v6004 = vmul.f32 %v4670, %v5446
      %v6005 = vmul.f32 %v4672, %v5447
      %v6006 = vmul.f32 %v4675, %v5448
      %v6007 = vmul.f32 %v4677, %v5449
      %v6008 = vmul.f32 %v4680, %v5450
      %v6009 = vmul.f32 %v4682, %v5451
      %v6010 = vmul.f32 %v4645, %v5452
      %v6011 = vperm.slane %v5455, 1
      %v6012 = vmul.f32 %v5995, %v6011
      %v6013 = vmul.f32 %v5996, %v6011
      %v6014 = vmul.f32 %v5997, %v6011
      %v6015 = vmul.f32 %v5998, %v6011
      %v6016 = vmul.f32 %v5999, %v6011
      %v6017 = vmul.f32 %v6000, %v6011
      %v6018 = vmul.f32 %v6001, %v6011
      %v6019 = vmul.f32 %v6002, %v6011
      %v6020 = vmul.f32 %v6003, %v6011
      %v6021 = vmul.f32 %v6004, %v6011
      %v6022 = vmul.f32 %v6005, %v6011
      %v6023 = vmul.f32 %v6006, %v6011
      %v6024 = vmul.f32 %v6007, %v6011
      %v6025 = vmul.f32 %v6008, %v6011
      %v6026 = vmul.f32 %v6009, %v6011
      %v6027 = vmul.f32 %v6010, %v6011
      %v6028 = vadd.f32 %v5979, %v6012
      %v6029 = vadd.f32 %v5980, %v6013
      %v6030 = vadd.f32 %v5981, %v6014
      %v6031 = vadd.f32 %v5982, %v6015
      %v6032 = vadd.f32 %v5983, %v6016
      %v6033 = vadd.f32 %v5984, %v6017
      %v6034 = vadd.f32 %v5985, %v6018
      %v6035 = vadd.f32 %v5986, %v6019
      %v6036 = vadd.f32 %v5987, %v6020
      %v6037 = vadd.f32 %v5988, %v6021
      %v6038 = vadd.f32 %v5989, %v6022
      %v6039 = vadd.f32 %v5990, %v6023
      %v6040 = vadd.f32 %v5991, %v6024
      %v6041 = vadd.f32 %v5992, %v6025
      %v6042 = vadd.f32 %v5993, %v6026
      %v6043 = vadd.f32 %v5994, %v6027
      %v6044 = vmul.f32 %v5437, %v5165
      %v6045 = vmul.f32 %v5438, %v5166
      %v6046 = vmul.f32 %v5439, %v5167
      %v6047 = vmul.f32 %v5440, %v5168
      %v6048 = vmul.f32 %v5441, %v5169
      %v6049 = vmul.f32 %v5442, %v5170
      %v6050 = vmul.f32 %v5443, %v5171
      %v6051 = vmul.f32 %v5444, %v5172
      %v6052 = vmul.f32 %v5445, %v5173
      %v6053 = vmul.f32 %v5446, %v5174
      %v6054 = vmul.f32 %v5447, %v5175
      %v6055 = vmul.f32 %v5448, %v5176
      %v6056 = vmul.f32 %v5449, %v5177
      %v6057 = vmul.f32 %v5450, %v5178
      %v6058 = vmul.f32 %v5451, %v5179
      %v6059 = vmul.f32 %v5452, %v5180
      %v6060 = vmul.f32 %v5643, %v6044
      %v6061 = vmul.f32 %v5645, %v6045
      %v6062 = vmul.f32 %v5647, %v6046
      %v6063 = vmul.f32 %v5649, %v6047
      %v6064 = vmul.f32 %v5651, %v6048
      %v6065 = vmul.f32 %v5653, %v6049
      %v6066 = vmul.f32 %v5655, %v6050
      %v6067 = vmul.f32 %v5657, %v6051
      %v6068 = vmul.f32 %v5659, %v6052
      %v6069 = vmul.f32 %v5661, %v6053
      %v6070 = vmul.f32 %v5663, %v6054
      %v6071 = vmul.f32 %v5665, %v6055
      %v6072 = vmul.f32 %v5667, %v6056
      %v6073 = vmul.f32 %v5668, %v6057
      %v6074 = vmul.f32 %v5685, %v6058
      %v6075 = vmul.f32 %v5641, %v6059
      %v6076 = vperm.slane %v5455, 2
      %v6077 = vmul.f32 %v6060, %v6076
      %v6078 = vmul.f32 %v6061, %v6076
      %v6079 = vmul.f32 %v6062, %v6076
      %v6080 = vmul.f32 %v6063, %v6076
      %v6081 = vmul.f32 %v6064, %v6076
      %v6082 = vmul.f32 %v6065, %v6076
      %v6083 = vmul.f32 %v6066, %v6076
      %v6084 = vmul.f32 %v6067, %v6076
      %v6085 = vmul.f32 %v6068, %v6076
      %v6086 = vmul.f32 %v6069, %v6076
      %v6087 = vmul.f32 %v6070, %v6076
      %v6088 = vmul.f32 %v6071, %v6076
      %v6089 = vmul.f32 %v6072, %v6076
      %v6090 = vmul.f32 %v6073, %v6076
      %v6091 = vmul.f32 %v6074, %v6076
      %v6092 = vmul.f32 %v6075, %v6076
      %v6093 = vadd.f32 %v6028, %v6077
      %v6094 = vadd.f32 %v6029, %v6078
      %v6095 = vadd.f32 %v6030, %v6079
      %v6096 = vadd.f32 %v6031, %v6080
      %v6097 = vadd.f32 %v6032, %v6081
      %v6098 = vadd.f32 %v6033, %v6082
      %v6099 = vadd.f32 %v6034, %v6083
      %v6100 = vadd.f32 %v6035, %v6084
      %v6101 = vadd.f32 %v6036, %v6085
      %v6102 = vadd.f32 %v6037, %v6086
      %v6103 = vadd.f32 %v6038, %v6087
      %v6104 = vadd.f32 %v6039, %v6088
      %v6105 = vadd.f32 %v6040, %v6089
      %v6106 = vadd.f32 %v6041, %v6090
      %v6107 = vadd.f32 %v6042, %v6091
      %v6108 = vadd.f32 %v6043, %v6092
      %v6109 = vld [vmem:[%s11] sm:$0x1]
      %v6111 = vperm.slane %v6109, 0
      %v6113 = vadd.f32 %v6093, %v6111
      %v6114 = vadd.f32 %v6094, %v6111
      %v6115 = vadd.f32 %v6095, %v6111
      %v6116 = vadd.f32 %v6096, %v6111
      %v6117 = vadd.f32 %v6097, %v6111
      %v6118 = vadd.f32 %v6098, %v6111
      %v6119 = vadd.f32 %v6099, %v6111
      %v6120 = vadd.f32 %v6100, %v6111
      %v6121 = vadd.f32 %v6101, %v6111
      %v6122 = vadd.f32 %v6102, %v6111
      %v6123 = vadd.f32 %v6103, %v6111
      %v6124 = vadd.f32 %v6104, %v6111
      %v6125 = vadd.f32 %v6105, %v6111
      %v6126 = vadd.f32 %v6106, %v6111
      %v6127 = vadd.f32 %v6107, %v6111
      %v6128 = vadd.f32 %v6108, %v6111
      %v6129 = vmul.f32 %v6113, 0.5
      %v6130 = vmul.f32 %v6114, 0.5
      %v6131 = vmul.f32 %v6115, 0.5
      %v6132 = vmul.f32 %v6116, 0.5
      %v6133 = vmul.f32 %v6117, 0.5
      %v6134 = vmul.f32 %v6118, 0.5
      %v6135 = vmul.f32 %v6119, 0.5
      %v6136 = vmul.f32 %v6120, 0.5
      %v6137 = vmul.f32 %v6121, 0.5
      %v6138 = vmul.f32 %v6122, 0.5
      %v6139 = vmul.f32 %v6123, 0.5
      %v6140 = vmul.f32 %v6124, 0.5
      %v6141 = vmul.f32 %v6125, 0.5
      %v6142 = vmul.f32 %v6126, 0.5
      %v6143 = vmul.f32 %v6127, 0.5
      %v6144 = vmul.f32 %v6128, 0.5
      %v6145 = vmul.f32 %v6113, 0.70710677
      %v6146 = vmul.f32 %v6114, 0.70710677
      %v6147 = vmul.f32 %v6115, 0.70710677
      %v6148 = vmul.f32 %v6116, 0.70710677
      %v6149 = vmul.f32 %v6117, 0.70710677
      %v6150 = vmul.f32 %v6118, 0.70710677
      %v6151 = vmul.f32 %v6119, 0.70710677
      %v6152 = vmul.f32 %v6120, 0.70710677
      %v6153 = vmul.f32 %v6121, 0.70710677
      %v6154 = vmul.f32 %v6122, 0.70710677
      %v6155 = vmul.f32 %v6123, 0.70710677
      %v6156 = vmul.f32 %v6124, 0.70710677
      %v6157 = vmul.f32 %v6125, 0.70710677
      %v6158 = vmul.f32 %v6126, 0.70710677
      %v6159 = vmul.f32 %v6127, 0.70710677
      %v6160 = vmul.f32 %v6128, 0.70710677
      %vm6161 = vcmp.lt.f32.partialorder %v6145, 0.0
      %vm6162 = vcmp.lt.f32.partialorder %v6146, 0.0
      %vm6163 = vcmp.lt.f32.partialorder %v6147, 0.0
      %vm6164 = vcmp.lt.f32.partialorder %v6148, 0.0
      %vm6165 = vcmp.lt.f32.partialorder %v6149, 0.0
      %vm6166 = vcmp.lt.f32.partialorder %v6150, 0.0
      %vm6167 = vcmp.lt.f32.partialorder %v6151, 0.0
      %vm6168 = vcmp.lt.f32.partialorder %v6152, 0.0
      %vm6169 = vcmp.lt.f32.partialorder %v6153, 0.0
      %vm6170 = vcmp.lt.f32.partialorder %v6154, 0.0
      %vm6171 = vcmp.lt.f32.partialorder %v6155, 0.0
      %vm6172 = vcmp.lt.f32.partialorder %v6156, 0.0
      %vm6173 = vcmp.lt.f32.partialorder %v6157, 0.0
      %vm6174 = vcmp.lt.f32.partialorder %v6158, 0.0
      %vm6175 = vcmp.lt.f32.partialorder %v6159, 0.0
      %vm6176 = vcmp.lt.f32.partialorder %v6160, 0.0
      %v6177 = vsel %vm6161, -1.0, 1.0
      %v6178 = vsel %vm6162, -1.0, 1.0
      %v6179 = vsel %vm6163, -1.0, 1.0
      %v6180 = vsel %vm6164, -1.0, 1.0
      %v6181 = vsel %vm6165, -1.0, 1.0
      %v6182 = vsel %vm6166, -1.0, 1.0
      %v6183 = vsel %vm6167, -1.0, 1.0
      %v6184 = vsel %vm6168, -1.0, 1.0
      %v6185 = vsel %vm6169, -1.0, 1.0
      %v6186 = vsel %vm6170, -1.0, 1.0
      %v6187 = vsel %vm6171, -1.0, 1.0
      %v6188 = vsel %vm6172, -1.0, 1.0
      %v6189 = vsel %vm6173, -1.0, 1.0
      %v6190 = vsel %vm6174, -1.0, 1.0
      %v6191 = vsel %vm6175, -1.0, 1.0
      %v6192 = vsel %vm6176, -1.0, 1.0
      %v6193 = vand.u32 2147483647, %v6145
      %v6194 = vand.u32 2147483647, %v6146
      %v6195 = vand.u32 2147483647, %v6147
      %v6196 = vand.u32 2147483647, %v6148
      %v6197 = vand.u32 2147483647, %v6149
      %v6198 = vand.u32 2147483647, %v6150
      %v6199 = vand.u32 2147483647, %v6151
      %v6200 = vand.u32 2147483647, %v6152
      %v6201 = vand.u32 2147483647, %v6153
      %v6202 = vand.u32 2147483647, %v6154
      %v6203 = vand.u32 2147483647, %v6155
      %v6204 = vand.u32 2147483647, %v6156
      %v6205 = vand.u32 2147483647, %v6157
      %v6206 = vand.u32 2147483647, %v6158
      %v6207 = vand.u32 2147483647, %v6159
      %v6208 = vand.u32 2147483647, %v6160
      %v6209 = vmul.f32 %v6193, 0.3275911
      %v6210 = vmul.f32 %v6194, 0.3275911
      %v6211 = vmul.f32 %v6195, 0.3275911
      %v6212 = vmul.f32 %v6196, 0.3275911
      %v6213 = vmul.f32 %v6197, 0.3275911
      %v6214 = vmul.f32 %v6198, 0.3275911
      %v6215 = vmul.f32 %v6199, 0.3275911
      %v6216 = vmul.f32 %v6200, 0.3275911
      %v6217 = vmul.f32 %v6201, 0.3275911
      %v6218 = vmul.f32 %v6202, 0.3275911
      %v6219 = vmul.f32 %v6203, 0.3275911
      %v6220 = vmul.f32 %v6204, 0.3275911
      %v6221 = vmul.f32 %v6205, 0.3275911
      %v6222 = vmul.f32 %v6206, 0.3275911
      %v6223 = vmul.f32 %v6207, 0.3275911
      %v6224 = vmul.f32 %v6208, 0.3275911
      %v6225 = vadd.f32 %v6209, 1.0
      %v6226 = vadd.f32 %v6210, 1.0
      %v6227 = vadd.f32 %v6211, 1.0
      %v6228 = vadd.f32 %v6212, 1.0
      %v6229 = vadd.f32 %v6213, 1.0
      %v6230 = vadd.f32 %v6214, 1.0
      %v6231 = vadd.f32 %v6215, 1.0
      %v6232 = vadd.f32 %v6216, 1.0
      %v6233 = vadd.f32 %v6217, 1.0
      %v6234 = vadd.f32 %v6218, 1.0
      %v6235 = vadd.f32 %v6219, 1.0
      %v6236 = vadd.f32 %v6220, 1.0
      %v6237 = vadd.f32 %v6221, 1.0
      %v6238 = vadd.f32 %v6222, 1.0
      %v6239 = vadd.f32 %v6223, 1.0
      %v6240 = vadd.f32 %v6224, 1.0
      %v6241 = vrcp.pop %v6225
      %v6242 = vmul.f32 %v6225, %v6241
      %v6243 = vsub.f32 1.0, %v6242
      %v6244 = vmul.f32 %v6241, %v6243
      %v6245 = vadd.f32 %v6241, %v6244
      %vm6246 = vweird.f32 %v6225
      %vm6247 = vweird.f32 %v6241
      %vm6248 = vmor %vm6246, %vm6247
      %v6249 = vsel %vm6248, %v6241, %v6245
      %v6250 = vand.u32 2147483647, %v6225
      %vm6251 = vcmp.eq.f32.partialorder %v6250, 8.507059e+37
      %v6252 = vand.u32 %v6225, 2147483648
      %v6253 = vor.u32 1.1754944e-38, %v6252
      %v6254 = vsel %vm6251, %v6253, %v6249
      %v6255 = vmul.f32 1.0, %v6254
      %v6256 = vrcp.pop %v6226
      %v6257 = vmul.f32 %v6226, %v6256
      %v6258 = vsub.f32 1.0, %v6257
      %v6259 = vmul.f32 %v6256, %v6258
      %v6260 = vadd.f32 %v6256, %v6259
      %vm6261 = vweird.f32 %v6226
      %vm6262 = vweird.f32 %v6256
      %vm6263 = vmor %vm6261, %vm6262
      %v6264 = vsel %vm6263, %v6256, %v6260
      %v6265 = vand.u32 2147483647, %v6226
      %vm6266 = vcmp.eq.f32.partialorder %v6265, 8.507059e+37
      %v6267 = vand.u32 %v6226, 2147483648
      %v6268 = vor.u32 1.1754944e-38, %v6267
      %v6269 = vsel %vm6266, %v6268, %v6264
      %v6270 = vmul.f32 1.0, %v6269
      %v6271 = vrcp.pop %v6227
      %v6272 = vmul.f32 %v6227, %v6271
      %v6273 = vsub.f32 1.0, %v6272
      %v6274 = vmul.f32 %v6271, %v6273
      %v6275 = vadd.f32 %v6271, %v6274
      %vm6276 = vweird.f32 %v6227
      %vm6277 = vweird.f32 %v6271
      %vm6278 = vmor %vm6276, %vm6277
      %v6279 = vsel %vm6278, %v6271, %v6275
      %v6280 = vand.u32 2147483647, %v6227
      %vm6281 = vcmp.eq.f32.partialorder %v6280, 8.507059e+37
      %v6282 = vand.u32 %v6227, 2147483648
      %v6283 = vor.u32 1.1754944e-38, %v6282
      %v6284 = vsel %vm6281, %v6283, %v6279
      %v6285 = vmul.f32 1.0, %v6284
      %v6286 = vrcp.pop %v6228
      %v6287 = vmul.f32 %v6228, %v6286
      %v6288 = vsub.f32 1.0, %v6287
      %v6289 = vmul.f32 %v6286, %v6288
      %v6290 = vadd.f32 %v6286, %v6289
      %vm6291 = vweird.f32 %v6228
      %vm6292 = vweird.f32 %v6286
      %vm6293 = vmor %vm6291, %vm6292
      %v6294 = vsel %vm6293, %v6286, %v6290
      %v6295 = vand.u32 2147483647, %v6228
      %vm6296 = vcmp.eq.f32.partialorder %v6295, 8.507059e+37
      %v6297 = vand.u32 %v6228, 2147483648
      %v6298 = vor.u32 1.1754944e-38, %v6297
      %v6299 = vsel %vm6296, %v6298, %v6294
      %v6300 = vmul.f32 1.0, %v6299
      %v6301 = vrcp.pop %v6229
      %v6302 = vmul.f32 %v6229, %v6301
      %v6303 = vsub.f32 1.0, %v6302
      %v6304 = vmul.f32 %v6301, %v6303
      %v6305 = vadd.f32 %v6301, %v6304
      %vm6306 = vweird.f32 %v6229
      %vm6307 = vweird.f32 %v6301
      %vm6308 = vmor %vm6306, %vm6307
      %v6309 = vsel %vm6308, %v6301, %v6305
      %v6310 = vand.u32 2147483647, %v6229
      %vm6311 = vcmp.eq.f32.partialorder %v6310, 8.507059e+37
      %v6312 = vand.u32 %v6229, 2147483648
      %v6313 = vor.u32 1.1754944e-38, %v6312
      %v6314 = vsel %vm6311, %v6313, %v6309
      %v6315 = vmul.f32 1.0, %v6314
      %v6316 = vrcp.pop %v6230
      %v6317 = vmul.f32 %v6230, %v6316
      %v6318 = vsub.f32 1.0, %v6317
      %v6319 = vmul.f32 %v6316, %v6318
      %v6320 = vadd.f32 %v6316, %v6319
      %vm6321 = vweird.f32 %v6230
      %vm6322 = vweird.f32 %v6316
      %vm6323 = vmor %vm6321, %vm6322
      %v6324 = vsel %vm6323, %v6316, %v6320
      %v6325 = vand.u32 2147483647, %v6230
      %vm6326 = vcmp.eq.f32.partialorder %v6325, 8.507059e+37
      %v6327 = vand.u32 %v6230, 2147483648
      %v6328 = vor.u32 1.1754944e-38, %v6327
      %v6329 = vsel %vm6326, %v6328, %v6324
      %v6330 = vmul.f32 1.0, %v6329
      %v6331 = vrcp.pop %v6231
      %v6332 = vmul.f32 %v6231, %v6331
      %v6333 = vsub.f32 1.0, %v6332
      %v6334 = vmul.f32 %v6331, %v6333
      %v6335 = vadd.f32 %v6331, %v6334
      %vm6336 = vweird.f32 %v6231
      %vm6337 = vweird.f32 %v6331
      %vm6338 = vmor %vm6336, %vm6337
      %v6339 = vsel %vm6338, %v6331, %v6335
      %v6340 = vand.u32 2147483647, %v6231
      %vm6341 = vcmp.eq.f32.partialorder %v6340, 8.507059e+37
      %v6342 = vand.u32 %v6231, 2147483648
      %v6343 = vor.u32 1.1754944e-38, %v6342
      %v6344 = vsel %vm6341, %v6343, %v6339
      %v6345 = vmul.f32 1.0, %v6344
      %v6346 = vrcp.pop %v6232
      %v6347 = vmul.f32 %v6232, %v6346
      %v6348 = vsub.f32 1.0, %v6347
      %v6349 = vmul.f32 %v6346, %v6348
      %v6350 = vadd.f32 %v6346, %v6349
      %vm6351 = vweird.f32 %v6232
      %vm6352 = vweird.f32 %v6346
      %vm6353 = vmor %vm6351, %vm6352
      %v6354 = vsel %vm6353, %v6346, %v6350
      %v6355 = vand.u32 2147483647, %v6232
      %vm6356 = vcmp.eq.f32.partialorder %v6355, 8.507059e+37
      %v6357 = vand.u32 %v6232, 2147483648
      %v6358 = vor.u32 1.1754944e-38, %v6357
      %v6359 = vsel %vm6356, %v6358, %v6354
      %v6360 = vmul.f32 1.0, %v6359
      %v6361 = vrcp.pop %v6233
      %v6362 = vmul.f32 %v6233, %v6361
      %v6363 = vsub.f32 1.0, %v6362
      %v6364 = vmul.f32 %v6361, %v6363
      %v6365 = vadd.f32 %v6361, %v6364
      %vm6366 = vweird.f32 %v6233
      %vm6367 = vweird.f32 %v6361
      %vm6368 = vmor %vm6366, %vm6367
      %v6369 = vsel %vm6368, %v6361, %v6365
      %v6370 = vand.u32 2147483647, %v6233
      %vm6371 = vcmp.eq.f32.partialorder %v6370, 8.507059e+37
      %v6372 = vand.u32 %v6233, 2147483648
      %v6373 = vor.u32 1.1754944e-38, %v6372
      %v6374 = vsel %vm6371, %v6373, %v6369
      %v6375 = vmul.f32 1.0, %v6374
      %v6376 = vrcp.pop %v6234
      %v6377 = vmul.f32 %v6234, %v6376
      %v6378 = vsub.f32 1.0, %v6377
      %v6379 = vmul.f32 %v6376, %v6378
      %v6380 = vadd.f32 %v6376, %v6379
      %vm6381 = vweird.f32 %v6234
      %vm6382 = vweird.f32 %v6376
      %vm6383 = vmor %vm6381, %vm6382
      %v6384 = vsel %vm6383, %v6376, %v6380
      %v6385 = vand.u32 2147483647, %v6234
      %vm6386 = vcmp.eq.f32.partialorder %v6385, 8.507059e+37
      %v6387 = vand.u32 %v6234, 2147483648
      %v6388 = vor.u32 1.1754944e-38, %v6387
      %v6389 = vsel %vm6386, %v6388, %v6384
      %v6390 = vmul.f32 1.0, %v6389
      %v6391 = vrcp.pop %v6235
      %v6392 = vmul.f32 %v6235, %v6391
      %v6393 = vsub.f32 1.0, %v6392
      %v6394 = vmul.f32 %v6391, %v6393
      %v6395 = vadd.f32 %v6391, %v6394
      %vm6396 = vweird.f32 %v6235
      %vm6397 = vweird.f32 %v6391
      %vm6398 = vmor %vm6396, %vm6397
      %v6399 = vsel %vm6398, %v6391, %v6395
      %v6400 = vand.u32 2147483647, %v6235
      %vm6401 = vcmp.eq.f32.partialorder %v6400, 8.507059e+37
      %v6402 = vand.u32 %v6235, 2147483648
      %v6403 = vor.u32 1.1754944e-38, %v6402
      %v6404 = vsel %vm6401, %v6403, %v6399
      %v6405 = vmul.f32 1.0, %v6404
      %v6406 = vrcp.pop %v6236
      %v6407 = vmul.f32 %v6236, %v6406
      %v6408 = vsub.f32 1.0, %v6407
      %v6409 = vmul.f32 %v6406, %v6408
      %v6410 = vadd.f32 %v6406, %v6409
      %vm6411 = vweird.f32 %v6236
      %vm6412 = vweird.f32 %v6406
      %vm6413 = vmor %vm6411, %vm6412
      %v6414 = vsel %vm6413, %v6406, %v6410
      %v6415 = vand.u32 2147483647, %v6236
      %vm6416 = vcmp.eq.f32.partialorder %v6415, 8.507059e+37
      %v6417 = vand.u32 %v6236, 2147483648
      %v6418 = vor.u32 1.1754944e-38, %v6417
      %v6419 = vsel %vm6416, %v6418, %v6414
      %v6420 = vmul.f32 1.0, %v6419
      %v6421 = vrcp.pop %v6237
      %v6422 = vmul.f32 %v6237, %v6421
      %v6423 = vsub.f32 1.0, %v6422
      %v6424 = vmul.f32 %v6421, %v6423
      %v6425 = vadd.f32 %v6421, %v6424
      %vm6426 = vweird.f32 %v6237
      %vm6427 = vweird.f32 %v6421
      %vm6428 = vmor %vm6426, %vm6427
      %v6429 = vsel %vm6428, %v6421, %v6425
      %v6430 = vand.u32 2147483647, %v6237
      %vm6431 = vcmp.eq.f32.partialorder %v6430, 8.507059e+37
      %v6432 = vand.u32 %v6237, 2147483648
      %v6433 = vor.u32 1.1754944e-38, %v6432
      %v6434 = vsel %vm6431, %v6433, %v6429
      %v6435 = vmul.f32 1.0, %v6434
      %v6436 = vrcp.pop %v6238
      %v6437 = vmul.f32 %v6238, %v6436
      %v6438 = vsub.f32 1.0, %v6437
      %v6439 = vmul.f32 %v6436, %v6438
      %v6440 = vadd.f32 %v6436, %v6439
      %vm6441 = vweird.f32 %v6238
      %vm6442 = vweird.f32 %v6436
      %vm6443 = vmor %vm6441, %vm6442
      %v6444 = vsel %vm6443, %v6436, %v6440
      %v6445 = vand.u32 2147483647, %v6238
      %vm6446 = vcmp.eq.f32.partialorder %v6445, 8.507059e+37
      %v6447 = vand.u32 %v6238, 2147483648
      %v6448 = vor.u32 1.1754944e-38, %v6447
      %v6449 = vsel %vm6446, %v6448, %v6444
      %v6450 = vmul.f32 1.0, %v6449
      %v6451 = vrcp.pop %v6239
      %v6452 = vmul.f32 %v6239, %v6451
      %v6453 = vsub.f32 1.0, %v6452
      %v6454 = vmul.f32 %v6451, %v6453
      %v6455 = vadd.f32 %v6451, %v6454
      %vm6456 = vweird.f32 %v6239
      %vm6457 = vweird.f32 %v6451
      %vm6458 = vmor %vm6456, %vm6457
      %v6459 = vsel %vm6458, %v6451, %v6455
      %v6460 = vand.u32 2147483647, %v6239
      %vm6461 = vcmp.eq.f32.partialorder %v6460, 8.507059e+37
      %v6462 = vand.u32 %v6239, 2147483648
      %v6463 = vor.u32 1.1754944e-38, %v6462
      %v6464 = vsel %vm6461, %v6463, %v6459
      %v6465 = vmul.f32 1.0, %v6464
      %v6466 = vrcp.pop %v6240
      %v6467 = vmul.f32 %v6240, %v6466
      %v6468 = vsub.f32 1.0, %v6467
      %v6469 = vmul.f32 %v6466, %v6468
      %v6470 = vadd.f32 %v6466, %v6469
      %vm6471 = vweird.f32 %v6240
      %vm6472 = vweird.f32 %v6466
      %vm6473 = vmor %vm6471, %vm6472
      %v6474 = vsel %vm6473, %v6466, %v6470
      %v6475 = vand.u32 2147483647, %v6240
      %vm6476 = vcmp.eq.f32.partialorder %v6475, 8.507059e+37
      %v6477 = vand.u32 %v6240, 2147483648
      %v6478 = vor.u32 1.1754944e-38, %v6477
      %v6479 = vsel %vm6476, %v6478, %v6474
      %v6480 = vmul.f32 1.0, %v6479
      %v6481 = vmul.f32 %v6255, 1.0614054
      %v6482 = vmul.f32 %v6270, 1.0614054
      %v6483 = vmul.f32 %v6285, 1.0614054
      %v6484 = vmul.f32 %v6300, 1.0614054
      %v6485 = vmul.f32 %v6315, 1.0614054
      %v6486 = vmul.f32 %v6330, 1.0614054
      %v6487 = vmul.f32 %v6345, 1.0614054
      %v6488 = vmul.f32 %v6360, 1.0614054
      %v6489 = vmul.f32 %v6375, 1.0614054
      %v6490 = vmul.f32 %v6390, 1.0614054
      %v6491 = vmul.f32 %v6405, 1.0614054
      %v6492 = vmul.f32 %v6420, 1.0614054
      %v6493 = vmul.f32 %v6435, 1.0614054
      %v6494 = vmul.f32 %v6450, 1.0614054
      %v6495 = vmul.f32 %v6465, 1.0614054
      %v6496 = vmul.f32 %v6480, 1.0614054
      %v6497 = vadd.f32 %v6481, -1.4531521
      %v6498 = vadd.f32 %v6482, -1.4531521
      %v6499 = vadd.f32 %v6483, -1.4531521
      %v6500 = vadd.f32 %v6484, -1.4531521
      %v6501 = vadd.f32 %v6485, -1.4531521
      %v6502 = vadd.f32 %v6486, -1.4531521
      %v6503 = vadd.f32 %v6487, -1.4531521
      %v6504 = vadd.f32 %v6488, -1.4531521
      %v6505 = vadd.f32 %v6489, -1.4531521
      %v6506 = vadd.f32 %v6490, -1.4531521
      %v6507 = vadd.f32 %v6491, -1.4531521
      %v6508 = vadd.f32 %v6492, -1.4531521
      %v6509 = vadd.f32 %v6493, -1.4531521
      %v6510 = vadd.f32 %v6494, -1.4531521
      %v6511 = vadd.f32 %v6495, -1.4531521
      %v6512 = vadd.f32 %v6496, -1.4531521
      %v6513 = vmul.f32 %v6497, %v6255
      %v6514 = vmul.f32 %v6498, %v6270
      %v6515 = vmul.f32 %v6499, %v6285
      %v6516 = vmul.f32 %v6500, %v6300
      %v6517 = vmul.f32 %v6501, %v6315
      %v6518 = vmul.f32 %v6502, %v6330
      %v6519 = vmul.f32 %v6503, %v6345
      %v6520 = vmul.f32 %v6504, %v6360
      %v6521 = vmul.f32 %v6505, %v6375
      %v6522 = vmul.f32 %v6506, %v6390
      %v6523 = vmul.f32 %v6507, %v6405
      %v6524 = vmul.f32 %v6508, %v6420
      %v6525 = vmul.f32 %v6509, %v6435
      %v6526 = vmul.f32 %v6510, %v6450
      %v6527 = vmul.f32 %v6511, %v6465
      %v6528 = vmul.f32 %v6512, %v6480
      %v6529 = vadd.f32 %v6513, 1.4214138
      %v6530 = vadd.f32 %v6514, 1.4214138
      %v6531 = vadd.f32 %v6515, 1.4214138
      %v6532 = vadd.f32 %v6516, 1.4214138
      %v6533 = vadd.f32 %v6517, 1.4214138
      %v6534 = vadd.f32 %v6518, 1.4214138
      %v6535 = vadd.f32 %v6519, 1.4214138
      %v6536 = vadd.f32 %v6520, 1.4214138
      %v6537 = vadd.f32 %v6521, 1.4214138
      %v6538 = vadd.f32 %v6522, 1.4214138
      %v6539 = vadd.f32 %v6523, 1.4214138
      %v6540 = vadd.f32 %v6524, 1.4214138
      %v6541 = vadd.f32 %v6525, 1.4214138
      %v6542 = vadd.f32 %v6526, 1.4214138
      %v6543 = vadd.f32 %v6527, 1.4214138
      %v6544 = vadd.f32 %v6528, 1.4214138
      %v6545 = vmul.f32 %v6529, %v6255
      %v6546 = vmul.f32 %v6530, %v6270
      %v6547 = vmul.f32 %v6531, %v6285
      %v6548 = vmul.f32 %v6532, %v6300
      %v6549 = vmul.f32 %v6533, %v6315
      %v6550 = vmul.f32 %v6534, %v6330
      %v6551 = vmul.f32 %v6535, %v6345
      %v6552 = vmul.f32 %v6536, %v6360
      %v6553 = vmul.f32 %v6537, %v6375
      %v6554 = vmul.f32 %v6538, %v6390
      %v6555 = vmul.f32 %v6539, %v6405
      %v6556 = vmul.f32 %v6540, %v6420
      %v6557 = vmul.f32 %v6541, %v6435
      %v6558 = vmul.f32 %v6542, %v6450
      %v6559 = vmul.f32 %v6543, %v6465
      %v6560 = vmul.f32 %v6544, %v6480
      %v6561 = vadd.f32 %v6545, -0.28449672
      %v6562 = vadd.f32 %v6546, -0.28449672
      %v6563 = vadd.f32 %v6547, -0.28449672
      %v6564 = vadd.f32 %v6548, -0.28449672
      %v6565 = vadd.f32 %v6549, -0.28449672
      %v6566 = vadd.f32 %v6550, -0.28449672
      %v6567 = vadd.f32 %v6551, -0.28449672
      %v6568 = vadd.f32 %v6552, -0.28449672
      %v6569 = vadd.f32 %v6553, -0.28449672
      %v6570 = vadd.f32 %v6554, -0.28449672
      %v6571 = vadd.f32 %v6555, -0.28449672
      %v6572 = vadd.f32 %v6556, -0.28449672
      %v6573 = vadd.f32 %v6557, -0.28449672
      %v6574 = vadd.f32 %v6558, -0.28449672
      %v6575 = vadd.f32 %v6559, -0.28449672
      %v6576 = vadd.f32 %v6560, -0.28449672
      %v6577 = vmul.f32 %v6561, %v6255
      %v6578 = vmul.f32 %v6562, %v6270
      %v6579 = vmul.f32 %v6563, %v6285
      %v6580 = vmul.f32 %v6564, %v6300
      %v6581 = vmul.f32 %v6565, %v6315
      %v6582 = vmul.f32 %v6566, %v6330
      %v6583 = vmul.f32 %v6567, %v6345
      %v6584 = vmul.f32 %v6568, %v6360
      %v6585 = vmul.f32 %v6569, %v6375
      %v6586 = vmul.f32 %v6570, %v6390
      %v6587 = vmul.f32 %v6571, %v6405
      %v6588 = vmul.f32 %v6572, %v6420
      %v6589 = vmul.f32 %v6573, %v6435
      %v6590 = vmul.f32 %v6574, %v6450
      %v6591 = vmul.f32 %v6575, %v6465
      %v6592 = vmul.f32 %v6576, %v6480
      %v6593 = vadd.f32 %v6577, 0.2548296
      %v6594 = vadd.f32 %v6578, 0.2548296
      %v6595 = vadd.f32 %v6579, 0.2548296
      %v6596 = vadd.f32 %v6580, 0.2548296
      %v6597 = vadd.f32 %v6581, 0.2548296
      %v6598 = vadd.f32 %v6582, 0.2548296
      %v6599 = vadd.f32 %v6583, 0.2548296
      %v6600 = vadd.f32 %v6584, 0.2548296
      %v6601 = vadd.f32 %v6585, 0.2548296
      %v6602 = vadd.f32 %v6586, 0.2548296
      %v6603 = vadd.f32 %v6587, 0.2548296
      %v6604 = vadd.f32 %v6588, 0.2548296
      %v6605 = vadd.f32 %v6589, 0.2548296
      %v6606 = vadd.f32 %v6590, 0.2548296
      %v6607 = vadd.f32 %v6591, 0.2548296
      %v6608 = vadd.f32 %v6592, 0.2548296
      %v6609 = vmul.f32 %v6593, %v6255
      %v6610 = vmul.f32 %v6594, %v6270
      %v6611 = vmul.f32 %v6595, %v6285
      %v6612 = vmul.f32 %v6596, %v6300
      %v6613 = vmul.f32 %v6597, %v6315
      %v6614 = vmul.f32 %v6598, %v6330
      %v6615 = vmul.f32 %v6599, %v6345
      %v6616 = vmul.f32 %v6600, %v6360
      %v6617 = vmul.f32 %v6601, %v6375
      %v6618 = vmul.f32 %v6602, %v6390
      %v6619 = vmul.f32 %v6603, %v6405
      %v6620 = vmul.f32 %v6604, %v6420
      %v6621 = vmul.f32 %v6605, %v6435
      %v6622 = vmul.f32 %v6606, %v6450
      %v6623 = vmul.f32 %v6607, %v6465
      %v6624 = vmul.f32 %v6608, %v6480
      %v6625 = vsub.f32 0.0, %v6193
      %v6626 = vsub.f32 0.0, %v6194
      %v6627 = vsub.f32 0.0, %v6195
      %v6628 = vsub.f32 0.0, %v6196
      %v6629 = vsub.f32 0.0, %v6197
      %v6630 = vsub.f32 0.0, %v6198
      %v6631 = vsub.f32 0.0, %v6199
      %v6632 = vsub.f32 0.0, %v6200
      %v6633 = vsub.f32 0.0, %v6201
      %v6634 = vsub.f32 0.0, %v6202
      %v6635 = vsub.f32 0.0, %v6203
      %v6636 = vsub.f32 0.0, %v6204
      %v6637 = vsub.f32 0.0, %v6205
      %v6638 = vsub.f32 0.0, %v6206
      %v6639 = vsub.f32 0.0, %v6207
      %v6640 = vsub.f32 0.0, %v6208
      %v6641 = vmul.f32 %v6625, %v6193
      %v6642 = vmul.f32 %v6626, %v6194
      %v6643 = vmul.f32 %v6627, %v6195
      %v6644 = vmul.f32 %v6628, %v6196
      %v6645 = vmul.f32 %v6629, %v6197
      %v6646 = vmul.f32 %v6630, %v6198
      %v6647 = vmul.f32 %v6631, %v6199
      %v6648 = vmul.f32 %v6632, %v6200
      %v6649 = vmul.f32 %v6633, %v6201
      %v6650 = vmul.f32 %v6634, %v6202
      %v6651 = vmul.f32 %v6635, %v6203
      %v6652 = vmul.f32 %v6636, %v6204
      %v6653 = vmul.f32 %v6637, %v6205
      %v6654 = vmul.f32 %v6638, %v6206
      %v6655 = vmul.f32 %v6639, %v6207
      %v6656 = vmul.f32 %v6640, %v6208
      %v6657 = vmul.f32 %v6641, 1.442695
      %v6658 = vpow.pop %v6657
      %v6659 = vmul.f32 %v6642, 1.442695
      %v6660 = vpow.pop %v6659
      %v6661 = vmul.f32 %v6643, 1.442695
      %v6662 = vpow.pop %v6661
      %v6663 = vmul.f32 %v6644, 1.442695
      %v6664 = vpow.pop %v6663
      %v6665 = vmul.f32 %v6645, 1.442695
      %v6666 = vpow.pop %v6665
      %v6667 = vmul.f32 %v6646, 1.442695
      %v6668 = vpow.pop %v6667
      %v6669 = vmul.f32 %v6647, 1.442695
      %v6670 = vpow.pop %v6669
      %v6671 = vmul.f32 %v6648, 1.442695
      %v6672 = vpow.pop %v6671
      %v6673 = vmul.f32 %v6649, 1.442695
      %v6674 = vpow.pop %v6673
      %v6675 = vmul.f32 %v6650, 1.442695
      %v6676 = vpow.pop %v6675
      %v6677 = vmul.f32 %v6651, 1.442695
      %v6678 = vpow.pop %v6677
      %v6679 = vmul.f32 %v6652, 1.442695
      %v6680 = vpow.pop %v6679
      %v6681 = vmul.f32 %v6653, 1.442695
      %v6682 = vpow.pop %v6681
      %v6683 = vmul.f32 %v6654, 1.442695
      %v6684 = vpow.pop %v6683
      %v6685 = vmul.f32 %v6655, 1.442695
      %v6686 = vpow.pop %v6685
      %v6687 = vmul.f32 %v6656, 1.442695
      %v6688 = vpow.pop %v6687
      %v6689 = vmul.f32 %v6609, %v6658
      %v6690 = vmul.f32 %v6610, %v6660
      %v6691 = vmul.f32 %v6611, %v6662
      %v6692 = vmul.f32 %v6612, %v6664
      %v6693 = vmul.f32 %v6613, %v6666
      %v6694 = vmul.f32 %v6614, %v6668
      %v6695 = vmul.f32 %v6615, %v6670
      %v6696 = vmul.f32 %v6616, %v6672
      %v6697 = vmul.f32 %v6617, %v6674
      %v6698 = vmul.f32 %v6618, %v6676
      %v6699 = vmul.f32 %v6619, %v6678
      %v6700 = vmul.f32 %v6620, %v6680
      %v6701 = vmul.f32 %v6621, %v6682
      %v6702 = vmul.f32 %v6622, %v6684
      %v6703 = vmul.f32 %v6623, %v6686
      %v6704 = vmul.f32 %v6624, %v6688
      %v6705 = vsub.f32 1.0, %v6689
      %v6706 = vsub.f32 1.0, %v6690
      %v6707 = vsub.f32 1.0, %v6691
      %v6708 = vsub.f32 1.0, %v6692
      %v6709 = vsub.f32 1.0, %v6693
      %v6710 = vsub.f32 1.0, %v6694
      %v6711 = vsub.f32 1.0, %v6695
      %v6712 = vsub.f32 1.0, %v6696
      %v6713 = vsub.f32 1.0, %v6697
      %v6714 = vsub.f32 1.0, %v6698
      %v6715 = vsub.f32 1.0, %v6699
      %v6716 = vsub.f32 1.0, %v6700
      %v6717 = vsub.f32 1.0, %v6701
      %v6718 = vsub.f32 1.0, %v6702
      %v6719 = vsub.f32 1.0, %v6703
      %v6720 = vsub.f32 1.0, %v6704
      %v6721 = vmul.f32 %v6177, %v6705
      %v6722 = vmul.f32 %v6178, %v6706
      %v6723 = vmul.f32 %v6179, %v6707
      %v6724 = vmul.f32 %v6180, %v6708
      %v6725 = vmul.f32 %v6181, %v6709
      %v6726 = vmul.f32 %v6182, %v6710
      %v6727 = vmul.f32 %v6183, %v6711
      %v6728 = vmul.f32 %v6184, %v6712
      %v6729 = vmul.f32 %v6185, %v6713
      %v6730 = vmul.f32 %v6186, %v6714
      %v6731 = vmul.f32 %v6187, %v6715
      %v6732 = vmul.f32 %v6188, %v6716
      %v6733 = vmul.f32 %v6189, %v6717
      %v6734 = vmul.f32 %v6190, %v6718
      %v6735 = vmul.f32 %v6191, %v6719
      %v6736 = vmul.f32 %v6192, %v6720
      %v6737 = vadd.f32 %v6721, 1.0
      %v6738 = vadd.f32 %v6722, 1.0
      %v6739 = vadd.f32 %v6723, 1.0
      %v6740 = vadd.f32 %v6724, 1.0
      %v6741 = vadd.f32 %v6725, 1.0
      %v6742 = vadd.f32 %v6726, 1.0
      %v6743 = vadd.f32 %v6727, 1.0
      %v6744 = vadd.f32 %v6728, 1.0
      %v6745 = vadd.f32 %v6729, 1.0
      %v6746 = vadd.f32 %v6730, 1.0
      %v6747 = vadd.f32 %v6731, 1.0
      %v6748 = vadd.f32 %v6732, 1.0
      %v6749 = vadd.f32 %v6733, 1.0
      %v6750 = vadd.f32 %v6734, 1.0
      %v6751 = vadd.f32 %v6735, 1.0
      %v6752 = vadd.f32 %v6736, 1.0
      %v6753 = vmul.f32 %v6129, %v6737
      %v6754 = vmul.f32 %v6130, %v6738
      %v6755 = vmul.f32 %v6131, %v6739
      %v6756 = vmul.f32 %v6132, %v6740
      %v6757 = vmul.f32 %v6133, %v6741
      %v6758 = vmul.f32 %v6134, %v6742
      %v6759 = vmul.f32 %v6135, %v6743
      %v6760 = vmul.f32 %v6136, %v6744
      %v6761 = vmul.f32 %v6137, %v6745
      %v6762 = vmul.f32 %v6138, %v6746
      %v6763 = vmul.f32 %v6139, %v6747
      %v6764 = vmul.f32 %v6140, %v6748
      %v6765 = vmul.f32 %v6141, %v6749
      %v6766 = vmul.f32 %v6142, %v6750
      %v6767 = vmul.f32 %v6143, %v6751
      %v6768 = vmul.f32 %v6144, %v6752
      %v6769 = vpack.c.bf16 %v6754, %v6753
      %v6770 = vpack.c.bf16 %v6756, %v6755
      %v6771 = vpack.c.bf16 %v6758, %v6757
      %v6772 = vpack.c.bf16 %v6760, %v6759
      %v6773 = vpack.c.bf16 %v6762, %v6761
      %v6774 = vpack.c.bf16 %v6764, %v6763
      %v6775 = vpack.c.bf16 %v6766, %v6765
      %v6776 = vpack.c.bf16 %v6768, %v6767
      %v6777 = vld [vmem:[%s12] sm:$0xf]
      %v6778 = vld [vmem:[%s12 + $0x4] sm:$0xf]
      %v6779 = vld [vmem:[%s12 + $0x8] sm:$0xf]
      %v6780 = vld [vmem:[%s12 + $0xc] sm:$0xf]
      %v6781 = vld [vmem:[%s12 + $0x10] sm:$0xf]
      %v6782 = vld [vmem:[%s12 + $0x14] sm:$0xf]
      %v6783 = vld [vmem:[%s12 + $0x18] sm:$0xf]
      %v6784 = vld [vmem:[%s12 + $0x1c] sm:$0xf]
      %v6785 = vld [vmem:[%s12 + $0x20] sm:$0xf]
      %v6786 = vld [vmem:[%s12 + $0x24] sm:$0xf]
      %v6787 = vld [vmem:[%s12 + $0x28] sm:$0xf]
      %v6788 = vld [vmem:[%s12 + $0x2c] sm:$0xf]
      %v6789 = vld [vmem:[%s12 + $0x30] sm:$0xf]
      %v6790 = vld [vmem:[%s12 + $0x34] sm:$0xf]
      %v6791 = vld [vmem:[%s12 + $0x38] sm:$0xf]
      %v6792 = vld [vmem:[%s12 + $0x3c] sm:$0xf]
      %v6793 = vld [vmem:[%s13] sm:$0x1]
      %v6795 = vperm.slane %v6793, 0
      %v6813 = vunpack.c.l.b16 %v6777
      %v6814 = vunpack.c.l.b16 %v6778
      %v6815 = vunpack.c.l.b16 %v6779
      %v6816 = vunpack.c.l.b16 %v6780
      %v6817 = vunpack.c.l.b16 %v6781
      %v6818 = vunpack.c.l.b16 %v6782
      %v6819 = vunpack.c.l.b16 %v6783
      %v6820 = vunpack.c.l.b16 %v6784
      %v6821 = vunpack.c.l.b16 %v6785
      %v6822 = vunpack.c.l.b16 %v6786
      %v6823 = vunpack.c.l.b16 %v6787
      %v6824 = vunpack.c.l.b16 %v6788
      %v6825 = vunpack.c.l.b16 %v6789
      %v6826 = vunpack.c.l.b16 %v6790
      %v6827 = vunpack.c.l.b16 %v6791
      %v6828 = vunpack.c.l.b16 %v6792
      %v6829 = vpack.c.b16 %v6814, %v6813
      %v6830 = vpack.c.b16 %v6816, %v6815
      %v6831 = vpack.c.b16 %v6818, %v6817
      %v6832 = vpack.c.b16 %v6820, %v6819
      %v6833 = vpack.c.b16 %v6822, %v6821
      %v6834 = vpack.c.b16 %v6824, %v6823
      %v6835 = vpack.c.b16 %v6826, %v6825
      %v6836 = vpack.c.b16 %v6828, %v6827
      %6845 = vmatpush.bf16.msra.mxu0 %v6836
      %6846 = vmatpush.bf16.msra.mxu0 %v6835
      %6847 = vmatpush.bf16.msra.mxu0 %v6834
      %6848 = vmatpush.bf16.msra.mxu0 %v6833
      %6849 = vmatpush.bf16.msra.mxu0 %v6832
      %6850 = vmatpush.bf16.msra.mxu0 %v6831
      %6851 = vmatpush.bf16.msra.mxu0 %v6830
      %6852 = vmatpush.bf16.msra.mxu0 %v6829
      %6853 = vmatmul.bf16.gmra.mxu0 %v6769
      %v6854 = vpop.f32.mrf.mxu0
      %v6855 = vadd.f32 %v6795, %v6854
      %v6856 = vpop.f32.mrf.mxu0
      %v6857 = vadd.f32 %v6795, %v6856
      %6858 = vmatmul.bf16.gmra.mxu0 %v6770
      %v6859 = vpop.f32.mrf.mxu0
      %v6860 = vadd.f32 %v6795, %v6859
      %v6861 = vpop.f32.mrf.mxu0
      %v6862 = vadd.f32 %v6795, %v6861
      %6863 = vmatmul.bf16.gmra.mxu0 %v6771
      %v6864 = vpop.f32.mrf.mxu0
      %v6865 = vadd.f32 %v6795, %v6864
      %v6866 = vpop.f32.mrf.mxu0
      %v6867 = vadd.f32 %v6795, %v6866
      %6868 = vmatmul.bf16.gmra.mxu0 %v6772
      %v6869 = vpop.f32.mrf.mxu0
      %v6870 = vadd.f32 %v6795, %v6869
      %v6871 = vpop.f32.mrf.mxu0
      %v6872 = vadd.f32 %v6795, %v6871
      %6873 = vmatmul.bf16.gmra.mxu0 %v6773
      %v6874 = vpop.f32.mrf.mxu0
      %v6875 = vadd.f32 %v6795, %v6874
      %v6876 = vpop.f32.mrf.mxu0
      %v6877 = vadd.f32 %v6795, %v6876
      %6878 = vmatmul.bf16.gmra.mxu0 %v6774
      %v6879 = vpop.f32.mrf.mxu0
      %v6880 = vadd.f32 %v6795, %v6879
      %v6881 = vpop.f32.mrf.mxu0
      %v6882 = vadd.f32 %v6795, %v6881
      %6883 = vmatmul.bf16.gmra.mxu0 %v6775
      %v6884 = vpop.f32.mrf.mxu0
      %v6885 = vadd.f32 %v6795, %v6884
      %v6886 = vpop.f32.mrf.mxu0
      %v6887 = vadd.f32 %v6795, %v6886
      %6888 = vmatmul.bf16.gmra.mxu0 %v6776
      %v6889 = vpop.f32.mrf.mxu0
      %v6890 = vadd.f32 %v6795, %v6889
      %v6891 = vpop.f32.mrf.mxu0
      %v6892 = vadd.f32 %v6795, %v6891
      %6893 = vdwg.mxu0
      %v6894 = vadd.f32 %v4175, %v6855
      %v6895 = vadd.f32 %v4176, %v6857
      %v6896 = vadd.f32 %v4177, %v6860
      %v6897 = vadd.f32 %v4178, %v6862
      %v6898 = vadd.f32 %v4179, %v6865
      %v6899 = vadd.f32 %v4180, %v6867
      %v6900 = vadd.f32 %v4181, %v6870
      %v6901 = vadd.f32 %v4182, %v6872
      %v6902 = vadd.f32 %v4183, %v6875
      %v6903 = vadd.f32 %v4184, %v6877
      %v6904 = vadd.f32 %v4185, %v6880
      %v6905 = vadd.f32 %v4186, %v6882
      %v6906 = vadd.f32 %v4187, %v6885
      %v6907 = vadd.f32 %v4188, %v6887
      %v6908 = vadd.f32 %v4189, %v6890
      %v6909 = vadd.f32 %v4190, %v6892
      %6910 = vst.msk [vmem:[%s474] sm:$0xff] %vm495, %v6894
      %6911 = vst.msk [vmem:[%s474 + $0x8] sm:$0xff] %vm495, %v6895
      %6912 = vst.msk [vmem:[%s474 + $0x10] sm:$0xff] %vm495, %v6896
      %6913 = vst.msk [vmem:[%s474 + $0x18] sm:$0xff] %vm495, %v6897
      %6914 = vst.msk [vmem:[%s474 + $0x20] sm:$0xff] %vm495, %v6898
      %6915 = vst.msk [vmem:[%s474 + $0x28] sm:$0xff] %vm495, %v6899
      %6916 = vst.msk [vmem:[%s474 + $0x30] sm:$0xff] %vm495, %v6900
      %6917 = vst.msk [vmem:[%s474 + $0x38] sm:$0xff] %vm495, %v6901
      %6918 = vst.msk [vmem:[%s474 + $0x40] sm:$0xff] %vm495, %v6902
      %6919 = vst.msk [vmem:[%s474 + $0x48] sm:$0xff] %vm495, %v6903
      %6920 = vst.msk [vmem:[%s474 + $0x50] sm:$0xff] %vm495, %v6904
      %6921 = vst.msk [vmem:[%s474 + $0x58] sm:$0xff] %vm495, %v6905
      %6922 = vst.msk [vmem:[%s474 + $0x60] sm:$0xff] %vm495, %v6906
      %6923 = vst.msk [vmem:[%s474 + $0x68] sm:$0xff] %vm495, %v6907
      %6924 = vst.msk [vmem:[%s474 + $0x70] sm:$0xff] %vm495, %v6908
      %6925 = vst.msk [vmem:[%s474 + $0x78] sm:$0xff] %vm495, %v6909
      %s6926 = smul.u32 2, %s25
      %p6927 = scmp.lt.s32.totalorder %s6926, 3
      %s6928 = scalar_select %p6927, %s6926, 3
      %s6929 = smul.addr %s6928, 8
      %s6930 = smul.addr %s6929, 8
      %s6931 = scalar_lea.vmem %s14, %s6930
      // Predicated region
      $region77: #{tpu_custom_call.1} parent=75 // pred_check
        %p6932 = pneg %p342
      $region78: #{tpu_custom_call.1} parent=75 // pred_check_branch
        %6934 = sbr.rel (%p6932) target = $region80
      $region79: #{tpu_custom_call.1} parent=75 // pred_region
        %s6935 = smul.u32 2, %s25
      $region80: #{tpu_custom_call.1} parent=75 // pred_fallthru
        _
    $region76: #{tpu_custom_call.1} parent=5 // pred_fallthru
      _
    %p6936 = scmp.le.s32.totalorder 2, %s20
    // Predicated region
    $region81: #{tpu_custom_call.1} parent=5 // pred_check
      %p6937 = pneg %p6936
    $region82: #{tpu_custom_call.1} parent=5 // pred_check_branch
      %6939 = sbr.rel (%p6937) target = $region84
    $region83: #{tpu_custom_call.1} parent=5 // pred_region
      %s6940 = ssub.s32 %s20, 2
      // Predicated region
      $region85: #{tpu_custom_call.1} parent=83 // pred_check
        %p6941 = pneg %p348
      $region86: #{tpu_custom_call.1} parent=83 // pred_check_branch
        %6943 = sbr.rel (%p6941) target = $region88
      $region87: #{tpu_custom_call.1} parent=83 // pred_region
        %s6944 = smul.u32 2, %s26
        %p6945 = scmp.lt.s32.totalorder %s6944, 3
        %s6946 = scalar_select %p6945, %s6944, 3
        %s6947 = smul.addr %s6946, 8
        %s6948 = smul.addr %s6947, 8
        %s6949 = scalar_lea.vmem %s14, %s6948
      $region88: #{tpu_custom_call.1} parent=83 // pred_fallthru
        _
    $region84: #{tpu_custom_call.1} parent=5 // pred_fallthru
      _
  $region6: #{tpu_custom_call.1} parent=0 // loop_footer
    %s24 = sadd.s32 1, %s20
  $region7: #{tpu_custom_call.1} parent=0 // loop_footer_branch
    %19 = sbr.rel target = $region3
  $region8: #{tpu_custom_call.1} parent=0 // loop_exit
    _

</llo_original>
